<compile_context>
chip_gen: v7x
topology: tpu7x:2x2x1
jax: 0.10.0
libtpu: 0.0.40
codegen_flags: <defaults>
</compile_context>

<pallas_src>
import functools

import numpy as np
import jax
import jax.numpy as jnp
from jax import lax
from jax.experimental import pallas as pl
from jax.experimental.pallas import tpu as pltpu

_G = 256            # lane-aligned group width (192 real columns + 64 zero pad)
_NPOOL = 9          # 3x3 pool-window offsets
_CROP = 26          # only the first 26x26 pixels are touched by conv(3) + pool(3, stride 3)
_IMG = _CROP * _CROP
_LOGIT_W = 128      # lane-dense padded logit width (10 real + 118 pad)
_PAD_BIAS = -1e30   # pad-column bias: excluded from max / logsumexp


def _round_up(n, m):
    return (n + m - 1) // m * m


# ---------------- fused Pallas kernel ----------------

def convnet_kernel(x_ref, wbig_ref, bconv_ref, wf_ref, bf_ref, o_ref):
    # x_ref    : (TB, 676)   f32 cropped flattened 26x26 images
    # wbig_ref : (676, 9*256) bf16 conv-as-matmul structure matrix (9 lane-aligned groups)
    # bconv_ref: (1, 256)    f32 conv bias repeated per pooled location (cols 192..255 = 0)
    # wf_ref   : (256, 128)  bf16 FC weight, rows 192..255 and cols 10..127 zero
    # bf_ref   : (1, 128)    f32 FC bias, cols 10..127 = -1e30 (pad columns)
    # o_ref    : (TB, 128)   f32 log-probabilities (cols 10..127 are junk, sliced off outside)
    x = x_ref[...].astype(jnp.bfloat16)                             # cast once, reused 9x

    # conv + 3x3/stride-3 max-pool: group-by-group MXU matmuls with a running max.
    pooled = jnp.dot(x, wbig_ref[:, 0:_G], preferred_element_type=jnp.float32)
    for k in range(1, _NPOOL):                                      # static unroll, 256-aligned slices
        pooled = jnp.maximum(
            pooled,
            jnp.dot(x, wbig_ref[:, k * _G:(k + 1) * _G],
                    preferred_element_type=jnp.float32))

    h = jnp.maximum(pooled + bconv_ref[...], 0.0)                   # bias + ReLU, (TB, 256) f32

    logits = jnp.dot(h.astype(jnp.bfloat16), wf_ref[...],
                     preferred_element_type=jnp.float32) + bf_ref[...]   # (TB, 128)

    m = jnp.max(logits, axis=1, keepdims=True)                      # pad cols (-1e30) never win
    z = logits - m
    lse = jnp.log(jnp.sum(jnp.exp(z), axis=1, keepdims=True))       # exp(pad) underflows to 0
    o_ref[...] = z - lse


# ---------------- parameter preparation (run once, outside the hot path) ----------------

def prepare_params(conv_w, conv_b, fc_w, fc_b):
    """Fold the conv into a dense bf16 (676, 9*256) matrix; pad/reshape/cast the FC weights."""
    conv_w = jnp.asarray(conv_w, jnp.float32)
    conv_b = jnp.asarray(conv_b, jnp.float32)
    fc_w = jnp.asarray(fc_w, jnp.float32)
    fc_b = jnp.asarray(fc_b, jnp.float32)

    # static index arrays: o = out channel, (p,q) = pool-window offset,
    # (i,j) = pooled location, (di,dj) = conv tap
    o, p, q, i, j, di, dj = np.meshgrid(
        np.arange(3), np.arange(3), np.arange(3),
        np.arange(8), np.arange(8), np.arange(3), np.arange(3), indexing="ij")
    rows = (3 * i + p + di) * _CROP + (3 * j + q + dj)    # flattened cropped-input pixel (h, w)
    cols = (p * 3 + q) * _G + o * 64 + i * 8 + j          # lane-aligned group + (C,H,W) flatten
    vals = conv_w[o, 0, di, dj]
    w_big = (jnp.zeros((_IMG, _NPOOL * _G), jnp.float32)
             .at[rows.ravel(), cols.ravel()].set(vals.ravel())
             .astype(jnp.bfloat16))

    bconv = jnp.zeros((1, _G), jnp.float32).at[0, :192].set(jnp.repeat(conv_b, 64))
    wf = (jnp.zeros((_G, _LOGIT_W), jnp.float32)
          .at[:192, :10].set(fc_w.T)
          .astype(jnp.bfloat16))
    bf = (jnp.full((1, _LOGIT_W), _PAD_BIAS, jnp.float32)
          .at[0, :10].set(fc_b))
    return w_big, bconv, wf, bf


# ---------------- forward wrapper ----------------

@functools.partial(jax.jit, static_argnames=("tb",))
def convnet_forward(x, params, *, tb=256):
    """x: (B, 1, 28, 28) float32 NCHW -> (B, 10) log-probabilities."""
    assert x.shape[1:] == (1, 28, 28)
    w_big, bconv, wf, bf = params
    B = x.shape[0]
    # crop the pixels the conv/pool never touch (rows/cols 26, 27)
    x2d = x[:, 0, :_CROP, :_CROP].reshape(B, _IMG).astype(jnp.float32)

    # batch-tile selection: multiple of 8 sublanes; prefer >=2 tiles so the
    # "parallel" grid axis can shard across v7x's two TensorCores.
    b8 = _round_up(B, 8)
    tb = max(8, min(tb, b8))
    if b8 >= 16 and b8 // tb < 2:
        tb = _round_up((b8 + 1) // 2, 8)
    bp = _round_up(B, tb)
    if bp != B:
        x2d = jnp.pad(x2d, ((0, bp - B), (0, 0)))

    out = pl.pallas_call(
        convnet_kernel,
        out_shape=jax.ShapeDtypeStruct((bp, _LOGIT_W), jnp.float32),
        grid=(bp // tb,),
        in_specs=[
            pl.BlockSpec((tb, _IMG), lambda b: (b, 0)),
            pl.BlockSpec((_IMG, _NPOOL * _G), lambda b: (0, 0)),    # resident, fetched once
            pl.BlockSpec((1, _G), lambda b: (0, 0)),
            pl.BlockSpec((_G, _LOGIT_W), lambda b: (0, 0)),
            pl.BlockSpec((1, _LOGIT_W), lambda b: (0, 0)),
        ],
        out_specs=pl.BlockSpec((tb, _LOGIT_W), lambda b: (b, 0)),
        compiler_params=pltpu.CompilerParams(
            dimension_semantics=("parallel",),                      # shards batch tiles over 2 TCs on v7x
            vmem_limit_bytes=32 * 1024 * 1024),
    )(x2d, w_big, bconv, wf, bf)
    return out[:B, :10]


# ---------------- plain-JAX reference (sanity check only) ----------------

def convnet_ref(x, conv_w, conv_b, fc_w, fc_b):
    conv = lax.conv_general_dilated(
        x, conv_w, window_strides=(1, 1), padding="VALID",
        dimension_numbers=("NCHW", "OIHW", "NCHW")) + conv_b.reshape(1, 3, 1, 1)
    pooled = lax.reduce_window(conv, -jnp.inf, lax.max,
                               (1, 1, 3, 3), (1, 1, 3, 3), "VALID")
    h = jnp.maximum(pooled, 0.0).reshape(x.shape[0], 192)
    logits = h @ fc_w.T + fc_b
    return jax.nn.log_softmax(logits, axis=1)


if __name__ == "__main__":
    key = jax.random.PRNGKey(0)
    kx, kw1, kb1, kw2, kb2 = jax.random.split(key, 5)

    B = 16                                    # -> 2 batch tiles of 8: exercises the parallel grid
    x = jax.random.normal(kx, (B, 1, 28, 28), jnp.float32)

    # deterministic parameter init (PyTorch-style uniform fan-in bounds)
    b1 = 1.0 / jnp.sqrt(1.0 * 3 * 3)
    conv_w = jax.random.uniform(kw1, (3, 1, 3, 3), jnp.float32, -b1, b1)
    conv_b = jax.random.uniform(kb1, (3,), jnp.float32, -b1, b1)
    b2 = 1.0 / jnp.sqrt(192.0)
    fc_w = jax.random.uniform(kw2, (10, 192), jnp.float32, -b2, b2)
    fc_b = jax.random.uniform(kb2, (10,), jnp.float32, -b2, b2)

    params = prepare_params(conv_w, conv_b, fc_w, fc_b)
    out = convnet_forward(x, params)
    out = jax.block_until_ready(out)
    assert out.shape == (B, 10) and out.dtype == jnp.float32

    ref = jax.block_until_ready(convnet_ref(x, conv_w, conv_b, fc_w, fc_b))
    assert jnp.allclose(out, ref, atol=2e-2, rtol=2e-2), "mismatch vs reference"

    print("KERNEL_OK")
</pallas_src>

<mosaic_0001>
module attributes {stable_mosaic.version = 11 : i64} {
  func.func @convnet_kernel(%arg0: i32, %arg1: memref<8x676xf32, #tpu.memory_space<vmem>>, %arg2: memref<676x2304xbf16, #tpu.memory_space<vmem>>, %arg3: memref<1x256xf32, #tpu.memory_space<vmem>>, %arg4: memref<256x128xbf16, #tpu.memory_space<vmem>>, %arg5: memref<1x128xf32, #tpu.memory_space<vmem>>, %arg6: memref<8x128xf32, #tpu.memory_space<vmem>>) attributes {dimension_semantics = [#tpu.dimension_semantics<parallel>], iteration_bounds = array<i64: 2>, scalar_prefetch = 0 : i64, scratch_operands = 0 : i64, tpu.core_type = #tpu.core_type<tc>, window_params = [{transform_indices = @transform_0, window_bounds = array<i64: 8, 676>}, {pipeline_mode = #tpu.pipeline_mode<synchronous>, transform_indices = @transform_1, window_bounds = array<i64: 676, 2304>}, {pipeline_mode = #tpu.pipeline_mode<synchronous>, transform_indices = @transform_2, window_bounds = array<i64: 1, 256>}, {pipeline_mode = #tpu.pipeline_mode<synchronous>, transform_indices = @transform_3, window_bounds = array<i64: 256, 128>}, {pipeline_mode = #tpu.pipeline_mode<synchronous>, transform_indices = @transform_4, window_bounds = array<i64: 1, 128>}, {transform_indices = @transform_5, window_bounds = array<i64: 8, 128>}]} {
    %c0 = arith.constant 0 : index
    %c0_0 = arith.constant 0 : index
    %0 = vector.load %arg1[%c0, %c0_0] : memref<8x676xf32, #tpu.memory_space<vmem>>, vector<8x676xf32>
    %1 = arith.truncf %0 : vector<8x676xf32> to vector<8x676xbf16>
    %c0_1 = arith.constant 0 : index
    %c0_2 = arith.constant 0 : index
    %2 = vector.load %arg2[%c0_1, %c0_2] : memref<676x2304xbf16, #tpu.memory_space<vmem>>, vector<676x256xbf16>
    %cst = arith.constant dense<0.000000e+00> : vector<8x256xf32>
    %3 = tpu.matmul %1, %2, %cst {dimension_numbers = #tpu.dot_dimension_numbers<[1], [0], [0], [1], [0, 0, 1, 1], [], []>} : vector<8x676xbf16>, vector<676x256xbf16>, vector<8x256xf32> -> vector<8x256xf32>
    %c0_3 = arith.constant 0 : index
    %c256 = arith.constant 256 : index
    %4 = vector.load %arg2[%c0_3, %c256] : memref<676x2304xbf16, #tpu.memory_space<vmem>>, vector<676x256xbf16>
    %cst_4 = arith.constant dense<0.000000e+00> : vector<8x256xf32>
    %5 = tpu.matmul %1, %4, %cst_4 {dimension_numbers = #tpu.dot_dimension_numbers<[1], [0], [0], [1], [0, 0, 1, 1], [], []>} : vector<8x676xbf16>, vector<676x256xbf16>, vector<8x256xf32> -> vector<8x256xf32>
    %6 = arith.maximumf %3, %5 : vector<8x256xf32>
    %c0_5 = arith.constant 0 : index
    %c512 = arith.constant 512 : index
    %7 = vector.load %arg2[%c0_5, %c512] : memref<676x2304xbf16, #tpu.memory_space<vmem>>, vector<676x256xbf16>
    %cst_6 = arith.constant dense<0.000000e+00> : vector<8x256xf32>
    %8 = tpu.matmul %1, %7, %cst_6 {dimension_numbers = #tpu.dot_dimension_numbers<[1], [0], [0], [1], [0, 0, 1, 1], [], []>} : vector<8x676xbf16>, vector<676x256xbf16>, vector<8x256xf32> -> vector<8x256xf32>
    %9 = arith.maximumf %6, %8 : vector<8x256xf32>
    %c0_7 = arith.constant 0 : index
    %c768 = arith.constant 768 : index
    %10 = vector.load %arg2[%c0_7, %c768] : memref<676x2304xbf16, #tpu.memory_space<vmem>>, vector<676x256xbf16>
    %cst_8 = arith.constant dense<0.000000e+00> : vector<8x256xf32>
    %11 = tpu.matmul %1, %10, %cst_8 {dimension_numbers = #tpu.dot_dimension_numbers<[1], [0], [0], [1], [0, 0, 1, 1], [], []>} : vector<8x676xbf16>, vector<676x256xbf16>, vector<8x256xf32> -> vector<8x256xf32>
    %12 = arith.maximumf %9, %11 : vector<8x256xf32>
    %c0_9 = arith.constant 0 : index
    %c1024 = arith.constant 1024 : index
    %13 = vector.load %arg2[%c0_9, %c1024] : memref<676x2304xbf16, #tpu.memory_space<vmem>>, vector<676x256xbf16>
    %cst_10 = arith.constant dense<0.000000e+00> : vector<8x256xf32>
    %14 = tpu.matmul %1, %13, %cst_10 {dimension_numbers = #tpu.dot_dimension_numbers<[1], [0], [0], [1], [0, 0, 1, 1], [], []>} : vector<8x676xbf16>, vector<676x256xbf16>, vector<8x256xf32> -> vector<8x256xf32>
    %15 = arith.maximumf %12, %14 : vector<8x256xf32>
    %c0_11 = arith.constant 0 : index
    %c1280 = arith.constant 1280 : index
    %16 = vector.load %arg2[%c0_11, %c1280] : memref<676x2304xbf16, #tpu.memory_space<vmem>>, vector<676x256xbf16>
    %cst_12 = arith.constant dense<0.000000e+00> : vector<8x256xf32>
    %17 = tpu.matmul %1, %16, %cst_12 {dimension_numbers = #tpu.dot_dimension_numbers<[1], [0], [0], [1], [0, 0, 1, 1], [], []>} : vector<8x676xbf16>, vector<676x256xbf16>, vector<8x256xf32> -> vector<8x256xf32>
    %18 = arith.maximumf %15, %17 : vector<8x256xf32>
    %c0_13 = arith.constant 0 : index
    %c1536 = arith.constant 1536 : index
    %19 = vector.load %arg2[%c0_13, %c1536] : memref<676x2304xbf16, #tpu.memory_space<vmem>>, vector<676x256xbf16>
    %cst_14 = arith.constant dense<0.000000e+00> : vector<8x256xf32>
    %20 = tpu.matmul %1, %19, %cst_14 {dimension_numbers = #tpu.dot_dimension_numbers<[1], [0], [0], [1], [0, 0, 1, 1], [], []>} : vector<8x676xbf16>, vector<676x256xbf16>, vector<8x256xf32> -> vector<8x256xf32>
    %21 = arith.maximumf %18, %20 : vector<8x256xf32>
    %c0_15 = arith.constant 0 : index
    %c1792 = arith.constant 1792 : index
    %22 = vector.load %arg2[%c0_15, %c1792] : memref<676x2304xbf16, #tpu.memory_space<vmem>>, vector<676x256xbf16>
    %cst_16 = arith.constant dense<0.000000e+00> : vector<8x256xf32>
    %23 = tpu.matmul %1, %22, %cst_16 {dimension_numbers = #tpu.dot_dimension_numbers<[1], [0], [0], [1], [0, 0, 1, 1], [], []>} : vector<8x676xbf16>, vector<676x256xbf16>, vector<8x256xf32> -> vector<8x256xf32>
    %24 = arith.maximumf %21, %23 : vector<8x256xf32>
    %c0_17 = arith.constant 0 : index
    %c2048 = arith.constant 2048 : index
    %25 = vector.load %arg2[%c0_17, %c2048] : memref<676x2304xbf16, #tpu.memory_space<vmem>>, vector<676x256xbf16>
    %cst_18 = arith.constant dense<0.000000e+00> : vector<8x256xf32>
    %26 = tpu.matmul %1, %25, %cst_18 {dimension_numbers = #tpu.dot_dimension_numbers<[1], [0], [0], [1], [0, 0, 1, 1], [], []>} : vector<8x676xbf16>, vector<676x256xbf16>, vector<8x256xf32> -> vector<8x256xf32>
    %27 = arith.maximumf %24, %26 : vector<8x256xf32>
    %c0_19 = arith.constant 0 : index
    %c0_20 = arith.constant 0 : index
    %28 = vector.load %arg3[%c0_19, %c0_20] : memref<1x256xf32, #tpu.memory_space<vmem>>, vector<1x256xf32>
    %29 = vector.broadcast %28 : vector<1x256xf32> to vector<8x256xf32>
    %30 = arith.addf %27, %29 : vector<8x256xf32>
    %cst_21 = arith.constant 0.000000e+00 : f32
    %31 = vector.broadcast %cst_21 : f32 to vector<8x256xf32>
    %32 = arith.maximumf %30, %31 : vector<8x256xf32>
    %33 = arith.truncf %32 : vector<8x256xf32> to vector<8x256xbf16>
    %c0_22 = arith.constant 0 : index
    %c0_23 = arith.constant 0 : index
    %34 = vector.load %arg4[%c0_22, %c0_23] : memref<256x128xbf16, #tpu.memory_space<vmem>>, vector<256x128xbf16>
    %cst_24 = arith.constant dense<0.000000e+00> : vector<8x128xf32>
    %35 = tpu.matmul %33, %34, %cst_24 {dimension_numbers = #tpu.dot_dimension_numbers<[1], [0], [0], [1], [0, 0, 1, 1], [], []>} : vector<8x256xbf16>, vector<256x128xbf16>, vector<8x128xf32> -> vector<8x128xf32>
    %c0_25 = arith.constant 0 : index
    %c0_26 = arith.constant 0 : index
    %36 = vector.load %arg5[%c0_25, %c0_26] : memref<1x128xf32, #tpu.memory_space<vmem>>, vector<1x128xf32>
    %37 = vector.broadcast %36 : vector<1x128xf32> to vector<8x128xf32>
    %38 = arith.addf %35, %37 : vector<8x128xf32>
    %cst_27 = arith.constant dense<0xFF800000> : vector<8xf32>
    %39 = vector.multi_reduction <maximumf>, %38, %cst_27 [1] : vector<8x128xf32> to vector<8xf32>
    %40 = vector.shape_cast %39 : vector<8xf32> to vector<8x1xf32>
    %41 = vector.broadcast %40 : vector<8x1xf32> to vector<8x128xf32>
    %42 = arith.subf %38, %41 : vector<8x128xf32>
    %43 = math.exp %42 : vector<8x128xf32>
    %cst_28 = arith.constant dense<0.000000e+00> : vector<8xf32>
    %44 = vector.multi_reduction <add>, %43, %cst_28 [1] : vector<8x128xf32> to vector<8xf32>
    %45 = vector.shape_cast %44 : vector<8xf32> to vector<8x1xf32>
    %46 = math.log %45 : vector<8x1xf32>
    %47 = vector.broadcast %46 : vector<8x1xf32> to vector<8x128xf32>
    %48 = arith.subf %42, %47 : vector<8x128xf32>
    %c0_29 = arith.constant 0 : index
    %c0_30 = arith.constant 0 : index
    %49 = vector.load %arg6[%c0_29, %c0_30] : memref<8x128xf32, #tpu.memory_space<vmem>>, vector<8x128xf32>
    tpu.vector_store %arg6[%c0_29, %c0_30], %48 {strides = array<i32>} : memref<8x128xf32, #tpu.memory_space<vmem>>, vector<8x128xf32>,
    return
  }
  func.func @transform_0(%arg0: i32) -> (i32, i32) {
    %c0_i32 = arith.constant 0 : i32
    %c0_i32_0 = arith.constant 0 : i32
    return %arg0, %c0_i32 : i32, i32
  }
  func.func @transform_1(%arg0: i32) -> (i32, i32) {
    %c0_i32 = arith.constant 0 : i32
    %c0_i32_0 = arith.constant 0 : i32
    %c0_i32_1 = arith.constant 0 : i32
    return %c0_i32, %c0_i32_0 : i32, i32
  }
  func.func @transform_2(%arg0: i32) -> (i32, i32) {
    %c0_i32 = arith.constant 0 : i32
    %c0_i32_0 = arith.constant 0 : i32
    %c0_i32_1 = arith.constant 0 : i32
    return %c0_i32, %c0_i32_0 : i32, i32
  }
  func.func @transform_3(%arg0: i32) -> (i32, i32) {
    %c0_i32 = arith.constant 0 : i32
    %c0_i32_0 = arith.constant 0 : i32
    %c0_i32_1 = arith.constant 0 : i32
    return %c0_i32, %c0_i32_0 : i32, i32
  }
  func.func @transform_4(%arg0: i32) -> (i32, i32) {
    %c0_i32 = arith.constant 0 : i32
    %c0_i32_0 = arith.constant 0 : i32
    %c0_i32_1 = arith.constant 0 : i32
    return %c0_i32, %c0_i32_0 : i32, i32
  }
  func.func @transform_5(%arg0: i32) -> (i32, i32) {
    %c0_i32 = arith.constant 0 : i32
    %c0_i32_0 = arith.constant 0 : i32
    return %arg0, %c0_i32 : i32, i32
  }
}

</mosaic_0001>

<llo_original>
// kernel: squeeze.1
$region0: #{squeeze.1}
  %s0 = inlined_call_operand.vmem [shape: f32[16,26,26], index: 0, kind: input, shape index: {}]
  %s1 = inlined_call_operand.vmem [shape: f32[16,676], index: 1, kind: output, shape index: {}]
  %v2 = vld [vmem:[%s0] sm:$0x1]
  %s3 = scalar_lea.vmem %s0, 31
  %v4 = vld [vmem:[%s3] sm:$0x2]
  %vm5 = vcmask 1041409
  %v6 = vsel %vm5, %v4, %v2
  %s7 = scalar_lea.vmem %s0, 62
  %v8 = vld [vmem:[%s7] sm:$0x4]
  %vm9 = vcmask 1042434
  %v10 = vsel %vm9, %v8, %v6
  %s11 = scalar_lea.vmem %s0, 93
  %v12 = vld [vmem:[%s11] sm:$0x8]
  %vm13 = vcmask 1043459
  %v14 = vsel %vm13, %v12, %v10
  %s15 = scalar_lea.vmem %s0, 124
  %v16 = vld [vmem:[%s15] sm:$0x10]
  %vm17 = vcmask 1044484
  %v18 = vsel %vm17, %v16, %v14
  %s19 = scalar_lea.vmem %s0, 155
  %v20 = vld [vmem:[%s19] sm:$0x20]
  %vm21 = vcmask 1045509
  %v22 = vsel %vm21, %v20, %v18
  %s23 = scalar_lea.vmem %s0, 186
  %v24 = vld [vmem:[%s23] sm:$0x40]
  %vm25 = vcmask 1046534
  %v26 = vsel %vm25, %v24, %v22
  %s27 = scalar_lea.vmem %s0, 217
  %v28 = vld [vmem:[%s27] sm:$0x80]
  %vm29 = vcmask 1047559
  %v30 = vsel %vm29, %v28, %v26
  %vm31 = vcmask 211968
  %32 = vst.msk [vmem:[%s1] sm:$0xff] %vm31, %v30
  %s33 = scalar_lea.vmem %s0, 256
  %v34 = vld [vmem:[%s33] sm:$0x1]
  %s35 = scalar_lea.vmem %s0, 287
  %v36 = vld [vmem:[%s35] sm:$0x2]
  %vm37 = vcmask 1041409
  %v38 = vsel %vm37, %v36, %v34
  %s39 = scalar_lea.vmem %s0, 318
  %v40 = vld [vmem:[%s39] sm:$0x4]
  %vm41 = vcmask 1042434
  %v42 = vsel %vm41, %v40, %v38
  %s43 = scalar_lea.vmem %s0, 349
  %v44 = vld [vmem:[%s43] sm:$0x8]
  %vm45 = vcmask 1043459
  %v46 = vsel %vm45, %v44, %v42
  %s47 = scalar_lea.vmem %s0, 380
  %v48 = vld [vmem:[%s47] sm:$0x10]
  %vm49 = vcmask 1044484
  %v50 = vsel %vm49, %v48, %v46
  %s51 = scalar_lea.vmem %s0, 411
  %v52 = vld [vmem:[%s51] sm:$0x20]
  %vm53 = vcmask 1045509
  %v54 = vsel %vm53, %v52, %v50
  %s55 = scalar_lea.vmem %s0, 442
  %v56 = vld [vmem:[%s55] sm:$0x40]
  %vm57 = vcmask 1046534
  %v58 = vsel %vm57, %v56, %v54
  %s59 = scalar_lea.vmem %s0, 473
  %v60 = vld [vmem:[%s59] sm:$0x80]
  %vm61 = vcmask 1047559
  %v62 = vsel %vm61, %v60, %v58
  %vm63 = vcmask 211968
  %s64 = scalar_lea.vmem %s1, 48
  %65 = vst.msk [vmem:[%s64] sm:$0xff] %vm63, %v62
  %s66 = scalar_lea.vmem %s0, 24
  %v67 = vld [vmem:[%s66] sm:$0x1]
  %s68 = scalar_lea.vmem %s0, 55
  %v69 = vld [vmem:[%s68] sm:$0x2]
  %vm70 = vcmask 1041409
  %v71 = vsel %vm70, %v69, %v67
  %s72 = scalar_lea.vmem %s0, 86
  %v73 = vld [vmem:[%s72] sm:$0x4]
  %vm74 = vcmask 1042434
  %v75 = vsel %vm74, %v73, %v71
  %s76 = scalar_lea.vmem %s0, 117
  %v77 = vld [vmem:[%s76] sm:$0x8]
  %vm78 = vcmask 1043459
  %v79 = vsel %vm78, %v77, %v75
  %s80 = scalar_lea.vmem %s0, 148
  %v81 = vld [vmem:[%s80] sm:$0x10]
  %vm82 = vcmask 1044484
  %v83 = vsel %vm82, %v81, %v79
  %s84 = scalar_lea.vmem %s0, 179
  %v85 = vld [vmem:[%s84] sm:$0x20]
  %vm86 = vcmask 1045509
  %v87 = vsel %vm86, %v85, %v83
  %s88 = scalar_lea.vmem %s0, 210
  %v89 = vld [vmem:[%s88] sm:$0x40]
  %vm90 = vcmask 1046534
  %v91 = vsel %vm90, %v89, %v87
  %s92 = scalar_lea.vmem %s0, 241
  %v93 = vld [vmem:[%s92] sm:$0x80]
  %vm94 = vcmask 1047559
  %v95 = vsel %vm94, %v93, %v91
  %96 = vrot.lane.b32.xlu0 %v95, 112
  %v97 = vpop.permute.xlu0 %96
  %vm98 = vcmask 80896
  %s99 = scalar_lea.vmem %s1, 40
  %100 = vst.msk [vmem:[%s99] sm:$0xff] %vm98, %v97
  %s101 = scalar_lea.vmem %s0, 24
  %v102 = vld [vmem:[%s101] sm:$0x1]
  %s103 = scalar_lea.vmem %s0, 55
  %v104 = vld [vmem:[%s103] sm:$0x2]
  %vm105 = vcmask 1041409
  %v106 = vsel %vm105, %v104, %v102
  %s107 = scalar_lea.vmem %s0, 86
  %v108 = vld [vmem:[%s107] sm:$0x4]
  %vm109 = vcmask 1042434
  %v110 = vsel %vm109, %v108, %v106
  %s111 = scalar_lea.vmem %s0, 117
  %v112 = vld [vmem:[%s111] sm:$0x8]
  %vm113 = vcmask 1043459
  %v114 = vsel %vm113, %v112, %v110
  %s115 = scalar_lea.vmem %s0, 148
  %v116 = vld [vmem:[%s115] sm:$0x10]
  %vm117 = vcmask 1044484
  %v118 = vsel %vm117, %v116, %v114
  %s119 = scalar_lea.vmem %s0, 179
  %v120 = vld [vmem:[%s119] sm:$0x20]
  %vm121 = vcmask 1045509
  %v122 = vsel %vm121, %v120, %v118
  %s123 = scalar_lea.vmem %s0, 210
  %v124 = vld [vmem:[%s123] sm:$0x40]
  %vm125 = vcmask 1046534
  %v126 = vsel %vm125, %v124, %v122
  %s127 = scalar_lea.vmem %s0, 241
  %v128 = vld [vmem:[%s127] sm:$0x80]
  %vm129 = vcmask 1047559
  %v130 = vsel %vm129, %v128, %v126
  %131 = vrot.lane.b32.xlu0 %v130, 112
  %v132 = vpop.permute.xlu0 %131
  %vm133 = vcmask 1048448
  %s134 = scalar_lea.vmem %s1, 32
  %135 = vst.msk [vmem:[%s134] sm:$0xff] %vm133, %v132
  %s136 = scalar_lea.vmem %s0, 280
  %v137 = vld [vmem:[%s136] sm:$0x1]
  %s138 = scalar_lea.vmem %s0, 311
  %v139 = vld [vmem:[%s138] sm:$0x2]
  %vm140 = vcmask 1041409
  %v141 = vsel %vm140, %v139, %v137
  %s142 = scalar_lea.vmem %s0, 342
  %v143 = vld [vmem:[%s142] sm:$0x4]
  %vm144 = vcmask 1042434
  %v145 = vsel %vm144, %v143, %v141
  %s146 = scalar_lea.vmem %s0, 373
  %v147 = vld [vmem:[%s146] sm:$0x8]
  %vm148 = vcmask 1043459
  %v149 = vsel %vm148, %v147, %v145
  %s150 = scalar_lea.vmem %s0, 404
  %v151 = vld [vmem:[%s150] sm:$0x10]
  %vm152 = vcmask 1044484
  %v153 = vsel %vm152, %v151, %v149
  %s154 = scalar_lea.vmem %s0, 435
  %v155 = vld [vmem:[%s154] sm:$0x20]
  %vm156 = vcmask 1045509
  %v157 = vsel %vm156, %v155, %v153
  %s158 = scalar_lea.vmem %s0, 466
  %v159 = vld [vmem:[%s158] sm:$0x40]
  %vm160 = vcmask 1046534
  %v161 = vsel %vm160, %v159, %v157
  %s162 = scalar_lea.vmem %s0, 497
  %v163 = vld [vmem:[%s162] sm:$0x80]
  %vm164 = vcmask 1047559
  %v165 = vsel %vm164, %v163, %v161
  %166 = vrot.lane.b32.xlu0 %v165, 112
  %v167 = vpop.permute.xlu0 %166
  %vm168 = vcmask 80896
  %s169 = scalar_lea.vmem %s1, 88
  %170 = vst.msk [vmem:[%s169] sm:$0xff] %vm168, %v167
  %s171 = scalar_lea.vmem %s0, 280
  %v172 = vld [vmem:[%s171] sm:$0x1]
  %s173 = scalar_lea.vmem %s0, 311
  %v174 = vld [vmem:[%s173] sm:$0x2]
  %vm175 = vcmask 1041409
  %v176 = vsel %vm175, %v174, %v172
  %s177 = scalar_lea.vmem %s0, 342
  %v178 = vld [vmem:[%s177] sm:$0x4]
  %vm179 = vcmask 1042434
  %v180 = vsel %vm179, %v178, %v176
  %s181 = scalar_lea.vmem %s0, 373
  %v182 = vld [vmem:[%s181] sm:$0x8]
  %vm183 = vcmask 1043459
  %v184 = vsel %vm183, %v182, %v180
  %s185 = scalar_lea.vmem %s0, 404
  %v186 = vld [vmem:[%s185] sm:$0x10]
  %vm187 = vcmask 1044484
  %v188 = vsel %vm187, %v186, %v184
  %s189 = scalar_lea.vmem %s0, 435
  %v190 = vld [vmem:[%s189] sm:$0x20]
  %vm191 = vcmask 1045509
  %v192 = vsel %vm191, %v190, %v188
  %s193 = scalar_lea.vmem %s0, 466
  %v194 = vld [vmem:[%s193] sm:$0x40]
  %vm195 = vcmask 1046534
  %v196 = vsel %vm195, %v194, %v192
  %s197 = scalar_lea.vmem %s0, 497
  %v198 = vld [vmem:[%s197] sm:$0x80]
  %vm199 = vcmask 1047559
  %v200 = vsel %vm199, %v198, %v196
  %201 = vrot.lane.b32.xlu0 %v200, 112
  %v202 = vpop.permute.xlu0 %201
  %vm203 = vcmask 1048448
  %s204 = scalar_lea.vmem %s1, 80
  %205 = vst.msk [vmem:[%s204] sm:$0xff] %vm203, %v202
  %s206 = scalar_lea.vmem %s0, 19
  %v207 = vld [vmem:[%s206] sm:$0x1]
  %s208 = scalar_lea.vmem %s0, 50
  %v209 = vld [vmem:[%s208] sm:$0x2]
  %vm210 = vcmask 1041409
  %v211 = vsel %vm210, %v209, %v207
  %s212 = scalar_lea.vmem %s0, 81
  %v213 = vld [vmem:[%s212] sm:$0x4]
  %vm214 = vcmask 1042434
  %v215 = vsel %vm214, %v213, %v211
  %s216 = scalar_lea.vmem %s0, 112
  %v217 = vld [vmem:[%s216] sm:$0x8]
  %vm218 = vcmask 1043459
  %v219 = vsel %vm218, %v217, %v215
  %s220 = scalar_lea.vmem %s0, 143
  %v221 = vld [vmem:[%s220] sm:$0x10]
  %vm222 = vcmask 1044484
  %v223 = vsel %vm222, %v221, %v219
  %s224 = scalar_lea.vmem %s0, 174
  %v225 = vld [vmem:[%s224] sm:$0x20]
  %vm226 = vcmask 1045509
  %v227 = vsel %vm226, %v225, %v223
  %s228 = scalar_lea.vmem %s0, 205
  %v229 = vld [vmem:[%s228] sm:$0x40]
  %vm230 = vcmask 1046534
  %v231 = vsel %vm230, %v229, %v227
  %s232 = scalar_lea.vmem %s0, 236
  %v233 = vld [vmem:[%s232] sm:$0x80]
  %vm234 = vcmask 1047559
  %v235 = vsel %vm234, %v233, %v231
  %236 = vrot.lane.b32.xlu0 %v235, 110
  %v237 = vpop.permute.xlu0 %236
  %vm238 = vcmask 64512
  %s239 = scalar_lea.vmem %s1, 32
  %240 = vst.msk [vmem:[%s239] sm:$0xff] %vm238, %v237
  %s241 = scalar_lea.vmem %s0, 275
  %v242 = vld [vmem:[%s241] sm:$0x1]
  %s243 = scalar_lea.vmem %s0, 306
  %v244 = vld [vmem:[%s243] sm:$0x2]
  %vm245 = vcmask 1041409
  %v246 = vsel %vm245, %v244, %v242
  %s247 = scalar_lea.vmem %s0, 337
  %v248 = vld [vmem:[%s247] sm:$0x4]
  %vm249 = vcmask 1042434
  %v250 = vsel %vm249, %v248, %v246
  %s251 = scalar_lea.vmem %s0, 368
  %v252 = vld [vmem:[%s251] sm:$0x8]
  %vm253 = vcmask 1043459
  %v254 = vsel %vm253, %v252, %v250
  %s255 = scalar_lea.vmem %s0, 399
  %v256 = vld [vmem:[%s255] sm:$0x10]
  %vm257 = vcmask 1044484
  %v258 = vsel %vm257, %v256, %v254
  %s259 = scalar_lea.vmem %s0, 430
  %v260 = vld [vmem:[%s259] sm:$0x20]
  %vm261 = vcmask 1045509
  %v262 = vsel %vm261, %v260, %v258
  %s263 = scalar_lea.vmem %s0, 461
  %v264 = vld [vmem:[%s263] sm:$0x40]
  %vm265 = vcmask 1046534
  %v266 = vsel %vm265, %v264, %v262
  %s267 = scalar_lea.vmem %s0, 492
  %v268 = vld [vmem:[%s267] sm:$0x80]
  %vm269 = vcmask 1047559
  %v270 = vsel %vm269, %v268, %v266
  %271 = vrot.lane.b32.xlu0 %v270, 110
  %v272 = vpop.permute.xlu0 %271
  %vm273 = vcmask 1048432
  %s274 = scalar_lea.vmem %s1, 72
  %275 = vst.msk [vmem:[%s274] sm:$0xff] %vm273, %v272
  %s276 = scalar_lea.vmem %s0, 275
  %v277 = vld [vmem:[%s276] sm:$0x1]
  %s278 = scalar_lea.vmem %s0, 306
  %v279 = vld [vmem:[%s278] sm:$0x2]
  %vm280 = vcmask 1041409
  %v281 = vsel %vm280, %v279, %v277
  %s282 = scalar_lea.vmem %s0, 337
  %v283 = vld [vmem:[%s282] sm:$0x4]
  %vm284 = vcmask 1042434
  %v285 = vsel %vm284, %v283, %v281
  %s286 = scalar_lea.vmem %s0, 368
  %v287 = vld [vmem:[%s286] sm:$0x8]
  %vm288 = vcmask 1043459
  %v289 = vsel %vm288, %v287, %v285
  %s290 = scalar_lea.vmem %s0, 399
  %v291 = vld [vmem:[%s290] sm:$0x10]
  %vm292 = vcmask 1044484
  %v293 = vsel %vm292, %v291, %v289
  %s294 = scalar_lea.vmem %s0, 430
  %v295 = vld [vmem:[%s294] sm:$0x20]
  %vm296 = vcmask 1045509
  %v297 = vsel %vm296, %v295, %v293
  %s298 = scalar_lea.vmem %s0, 461
  %v299 = vld [vmem:[%s298] sm:$0x40]
  %vm300 = vcmask 1046534
  %v301 = vsel %vm300, %v299, %v297
  %s302 = scalar_lea.vmem %s0, 492
  %v303 = vld [vmem:[%s302] sm:$0x80]
  %vm304 = vcmask 1047559
  %v305 = vsel %vm304, %v303, %v301
  %306 = vrot.lane.b32.xlu0 %v305, 110
  %v307 = vpop.permute.xlu0 %306
  %vm308 = vcmask 64512
  %s309 = scalar_lea.vmem %s1, 80
  %310 = vst.msk [vmem:[%s309] sm:$0xff] %vm308, %v307
  %s311 = scalar_lea.vmem %s0, 19
  %v312 = vld [vmem:[%s311] sm:$0x1]
  %s313 = scalar_lea.vmem %s0, 50
  %v314 = vld [vmem:[%s313] sm:$0x2]
  %vm315 = vcmask 1041409
  %v316 = vsel %vm315, %v314, %v312
  %s317 = scalar_lea.vmem %s0, 81
  %v318 = vld [vmem:[%s317] sm:$0x4]
  %vm319 = vcmask 1042434
  %v320 = vsel %vm319, %v318, %v316
  %s321 = scalar_lea.vmem %s0, 112
  %v322 = vld [vmem:[%s321] sm:$0x8]
  %vm323 = vcmask 1043459
  %v324 = vsel %vm323, %v322, %v320
  %s325 = scalar_lea.vmem %s0, 143
  %v326 = vld [vmem:[%s325] sm:$0x10]
  %vm327 = vcmask 1044484
  %v328 = vsel %vm327, %v326, %v324
  %s329 = scalar_lea.vmem %s0, 174
  %v330 = vld [vmem:[%s329] sm:$0x20]
  %vm331 = vcmask 1045509
  %v332 = vsel %vm331, %v330, %v328
  %s333 = scalar_lea.vmem %s0, 205
  %v334 = vld [vmem:[%s333] sm:$0x40]
  %vm335 = vcmask 1046534
  %v336 = vsel %vm335, %v334, %v332
  %s337 = scalar_lea.vmem %s0, 236
  %v338 = vld [vmem:[%s337] sm:$0x80]
  %vm339 = vcmask 1047559
  %v340 = vsel %vm339, %v338, %v336
  %341 = vrot.lane.b32.xlu0 %v340, 110
  %v342 = vpop.permute.xlu0 %341
  %vm343 = vcmask 1048432
  %s344 = scalar_lea.vmem %s1, 24
  %345 = vst.msk [vmem:[%s344] sm:$0xff] %vm343, %v342
  %s346 = scalar_lea.vmem %s0, 270
  %v347 = vld [vmem:[%s346] sm:$0x1]
  %s348 = scalar_lea.vmem %s0, 301
  %v349 = vld [vmem:[%s348] sm:$0x2]
  %vm350 = vcmask 1041409
  %v351 = vsel %vm350, %v349, %v347
  %s352 = scalar_lea.vmem %s0, 332
  %v353 = vld [vmem:[%s352] sm:$0x4]
  %vm354 = vcmask 1042434
  %v355 = vsel %vm354, %v353, %v351
  %s356 = scalar_lea.vmem %s0, 363
  %v357 = vld [vmem:[%s356] sm:$0x8]
  %vm358 = vcmask 1043459
  %v359 = vsel %vm358, %v357, %v355
  %s360 = scalar_lea.vmem %s0, 394
  %v361 = vld [vmem:[%s360] sm:$0x10]
  %vm362 = vcmask 1044484
  %v363 = vsel %vm362, %v361, %v359
  %s364 = scalar_lea.vmem %s0, 425
  %v365 = vld [vmem:[%s364] sm:$0x20]
  %vm366 = vcmask 1045509
  %v367 = vsel %vm366, %v365, %v363
  %s368 = scalar_lea.vmem %s0, 456
  %v369 = vld [vmem:[%s368] sm:$0x40]
  %vm370 = vcmask 1046534
  %v371 = vsel %vm370, %v369, %v367
  %s372 = scalar_lea.vmem %s0, 487
  %v373 = vld [vmem:[%s372] sm:$0x80]
  %vm374 = vcmask 1047559
  %v375 = vsel %vm374, %v373, %v371
  %376 = vrot.lane.b32.xlu0 %v375, 108
  %v377 = vpop.permute.xlu0 %376
  %vm378 = vcmask 48128
  %s379 = scalar_lea.vmem %s1, 72
  %380 = vst.msk [vmem:[%s379] sm:$0xff] %vm378, %v377
  %s381 = scalar_lea.vmem %s0, 270
  %v382 = vld [vmem:[%s381] sm:$0x1]
  %s383 = scalar_lea.vmem %s0, 301
  %v384 = vld [vmem:[%s383] sm:$0x2]
  %vm385 = vcmask 1041409
  %v386 = vsel %vm385, %v384, %v382
  %s387 = scalar_lea.vmem %s0, 332
  %v388 = vld [vmem:[%s387] sm:$0x4]
  %vm389 = vcmask 1042434
  %v390 = vsel %vm389, %v388, %v386
  %s391 = scalar_lea.vmem %s0, 363
  %v392 = vld [vmem:[%s391] sm:$0x8]
  %vm393 = vcmask 1043459
  %v394 = vsel %vm393, %v392, %v390
  %s395 = scalar_lea.vmem %s0, 394
  %v396 = vld [vmem:[%s395] sm:$0x10]
  %vm397 = vcmask 1044484
  %v398 = vsel %vm397, %v396, %v394
  %s399 = scalar_lea.vmem %s0, 425
  %v400 = vld [vmem:[%s399] sm:$0x20]
  %vm401 = vcmask 1045509
  %v402 = vsel %vm401, %v400, %v398
  %s403 = scalar_lea.vmem %s0, 456
  %v404 = vld [vmem:[%s403] sm:$0x40]
  %vm405 = vcmask 1046534
  %v406 = vsel %vm405, %v404, %v402
  %s407 = scalar_lea.vmem %s0, 487
  %v408 = vld [vmem:[%s407] sm:$0x80]
  %vm409 = vcmask 1047559
  %v410 = vsel %vm409, %v408, %v406
  %411 = vrot.lane.b32.xlu0 %v410, 108
  %v412 = vpop.permute.xlu0 %411
  %vm413 = vcmask 1048416
  %s414 = scalar_lea.vmem %s1, 64
  %415 = vst.msk [vmem:[%s414] sm:$0xff] %vm413, %v412
  %s416 = scalar_lea.vmem %s0, 14
  %v417 = vld [vmem:[%s416] sm:$0x1]
  %s418 = scalar_lea.vmem %s0, 45
  %v419 = vld [vmem:[%s418] sm:$0x2]
  %vm420 = vcmask 1041409
  %v421 = vsel %vm420, %v419, %v417
  %s422 = scalar_lea.vmem %s0, 76
  %v423 = vld [vmem:[%s422] sm:$0x4]
  %vm424 = vcmask 1042434
  %v425 = vsel %vm424, %v423, %v421
  %s426 = scalar_lea.vmem %s0, 107
  %v427 = vld [vmem:[%s426] sm:$0x8]
  %vm428 = vcmask 1043459
  %v429 = vsel %vm428, %v427, %v425
  %s430 = scalar_lea.vmem %s0, 138
  %v431 = vld [vmem:[%s430] sm:$0x10]
  %vm432 = vcmask 1044484
  %v433 = vsel %vm432, %v431, %v429
  %s434 = scalar_lea.vmem %s0, 169
  %v435 = vld [vmem:[%s434] sm:$0x20]
  %vm436 = vcmask 1045509
  %v437 = vsel %vm436, %v435, %v433
  %s438 = scalar_lea.vmem %s0, 200
  %v439 = vld [vmem:[%s438] sm:$0x40]
  %vm440 = vcmask 1046534
  %v441 = vsel %vm440, %v439, %v437
  %s442 = scalar_lea.vmem %s0, 231
  %v443 = vld [vmem:[%s442] sm:$0x80]
  %vm444 = vcmask 1047559
  %v445 = vsel %vm444, %v443, %v441
  %446 = vrot.lane.b32.xlu0 %v445, 108
  %v447 = vpop.permute.xlu0 %446
  %vm448 = vcmask 48128
  %s449 = scalar_lea.vmem %s1, 24
  %450 = vst.msk [vmem:[%s449] sm:$0xff] %vm448, %v447
  %s451 = scalar_lea.vmem %s0, 14
  %v452 = vld [vmem:[%s451] sm:$0x1]
  %s453 = scalar_lea.vmem %s0, 45
  %v454 = vld [vmem:[%s453] sm:$0x2]
  %vm455 = vcmask 1041409
  %v456 = vsel %vm455, %v454, %v452
  %s457 = scalar_lea.vmem %s0, 76
  %v458 = vld [vmem:[%s457] sm:$0x4]
  %vm459 = vcmask 1042434
  %v460 = vsel %vm459, %v458, %v456
  %s461 = scalar_lea.vmem %s0, 107
  %v462 = vld [vmem:[%s461] sm:$0x8]
  %vm463 = vcmask 1043459
  %v464 = vsel %vm463, %v462, %v460
  %s465 = scalar_lea.vmem %s0, 138
  %v466 = vld [vmem:[%s465] sm:$0x10]
  %vm467 = vcmask 1044484
  %v468 = vsel %vm467, %v466, %v464
  %s469 = scalar_lea.vmem %s0, 169
  %v470 = vld [vmem:[%s469] sm:$0x20]
  %vm471 = vcmask 1045509
  %v472 = vsel %vm471, %v470, %v468
  %s473 = scalar_lea.vmem %s0, 200
  %v474 = vld [vmem:[%s473] sm:$0x40]
  %vm475 = vcmask 1046534
  %v476 = vsel %vm475, %v474, %v472
  %s477 = scalar_lea.vmem %s0, 231
  %v478 = vld [vmem:[%s477] sm:$0x80]
  %vm479 = vcmask 1047559
  %v480 = vsel %vm479, %v478, %v476
  %481 = vrot.lane.b32.xlu0 %v480, 108
  %v482 = vpop.permute.xlu0 %481
  %vm483 = vcmask 1048416
  %s484 = scalar_lea.vmem %s1, 16
  %485 = vst.msk [vmem:[%s484] sm:$0xff] %vm483, %v482
  %s486 = scalar_lea.vmem %s0, 265
  %v487 = vld [vmem:[%s486] sm:$0x1]
  %s488 = scalar_lea.vmem %s0, 296
  %v489 = vld [vmem:[%s488] sm:$0x2]
  %vm490 = vcmask 1041409
  %v491 = vsel %vm490, %v489, %v487
  %s492 = scalar_lea.vmem %s0, 327
  %v493 = vld [vmem:[%s492] sm:$0x4]
  %vm494 = vcmask 1042434
  %v495 = vsel %vm494, %v493, %v491
  %s496 = scalar_lea.vmem %s0, 358
  %v497 = vld [vmem:[%s496] sm:$0x8]
  %vm498 = vcmask 1043459
  %v499 = vsel %vm498, %v497, %v495
  %s500 = scalar_lea.vmem %s0, 389
  %v501 = vld [vmem:[%s500] sm:$0x10]
  %vm502 = vcmask 1044484
  %v503 = vsel %vm502, %v501, %v499
  %s504 = scalar_lea.vmem %s0, 420
  %v505 = vld [vmem:[%s504] sm:$0x20]
  %vm506 = vcmask 1045509
  %v507 = vsel %vm506, %v505, %v503
  %s508 = scalar_lea.vmem %s0, 451
  %v509 = vld [vmem:[%s508] sm:$0x40]
  %vm510 = vcmask 1046534
  %v511 = vsel %vm510, %v509, %v507
  %s512 = scalar_lea.vmem %s0, 482
  %v513 = vld [vmem:[%s512] sm:$0x80]
  %vm514 = vcmask 1047559
  %v515 = vsel %vm514, %v513, %v511
  %516 = vrot.lane.b32.xlu0 %v515, 106
  %v517 = vpop.permute.xlu0 %516
  %vm518 = vcmask 31744
  %s519 = scalar_lea.vmem %s1, 64
  %520 = vst.msk [vmem:[%s519] sm:$0xff] %vm518, %v517
  %s521 = scalar_lea.vmem %s0, 9
  %v522 = vld [vmem:[%s521] sm:$0x1]
  %s523 = scalar_lea.vmem %s0, 40
  %v524 = vld [vmem:[%s523] sm:$0x2]
  %vm525 = vcmask 1041409
  %v526 = vsel %vm525, %v524, %v522
  %s527 = scalar_lea.vmem %s0, 71
  %v528 = vld [vmem:[%s527] sm:$0x4]
  %vm529 = vcmask 1042434
  %v530 = vsel %vm529, %v528, %v526
  %s531 = scalar_lea.vmem %s0, 102
  %v532 = vld [vmem:[%s531] sm:$0x8]
  %vm533 = vcmask 1043459
  %v534 = vsel %vm533, %v532, %v530
  %s535 = scalar_lea.vmem %s0, 133
  %v536 = vld [vmem:[%s535] sm:$0x10]
  %vm537 = vcmask 1044484
  %v538 = vsel %vm537, %v536, %v534
  %s539 = scalar_lea.vmem %s0, 164
  %v540 = vld [vmem:[%s539] sm:$0x20]
  %vm541 = vcmask 1045509
  %v542 = vsel %vm541, %v540, %v538
  %s543 = scalar_lea.vmem %s0, 195
  %v544 = vld [vmem:[%s543] sm:$0x40]
  %vm545 = vcmask 1046534
  %v546 = vsel %vm545, %v544, %v542
  %s547 = scalar_lea.vmem %s0, 226
  %v548 = vld [vmem:[%s547] sm:$0x80]
  %vm549 = vcmask 1047559
  %v550 = vsel %vm549, %v548, %v546
  %551 = vrot.lane.b32.xlu0 %v550, 106
  %v552 = vpop.permute.xlu0 %551
  %vm553 = vcmask 1048400
  %s554 = scalar_lea.vmem %s1, 8
  %555 = vst.msk [vmem:[%s554] sm:$0xff] %vm553, %v552
  %s556 = scalar_lea.vmem %s0, 9
  %v557 = vld [vmem:[%s556] sm:$0x1]
  %s558 = scalar_lea.vmem %s0, 40
  %v559 = vld [vmem:[%s558] sm:$0x2]
  %vm560 = vcmask 1041409
  %v561 = vsel %vm560, %v559, %v557
  %s562 = scalar_lea.vmem %s0, 71
  %v563 = vld [vmem:[%s562] sm:$0x4]
  %vm564 = vcmask 1042434
  %v565 = vsel %vm564, %v563, %v561
  %s566 = scalar_lea.vmem %s0, 102
  %v567 = vld [vmem:[%s566] sm:$0x8]
  %vm568 = vcmask 1043459
  %v569 = vsel %vm568, %v567, %v565
  %s570 = scalar_lea.vmem %s0, 133
  %v571 = vld [vmem:[%s570] sm:$0x10]
  %vm572 = vcmask 1044484
  %v573 = vsel %vm572, %v571, %v569
  %s574 = scalar_lea.vmem %s0, 164
  %v575 = vld [vmem:[%s574] sm:$0x20]
  %vm576 = vcmask 1045509
  %v577 = vsel %vm576, %v575, %v573
  %s578 = scalar_lea.vmem %s0, 195
  %v579 = vld [vmem:[%s578] sm:$0x40]
  %vm580 = vcmask 1046534
  %v581 = vsel %vm580, %v579, %v577
  %s582 = scalar_lea.vmem %s0, 226
  %v583 = vld [vmem:[%s582] sm:$0x80]
  %vm584 = vcmask 1047559
  %v585 = vsel %vm584, %v583, %v581
  %586 = vrot.lane.b32.xlu0 %v585, 106
  %v587 = vpop.permute.xlu0 %586
  %vm588 = vcmask 31744
  %s589 = scalar_lea.vmem %s1, 16
  %590 = vst.msk [vmem:[%s589] sm:$0xff] %vm588, %v587
  %s591 = scalar_lea.vmem %s0, 265
  %v592 = vld [vmem:[%s591] sm:$0x1]
  %s593 = scalar_lea.vmem %s0, 296
  %v594 = vld [vmem:[%s593] sm:$0x2]
  %vm595 = vcmask 1041409
  %v596 = vsel %vm595, %v594, %v592
  %s597 = scalar_lea.vmem %s0, 327
  %v598 = vld [vmem:[%s597] sm:$0x4]
  %vm599 = vcmask 1042434
  %v600 = vsel %vm599, %v598, %v596
  %s601 = scalar_lea.vmem %s0, 358
  %v602 = vld [vmem:[%s601] sm:$0x8]
  %vm603 = vcmask 1043459
  %v604 = vsel %vm603, %v602, %v600
  %s605 = scalar_lea.vmem %s0, 389
  %v606 = vld [vmem:[%s605] sm:$0x10]
  %vm607 = vcmask 1044484
  %v608 = vsel %vm607, %v606, %v604
  %s609 = scalar_lea.vmem %s0, 420
  %v610 = vld [vmem:[%s609] sm:$0x20]
  %vm611 = vcmask 1045509
  %v612 = vsel %vm611, %v610, %v608
  %s613 = scalar_lea.vmem %s0, 451
  %v614 = vld [vmem:[%s613] sm:$0x40]
  %vm615 = vcmask 1046534
  %v616 = vsel %vm615, %v614, %v612
  %s617 = scalar_lea.vmem %s0, 482
  %v618 = vld [vmem:[%s617] sm:$0x80]
  %vm619 = vcmask 1047559
  %v620 = vsel %vm619, %v618, %v616
  %621 = vrot.lane.b32.xlu0 %v620, 106
  %v622 = vpop.permute.xlu0 %621
  %vm623 = vcmask 1048400
  %s624 = scalar_lea.vmem %s1, 56
  %625 = vst.msk [vmem:[%s624] sm:$0xff] %vm623, %v622
  %s626 = scalar_lea.vmem %s0, 4
  %v627 = vld [vmem:[%s626] sm:$0x1]
  %s628 = scalar_lea.vmem %s0, 35
  %v629 = vld [vmem:[%s628] sm:$0x2]
  %vm630 = vcmask 1041409
  %v631 = vsel %vm630, %v629, %v627
  %s632 = scalar_lea.vmem %s0, 66
  %v633 = vld [vmem:[%s632] sm:$0x4]
  %vm634 = vcmask 1042434
  %v635 = vsel %vm634, %v633, %v631
  %s636 = scalar_lea.vmem %s0, 97
  %v637 = vld [vmem:[%s636] sm:$0x8]
  %vm638 = vcmask 1043459
  %v639 = vsel %vm638, %v637, %v635
  %s640 = scalar_lea.vmem %s0, 128
  %v641 = vld [vmem:[%s640] sm:$0x10]
  %vm642 = vcmask 1044484
  %v643 = vsel %vm642, %v641, %v639
  %s644 = scalar_lea.vmem %s0, 159
  %v645 = vld [vmem:[%s644] sm:$0x20]
  %vm646 = vcmask 1045509
  %v647 = vsel %vm646, %v645, %v643
  %s648 = scalar_lea.vmem %s0, 190
  %v649 = vld [vmem:[%s648] sm:$0x40]
  %vm650 = vcmask 1046534
  %v651 = vsel %vm650, %v649, %v647
  %s652 = scalar_lea.vmem %s0, 221
  %v653 = vld [vmem:[%s652] sm:$0x80]
  %vm654 = vcmask 1047559
  %v655 = vsel %vm654, %v653, %v651
  %656 = vrot.lane.b32.xlu0 %v655, 104
  %v657 = vpop.permute.xlu0 %656
  %vm658 = vcmask 15360
  %s659 = scalar_lea.vmem %s1, 8
  %660 = vst.msk [vmem:[%s659] sm:$0xff] %vm658, %v657
  %s661 = scalar_lea.vmem %s0, 4
  %v662 = vld [vmem:[%s661] sm:$0x1]
  %s663 = scalar_lea.vmem %s0, 35
  %v664 = vld [vmem:[%s663] sm:$0x2]
  %vm665 = vcmask 1041409
  %v666 = vsel %vm665, %v664, %v662
  %s667 = scalar_lea.vmem %s0, 66
  %v668 = vld [vmem:[%s667] sm:$0x4]
  %vm669 = vcmask 1042434
  %v670 = vsel %vm669, %v668, %v666
  %s671 = scalar_lea.vmem %s0, 97
  %v672 = vld [vmem:[%s671] sm:$0x8]
  %vm673 = vcmask 1043459
  %v674 = vsel %vm673, %v672, %v670
  %s675 = scalar_lea.vmem %s0, 128
  %v676 = vld [vmem:[%s675] sm:$0x10]
  %vm677 = vcmask 1044484
  %v678 = vsel %vm677, %v676, %v674
  %s679 = scalar_lea.vmem %s0, 159
  %v680 = vld [vmem:[%s679] sm:$0x20]
  %vm681 = vcmask 1045509
  %v682 = vsel %vm681, %v680, %v678
  %s683 = scalar_lea.vmem %s0, 190
  %v684 = vld [vmem:[%s683] sm:$0x40]
  %vm685 = vcmask 1046534
  %v686 = vsel %vm685, %v684, %v682
  %s687 = scalar_lea.vmem %s0, 221
  %v688 = vld [vmem:[%s687] sm:$0x80]
  %vm689 = vcmask 1047559
  %v690 = vsel %vm689, %v688, %v686
  %691 = vrot.lane.b32.xlu0 %v690, 104
  %v692 = vpop.permute.xlu0 %691
  %vm693 = vcmask 1048384
  %694 = vst.msk [vmem:[%s1] sm:$0xff] %vm693, %v692
  %s695 = scalar_lea.vmem %s0, 260
  %v696 = vld [vmem:[%s695] sm:$0x1]
  %s697 = scalar_lea.vmem %s0, 291
  %v698 = vld [vmem:[%s697] sm:$0x2]
  %vm699 = vcmask 1041409
  %v700 = vsel %vm699, %v698, %v696
  %s701 = scalar_lea.vmem %s0, 322
  %v702 = vld [vmem:[%s701] sm:$0x4]
  %vm703 = vcmask 1042434
  %v704 = vsel %vm703, %v702, %v700
  %s705 = scalar_lea.vmem %s0, 353
  %v706 = vld [vmem:[%s705] sm:$0x8]
  %vm707 = vcmask 1043459
  %v708 = vsel %vm707, %v706, %v704
  %s709 = scalar_lea.vmem %s0, 384
  %v710 = vld [vmem:[%s709] sm:$0x10]
  %vm711 = vcmask 1044484
  %v712 = vsel %vm711, %v710, %v708
  %s713 = scalar_lea.vmem %s0, 415
  %v714 = vld [vmem:[%s713] sm:$0x20]
  %vm715 = vcmask 1045509
  %v716 = vsel %vm715, %v714, %v712
  %s717 = scalar_lea.vmem %s0, 446
  %v718 = vld [vmem:[%s717] sm:$0x40]
  %vm719 = vcmask 1046534
  %v720 = vsel %vm719, %v718, %v716
  %s721 = scalar_lea.vmem %s0, 477
  %v722 = vld [vmem:[%s721] sm:$0x80]
  %vm723 = vcmask 1047559
  %v724 = vsel %vm723, %v722, %v720
  %725 = vrot.lane.b32.xlu0 %v724, 104
  %v726 = vpop.permute.xlu0 %725
  %vm727 = vcmask 15360
  %s728 = scalar_lea.vmem %s1, 56
  %729 = vst.msk [vmem:[%s728] sm:$0xff] %vm727, %v726
  %s730 = scalar_lea.vmem %s0, 260
  %v731 = vld [vmem:[%s730] sm:$0x1]
  %s732 = scalar_lea.vmem %s0, 291
  %v733 = vld [vmem:[%s732] sm:$0x2]
  %vm734 = vcmask 1041409
  %v735 = vsel %vm734, %v733, %v731
  %s736 = scalar_lea.vmem %s0, 322
  %v737 = vld [vmem:[%s736] sm:$0x4]
  %vm738 = vcmask 1042434
  %v739 = vsel %vm738, %v737, %v735
  %s740 = scalar_lea.vmem %s0, 353
  %v741 = vld [vmem:[%s740] sm:$0x8]
  %vm742 = vcmask 1043459
  %v743 = vsel %vm742, %v741, %v739
  %s744 = scalar_lea.vmem %s0, 384
  %v745 = vld [vmem:[%s744] sm:$0x10]
  %vm746 = vcmask 1044484
  %v747 = vsel %vm746, %v745, %v743
  %s748 = scalar_lea.vmem %s0, 415
  %v749 = vld [vmem:[%s748] sm:$0x20]
  %vm750 = vcmask 1045509
  %v751 = vsel %vm750, %v749, %v747
  %s752 = scalar_lea.vmem %s0, 446
  %v753 = vld [vmem:[%s752] sm:$0x40]
  %vm754 = vcmask 1046534
  %v755 = vsel %vm754, %v753, %v751
  %s756 = scalar_lea.vmem %s0, 477
  %v757 = vld [vmem:[%s756] sm:$0x80]
  %vm758 = vcmask 1047559
  %v759 = vsel %vm758, %v757, %v755
  %760 = vrot.lane.b32.xlu0 %v759, 104
  %v761 = vpop.permute.xlu0 %760
  %vm762 = vcmask 1048384
  %s763 = scalar_lea.vmem %s1, 48
  %764 = vst.msk [vmem:[%s763] sm:$0xff] %vm762, %v761
  %s765 = scalar_lea.vmem %s0, 23
  %v766 = vld [vmem:[%s765] sm:$0x1]
  %s767 = scalar_lea.vmem %s0, 54
  %v768 = vld [vmem:[%s767] sm:$0x2]
  %vm769 = vcmask 1041409
  %v770 = vsel %vm769, %v768, %v766
  %s771 = scalar_lea.vmem %s0, 85
  %v772 = vld [vmem:[%s771] sm:$0x4]
  %vm773 = vcmask 1042434
  %v774 = vsel %vm773, %v772, %v770
  %s775 = scalar_lea.vmem %s0, 116
  %v776 = vld [vmem:[%s775] sm:$0x8]
  %vm777 = vcmask 1043459
  %v778 = vsel %vm777, %v776, %v774
  %s779 = scalar_lea.vmem %s0, 147
  %v780 = vld [vmem:[%s779] sm:$0x10]
  %vm781 = vcmask 1044484
  %v782 = vsel %vm781, %v780, %v778
  %s783 = scalar_lea.vmem %s0, 178
  %v784 = vld [vmem:[%s783] sm:$0x20]
  %vm785 = vcmask 1045509
  %v786 = vsel %vm785, %v784, %v782
  %s787 = scalar_lea.vmem %s0, 209
  %v788 = vld [vmem:[%s787] sm:$0x40]
  %vm789 = vcmask 1046534
  %v790 = vsel %vm789, %v788, %v786
  %s791 = scalar_lea.vmem %s0, 240
  %v792 = vld [vmem:[%s791] sm:$0x80]
  %vm793 = vcmask 1047559
  %v794 = vsel %vm793, %v792, %v790
  %795 = vrot.lane.b32.xlu0 %v794, 86
  %v796 = vpop.permute.xlu0 %795
  %vm797 = vcmask 917168
  %s798 = scalar_lea.vmem %s1, 32
  %799 = vst.msk [vmem:[%s798] sm:$0xff] %vm797, %v796
  %s800 = scalar_lea.vmem %s0, 279
  %v801 = vld [vmem:[%s800] sm:$0x1]
  %s802 = scalar_lea.vmem %s0, 310
  %v803 = vld [vmem:[%s802] sm:$0x2]
  %vm804 = vcmask 1041409
  %v805 = vsel %vm804, %v803, %v801
  %s806 = scalar_lea.vmem %s0, 341
  %v807 = vld [vmem:[%s806] sm:$0x4]
  %vm808 = vcmask 1042434
  %v809 = vsel %vm808, %v807, %v805
  %s810 = scalar_lea.vmem %s0, 372
  %v811 = vld [vmem:[%s810] sm:$0x8]
  %vm812 = vcmask 1043459
  %v813 = vsel %vm812, %v811, %v809
  %s814 = scalar_lea.vmem %s0, 403
  %v815 = vld [vmem:[%s814] sm:$0x10]
  %vm816 = vcmask 1044484
  %v817 = vsel %vm816, %v815, %v813
  %s818 = scalar_lea.vmem %s0, 434
  %v819 = vld [vmem:[%s818] sm:$0x20]
  %vm820 = vcmask 1045509
  %v821 = vsel %vm820, %v819, %v817
  %s822 = scalar_lea.vmem %s0, 465
  %v823 = vld [vmem:[%s822] sm:$0x40]
  %vm824 = vcmask 1046534
  %v825 = vsel %vm824, %v823, %v821
  %s826 = scalar_lea.vmem %s0, 496
  %v827 = vld [vmem:[%s826] sm:$0x80]
  %vm828 = vcmask 1047559
  %v829 = vsel %vm828, %v827, %v825
  %830 = vrot.lane.b32.xlu0 %v829, 86
  %v831 = vpop.permute.xlu0 %830
  %vm832 = vcmask 917168
  %s833 = scalar_lea.vmem %s1, 80
  %834 = vst.msk [vmem:[%s833] sm:$0xff] %vm832, %v831
  %s835 = scalar_lea.vmem %s0, 274
  %v836 = vld [vmem:[%s835] sm:$0x1]
  %s837 = scalar_lea.vmem %s0, 305
  %v838 = vld [vmem:[%s837] sm:$0x2]
  %vm839 = vcmask 1041409
  %v840 = vsel %vm839, %v838, %v836
  %s841 = scalar_lea.vmem %s0, 336
  %v842 = vld [vmem:[%s841] sm:$0x4]
  %vm843 = vcmask 1042434
  %v844 = vsel %vm843, %v842, %v840
  %s845 = scalar_lea.vmem %s0, 367
  %v846 = vld [vmem:[%s845] sm:$0x8]
  %vm847 = vcmask 1043459
  %v848 = vsel %vm847, %v846, %v844
  %s849 = scalar_lea.vmem %s0, 398
  %v850 = vld [vmem:[%s849] sm:$0x10]
  %vm851 = vcmask 1044484
  %v852 = vsel %vm851, %v850, %v848
  %s853 = scalar_lea.vmem %s0, 429
  %v854 = vld [vmem:[%s853] sm:$0x20]
  %vm855 = vcmask 1045509
  %v856 = vsel %vm855, %v854, %v852
  %s857 = scalar_lea.vmem %s0, 460
  %v858 = vld [vmem:[%s857] sm:$0x40]
  %vm859 = vcmask 1046534
  %v860 = vsel %vm859, %v858, %v856
  %s861 = scalar_lea.vmem %s0, 491
  %v862 = vld [vmem:[%s861] sm:$0x80]
  %vm863 = vcmask 1047559
  %v864 = vsel %vm863, %v862, %v860
  %865 = vrot.lane.b32.xlu0 %v864, 84
  %v866 = vpop.permute.xlu0 %865
  %vm867 = vcmask 900768
  %s868 = scalar_lea.vmem %s1, 72
  %869 = vst.msk [vmem:[%s868] sm:$0xff] %vm867, %v866
  %s870 = scalar_lea.vmem %s0, 18
  %v871 = vld [vmem:[%s870] sm:$0x1]
  %s872 = scalar_lea.vmem %s0, 49
  %v873 = vld [vmem:[%s872] sm:$0x2]
  %vm874 = vcmask 1041409
  %v875 = vsel %vm874, %v873, %v871
  %s876 = scalar_lea.vmem %s0, 80
  %v877 = vld [vmem:[%s876] sm:$0x4]
  %vm878 = vcmask 1042434
  %v879 = vsel %vm878, %v877, %v875
  %s880 = scalar_lea.vmem %s0, 111
  %v881 = vld [vmem:[%s880] sm:$0x8]
  %vm882 = vcmask 1043459
  %v883 = vsel %vm882, %v881, %v879
  %s884 = scalar_lea.vmem %s0, 142
  %v885 = vld [vmem:[%s884] sm:$0x10]
  %vm886 = vcmask 1044484
  %v887 = vsel %vm886, %v885, %v883
  %s888 = scalar_lea.vmem %s0, 173
  %v889 = vld [vmem:[%s888] sm:$0x20]
  %vm890 = vcmask 1045509
  %v891 = vsel %vm890, %v889, %v887
  %s892 = scalar_lea.vmem %s0, 204
  %v893 = vld [vmem:[%s892] sm:$0x40]
  %vm894 = vcmask 1046534
  %v895 = vsel %vm894, %v893, %v891
  %s896 = scalar_lea.vmem %s0, 235
  %v897 = vld [vmem:[%s896] sm:$0x80]
  %vm898 = vcmask 1047559
  %v899 = vsel %vm898, %v897, %v895
  %900 = vrot.lane.b32.xlu0 %v899, 84
  %v901 = vpop.permute.xlu0 %900
  %vm902 = vcmask 900768
  %s903 = scalar_lea.vmem %s1, 24
  %904 = vst.msk [vmem:[%s903] sm:$0xff] %vm902, %v901
  %s905 = scalar_lea.vmem %s0, 269
  %v906 = vld [vmem:[%s905] sm:$0x1]
  %s907 = scalar_lea.vmem %s0, 300
  %v908 = vld [vmem:[%s907] sm:$0x2]
  %vm909 = vcmask 1041409
  %v910 = vsel %vm909, %v908, %v906
  %s911 = scalar_lea.vmem %s0, 331
  %v912 = vld [vmem:[%s911] sm:$0x4]
  %vm913 = vcmask 1042434
  %v914 = vsel %vm913, %v912, %v910
  %s915 = scalar_lea.vmem %s0, 362
  %v916 = vld [vmem:[%s915] sm:$0x8]
  %vm917 = vcmask 1043459
  %v918 = vsel %vm917, %v916, %v914
  %s919 = scalar_lea.vmem %s0, 393
  %v920 = vld [vmem:[%s919] sm:$0x10]
  %vm921 = vcmask 1044484
  %v922 = vsel %vm921, %v920, %v918
  %s923 = scalar_lea.vmem %s0, 424
  %v924 = vld [vmem:[%s923] sm:$0x20]
  %vm925 = vcmask 1045509
  %v926 = vsel %vm925, %v924, %v922
  %s927 = scalar_lea.vmem %s0, 455
  %v928 = vld [vmem:[%s927] sm:$0x40]
  %vm929 = vcmask 1046534
  %v930 = vsel %vm929, %v928, %v926
  %s931 = scalar_lea.vmem %s0, 486
  %v932 = vld [vmem:[%s931] sm:$0x80]
  %vm933 = vcmask 1047559
  %v934 = vsel %vm933, %v932, %v930
  %935 = vrot.lane.b32.xlu0 %v934, 82
  %v936 = vpop.permute.xlu0 %935
  %vm937 = vcmask 884368
  %s938 = scalar_lea.vmem %s1, 64
  %939 = vst.msk [vmem:[%s938] sm:$0xff] %vm937, %v936
  %s940 = scalar_lea.vmem %s0, 13
  %v941 = vld [vmem:[%s940] sm:$0x1]
  %s942 = scalar_lea.vmem %s0, 44
  %v943 = vld [vmem:[%s942] sm:$0x2]
  %vm944 = vcmask 1041409
  %v945 = vsel %vm944, %v943, %v941
  %s946 = scalar_lea.vmem %s0, 75
  %v947 = vld [vmem:[%s946] sm:$0x4]
  %vm948 = vcmask 1042434
  %v949 = vsel %vm948, %v947, %v945
  %s950 = scalar_lea.vmem %s0, 106
  %v951 = vld [vmem:[%s950] sm:$0x8]
  %vm952 = vcmask 1043459
  %v953 = vsel %vm952, %v951, %v949
  %s954 = scalar_lea.vmem %s0, 137
  %v955 = vld [vmem:[%s954] sm:$0x10]
  %vm956 = vcmask 1044484
  %v957 = vsel %vm956, %v955, %v953
  %s958 = scalar_lea.vmem %s0, 168
  %v959 = vld [vmem:[%s958] sm:$0x20]
  %vm960 = vcmask 1045509
  %v961 = vsel %vm960, %v959, %v957
  %s962 = scalar_lea.vmem %s0, 199
  %v963 = vld [vmem:[%s962] sm:$0x40]
  %vm964 = vcmask 1046534
  %v965 = vsel %vm964, %v963, %v961
  %s966 = scalar_lea.vmem %s0, 230
  %v967 = vld [vmem:[%s966] sm:$0x80]
  %vm968 = vcmask 1047559
  %v969 = vsel %vm968, %v967, %v965
  %970 = vrot.lane.b32.xlu0 %v969, 82
  %v971 = vpop.permute.xlu0 %970
  %vm972 = vcmask 884368
  %s973 = scalar_lea.vmem %s1, 16
  %974 = vst.msk [vmem:[%s973] sm:$0xff] %vm972, %v971
  %s975 = scalar_lea.vmem %s0, 8
  %v976 = vld [vmem:[%s975] sm:$0x1]
  %s977 = scalar_lea.vmem %s0, 39
  %v978 = vld [vmem:[%s977] sm:$0x2]
  %vm979 = vcmask 1041409
  %v980 = vsel %vm979, %v978, %v976
  %s981 = scalar_lea.vmem %s0, 70
  %v982 = vld [vmem:[%s981] sm:$0x4]
  %vm983 = vcmask 1042434
  %v984 = vsel %vm983, %v982, %v980
  %s985 = scalar_lea.vmem %s0, 101
  %v986 = vld [vmem:[%s985] sm:$0x8]
  %vm987 = vcmask 1043459
  %v988 = vsel %vm987, %v986, %v984
  %s989 = scalar_lea.vmem %s0, 132
  %v990 = vld [vmem:[%s989] sm:$0x10]
  %vm991 = vcmask 1044484
  %v992 = vsel %vm991, %v990, %v988
  %s993 = scalar_lea.vmem %s0, 163
  %v994 = vld [vmem:[%s993] sm:$0x20]
  %vm995 = vcmask 1045509
  %v996 = vsel %vm995, %v994, %v992
  %s997 = scalar_lea.vmem %s0, 194
  %v998 = vld [vmem:[%s997] sm:$0x40]
  %vm999 = vcmask 1046534
  %v1000 = vsel %vm999, %v998, %v996
  %s1001 = scalar_lea.vmem %s0, 225
  %v1002 = vld [vmem:[%s1001] sm:$0x80]
  %vm1003 = vcmask 1047559
  %v1004 = vsel %vm1003, %v1002, %v1000
  %1005 = vrot.lane.b32.xlu0 %v1004, 80
  %v1006 = vpop.permute.xlu0 %1005
  %vm1007 = vcmask 867968
  %s1008 = scalar_lea.vmem %s1, 8
  %1009 = vst.msk [vmem:[%s1008] sm:$0xff] %vm1007, %v1006
  %s1010 = scalar_lea.vmem %s0, 264
  %v1011 = vld [vmem:[%s1010] sm:$0x1]
  %s1012 = scalar_lea.vmem %s0, 295
  %v1013 = vld [vmem:[%s1012] sm:$0x2]
  %vm1014 = vcmask 1041409
  %v1015 = vsel %vm1014, %v1013, %v1011
  %s1016 = scalar_lea.vmem %s0, 326
  %v1017 = vld [vmem:[%s1016] sm:$0x4]
  %vm1018 = vcmask 1042434
  %v1019 = vsel %vm1018, %v1017, %v1015
  %s1020 = scalar_lea.vmem %s0, 357
  %v1021 = vld [vmem:[%s1020] sm:$0x8]
  %vm1022 = vcmask 1043459
  %v1023 = vsel %vm1022, %v1021, %v1019
  %s1024 = scalar_lea.vmem %s0, 388
  %v1025 = vld [vmem:[%s1024] sm:$0x10]
  %vm1026 = vcmask 1044484
  %v1027 = vsel %vm1026, %v1025, %v1023
  %s1028 = scalar_lea.vmem %s0, 419
  %v1029 = vld [vmem:[%s1028] sm:$0x20]
  %vm1030 = vcmask 1045509
  %v1031 = vsel %vm1030, %v1029, %v1027
  %s1032 = scalar_lea.vmem %s0, 450
  %v1033 = vld [vmem:[%s1032] sm:$0x40]
  %vm1034 = vcmask 1046534
  %v1035 = vsel %vm1034, %v1033, %v1031
  %s1036 = scalar_lea.vmem %s0, 481
  %v1037 = vld [vmem:[%s1036] sm:$0x80]
  %vm1038 = vcmask 1047559
  %v1039 = vsel %vm1038, %v1037, %v1035
  %1040 = vrot.lane.b32.xlu0 %v1039, 80
  %v1041 = vpop.permute.xlu0 %1040
  %vm1042 = vcmask 867968
  %s1043 = scalar_lea.vmem %s1, 56
  %1044 = vst.msk [vmem:[%s1043] sm:$0xff] %vm1042, %v1041
  %s1045 = scalar_lea.vmem %s0, 3
  %v1046 = vld [vmem:[%s1045] sm:$0x1]
  %s1047 = scalar_lea.vmem %s0, 34
  %v1048 = vld [vmem:[%s1047] sm:$0x2]
  %vm1049 = vcmask 1041409
  %v1050 = vsel %vm1049, %v1048, %v1046
  %s1051 = scalar_lea.vmem %s0, 65
  %v1052 = vld [vmem:[%s1051] sm:$0x4]
  %vm1053 = vcmask 1042434
  %v1054 = vsel %vm1053, %v1052, %v1050
  %s1055 = scalar_lea.vmem %s0, 96
  %v1056 = vld [vmem:[%s1055] sm:$0x8]
  %vm1057 = vcmask 1043459
  %v1058 = vsel %vm1057, %v1056, %v1054
  %s1059 = scalar_lea.vmem %s0, 127
  %v1060 = vld [vmem:[%s1059] sm:$0x10]
  %vm1061 = vcmask 1044484
  %v1062 = vsel %vm1061, %v1060, %v1058
  %s1063 = scalar_lea.vmem %s0, 158
  %v1064 = vld [vmem:[%s1063] sm:$0x20]
  %vm1065 = vcmask 1045509
  %v1066 = vsel %vm1065, %v1064, %v1062
  %s1067 = scalar_lea.vmem %s0, 189
  %v1068 = vld [vmem:[%s1067] sm:$0x40]
  %vm1069 = vcmask 1046534
  %v1070 = vsel %vm1069, %v1068, %v1066
  %s1071 = scalar_lea.vmem %s0, 220
  %v1072 = vld [vmem:[%s1071] sm:$0x80]
  %vm1073 = vcmask 1047559
  %v1074 = vsel %vm1073, %v1072, %v1070
  %1075 = vrot.lane.b32.xlu0 %v1074, 78
  %v1076 = vpop.permute.xlu0 %1075
  %vm1077 = vcmask 851568
  %1078 = vst.msk [vmem:[%s1] sm:$0xff] %vm1077, %v1076
  %s1079 = scalar_lea.vmem %s0, 259
  %v1080 = vld [vmem:[%s1079] sm:$0x1]
  %s1081 = scalar_lea.vmem %s0, 290
  %v1082 = vld [vmem:[%s1081] sm:$0x2]
  %vm1083 = vcmask 1041409
  %v1084 = vsel %vm1083, %v1082, %v1080
  %s1085 = scalar_lea.vmem %s0, 321
  %v1086 = vld [vmem:[%s1085] sm:$0x4]
  %vm1087 = vcmask 1042434
  %v1088 = vsel %vm1087, %v1086, %v1084
  %s1089 = scalar_lea.vmem %s0, 352
  %v1090 = vld [vmem:[%s1089] sm:$0x8]
  %vm1091 = vcmask 1043459
  %v1092 = vsel %vm1091, %v1090, %v1088
  %s1093 = scalar_lea.vmem %s0, 383
  %v1094 = vld [vmem:[%s1093] sm:$0x10]
  %vm1095 = vcmask 1044484
  %v1096 = vsel %vm1095, %v1094, %v1092
  %s1097 = scalar_lea.vmem %s0, 414
  %v1098 = vld [vmem:[%s1097] sm:$0x20]
  %vm1099 = vcmask 1045509
  %v1100 = vsel %vm1099, %v1098, %v1096
  %s1101 = scalar_lea.vmem %s0, 445
  %v1102 = vld [vmem:[%s1101] sm:$0x40]
  %vm1103 = vcmask 1046534
  %v1104 = vsel %vm1103, %v1102, %v1100
  %s1105 = scalar_lea.vmem %s0, 476
  %v1106 = vld [vmem:[%s1105] sm:$0x80]
  %vm1107 = vcmask 1047559
  %v1108 = vsel %vm1107, %v1106, %v1104
  %1109 = vrot.lane.b32.xlu0 %v1108, 78
  %v1110 = vpop.permute.xlu0 %1109
  %vm1111 = vcmask 851568
  %s1112 = scalar_lea.vmem %s1, 48
  %1113 = vst.msk [vmem:[%s1112] sm:$0xff] %vm1111, %v1110
  %s1114 = scalar_lea.vmem %s0, 22
  %v1115 = vld [vmem:[%s1114] sm:$0x1]
  %s1116 = scalar_lea.vmem %s0, 53
  %v1117 = vld [vmem:[%s1116] sm:$0x2]
  %vm1118 = vcmask 1041409
  %v1119 = vsel %vm1118, %v1117, %v1115
  %s1120 = scalar_lea.vmem %s0, 84
  %v1121 = vld [vmem:[%s1120] sm:$0x4]
  %vm1122 = vcmask 1042434
  %v1123 = vsel %vm1122, %v1121, %v1119
  %s1124 = scalar_lea.vmem %s0, 115
  %v1125 = vld [vmem:[%s1124] sm:$0x8]
  %vm1126 = vcmask 1043459
  %v1127 = vsel %vm1126, %v1125, %v1123
  %s1128 = scalar_lea.vmem %s0, 146
  %v1129 = vld [vmem:[%s1128] sm:$0x10]
  %vm1130 = vcmask 1044484
  %v1131 = vsel %vm1130, %v1129, %v1127
  %s1132 = scalar_lea.vmem %s0, 177
  %v1133 = vld [vmem:[%s1132] sm:$0x20]
  %vm1134 = vcmask 1045509
  %v1135 = vsel %vm1134, %v1133, %v1131
  %s1136 = scalar_lea.vmem %s0, 208
  %v1137 = vld [vmem:[%s1136] sm:$0x40]
  %vm1138 = vcmask 1046534
  %v1139 = vsel %vm1138, %v1137, %v1135
  %s1140 = scalar_lea.vmem %s0, 239
  %v1141 = vld [vmem:[%s1140] sm:$0x80]
  %vm1142 = vcmask 1047559
  %v1143 = vsel %vm1142, %v1141, %v1139
  %1144 = vrot.lane.b32.xlu0 %v1143, 60
  %v1145 = vpop.permute.xlu0 %1144
  %vm1146 = vcmask 703968
  %s1147 = scalar_lea.vmem %s1, 32
  %1148 = vst.msk [vmem:[%s1147] sm:$0xff] %vm1146, %v1145
  %s1149 = scalar_lea.vmem %s0, 278
  %v1150 = vld [vmem:[%s1149] sm:$0x1]
  %s1151 = scalar_lea.vmem %s0, 309
  %v1152 = vld [vmem:[%s1151] sm:$0x2]
  %vm1153 = vcmask 1041409
  %v1154 = vsel %vm1153, %v1152, %v1150
  %s1155 = scalar_lea.vmem %s0, 340
  %v1156 = vld [vmem:[%s1155] sm:$0x4]
  %vm1157 = vcmask 1042434
  %v1158 = vsel %vm1157, %v1156, %v1154
  %s1159 = scalar_lea.vmem %s0, 371
  %v1160 = vld [vmem:[%s1159] sm:$0x8]
  %vm1161 = vcmask 1043459
  %v1162 = vsel %vm1161, %v1160, %v1158
  %s1163 = scalar_lea.vmem %s0, 402
  %v1164 = vld [vmem:[%s1163] sm:$0x10]
  %vm1165 = vcmask 1044484
  %v1166 = vsel %vm1165, %v1164, %v1162
  %s1167 = scalar_lea.vmem %s0, 433
  %v1168 = vld [vmem:[%s1167] sm:$0x20]
  %vm1169 = vcmask 1045509
  %v1170 = vsel %vm1169, %v1168, %v1166
  %s1171 = scalar_lea.vmem %s0, 464
  %v1172 = vld [vmem:[%s1171] sm:$0x40]
  %vm1173 = vcmask 1046534
  %v1174 = vsel %vm1173, %v1172, %v1170
  %s1175 = scalar_lea.vmem %s0, 495
  %v1176 = vld [vmem:[%s1175] sm:$0x80]
  %vm1177 = vcmask 1047559
  %v1178 = vsel %vm1177, %v1176, %v1174
  %1179 = vrot.lane.b32.xlu0 %v1178, 60
  %v1180 = vpop.permute.xlu0 %1179
  %vm1181 = vcmask 703968
  %s1182 = scalar_lea.vmem %s1, 80
  %1183 = vst.msk [vmem:[%s1182] sm:$0xff] %vm1181, %v1180
  %s1184 = scalar_lea.vmem %s0, 273
  %v1185 = vld [vmem:[%s1184] sm:$0x1]
  %s1186 = scalar_lea.vmem %s0, 304
  %v1187 = vld [vmem:[%s1186] sm:$0x2]
  %vm1188 = vcmask 1041409
  %v1189 = vsel %vm1188, %v1187, %v1185
  %s1190 = scalar_lea.vmem %s0, 335
  %v1191 = vld [vmem:[%s1190] sm:$0x4]
  %vm1192 = vcmask 1042434
  %v1193 = vsel %vm1192, %v1191, %v1189
  %s1194 = scalar_lea.vmem %s0, 366
  %v1195 = vld [vmem:[%s1194] sm:$0x8]
  %vm1196 = vcmask 1043459
  %v1197 = vsel %vm1196, %v1195, %v1193
  %s1198 = scalar_lea.vmem %s0, 397
  %v1199 = vld [vmem:[%s1198] sm:$0x10]
  %vm1200 = vcmask 1044484
  %v1201 = vsel %vm1200, %v1199, %v1197
  %s1202 = scalar_lea.vmem %s0, 428
  %v1203 = vld [vmem:[%s1202] sm:$0x20]
  %vm1204 = vcmask 1045509
  %v1205 = vsel %vm1204, %v1203, %v1201
  %s1206 = scalar_lea.vmem %s0, 459
  %v1207 = vld [vmem:[%s1206] sm:$0x40]
  %vm1208 = vcmask 1046534
  %v1209 = vsel %vm1208, %v1207, %v1205
  %s1210 = scalar_lea.vmem %s0, 490
  %v1211 = vld [vmem:[%s1210] sm:$0x80]
  %vm1212 = vcmask 1047559
  %v1213 = vsel %vm1212, %v1211, %v1209
  %1214 = vrot.lane.b32.xlu0 %v1213, 58
  %v1215 = vpop.permute.xlu0 %1214
  %vm1216 = vcmask 687568
  %s1217 = scalar_lea.vmem %s1, 72
  %1218 = vst.msk [vmem:[%s1217] sm:$0xff] %vm1216, %v1215
  %s1219 = scalar_lea.vmem %s0, 17
  %v1220 = vld [vmem:[%s1219] sm:$0x1]
  %s1221 = scalar_lea.vmem %s0, 48
  %v1222 = vld [vmem:[%s1221] sm:$0x2]
  %vm1223 = vcmask 1041409
  %v1224 = vsel %vm1223, %v1222, %v1220
  %s1225 = scalar_lea.vmem %s0, 79
  %v1226 = vld [vmem:[%s1225] sm:$0x4]
  %vm1227 = vcmask 1042434
  %v1228 = vsel %vm1227, %v1226, %v1224
  %s1229 = scalar_lea.vmem %s0, 110
  %v1230 = vld [vmem:[%s1229] sm:$0x8]
  %vm1231 = vcmask 1043459
  %v1232 = vsel %vm1231, %v1230, %v1228
  %s1233 = scalar_lea.vmem %s0, 141
  %v1234 = vld [vmem:[%s1233] sm:$0x10]
  %vm1235 = vcmask 1044484
  %v1236 = vsel %vm1235, %v1234, %v1232
  %s1237 = scalar_lea.vmem %s0, 172
  %v1238 = vld [vmem:[%s1237] sm:$0x20]
  %vm1239 = vcmask 1045509
  %v1240 = vsel %vm1239, %v1238, %v1236
  %s1241 = scalar_lea.vmem %s0, 203
  %v1242 = vld [vmem:[%s1241] sm:$0x40]
  %vm1243 = vcmask 1046534
  %v1244 = vsel %vm1243, %v1242, %v1240
  %s1245 = scalar_lea.vmem %s0, 234
  %v1246 = vld [vmem:[%s1245] sm:$0x80]
  %vm1247 = vcmask 1047559
  %v1248 = vsel %vm1247, %v1246, %v1244
  %1249 = vrot.lane.b32.xlu0 %v1248, 58
  %v1250 = vpop.permute.xlu0 %1249
  %vm1251 = vcmask 687568
  %s1252 = scalar_lea.vmem %s1, 24
  %1253 = vst.msk [vmem:[%s1252] sm:$0xff] %vm1251, %v1250
  %s1254 = scalar_lea.vmem %s0, 268
  %v1255 = vld [vmem:[%s1254] sm:$0x1]
  %s1256 = scalar_lea.vmem %s0, 299
  %v1257 = vld [vmem:[%s1256] sm:$0x2]
  %vm1258 = vcmask 1041409
  %v1259 = vsel %vm1258, %v1257, %v1255
  %s1260 = scalar_lea.vmem %s0, 330
  %v1261 = vld [vmem:[%s1260] sm:$0x4]
  %vm1262 = vcmask 1042434
  %v1263 = vsel %vm1262, %v1261, %v1259
  %s1264 = scalar_lea.vmem %s0, 361
  %v1265 = vld [vmem:[%s1264] sm:$0x8]
  %vm1266 = vcmask 1043459
  %v1267 = vsel %vm1266, %v1265, %v1263
  %s1268 = scalar_lea.vmem %s0, 392
  %v1269 = vld [vmem:[%s1268] sm:$0x10]
  %vm1270 = vcmask 1044484
  %v1271 = vsel %vm1270, %v1269, %v1267
  %s1272 = scalar_lea.vmem %s0, 423
  %v1273 = vld [vmem:[%s1272] sm:$0x20]
  %vm1274 = vcmask 1045509
  %v1275 = vsel %vm1274, %v1273, %v1271
  %s1276 = scalar_lea.vmem %s0, 454
  %v1277 = vld [vmem:[%s1276] sm:$0x40]
  %vm1278 = vcmask 1046534
  %v1279 = vsel %vm1278, %v1277, %v1275
  %s1280 = scalar_lea.vmem %s0, 485
  %v1281 = vld [vmem:[%s1280] sm:$0x80]
  %vm1282 = vcmask 1047559
  %v1283 = vsel %vm1282, %v1281, %v1279
  %1284 = vrot.lane.b32.xlu0 %v1283, 56
  %v1285 = vpop.permute.xlu0 %1284
  %vm1286 = vcmask 671168
  %s1287 = scalar_lea.vmem %s1, 64
  %1288 = vst.msk [vmem:[%s1287] sm:$0xff] %vm1286, %v1285
  %s1289 = scalar_lea.vmem %s0, 12
  %v1290 = vld [vmem:[%s1289] sm:$0x1]
  %s1291 = scalar_lea.vmem %s0, 43
  %v1292 = vld [vmem:[%s1291] sm:$0x2]
  %vm1293 = vcmask 1041409
  %v1294 = vsel %vm1293, %v1292, %v1290
  %s1295 = scalar_lea.vmem %s0, 74
  %v1296 = vld [vmem:[%s1295] sm:$0x4]
  %vm1297 = vcmask 1042434
  %v1298 = vsel %vm1297, %v1296, %v1294
  %s1299 = scalar_lea.vmem %s0, 105
  %v1300 = vld [vmem:[%s1299] sm:$0x8]
  %vm1301 = vcmask 1043459
  %v1302 = vsel %vm1301, %v1300, %v1298
  %s1303 = scalar_lea.vmem %s0, 136
  %v1304 = vld [vmem:[%s1303] sm:$0x10]
  %vm1305 = vcmask 1044484
  %v1306 = vsel %vm1305, %v1304, %v1302
  %s1307 = scalar_lea.vmem %s0, 167
  %v1308 = vld [vmem:[%s1307] sm:$0x20]
  %vm1309 = vcmask 1045509
  %v1310 = vsel %vm1309, %v1308, %v1306
  %s1311 = scalar_lea.vmem %s0, 198
  %v1312 = vld [vmem:[%s1311] sm:$0x40]
  %vm1313 = vcmask 1046534
  %v1314 = vsel %vm1313, %v1312, %v1310
  %s1315 = scalar_lea.vmem %s0, 229
  %v1316 = vld [vmem:[%s1315] sm:$0x80]
  %vm1317 = vcmask 1047559
  %v1318 = vsel %vm1317, %v1316, %v1314
  %1319 = vrot.lane.b32.xlu0 %v1318, 56
  %v1320 = vpop.permute.xlu0 %1319
  %vm1321 = vcmask 671168
  %s1322 = scalar_lea.vmem %s1, 16
  %1323 = vst.msk [vmem:[%s1322] sm:$0xff] %vm1321, %v1320
  %s1324 = scalar_lea.vmem %s0, 7
  %v1325 = vld [vmem:[%s1324] sm:$0x1]
  %s1326 = scalar_lea.vmem %s0, 38
  %v1327 = vld [vmem:[%s1326] sm:$0x2]
  %vm1328 = vcmask 1041409
  %v1329 = vsel %vm1328, %v1327, %v1325
  %s1330 = scalar_lea.vmem %s0, 69
  %v1331 = vld [vmem:[%s1330] sm:$0x4]
  %vm1332 = vcmask 1042434
  %v1333 = vsel %vm1332, %v1331, %v1329
  %s1334 = scalar_lea.vmem %s0, 100
  %v1335 = vld [vmem:[%s1334] sm:$0x8]
  %vm1336 = vcmask 1043459
  %v1337 = vsel %vm1336, %v1335, %v1333
  %s1338 = scalar_lea.vmem %s0, 131
  %v1339 = vld [vmem:[%s1338] sm:$0x10]
  %vm1340 = vcmask 1044484
  %v1341 = vsel %vm1340, %v1339, %v1337
  %s1342 = scalar_lea.vmem %s0, 162
  %v1343 = vld [vmem:[%s1342] sm:$0x20]
  %vm1344 = vcmask 1045509
  %v1345 = vsel %vm1344, %v1343, %v1341
  %s1346 = scalar_lea.vmem %s0, 193
  %v1347 = vld [vmem:[%s1346] sm:$0x40]
  %vm1348 = vcmask 1046534
  %v1349 = vsel %vm1348, %v1347, %v1345
  %s1350 = scalar_lea.vmem %s0, 224
  %v1351 = vld [vmem:[%s1350] sm:$0x80]
  %vm1352 = vcmask 1047559
  %v1353 = vsel %vm1352, %v1351, %v1349
  %1354 = vrot.lane.b32.xlu0 %v1353, 54
  %v1355 = vpop.permute.xlu0 %1354
  %vm1356 = vcmask 654768
  %s1357 = scalar_lea.vmem %s1, 8
  %1358 = vst.msk [vmem:[%s1357] sm:$0xff] %vm1356, %v1355
  %s1359 = scalar_lea.vmem %s0, 263
  %v1360 = vld [vmem:[%s1359] sm:$0x1]
  %s1361 = scalar_lea.vmem %s0, 294
  %v1362 = vld [vmem:[%s1361] sm:$0x2]
  %vm1363 = vcmask 1041409
  %v1364 = vsel %vm1363, %v1362, %v1360
  %s1365 = scalar_lea.vmem %s0, 325
  %v1366 = vld [vmem:[%s1365] sm:$0x4]
  %vm1367 = vcmask 1042434
  %v1368 = vsel %vm1367, %v1366, %v1364
  %s1369 = scalar_lea.vmem %s0, 356
  %v1370 = vld [vmem:[%s1369] sm:$0x8]
  %vm1371 = vcmask 1043459
  %v1372 = vsel %vm1371, %v1370, %v1368
  %s1373 = scalar_lea.vmem %s0, 387
  %v1374 = vld [vmem:[%s1373] sm:$0x10]
  %vm1375 = vcmask 1044484
  %v1376 = vsel %vm1375, %v1374, %v1372
  %s1377 = scalar_lea.vmem %s0, 418
  %v1378 = vld [vmem:[%s1377] sm:$0x20]
  %vm1379 = vcmask 1045509
  %v1380 = vsel %vm1379, %v1378, %v1376
  %s1381 = scalar_lea.vmem %s0, 449
  %v1382 = vld [vmem:[%s1381] sm:$0x40]
  %vm1383 = vcmask 1046534
  %v1384 = vsel %vm1383, %v1382, %v1380
  %s1385 = scalar_lea.vmem %s0, 480
  %v1386 = vld [vmem:[%s1385] sm:$0x80]
  %vm1387 = vcmask 1047559
  %v1388 = vsel %vm1387, %v1386, %v1384
  %1389 = vrot.lane.b32.xlu0 %v1388, 54
  %v1390 = vpop.permute.xlu0 %1389
  %vm1391 = vcmask 654768
  %s1392 = scalar_lea.vmem %s1, 56
  %1393 = vst.msk [vmem:[%s1392] sm:$0xff] %vm1391, %v1390
  %s1394 = scalar_lea.vmem %s0, 2
  %v1395 = vld [vmem:[%s1394] sm:$0x1]
  %s1396 = scalar_lea.vmem %s0, 33
  %v1397 = vld [vmem:[%s1396] sm:$0x2]
  %vm1398 = vcmask 1041409
  %v1399 = vsel %vm1398, %v1397, %v1395
  %s1400 = scalar_lea.vmem %s0, 64
  %v1401 = vld [vmem:[%s1400] sm:$0x4]
  %vm1402 = vcmask 1042434
  %v1403 = vsel %vm1402, %v1401, %v1399
  %s1404 = scalar_lea.vmem %s0, 95
  %v1405 = vld [vmem:[%s1404] sm:$0x8]
  %vm1406 = vcmask 1043459
  %v1407 = vsel %vm1406, %v1405, %v1403
  %s1408 = scalar_lea.vmem %s0, 126
  %v1409 = vld [vmem:[%s1408] sm:$0x10]
  %vm1410 = vcmask 1044484
  %v1411 = vsel %vm1410, %v1409, %v1407
  %s1412 = scalar_lea.vmem %s0, 157
  %v1413 = vld [vmem:[%s1412] sm:$0x20]
  %vm1414 = vcmask 1045509
  %v1415 = vsel %vm1414, %v1413, %v1411
  %s1416 = scalar_lea.vmem %s0, 188
  %v1417 = vld [vmem:[%s1416] sm:$0x40]
  %vm1418 = vcmask 1046534
  %v1419 = vsel %vm1418, %v1417, %v1415
  %s1420 = scalar_lea.vmem %s0, 219
  %v1421 = vld [vmem:[%s1420] sm:$0x80]
  %vm1422 = vcmask 1047559
  %v1423 = vsel %vm1422, %v1421, %v1419
  %1424 = vrot.lane.b32.xlu0 %v1423, 52
  %v1425 = vpop.permute.xlu0 %1424
  %vm1426 = vcmask 638368
  %1427 = vst.msk [vmem:[%s1] sm:$0xff] %vm1426, %v1425
  %s1428 = scalar_lea.vmem %s0, 258
  %v1429 = vld [vmem:[%s1428] sm:$0x1]
  %s1430 = scalar_lea.vmem %s0, 289
  %v1431 = vld [vmem:[%s1430] sm:$0x2]
  %vm1432 = vcmask 1041409
  %v1433 = vsel %vm1432, %v1431, %v1429
  %s1434 = scalar_lea.vmem %s0, 320
  %v1435 = vld [vmem:[%s1434] sm:$0x4]
  %vm1436 = vcmask 1042434
  %v1437 = vsel %vm1436, %v1435, %v1433
  %s1438 = scalar_lea.vmem %s0, 351
  %v1439 = vld [vmem:[%s1438] sm:$0x8]
  %vm1440 = vcmask 1043459
  %v1441 = vsel %vm1440, %v1439, %v1437
  %s1442 = scalar_lea.vmem %s0, 382
  %v1443 = vld [vmem:[%s1442] sm:$0x10]
  %vm1444 = vcmask 1044484
  %v1445 = vsel %vm1444, %v1443, %v1441
  %s1446 = scalar_lea.vmem %s0, 413
  %v1447 = vld [vmem:[%s1446] sm:$0x20]
  %vm1448 = vcmask 1045509
  %v1449 = vsel %vm1448, %v1447, %v1445
  %s1450 = scalar_lea.vmem %s0, 444
  %v1451 = vld [vmem:[%s1450] sm:$0x40]
  %vm1452 = vcmask 1046534
  %v1453 = vsel %vm1452, %v1451, %v1449
  %s1454 = scalar_lea.vmem %s0, 475
  %v1455 = vld [vmem:[%s1454] sm:$0x80]
  %vm1456 = vcmask 1047559
  %v1457 = vsel %vm1456, %v1455, %v1453
  %1458 = vrot.lane.b32.xlu0 %v1457, 52
  %v1459 = vpop.permute.xlu0 %1458
  %vm1460 = vcmask 638368
  %s1461 = scalar_lea.vmem %s1, 48
  %1462 = vst.msk [vmem:[%s1461] sm:$0xff] %vm1460, %v1459
  %s1463 = scalar_lea.vmem %s0, 21
  %v1464 = vld [vmem:[%s1463] sm:$0x1]
  %s1465 = scalar_lea.vmem %s0, 52
  %v1466 = vld [vmem:[%s1465] sm:$0x2]
  %vm1467 = vcmask 1041409
  %v1468 = vsel %vm1467, %v1466, %v1464
  %s1469 = scalar_lea.vmem %s0, 83
  %v1470 = vld [vmem:[%s1469] sm:$0x4]
  %vm1471 = vcmask 1042434
  %v1472 = vsel %vm1471, %v1470, %v1468
  %s1473 = scalar_lea.vmem %s0, 114
  %v1474 = vld [vmem:[%s1473] sm:$0x8]
  %vm1475 = vcmask 1043459
  %v1476 = vsel %vm1475, %v1474, %v1472
  %s1477 = scalar_lea.vmem %s0, 145
  %v1478 = vld [vmem:[%s1477] sm:$0x10]
  %vm1479 = vcmask 1044484
  %v1480 = vsel %vm1479, %v1478, %v1476
  %s1481 = scalar_lea.vmem %s0, 176
  %v1482 = vld [vmem:[%s1481] sm:$0x20]
  %vm1483 = vcmask 1045509
  %v1484 = vsel %vm1483, %v1482, %v1480
  %s1485 = scalar_lea.vmem %s0, 207
  %v1486 = vld [vmem:[%s1485] sm:$0x40]
  %vm1487 = vcmask 1046534
  %v1488 = vsel %vm1487, %v1486, %v1484
  %s1489 = scalar_lea.vmem %s0, 238
  %v1490 = vld [vmem:[%s1489] sm:$0x80]
  %vm1491 = vcmask 1047559
  %v1492 = vsel %vm1491, %v1490, %v1488
  %1493 = vrot.lane.b32.xlu0 %v1492, 34
  %v1494 = vpop.permute.xlu0 %1493
  %vm1495 = vcmask 490768
  %s1496 = scalar_lea.vmem %s1, 32
  %1497 = vst.msk [vmem:[%s1496] sm:$0xff] %vm1495, %v1494
  %s1498 = scalar_lea.vmem %s0, 277
  %v1499 = vld [vmem:[%s1498] sm:$0x1]
  %s1500 = scalar_lea.vmem %s0, 308
  %v1501 = vld [vmem:[%s1500] sm:$0x2]
  %vm1502 = vcmask 1041409
  %v1503 = vsel %vm1502, %v1501, %v1499
  %s1504 = scalar_lea.vmem %s0, 339
  %v1505 = vld [vmem:[%s1504] sm:$0x4]
  %vm1506 = vcmask 1042434
  %v1507 = vsel %vm1506, %v1505, %v1503
  %s1508 = scalar_lea.vmem %s0, 370
  %v1509 = vld [vmem:[%s1508] sm:$0x8]
  %vm1510 = vcmask 1043459
  %v1511 = vsel %vm1510, %v1509, %v1507
  %s1512 = scalar_lea.vmem %s0, 401
  %v1513 = vld [vmem:[%s1512] sm:$0x10]
  %vm1514 = vcmask 1044484
  %v1515 = vsel %vm1514, %v1513, %v1511
  %s1516 = scalar_lea.vmem %s0, 432
  %v1517 = vld [vmem:[%s1516] sm:$0x20]
  %vm1518 = vcmask 1045509
  %v1519 = vsel %vm1518, %v1517, %v1515
  %s1520 = scalar_lea.vmem %s0, 463
  %v1521 = vld [vmem:[%s1520] sm:$0x40]
  %vm1522 = vcmask 1046534
  %v1523 = vsel %vm1522, %v1521, %v1519
  %s1524 = scalar_lea.vmem %s0, 494
  %v1525 = vld [vmem:[%s1524] sm:$0x80]
  %vm1526 = vcmask 1047559
  %v1527 = vsel %vm1526, %v1525, %v1523
  %1528 = vrot.lane.b32.xlu0 %v1527, 34
  %v1529 = vpop.permute.xlu0 %1528
  %vm1530 = vcmask 490768
  %s1531 = scalar_lea.vmem %s1, 80
  %1532 = vst.msk [vmem:[%s1531] sm:$0xff] %vm1530, %v1529
  %s1533 = scalar_lea.vmem %s0, 272
  %v1534 = vld [vmem:[%s1533] sm:$0x1]
  %s1535 = scalar_lea.vmem %s0, 303
  %v1536 = vld [vmem:[%s1535] sm:$0x2]
  %vm1537 = vcmask 1041409
  %v1538 = vsel %vm1537, %v1536, %v1534
  %s1539 = scalar_lea.vmem %s0, 334
  %v1540 = vld [vmem:[%s1539] sm:$0x4]
  %vm1541 = vcmask 1042434
  %v1542 = vsel %vm1541, %v1540, %v1538
  %s1543 = scalar_lea.vmem %s0, 365
  %v1544 = vld [vmem:[%s1543] sm:$0x8]
  %vm1545 = vcmask 1043459
  %v1546 = vsel %vm1545, %v1544, %v1542
  %s1547 = scalar_lea.vmem %s0, 396
  %v1548 = vld [vmem:[%s1547] sm:$0x10]
  %vm1549 = vcmask 1044484
  %v1550 = vsel %vm1549, %v1548, %v1546
  %s1551 = scalar_lea.vmem %s0, 427
  %v1552 = vld [vmem:[%s1551] sm:$0x20]
  %vm1553 = vcmask 1045509
  %v1554 = vsel %vm1553, %v1552, %v1550
  %s1555 = scalar_lea.vmem %s0, 458
  %v1556 = vld [vmem:[%s1555] sm:$0x40]
  %vm1557 = vcmask 1046534
  %v1558 = vsel %vm1557, %v1556, %v1554
  %s1559 = scalar_lea.vmem %s0, 489
  %v1560 = vld [vmem:[%s1559] sm:$0x80]
  %vm1561 = vcmask 1047559
  %v1562 = vsel %vm1561, %v1560, %v1558
  %1563 = vrot.lane.b32.xlu0 %v1562, 32
  %v1564 = vpop.permute.xlu0 %1563
  %vm1565 = vcmask 474368
  %s1566 = scalar_lea.vmem %s1, 72
  %1567 = vst.msk [vmem:[%s1566] sm:$0xff] %vm1565, %v1564
  %s1568 = scalar_lea.vmem %s0, 16
  %v1569 = vld [vmem:[%s1568] sm:$0x1]
  %s1570 = scalar_lea.vmem %s0, 47
  %v1571 = vld [vmem:[%s1570] sm:$0x2]
  %vm1572 = vcmask 1041409
  %v1573 = vsel %vm1572, %v1571, %v1569
  %s1574 = scalar_lea.vmem %s0, 78
  %v1575 = vld [vmem:[%s1574] sm:$0x4]
  %vm1576 = vcmask 1042434
  %v1577 = vsel %vm1576, %v1575, %v1573
  %s1578 = scalar_lea.vmem %s0, 109
  %v1579 = vld [vmem:[%s1578] sm:$0x8]
  %vm1580 = vcmask 1043459
  %v1581 = vsel %vm1580, %v1579, %v1577
  %s1582 = scalar_lea.vmem %s0, 140
  %v1583 = vld [vmem:[%s1582] sm:$0x10]
  %vm1584 = vcmask 1044484
  %v1585 = vsel %vm1584, %v1583, %v1581
  %s1586 = scalar_lea.vmem %s0, 171
  %v1587 = vld [vmem:[%s1586] sm:$0x20]
  %vm1588 = vcmask 1045509
  %v1589 = vsel %vm1588, %v1587, %v1585
  %s1590 = scalar_lea.vmem %s0, 202
  %v1591 = vld [vmem:[%s1590] sm:$0x40]
  %vm1592 = vcmask 1046534
  %v1593 = vsel %vm1592, %v1591, %v1589
  %s1594 = scalar_lea.vmem %s0, 233
  %v1595 = vld [vmem:[%s1594] sm:$0x80]
  %vm1596 = vcmask 1047559
  %v1597 = vsel %vm1596, %v1595, %v1593
  %1598 = vrot.lane.b32.xlu0 %v1597, 32
  %v1599 = vpop.permute.xlu0 %1598
  %vm1600 = vcmask 474368
  %s1601 = scalar_lea.vmem %s1, 24
  %1602 = vst.msk [vmem:[%s1601] sm:$0xff] %vm1600, %v1599
  %s1603 = scalar_lea.vmem %s0, 267
  %v1604 = vld [vmem:[%s1603] sm:$0x1]
  %s1605 = scalar_lea.vmem %s0, 298
  %v1606 = vld [vmem:[%s1605] sm:$0x2]
  %vm1607 = vcmask 1041409
  %v1608 = vsel %vm1607, %v1606, %v1604
  %s1609 = scalar_lea.vmem %s0, 329
  %v1610 = vld [vmem:[%s1609] sm:$0x4]
  %vm1611 = vcmask 1042434
  %v1612 = vsel %vm1611, %v1610, %v1608
  %s1613 = scalar_lea.vmem %s0, 360
  %v1614 = vld [vmem:[%s1613] sm:$0x8]
  %vm1615 = vcmask 1043459
  %v1616 = vsel %vm1615, %v1614, %v1612
  %s1617 = scalar_lea.vmem %s0, 391
  %v1618 = vld [vmem:[%s1617] sm:$0x10]
  %vm1619 = vcmask 1044484
  %v1620 = vsel %vm1619, %v1618, %v1616
  %s1621 = scalar_lea.vmem %s0, 422
  %v1622 = vld [vmem:[%s1621] sm:$0x20]
  %vm1623 = vcmask 1045509
  %v1624 = vsel %vm1623, %v1622, %v1620
  %s1625 = scalar_lea.vmem %s0, 453
  %v1626 = vld [vmem:[%s1625] sm:$0x40]
  %vm1627 = vcmask 1046534
  %v1628 = vsel %vm1627, %v1626, %v1624
  %s1629 = scalar_lea.vmem %s0, 484
  %v1630 = vld [vmem:[%s1629] sm:$0x80]
  %vm1631 = vcmask 1047559
  %v1632 = vsel %vm1631, %v1630, %v1628
  %1633 = vrot.lane.b32.xlu0 %v1632, 30
  %v1634 = vpop.permute.xlu0 %1633
  %vm1635 = vcmask 457968
  %s1636 = scalar_lea.vmem %s1, 64
  %1637 = vst.msk [vmem:[%s1636] sm:$0xff] %vm1635, %v1634
  %s1638 = scalar_lea.vmem %s0, 11
  %v1639 = vld [vmem:[%s1638] sm:$0x1]
  %s1640 = scalar_lea.vmem %s0, 42
  %v1641 = vld [vmem:[%s1640] sm:$0x2]
  %vm1642 = vcmask 1041409
  %v1643 = vsel %vm1642, %v1641, %v1639
  %s1644 = scalar_lea.vmem %s0, 73
  %v1645 = vld [vmem:[%s1644] sm:$0x4]
  %vm1646 = vcmask 1042434
  %v1647 = vsel %vm1646, %v1645, %v1643
  %s1648 = scalar_lea.vmem %s0, 104
  %v1649 = vld [vmem:[%s1648] sm:$0x8]
  %vm1650 = vcmask 1043459
  %v1651 = vsel %vm1650, %v1649, %v1647
  %s1652 = scalar_lea.vmem %s0, 135
  %v1653 = vld [vmem:[%s1652] sm:$0x10]
  %vm1654 = vcmask 1044484
  %v1655 = vsel %vm1654, %v1653, %v1651
  %s1656 = scalar_lea.vmem %s0, 166
  %v1657 = vld [vmem:[%s1656] sm:$0x20]
  %vm1658 = vcmask 1045509
  %v1659 = vsel %vm1658, %v1657, %v1655
  %s1660 = scalar_lea.vmem %s0, 197
  %v1661 = vld [vmem:[%s1660] sm:$0x40]
  %vm1662 = vcmask 1046534
  %v1663 = vsel %vm1662, %v1661, %v1659
  %s1664 = scalar_lea.vmem %s0, 228
  %v1665 = vld [vmem:[%s1664] sm:$0x80]
  %vm1666 = vcmask 1047559
  %v1667 = vsel %vm1666, %v1665, %v1663
  %1668 = vrot.lane.b32.xlu0 %v1667, 30
  %v1669 = vpop.permute.xlu0 %1668
  %vm1670 = vcmask 457968
  %s1671 = scalar_lea.vmem %s1, 16
  %1672 = vst.msk [vmem:[%s1671] sm:$0xff] %vm1670, %v1669
  %s1673 = scalar_lea.vmem %s0, 6
  %v1674 = vld [vmem:[%s1673] sm:$0x1]
  %s1675 = scalar_lea.vmem %s0, 37
  %v1676 = vld [vmem:[%s1675] sm:$0x2]
  %vm1677 = vcmask 1041409
  %v1678 = vsel %vm1677, %v1676, %v1674
  %s1679 = scalar_lea.vmem %s0, 68
  %v1680 = vld [vmem:[%s1679] sm:$0x4]
  %vm1681 = vcmask 1042434
  %v1682 = vsel %vm1681, %v1680, %v1678
  %s1683 = scalar_lea.vmem %s0, 99
  %v1684 = vld [vmem:[%s1683] sm:$0x8]
  %vm1685 = vcmask 1043459
  %v1686 = vsel %vm1685, %v1684, %v1682
  %s1687 = scalar_lea.vmem %s0, 130
  %v1688 = vld [vmem:[%s1687] sm:$0x10]
  %vm1689 = vcmask 1044484
  %v1690 = vsel %vm1689, %v1688, %v1686
  %s1691 = scalar_lea.vmem %s0, 161
  %v1692 = vld [vmem:[%s1691] sm:$0x20]
  %vm1693 = vcmask 1045509
  %v1694 = vsel %vm1693, %v1692, %v1690
  %s1695 = scalar_lea.vmem %s0, 192
  %v1696 = vld [vmem:[%s1695] sm:$0x40]
  %vm1697 = vcmask 1046534
  %v1698 = vsel %vm1697, %v1696, %v1694
  %s1699 = scalar_lea.vmem %s0, 223
  %v1700 = vld [vmem:[%s1699] sm:$0x80]
  %vm1701 = vcmask 1047559
  %v1702 = vsel %vm1701, %v1700, %v1698
  %1703 = vrot.lane.b32.xlu0 %v1702, 28
  %v1704 = vpop.permute.xlu0 %1703
  %vm1705 = vcmask 441568
  %s1706 = scalar_lea.vmem %s1, 8
  %1707 = vst.msk [vmem:[%s1706] sm:$0xff] %vm1705, %v1704
  %s1708 = scalar_lea.vmem %s0, 262
  %v1709 = vld [vmem:[%s1708] sm:$0x1]
  %s1710 = scalar_lea.vmem %s0, 293
  %v1711 = vld [vmem:[%s1710] sm:$0x2]
  %vm1712 = vcmask 1041409
  %v1713 = vsel %vm1712, %v1711, %v1709
  %s1714 = scalar_lea.vmem %s0, 324
  %v1715 = vld [vmem:[%s1714] sm:$0x4]
  %vm1716 = vcmask 1042434
  %v1717 = vsel %vm1716, %v1715, %v1713
  %s1718 = scalar_lea.vmem %s0, 355
  %v1719 = vld [vmem:[%s1718] sm:$0x8]
  %vm1720 = vcmask 1043459
  %v1721 = vsel %vm1720, %v1719, %v1717
  %s1722 = scalar_lea.vmem %s0, 386
  %v1723 = vld [vmem:[%s1722] sm:$0x10]
  %vm1724 = vcmask 1044484
  %v1725 = vsel %vm1724, %v1723, %v1721
  %s1726 = scalar_lea.vmem %s0, 417
  %v1727 = vld [vmem:[%s1726] sm:$0x20]
  %vm1728 = vcmask 1045509
  %v1729 = vsel %vm1728, %v1727, %v1725
  %s1730 = scalar_lea.vmem %s0, 448
  %v1731 = vld [vmem:[%s1730] sm:$0x40]
  %vm1732 = vcmask 1046534
  %v1733 = vsel %vm1732, %v1731, %v1729
  %s1734 = scalar_lea.vmem %s0, 479
  %v1735 = vld [vmem:[%s1734] sm:$0x80]
  %vm1736 = vcmask 1047559
  %v1737 = vsel %vm1736, %v1735, %v1733
  %1738 = vrot.lane.b32.xlu0 %v1737, 28
  %v1739 = vpop.permute.xlu0 %1738
  %vm1740 = vcmask 441568
  %s1741 = scalar_lea.vmem %s1, 56
  %1742 = vst.msk [vmem:[%s1741] sm:$0xff] %vm1740, %v1739
  %s1743 = scalar_lea.vmem %s0, 1
  %v1744 = vld [vmem:[%s1743] sm:$0x1]
  %s1745 = scalar_lea.vmem %s0, 32
  %v1746 = vld [vmem:[%s1745] sm:$0x2]
  %vm1747 = vcmask 1041409
  %v1748 = vsel %vm1747, %v1746, %v1744
  %s1749 = scalar_lea.vmem %s0, 63
  %v1750 = vld [vmem:[%s1749] sm:$0x4]
  %vm1751 = vcmask 1042434
  %v1752 = vsel %vm1751, %v1750, %v1748
  %s1753 = scalar_lea.vmem %s0, 94
  %v1754 = vld [vmem:[%s1753] sm:$0x8]
  %vm1755 = vcmask 1043459
  %v1756 = vsel %vm1755, %v1754, %v1752
  %s1757 = scalar_lea.vmem %s0, 125
  %v1758 = vld [vmem:[%s1757] sm:$0x10]
  %vm1759 = vcmask 1044484
  %v1760 = vsel %vm1759, %v1758, %v1756
  %s1761 = scalar_lea.vmem %s0, 156
  %v1762 = vld [vmem:[%s1761] sm:$0x20]
  %vm1763 = vcmask 1045509
  %v1764 = vsel %vm1763, %v1762, %v1760
  %s1765 = scalar_lea.vmem %s0, 187
  %v1766 = vld [vmem:[%s1765] sm:$0x40]
  %vm1767 = vcmask 1046534
  %v1768 = vsel %vm1767, %v1766, %v1764
  %s1769 = scalar_lea.vmem %s0, 218
  %v1770 = vld [vmem:[%s1769] sm:$0x80]
  %vm1771 = vcmask 1047559
  %v1772 = vsel %vm1771, %v1770, %v1768
  %1773 = vrot.lane.b32.xlu0 %v1772, 26
  %v1774 = vpop.permute.xlu0 %1773
  %vm1775 = vcmask 425168
  %1776 = vst.msk [vmem:[%s1] sm:$0xff] %vm1775, %v1774
  %s1777 = scalar_lea.vmem %s0, 257
  %v1778 = vld [vmem:[%s1777] sm:$0x1]
  %s1779 = scalar_lea.vmem %s0, 288
  %v1780 = vld [vmem:[%s1779] sm:$0x2]
  %vm1781 = vcmask 1041409
  %v1782 = vsel %vm1781, %v1780, %v1778
  %s1783 = scalar_lea.vmem %s0, 319
  %v1784 = vld [vmem:[%s1783] sm:$0x4]
  %vm1785 = vcmask 1042434
  %v1786 = vsel %vm1785, %v1784, %v1782
  %s1787 = scalar_lea.vmem %s0, 350
  %v1788 = vld [vmem:[%s1787] sm:$0x8]
  %vm1789 = vcmask 1043459
  %v1790 = vsel %vm1789, %v1788, %v1786
  %s1791 = scalar_lea.vmem %s0, 381
  %v1792 = vld [vmem:[%s1791] sm:$0x10]
  %vm1793 = vcmask 1044484
  %v1794 = vsel %vm1793, %v1792, %v1790
  %s1795 = scalar_lea.vmem %s0, 412
  %v1796 = vld [vmem:[%s1795] sm:$0x20]
  %vm1797 = vcmask 1045509
  %v1798 = vsel %vm1797, %v1796, %v1794
  %s1799 = scalar_lea.vmem %s0, 443
  %v1800 = vld [vmem:[%s1799] sm:$0x40]
  %vm1801 = vcmask 1046534
  %v1802 = vsel %vm1801, %v1800, %v1798
  %s1803 = scalar_lea.vmem %s0, 474
  %v1804 = vld [vmem:[%s1803] sm:$0x80]
  %vm1805 = vcmask 1047559
  %v1806 = vsel %vm1805, %v1804, %v1802
  %1807 = vrot.lane.b32.xlu0 %v1806, 26
  %v1808 = vpop.permute.xlu0 %1807
  %vm1809 = vcmask 425168
  %s1810 = scalar_lea.vmem %s1, 48
  %1811 = vst.msk [vmem:[%s1810] sm:$0xff] %vm1809, %v1808
  %s1812 = scalar_lea.vmem %s0, 25
  %v1813 = vld [vmem:[%s1812] sm:$0x1]
  %s1814 = scalar_lea.vmem %s0, 56
  %v1815 = vld [vmem:[%s1814] sm:$0x2]
  %vm1816 = vcmask 1041409
  %v1817 = vsel %vm1816, %v1815, %v1813
  %s1818 = scalar_lea.vmem %s0, 87
  %v1819 = vld [vmem:[%s1818] sm:$0x4]
  %vm1820 = vcmask 1042434
  %v1821 = vsel %vm1820, %v1819, %v1817
  %s1822 = scalar_lea.vmem %s0, 118
  %v1823 = vld [vmem:[%s1822] sm:$0x8]
  %vm1824 = vcmask 1043459
  %v1825 = vsel %vm1824, %v1823, %v1821
  %s1826 = scalar_lea.vmem %s0, 149
  %v1827 = vld [vmem:[%s1826] sm:$0x10]
  %vm1828 = vcmask 1044484
  %v1829 = vsel %vm1828, %v1827, %v1825
  %s1830 = scalar_lea.vmem %s0, 180
  %v1831 = vld [vmem:[%s1830] sm:$0x20]
  %vm1832 = vcmask 1045509
  %v1833 = vsel %vm1832, %v1831, %v1829
  %s1834 = scalar_lea.vmem %s0, 211
  %v1835 = vld [vmem:[%s1834] sm:$0x40]
  %vm1836 = vcmask 1046534
  %v1837 = vsel %vm1836, %v1835, %v1833
  %s1838 = scalar_lea.vmem %s0, 242
  %v1839 = vld [vmem:[%s1838] sm:$0x80]
  %vm1840 = vcmask 1047559
  %v1841 = vsel %vm1840, %v1839, %v1837
  %1842 = vrot.lane.b32.xlu0 %v1841, 10
  %v1843 = vpop.permute.xlu0 %1842
  %vm1844 = vcmask 293968
  %s1845 = scalar_lea.vmem %s1, 40
  %1846 = vst.msk [vmem:[%s1845] sm:$0xff] %vm1844, %v1843
  %s1847 = scalar_lea.vmem %s0, 281
  %v1848 = vld [vmem:[%s1847] sm:$0x1]
  %s1849 = scalar_lea.vmem %s0, 312
  %v1850 = vld [vmem:[%s1849] sm:$0x2]
  %vm1851 = vcmask 1041409
  %v1852 = vsel %vm1851, %v1850, %v1848
  %s1853 = scalar_lea.vmem %s0, 343
  %v1854 = vld [vmem:[%s1853] sm:$0x4]
  %vm1855 = vcmask 1042434
  %v1856 = vsel %vm1855, %v1854, %v1852
  %s1857 = scalar_lea.vmem %s0, 374
  %v1858 = vld [vmem:[%s1857] sm:$0x8]
  %vm1859 = vcmask 1043459
  %v1860 = vsel %vm1859, %v1858, %v1856
  %s1861 = scalar_lea.vmem %s0, 405
  %v1862 = vld [vmem:[%s1861] sm:$0x10]
  %vm1863 = vcmask 1044484
  %v1864 = vsel %vm1863, %v1862, %v1860
  %s1865 = scalar_lea.vmem %s0, 436
  %v1866 = vld [vmem:[%s1865] sm:$0x20]
  %vm1867 = vcmask 1045509
  %v1868 = vsel %vm1867, %v1866, %v1864
  %s1869 = scalar_lea.vmem %s0, 467
  %v1870 = vld [vmem:[%s1869] sm:$0x40]
  %vm1871 = vcmask 1046534
  %v1872 = vsel %vm1871, %v1870, %v1868
  %s1873 = scalar_lea.vmem %s0, 498
  %v1874 = vld [vmem:[%s1873] sm:$0x80]
  %vm1875 = vcmask 1047559
  %v1876 = vsel %vm1875, %v1874, %v1872
  %1877 = vrot.lane.b32.xlu0 %v1876, 10
  %v1878 = vpop.permute.xlu0 %1877
  %vm1879 = vcmask 293968
  %s1880 = scalar_lea.vmem %s1, 88
  %1881 = vst.msk [vmem:[%s1880] sm:$0xff] %vm1879, %v1878
  %s1882 = scalar_lea.vmem %s0, 20
  %v1883 = vld [vmem:[%s1882] sm:$0x1]
  %s1884 = scalar_lea.vmem %s0, 51
  %v1885 = vld [vmem:[%s1884] sm:$0x2]
  %vm1886 = vcmask 1041409
  %v1887 = vsel %vm1886, %v1885, %v1883
  %s1888 = scalar_lea.vmem %s0, 82
  %v1889 = vld [vmem:[%s1888] sm:$0x4]
  %vm1890 = vcmask 1042434
  %v1891 = vsel %vm1890, %v1889, %v1887
  %s1892 = scalar_lea.vmem %s0, 113
  %v1893 = vld [vmem:[%s1892] sm:$0x8]
  %vm1894 = vcmask 1043459
  %v1895 = vsel %vm1894, %v1893, %v1891
  %s1896 = scalar_lea.vmem %s0, 144
  %v1897 = vld [vmem:[%s1896] sm:$0x10]
  %vm1898 = vcmask 1044484
  %v1899 = vsel %vm1898, %v1897, %v1895
  %s1900 = scalar_lea.vmem %s0, 175
  %v1901 = vld [vmem:[%s1900] sm:$0x20]
  %vm1902 = vcmask 1045509
  %v1903 = vsel %vm1902, %v1901, %v1899
  %s1904 = scalar_lea.vmem %s0, 206
  %v1905 = vld [vmem:[%s1904] sm:$0x40]
  %vm1906 = vcmask 1046534
  %v1907 = vsel %vm1906, %v1905, %v1903
  %s1908 = scalar_lea.vmem %s0, 237
  %v1909 = vld [vmem:[%s1908] sm:$0x80]
  %vm1910 = vcmask 1047559
  %v1911 = vsel %vm1910, %v1909, %v1907
  %1912 = vrot.lane.b32.xlu0 %v1911, 8
  %v1913 = vpop.permute.xlu0 %1912
  %vm1914 = vcmask 277568
  %s1915 = scalar_lea.vmem %s1, 32
  %1916 = vst.msk [vmem:[%s1915] sm:$0xff] %vm1914, %v1913
  %s1917 = scalar_lea.vmem %s0, 276
  %v1918 = vld [vmem:[%s1917] sm:$0x1]
  %s1919 = scalar_lea.vmem %s0, 307
  %v1920 = vld [vmem:[%s1919] sm:$0x2]
  %vm1921 = vcmask 1041409
  %v1922 = vsel %vm1921, %v1920, %v1918
  %s1923 = scalar_lea.vmem %s0, 338
  %v1924 = vld [vmem:[%s1923] sm:$0x4]
  %vm1925 = vcmask 1042434
  %v1926 = vsel %vm1925, %v1924, %v1922
  %s1927 = scalar_lea.vmem %s0, 369
  %v1928 = vld [vmem:[%s1927] sm:$0x8]
  %vm1929 = vcmask 1043459
  %v1930 = vsel %vm1929, %v1928, %v1926
  %s1931 = scalar_lea.vmem %s0, 400
  %v1932 = vld [vmem:[%s1931] sm:$0x10]
  %vm1933 = vcmask 1044484
  %v1934 = vsel %vm1933, %v1932, %v1930
  %s1935 = scalar_lea.vmem %s0, 431
  %v1936 = vld [vmem:[%s1935] sm:$0x20]
  %vm1937 = vcmask 1045509
  %v1938 = vsel %vm1937, %v1936, %v1934
  %s1939 = scalar_lea.vmem %s0, 462
  %v1940 = vld [vmem:[%s1939] sm:$0x40]
  %vm1941 = vcmask 1046534
  %v1942 = vsel %vm1941, %v1940, %v1938
  %s1943 = scalar_lea.vmem %s0, 493
  %v1944 = vld [vmem:[%s1943] sm:$0x80]
  %vm1945 = vcmask 1047559
  %v1946 = vsel %vm1945, %v1944, %v1942
  %1947 = vrot.lane.b32.xlu0 %v1946, 8
  %v1948 = vpop.permute.xlu0 %1947
  %vm1949 = vcmask 277568
  %s1950 = scalar_lea.vmem %s1, 80
  %1951 = vst.msk [vmem:[%s1950] sm:$0xff] %vm1949, %v1948
  %s1952 = scalar_lea.vmem %s0, 271
  %v1953 = vld [vmem:[%s1952] sm:$0x1]
  %s1954 = scalar_lea.vmem %s0, 302
  %v1955 = vld [vmem:[%s1954] sm:$0x2]
  %vm1956 = vcmask 1041409
  %v1957 = vsel %vm1956, %v1955, %v1953
  %s1958 = scalar_lea.vmem %s0, 333
  %v1959 = vld [vmem:[%s1958] sm:$0x4]
  %vm1960 = vcmask 1042434
  %v1961 = vsel %vm1960, %v1959, %v1957
  %s1962 = scalar_lea.vmem %s0, 364
  %v1963 = vld [vmem:[%s1962] sm:$0x8]
  %vm1964 = vcmask 1043459
  %v1965 = vsel %vm1964, %v1963, %v1961
  %s1966 = scalar_lea.vmem %s0, 395
  %v1967 = vld [vmem:[%s1966] sm:$0x10]
  %vm1968 = vcmask 1044484
  %v1969 = vsel %vm1968, %v1967, %v1965
  %s1970 = scalar_lea.vmem %s0, 426
  %v1971 = vld [vmem:[%s1970] sm:$0x20]
  %vm1972 = vcmask 1045509
  %v1973 = vsel %vm1972, %v1971, %v1969
  %s1974 = scalar_lea.vmem %s0, 457
  %v1975 = vld [vmem:[%s1974] sm:$0x40]
  %vm1976 = vcmask 1046534
  %v1977 = vsel %vm1976, %v1975, %v1973
  %s1978 = scalar_lea.vmem %s0, 488
  %v1979 = vld [vmem:[%s1978] sm:$0x80]
  %vm1980 = vcmask 1047559
  %v1981 = vsel %vm1980, %v1979, %v1977
  %1982 = vrot.lane.b32.xlu0 %v1981, 6
  %v1983 = vpop.permute.xlu0 %1982
  %vm1984 = vcmask 261168
  %s1985 = scalar_lea.vmem %s1, 72
  %1986 = vst.msk [vmem:[%s1985] sm:$0xff] %vm1984, %v1983
  %s1987 = scalar_lea.vmem %s0, 15
  %v1988 = vld [vmem:[%s1987] sm:$0x1]
  %s1989 = scalar_lea.vmem %s0, 46
  %v1990 = vld [vmem:[%s1989] sm:$0x2]
  %vm1991 = vcmask 1041409
  %v1992 = vsel %vm1991, %v1990, %v1988
  %s1993 = scalar_lea.vmem %s0, 77
  %v1994 = vld [vmem:[%s1993] sm:$0x4]
  %vm1995 = vcmask 1042434
  %v1996 = vsel %vm1995, %v1994, %v1992
  %s1997 = scalar_lea.vmem %s0, 108
  %v1998 = vld [vmem:[%s1997] sm:$0x8]
  %vm1999 = vcmask 1043459
  %v2000 = vsel %vm1999, %v1998, %v1996
  %s2001 = scalar_lea.vmem %s0, 139
  %v2002 = vld [vmem:[%s2001] sm:$0x10]
  %vm2003 = vcmask 1044484
  %v2004 = vsel %vm2003, %v2002, %v2000
  %s2005 = scalar_lea.vmem %s0, 170
  %v2006 = vld [vmem:[%s2005] sm:$0x20]
  %vm2007 = vcmask 1045509
  %v2008 = vsel %vm2007, %v2006, %v2004
  %s2009 = scalar_lea.vmem %s0, 201
  %v2010 = vld [vmem:[%s2009] sm:$0x40]
  %vm2011 = vcmask 1046534
  %v2012 = vsel %vm2011, %v2010, %v2008
  %s2013 = scalar_lea.vmem %s0, 232
  %v2014 = vld [vmem:[%s2013] sm:$0x80]
  %vm2015 = vcmask 1047559
  %v2016 = vsel %vm2015, %v2014, %v2012
  %2017 = vrot.lane.b32.xlu0 %v2016, 6
  %v2018 = vpop.permute.xlu0 %2017
  %vm2019 = vcmask 261168
  %s2020 = scalar_lea.vmem %s1, 24
  %2021 = vst.msk [vmem:[%s2020] sm:$0xff] %vm2019, %v2018
  %s2022 = scalar_lea.vmem %s0, 266
  %v2023 = vld [vmem:[%s2022] sm:$0x1]
  %s2024 = scalar_lea.vmem %s0, 297
  %v2025 = vld [vmem:[%s2024] sm:$0x2]
  %vm2026 = vcmask 1041409
  %v2027 = vsel %vm2026, %v2025, %v2023
  %s2028 = scalar_lea.vmem %s0, 328
  %v2029 = vld [vmem:[%s2028] sm:$0x4]
  %vm2030 = vcmask 1042434
  %v2031 = vsel %vm2030, %v2029, %v2027
  %s2032 = scalar_lea.vmem %s0, 359
  %v2033 = vld [vmem:[%s2032] sm:$0x8]
  %vm2034 = vcmask 1043459
  %v2035 = vsel %vm2034, %v2033, %v2031
  %s2036 = scalar_lea.vmem %s0, 390
  %v2037 = vld [vmem:[%s2036] sm:$0x10]
  %vm2038 = vcmask 1044484
  %v2039 = vsel %vm2038, %v2037, %v2035
  %s2040 = scalar_lea.vmem %s0, 421
  %v2041 = vld [vmem:[%s2040] sm:$0x20]
  %vm2042 = vcmask 1045509
  %v2043 = vsel %vm2042, %v2041, %v2039
  %s2044 = scalar_lea.vmem %s0, 452
  %v2045 = vld [vmem:[%s2044] sm:$0x40]
  %vm2046 = vcmask 1046534
  %v2047 = vsel %vm2046, %v2045, %v2043
  %s2048 = scalar_lea.vmem %s0, 483
  %v2049 = vld [vmem:[%s2048] sm:$0x80]
  %vm2050 = vcmask 1047559
  %v2051 = vsel %vm2050, %v2049, %v2047
  %2052 = vrot.lane.b32.xlu0 %v2051, 4
  %v2053 = vpop.permute.xlu0 %2052
  %vm2054 = vcmask 244768
  %s2055 = scalar_lea.vmem %s1, 64
  %2056 = vst.msk [vmem:[%s2055] sm:$0xff] %vm2054, %v2053
  %s2057 = scalar_lea.vmem %s0, 10
  %v2058 = vld [vmem:[%s2057] sm:$0x1]
  %s2059 = scalar_lea.vmem %s0, 41
  %v2060 = vld [vmem:[%s2059] sm:$0x2]
  %vm2061 = vcmask 1041409
  %v2062 = vsel %vm2061, %v2060, %v2058
  %s2063 = scalar_lea.vmem %s0, 72
  %v2064 = vld [vmem:[%s2063] sm:$0x4]
  %vm2065 = vcmask 1042434
  %v2066 = vsel %vm2065, %v2064, %v2062
  %s2067 = scalar_lea.vmem %s0, 103
  %v2068 = vld [vmem:[%s2067] sm:$0x8]
  %vm2069 = vcmask 1043459
  %v2070 = vsel %vm2069, %v2068, %v2066
  %s2071 = scalar_lea.vmem %s0, 134
  %v2072 = vld [vmem:[%s2071] sm:$0x10]
  %vm2073 = vcmask 1044484
  %v2074 = vsel %vm2073, %v2072, %v2070
  %s2075 = scalar_lea.vmem %s0, 165
  %v2076 = vld [vmem:[%s2075] sm:$0x20]
  %vm2077 = vcmask 1045509
  %v2078 = vsel %vm2077, %v2076, %v2074
  %s2079 = scalar_lea.vmem %s0, 196
  %v2080 = vld [vmem:[%s2079] sm:$0x40]
  %vm2081 = vcmask 1046534
  %v2082 = vsel %vm2081, %v2080, %v2078
  %s2083 = scalar_lea.vmem %s0, 227
  %v2084 = vld [vmem:[%s2083] sm:$0x80]
  %vm2085 = vcmask 1047559
  %v2086 = vsel %vm2085, %v2084, %v2082
  %2087 = vrot.lane.b32.xlu0 %v2086, 4
  %v2088 = vpop.permute.xlu0 %2087
  %vm2089 = vcmask 244768
  %s2090 = scalar_lea.vmem %s1, 16
  %2091 = vst.msk [vmem:[%s2090] sm:$0xff] %vm2089, %v2088
  %s2092 = scalar_lea.vmem %s0, 5
  %v2093 = vld [vmem:[%s2092] sm:$0x1]
  %s2094 = scalar_lea.vmem %s0, 36
  %v2095 = vld [vmem:[%s2094] sm:$0x2]
  %vm2096 = vcmask 1041409
  %v2097 = vsel %vm2096, %v2095, %v2093
  %s2098 = scalar_lea.vmem %s0, 67
  %v2099 = vld [vmem:[%s2098] sm:$0x4]
  %vm2100 = vcmask 1042434
  %v2101 = vsel %vm2100, %v2099, %v2097
  %s2102 = scalar_lea.vmem %s0, 98
  %v2103 = vld [vmem:[%s2102] sm:$0x8]
  %vm2104 = vcmask 1043459
  %v2105 = vsel %vm2104, %v2103, %v2101
  %s2106 = scalar_lea.vmem %s0, 129
  %v2107 = vld [vmem:[%s2106] sm:$0x10]
  %vm2108 = vcmask 1044484
  %v2109 = vsel %vm2108, %v2107, %v2105
  %s2110 = scalar_lea.vmem %s0, 160
  %v2111 = vld [vmem:[%s2110] sm:$0x20]
  %vm2112 = vcmask 1045509
  %v2113 = vsel %vm2112, %v2111, %v2109
  %s2114 = scalar_lea.vmem %s0, 191
  %v2115 = vld [vmem:[%s2114] sm:$0x40]
  %vm2116 = vcmask 1046534
  %v2117 = vsel %vm2116, %v2115, %v2113
  %s2118 = scalar_lea.vmem %s0, 222
  %v2119 = vld [vmem:[%s2118] sm:$0x80]
  %vm2120 = vcmask 1047559
  %v2121 = vsel %vm2120, %v2119, %v2117
  %2122 = vrot.lane.b32.xlu0 %v2121, 2
  %v2123 = vpop.permute.xlu0 %2122
  %vm2124 = vcmask 228368
  %s2125 = scalar_lea.vmem %s1, 8
  %2126 = vst.msk [vmem:[%s2125] sm:$0xff] %vm2124, %v2123
  %s2127 = scalar_lea.vmem %s0, 261
  %v2128 = vld [vmem:[%s2127] sm:$0x1]
  %s2129 = scalar_lea.vmem %s0, 292
  %v2130 = vld [vmem:[%s2129] sm:$0x2]
  %vm2131 = vcmask 1041409
  %v2132 = vsel %vm2131, %v2130, %v2128
  %s2133 = scalar_lea.vmem %s0, 323
  %v2134 = vld [vmem:[%s2133] sm:$0x4]
  %vm2135 = vcmask 1042434
  %v2136 = vsel %vm2135, %v2134, %v2132
  %s2137 = scalar_lea.vmem %s0, 354
  %v2138 = vld [vmem:[%s2137] sm:$0x8]
  %vm2139 = vcmask 1043459
  %v2140 = vsel %vm2139, %v2138, %v2136
  %s2141 = scalar_lea.vmem %s0, 385
  %v2142 = vld [vmem:[%s2141] sm:$0x10]
  %vm2143 = vcmask 1044484
  %v2144 = vsel %vm2143, %v2142, %v2140
  %s2145 = scalar_lea.vmem %s0, 416
  %v2146 = vld [vmem:[%s2145] sm:$0x20]
  %vm2147 = vcmask 1045509
  %v2148 = vsel %vm2147, %v2146, %v2144
  %s2149 = scalar_lea.vmem %s0, 447
  %v2150 = vld [vmem:[%s2149] sm:$0x40]
  %vm2151 = vcmask 1046534
  %v2152 = vsel %vm2151, %v2150, %v2148
  %s2153 = scalar_lea.vmem %s0, 478
  %v2154 = vld [vmem:[%s2153] sm:$0x80]
  %vm2155 = vcmask 1047559
  %v2156 = vsel %vm2155, %v2154, %v2152
  %2157 = vrot.lane.b32.xlu0 %v2156, 2
  %v2158 = vpop.permute.xlu0 %2157
  %vm2159 = vcmask 228368
  %s2160 = scalar_lea.vmem %s1, 56
  %2161 = vst.msk [vmem:[%s2160] sm:$0xff] %vm2159, %v2158

// kernel: convnet_forward.1
$region0: #{convnet_forward.1}
  #allocation0 [shape = 'u32[]', space=smem, size = 0x4, offset = 0x4, fixed_abs, tag = 'smem constant byte address 0x4 - core index']
  #allocation1 [shape = 'u32[144,128]{1,0:T(1,128)}', space=vmem, size = 0x12000, scoped, tag = 'internal scratch']
  %s0 = inlined_call_operand.vmem [shape: f32[16,676], index: 0, kind: input, shape index: {}]
  %s1 = inlined_call_operand.hbm [shape: bf16[676,2304], index: 1, kind: input, shape index: {}]
  %s2 = inlined_call_operand.hbm [shape: f32[1,256], index: 2, kind: input, shape index: {}]
  %s3 = inlined_call_operand.hbm [shape: bf16[256,128], index: 3, kind: input, shape index: {}]
  %s4 = inlined_call_operand.hbm [shape: f32[1,128], index: 4, kind: input, shape index: {}]
  %s5 = inlined_call_operand.hbm [shape: f32[16,128], index: 5, kind: output, shape index: {}]
  %s6 = sld [smem:[#allocation0]]
  $region69: #{convnet_forward.1} parent=0
    _
  %s8 = ssub.s32 1, %s6
  %s9 = scalar_select 0, %s8, %s6
  $region1: #{convnet_forward.1} parent=0
    #allocation2 [shape = 'u8[3133440]{0}', space=vmem, size = 0x2fd000, scoped, tag = 'input window, operand 1, single buffered']
    #allocation3 [shape = 's32[2]{0}', space=sflag, size = 0x8, scoped, tag = 'scoped memory for convnet_forward.1']
    #allocation4 [shape = 's32[2]{0}', space=sflag, size = 0x8, scoped, tag = 'scoped memory for convnet_forward.1']
    #allocation5 [shape = 'u8[1024]{0}', space=vmem, size = 0x400, scoped, tag = 'input window, operand 2, single buffered']
    #allocation6 [shape = 's32[1]{0}', space=sflag, size = 0x4, scoped, tag = 'scoped memory for convnet_forward.1']
    #allocation7 [shape = 'u8[65536]{0}', space=vmem, size = 0x10000, scoped, tag = 'input window, operand 3, single buffered']
    #allocation8 [shape = 'u8[512]{0}', space=vmem, size = 0x400, scoped, tag = 'input window, operand 4, single buffered']
    #allocation9 [shape = 's32[1]{0}', space=sflag, size = 0x4, scoped, tag = 'scoped memory for convnet_forward.1']
    #allocation10 [shape = 'u8[8192]{0}', space=vmem, size = 0x2000, scoped, tag = 'output window, operand 0']
    %10 = vsyncpa [#allocation3], 0
    %11 = vsyncpa [#allocation6], 0
    %12 = vsyncpa [#allocation9], 0
    %13 = vsyncpa [#allocation4], 0
    %s14 = scalar_lea.sflag [#allocation4], 1
    %15 = vsyncpa %s14, 0
    loop: start=0, step=1, limit=4
    $region2: #{convnet_forward.1} parent=1 // loop_pre_header
      _
    $region3: #{convnet_forward.1} parent=1 // loop_header
      %s17 = sphi 0, %s21
      %p18 = scmp.ge.s32.totalorder %s17, 4
      %s27 = sphi 0, %s29
      %s30 = sphi 0, %s27
      %s31 = sphi 0, %s30
      %s47 = sphi 0, %s31
      %s51 = sphi 0, %s51
      %s53 = sphi 0, %s51
      %s54 = sphi 0, %s53
      %s68 = sphi 0, %s54
      %s72 = sphi 0, %s72
      %s74 = sphi 0, %s72
      %s75 = sphi 0, %s74
      %s89 = sphi 0, %s75
      %s93 = sphi 0, %s93
      %s95 = sphi 0, %s93
      %s96 = sphi 0, %s95
      %s110 = sphi 0, %s96
      %s114 = sphi 0, %s114
      %s116 = sphi 0, %s114
      %s117 = sphi 0, %s116
      %s131 = sphi 0, %s117
      %s137 = sphi 0, %s139
      %s140 = sphi 0, %s137
      %s141 = sphi 0, %s140
      %s157 = sphi 0, %s141
    $region4: #{convnet_forward.1} parent=1 // loop_header_branch
      %20 = sbr.rel (%p18) target = $region8
    $region5: #{convnet_forward.1} parent=1 // loop_body
      %s22 = ssub.s32 %s17, 1
      %s23 = ssub.s32 %s17, 2
      %s24 = sadd.s32 %s17, 1
      %s25 = ssub.s32 %s17, %s24
      %p26 = scmp.eq.s32.totalorder %s25, 0
      %s28 = sadd.s32 %s27, 1
      %s29 = scalar_select %p26, %s27, %s28
      %p32 = pneg %p26
      %p33 = scmp.eq.s32.totalorder %s17, 1
      %p34 = por %p32, %p33
      %p35 = scmp.ne.s32.totalorder %s27, %s30
      %p36 = scmp.eq.s32.totalorder %s17, 0
      %p37 = por %p35, %p36
      %p38 = scmp.ne.s32.totalorder %s27, %s30
      %p39 = scmp.eq.s32.totalorder %s22, 1
      %p40 = por %p38, %p39
      %p41 = scmp.ne.s32.totalorder %s30, %s31
      %p42 = scmp.eq.s32.totalorder %s22, 0
      %p43 = por %p41, %p42
      %p44 = scmp.ne.s32.totalorder %s30, %s31
      %p45 = scmp.eq.s32.totalorder %s23, 1
      %p46 = por %p44, %p45
      %p48 = scmp.ne.s32.totalorder %s31, %s47
      %p49 = scmp.eq.s32.totalorder %s23, 0
      %p50 = por %p48, %p49
      %s52 = sadd.s32 %s51, 1
      %p55 = scmp.eq.s32.totalorder %s17, 1
      %p56 = scmp.ne.s32.totalorder %s51, %s53
      %p57 = scmp.eq.s32.totalorder %s17, 0
      %p58 = por %p56, %p57
      %p59 = scmp.ne.s32.totalorder %s51, %s53
      %p60 = scmp.eq.s32.totalorder %s22, 1
      %p61 = por %p59, %p60
      %p62 = scmp.ne.s32.totalorder %s53, %s54
      %p63 = scmp.eq.s32.totalorder %s22, 0
      %p64 = por %p62, %p63
      %p65 = scmp.ne.s32.totalorder %s53, %s54
      %p66 = scmp.eq.s32.totalorder %s23, 1
      %p67 = por %p65, %p66
      %p69 = scmp.ne.s32.totalorder %s54, %s68
      %p70 = scmp.eq.s32.totalorder %s23, 0
      %p71 = por %p69, %p70
      %s73 = sadd.s32 %s72, 1
      %p76 = scmp.eq.s32.totalorder %s17, 1
      %p77 = scmp.ne.s32.totalorder %s72, %s74
      %p78 = scmp.eq.s32.totalorder %s17, 0
      %p79 = por %p77, %p78
      %p80 = scmp.ne.s32.totalorder %s72, %s74
      %p81 = scmp.eq.s32.totalorder %s22, 1
      %p82 = por %p80, %p81
      %p83 = scmp.ne.s32.totalorder %s74, %s75
      %p84 = scmp.eq.s32.totalorder %s22, 0
      %p85 = por %p83, %p84
      %p86 = scmp.ne.s32.totalorder %s74, %s75
      %p87 = scmp.eq.s32.totalorder %s23, 1
      %p88 = por %p86, %p87
      %p90 = scmp.ne.s32.totalorder %s75, %s89
      %p91 = scmp.eq.s32.totalorder %s23, 0
      %p92 = por %p90, %p91
      %s94 = sadd.s32 %s93, 1
      %p97 = scmp.eq.s32.totalorder %s17, 1
      %p98 = scmp.ne.s32.totalorder %s93, %s95
      %p99 = scmp.eq.s32.totalorder %s17, 0
      %p100 = por %p98, %p99
      %p101 = scmp.ne.s32.totalorder %s93, %s95
      %p102 = scmp.eq.s32.totalorder %s22, 1
      %p103 = por %p101, %p102
      %p104 = scmp.ne.s32.totalorder %s95, %s96
      %p105 = scmp.eq.s32.totalorder %s22, 0
      %p106 = por %p104, %p105
      %p107 = scmp.ne.s32.totalorder %s95, %s96
      %p108 = scmp.eq.s32.totalorder %s23, 1
      %p109 = por %p107, %p108
      %p111 = scmp.ne.s32.totalorder %s96, %s110
      %p112 = scmp.eq.s32.totalorder %s23, 0
      %p113 = por %p111, %p112
      %s115 = sadd.s32 %s114, 1
      %p118 = scmp.eq.s32.totalorder %s17, 1
      %p119 = scmp.ne.s32.totalorder %s114, %s116
      %p120 = scmp.eq.s32.totalorder %s17, 0
      %p121 = por %p119, %p120
      %p122 = scmp.ne.s32.totalorder %s114, %s116
      %p123 = scmp.eq.s32.totalorder %s22, 1
      %p124 = por %p122, %p123
      %p125 = scmp.ne.s32.totalorder %s116, %s117
      %p126 = scmp.eq.s32.totalorder %s22, 0
      %p127 = por %p125, %p126
      %p128 = scmp.ne.s32.totalorder %s116, %s117
      %p129 = scmp.eq.s32.totalorder %s23, 1
      %p130 = por %p128, %p129
      %p132 = scmp.ne.s32.totalorder %s117, %s131
      %p133 = scmp.eq.s32.totalorder %s23, 0
      %p134 = por %p132, %p133
      %s135 = ssub.s32 %s17, %s24
      %p136 = scmp.eq.s32.totalorder %s135, 0
      %s138 = sadd.s32 %s137, 1
      %s139 = scalar_select %p136, %s137, %s138
      %p142 = pneg %p136
      %p143 = scmp.eq.s32.totalorder %s17, 1
      %p144 = por %p142, %p143
      %p145 = scmp.ne.s32.totalorder %s137, %s140
      %p146 = scmp.eq.s32.totalorder %s17, 0
      %p147 = por %p145, %p146
      %p148 = scmp.ne.s32.totalorder %s137, %s140
      %p149 = scmp.eq.s32.totalorder %s22, 1
      %p150 = por %p148, %p149
      %p151 = scmp.ne.s32.totalorder %s140, %s141
      %p152 = scmp.eq.s32.totalorder %s22, 0
      %p153 = por %p151, %p152
      %p154 = scmp.ne.s32.totalorder %s140, %s141
      %p155 = scmp.eq.s32.totalorder %s23, 1
      %p156 = por %p154, %p155
      %p158 = scmp.ne.s32.totalorder %s141, %s157
      %p159 = scmp.eq.s32.totalorder %s23, 0
      %p160 = por %p158, %p159
      %p161 = scmp.le.s32.totalorder 1, %s17
      %p162 = scmp.lt.s32.totalorder %s17, 3
      %p163 = pnand %p161, %p162
      %p164 = pneg %p163
      // Predicated region
      $region9: #{convnet_forward.1} parent=5 // pred_check
        _
      $region10: #{convnet_forward.1} parent=5 // pred_check_branch
        %166 = sbr.rel (%p163) target = $region12
      $region11: #{convnet_forward.1} parent=5 // pred_region
        %s167 = ssub.s32 %s17, 1
        // Predicated region
        $region13: #{convnet_forward.1} parent=11 // pred_check
          %p168 = pneg %p64
        $region14: #{convnet_forward.1} parent=11 // pred_check_branch
          %170 = sbr.rel (%p168) target = $region16
        $region15: #{convnet_forward.1} parent=11 // pred_region
          %s172 = ssub.s32 97920, 97920
          %173 = vsyncadd [#allocation3], %s172
          %s174 = sshll.u32 [#allocation2], 4
          %s175 = int_to_ptr.vmem [resolvable:$true] %s174
          %180 = dma.hbm_to_vmem [thread:$0]  %s1, 97920, %s175, [#allocation3], 1152, 1152, 72
        $region16: #{convnet_forward.1} parent=11 // pred_fallthru
          _
        // Predicated region
        $region17: #{convnet_forward.1} parent=11 // pred_check
          %p181 = pneg %p85
        $region18: #{convnet_forward.1} parent=11 // pred_check_branch
          %183 = sbr.rel (%p181) target = $region20
        $region19: #{convnet_forward.1} parent=11 // pred_region
          %s185 = ssub.s32 32, 32
          %186 = vsyncadd [#allocation6], %s185
          %s188 = sshll.u32 [#allocation5], 4
          %s189 = int_to_ptr.vmem [resolvable:$true] %s188
          %191 = dma.hbm_to_vmem [thread:$0]  %s2, 32, %s189, [#allocation6]
        $region20: #{convnet_forward.1} parent=11 // pred_fallthru
          _
        // Predicated region
        $region21: #{convnet_forward.1} parent=11 // pred_check
          %p192 = pneg %p106
        $region22: #{convnet_forward.1} parent=11 // pred_check_branch
          %194 = sbr.rel (%p192) target = $region24
        $region23: #{convnet_forward.1} parent=11 // pred_region
          %s196 = ssub.s32 2048, 2048
          %197 = vsyncadd [#allocation6], %s196
          %s198 = sshll.u32 [#allocation7], 4
          %s199 = int_to_ptr.vmem [resolvable:$true] %s198
          %204 = dma.hbm_to_vmem [thread:$0]  %s3, 2048, %s199, [#allocation6], 64, 64, 4
        $region24: #{convnet_forward.1} parent=11 // pred_fallthru
          _
        // Predicated region
        $region25: #{convnet_forward.1} parent=11 // pred_check
          %p205 = pneg %p127
        $region26: #{convnet_forward.1} parent=11 // pred_check_branch
          %207 = sbr.rel (%p205) target = $region28
        $region27: #{convnet_forward.1} parent=11 // pred_region
          %s209 = ssub.s32 16, 16
          %210 = vsyncadd [#allocation9], %s209
          %s212 = sshll.u32 [#allocation8], 4
          %s213 = int_to_ptr.vmem [resolvable:$true] %s212
          %215 = dma.hbm_to_vmem [thread:$0]  %s4, 16, %s213, [#allocation9]
        $region28: #{convnet_forward.1} parent=11 // pred_fallthru
          _
      $region12: #{convnet_forward.1} parent=5 // pred_fallthru
        _
      %p216 = scmp.lt.s32.totalorder %s17, 2
      // Predicated region
      $region29: #{convnet_forward.1} parent=5 // pred_check
        %p217 = pneg %p216
      $region30: #{convnet_forward.1} parent=5 // pred_check_branch
        %219 = sbr.rel (%p217) target = $region32
      $region31: #{convnet_forward.1} parent=5 // pred_region
        // Predicated region
        $region33: #{convnet_forward.1} parent=31 // pred_check
          %p220 = pneg %p37
        $region34: #{convnet_forward.1} parent=31 // pred_check_branch
          %222 = sbr.rel (%p220) target = $region36
        $region35: #{convnet_forward.1} parent=31 // pred_region
          %p223 = scmp.lt.s32.totalorder %s17, 1
          %s224 = scalar_select %p223, %s17, 1
          %s225 = smul.addr %s224, 6
          %s226 = smul.addr %s225, 8
          %s227 = scalar_lea.vmem %s0, %s226
        $region36: #{convnet_forward.1} parent=31 // pred_fallthru
          _
      $region32: #{convnet_forward.1} parent=5 // pred_fallthru
        _
      %p228 = scmp.le.s32.totalorder 1, %s17
      %p229 = scmp.lt.s32.totalorder %s17, 3
      %p230 = pnand %p228, %p229
      %p231 = pneg %p230
      // Predicated region
      $region37: #{convnet_forward.1} parent=5 // pred_check
        _
      $region38: #{convnet_forward.1} parent=5 // pred_check_branch
        %233 = sbr.rel (%p230) target = $region40
      $region39: #{convnet_forward.1} parent=5 // pred_region
        %s234 = ssub.s32 %s17, 1
        // Predicated region
        $region41: #{convnet_forward.1} parent=39 // pred_check
          %p235 = pneg %p64
        $region42: #{convnet_forward.1} parent=39 // pred_check_branch
          %237 = sbr.rel (%p235) target = $region44
        $region43: #{convnet_forward.1} parent=39 // pred_region
          %238 = dma.done [#allocation3], 97920
        $region44: #{convnet_forward.1} parent=39 // pred_fallthru
          _
        // Predicated region
        $region45: #{convnet_forward.1} parent=39 // pred_check
          %p239 = pneg %p85
        $region46: #{convnet_forward.1} parent=39 // pred_check_branch
          %241 = sbr.rel (%p239) target = $region48
        $region47: #{convnet_forward.1} parent=39 // pred_region
          %242 = dma.done [#allocation6], 32
        $region48: #{convnet_forward.1} parent=39 // pred_fallthru
          _
        // Predicated region
        $region49: #{convnet_forward.1} parent=39 // pred_check
          %p243 = pneg %p106
        $region50: #{convnet_forward.1} parent=39 // pred_check_branch
          %245 = sbr.rel (%p243) target = $region52
        $region51: #{convnet_forward.1} parent=39 // pred_region
          %246 = dma.done [#allocation6], 2048
        $region52: #{convnet_forward.1} parent=39 // pred_fallthru
          _
        // Predicated region
        $region53: #{convnet_forward.1} parent=39 // pred_check
          %p247 = pneg %p127
        $region54: #{convnet_forward.1} parent=39 // pred_check_branch
          %249 = sbr.rel (%p247) target = $region56
        $region55: #{convnet_forward.1} parent=39 // pred_region
          %250 = dma.done [#allocation9], 16
        $region56: #{convnet_forward.1} parent=39 // pred_fallthru
          _
        %p251 = scmp.lt.s32.totalorder %s22, 1
        %s252 = scalar_select %p251, %s22, 1
        %s253 = smul.addr %s252, 6
        %s254 = smul.addr %s253, 8
        %s255 = scalar_lea.vmem %s0, %s254
        %p256 = pneg %p43
        %p257 = pneg %p40
        %p258 = pneg %p64
        %p259 = pneg %p61
        %p260 = pneg %p85
        %p261 = pneg %p82
        %p262 = pneg %p106
        %p263 = pneg %p103
        %p264 = pneg %p127
        %p265 = pneg %p124
        %p266 = pneg %p153
        %p267 = pneg %p150
        %s268 = sand.u32 %s140, 1
        %s269 = scalar_lea.sflag [#allocation4], %s268
        %s270 = sand.u32 %s140, 1
        %s271 = smul.addr %s270, 8
        %s272 = scalar_lea.vmem [#allocation10], %s271
        %p273 = scmp.lt.s32.totalorder %s22, 1
        %s274 = scalar_select %p273, %s22, 1
        %s275 = smul.addr %s274, 6
        %s276 = smul.addr %s275, 8
        %s277 = scalar_lea.vmem %s0, %s276
        %v279 = vld [vmem:[%s277] sm:$0xff]
        %v280 = vld [vmem:[%s277 + $0x8] sm:$0xff]
        %v281 = vld [vmem:[%s277 + $0x10] sm:$0xff]
        %v282 = vld [vmem:[%s277 + $0x18] sm:$0xff]
        %v283 = vld [vmem:[%s277 + $0x20] sm:$0xff]
        %v284 = vld [vmem:[%s277 + $0x28] sm:$0xff]
        %v285 = vpack.c.bf16 %v279, %v279
        %v286 = vpack.c.bf16 %v280, %v280
        %v287 = vpack.c.bf16 %v281, %v281
        %v288 = vpack.c.bf16 %v282, %v282
        %v289 = vpack.c.bf16 %v283, %v283
        %v290 = vpack.c.bf16 %v284, %v284
        %v291 = vld [vmem:[#allocation2] sm:$0xff]
        %v292 = vld [vmem:[#allocation2 + $0x48] sm:$0xff]
        %v293 = vld [vmem:[#allocation2 + $0x90] sm:$0xff]
        %v294 = vld [vmem:[#allocation2 + $0xd8] sm:$0xff]
        %v295 = vld [vmem:[#allocation2 + $0x120] sm:$0xff]
        %v296 = vld [vmem:[#allocation2 + $0x168] sm:$0xff]
        %v297 = vld [vmem:[#allocation2 + $0x1b0] sm:$0xff]
        %v298 = vld [vmem:[#allocation2 + $0x1f8] sm:$0xff]
        %v299 = vld [vmem:[#allocation2 + $0x240] sm:$0xff]
        %v300 = vld [vmem:[#allocation2 + $0x288] sm:$0xff]
        %v301 = vld [vmem:[#allocation2 + $0x2d0] sm:$0xff]
        %v302 = vld [vmem:[#allocation2 + $0x318] sm:$0xff]
        %v303 = vld [vmem:[#allocation2 + $0x360] sm:$0xff]
        %v304 = vld [vmem:[#allocation2 + $0x3a8] sm:$0xff]
        %v305 = vld [vmem:[#allocation2 + $0x3f0] sm:$0xff]
        %v306 = vld [vmem:[#allocation2 + $0x438] sm:$0xff]
        %v307 = vld [vmem:[#allocation2 + $0x480] sm:$0xff]
        %v308 = vld [vmem:[#allocation2 + $0x4c8] sm:$0xff]
        %v309 = vld [vmem:[#allocation2 + $0x510] sm:$0xff]
        %v310 = vld [vmem:[#allocation2 + $0x558] sm:$0xff]
        %v311 = vld [vmem:[#allocation2 + $0x5a0] sm:$0xff]
        %v312 = vld [vmem:[#allocation2 + $0x5e8] sm:$0xff]
        %v313 = vld [vmem:[#allocation2 + $0x630] sm:$0xff]
        %v314 = vld [vmem:[#allocation2 + $0x678] sm:$0xff]
        %v315 = vld [vmem:[#allocation2 + $0x6c0] sm:$0xff]
        %v316 = vld [vmem:[#allocation2 + $0x708] sm:$0xff]
        %v317 = vld [vmem:[#allocation2 + $0x750] sm:$0xff]
        %v318 = vld [vmem:[#allocation2 + $0x798] sm:$0xff]
        %v319 = vld [vmem:[#allocation2 + $0x7e0] sm:$0xff]
        %v320 = vld [vmem:[#allocation2 + $0x828] sm:$0xff]
        %v321 = vld [vmem:[#allocation2 + $0x870] sm:$0xff]
        %v322 = vld [vmem:[#allocation2 + $0x8b8] sm:$0xff]
        %v323 = vld [vmem:[#allocation2 + $0x900] sm:$0xff]
        %v324 = vld [vmem:[#allocation2 + $0x948] sm:$0xff]
        %v325 = vld [vmem:[#allocation2 + $0x990] sm:$0xff]
        %v326 = vld [vmem:[#allocation2 + $0x9d8] sm:$0xff]
        %v327 = vld [vmem:[#allocation2 + $0xa20] sm:$0xff]
        %v328 = vld [vmem:[#allocation2 + $0xa68] sm:$0xff]
        %v329 = vld [vmem:[#allocation2 + $0xab0] sm:$0xff]
        %v330 = vld [vmem:[#allocation2 + $0xaf8] sm:$0xff]
        %v331 = vld [vmem:[#allocation2 + $0xb40] sm:$0xff]
        %v332 = vld [vmem:[#allocation2 + $0xb88] sm:$0xff]
        %v333 = vld [vmem:[#allocation2 + $0xbd0] sm:$0xff]
        %v334 = vld [vmem:[#allocation2 + $0xc18] sm:$0xff]
        %v335 = vld [vmem:[#allocation2 + $0xc60] sm:$0xff]
        %v336 = vld [vmem:[#allocation2 + $0xca8] sm:$0xff]
        %v337 = vld [vmem:[#allocation2 + $0xcf0] sm:$0xff]
        %v338 = vld [vmem:[#allocation2 + $0xd38] sm:$0xff]
        %v339 = vld [vmem:[#allocation2 + $0xd80] sm:$0xff]
        %v340 = vld [vmem:[#allocation2 + $0xdc8] sm:$0xff]
        %v341 = vld [vmem:[#allocation2 + $0xe10] sm:$0xff]
        %v342 = vld [vmem:[#allocation2 + $0xe58] sm:$0xff]
        %v343 = vld [vmem:[#allocation2 + $0xea0] sm:$0xff]
        %v344 = vld [vmem:[#allocation2 + $0xee8] sm:$0xff]
        %v345 = vld [vmem:[#allocation2 + $0xf30] sm:$0xff]
        %v346 = vld [vmem:[#allocation2 + $0xf78] sm:$0xff]
        %v347 = vld [vmem:[#allocation2 + $0xfc0] sm:$0xff]
        %v348 = vld [vmem:[#allocation2 + $0x1008] sm:$0xff]
        %v349 = vld [vmem:[#allocation2 + $0x1050] sm:$0xff]
        %v350 = vld [vmem:[#allocation2 + $0x1098] sm:$0xff]
        %v351 = vld [vmem:[#allocation2 + $0x10e0] sm:$0xff]
        %v352 = vld [vmem:[#allocation2 + $0x1128] sm:$0xff]
        %v353 = vld [vmem:[#allocation2 + $0x1170] sm:$0xff]
        %v354 = vld [vmem:[#allocation2 + $0x11b8] sm:$0xff]
        %v355 = vld [vmem:[#allocation2 + $0x1200] sm:$0xff]
        %v356 = vld [vmem:[#allocation2 + $0x1248] sm:$0xff]
        %v357 = vld [vmem:[#allocation2 + $0x1290] sm:$0xff]
        %v358 = vld [vmem:[#allocation2 + $0x12d8] sm:$0xff]
        %v359 = vld [vmem:[#allocation2 + $0x1320] sm:$0xff]
        %v360 = vld [vmem:[#allocation2 + $0x1368] sm:$0xff]
        %v361 = vld [vmem:[#allocation2 + $0x13b0] sm:$0xff]
        %v362 = vld [vmem:[#allocation2 + $0x13f8] sm:$0xff]
        %v363 = vld [vmem:[#allocation2 + $0x1440] sm:$0xff]
        %v364 = vld [vmem:[#allocation2 + $0x1488] sm:$0xff]
        %v365 = vld [vmem:[#allocation2 + $0x14d0] sm:$0xff]
        %v366 = vld [vmem:[#allocation2 + $0x1518] sm:$0xff]
        %v367 = vld [vmem:[#allocation2 + $0x1560] sm:$0xff]
        %v368 = vld [vmem:[#allocation2 + $0x15a8] sm:$0xff]
        %v369 = vld [vmem:[#allocation2 + $0x15f0] sm:$0xff]
        %v370 = vld [vmem:[#allocation2 + $0x1638] sm:$0xff]
        %v371 = vld [vmem:[#allocation2 + $0x1680] sm:$0xff]
        %v372 = vld [vmem:[#allocation2 + $0x16c8] sm:$0xff]
        %v373 = vld [vmem:[#allocation2 + $0x1710] sm:$0xff]
        %v374 = vld [vmem:[#allocation2 + $0x1758] sm:$0xff]
        %v375 = vld [vmem:[#allocation2 + $0x17a0] sm:$0x33]
        %v461 = vunpack.c.l.b16 %v291
        %v462 = vunpack.c.h.b16 %v291
        %v463 = vunpack.c.l.b16 %v292
        %v464 = vunpack.c.h.b16 %v292
        %v465 = vunpack.c.l.b16 %v293
        %v466 = vunpack.c.h.b16 %v293
        %v467 = vunpack.c.l.b16 %v294
        %v468 = vunpack.c.h.b16 %v294
        %v469 = vunpack.c.l.b16 %v295
        %v470 = vunpack.c.h.b16 %v295
        %v471 = vunpack.c.l.b16 %v296
        %v472 = vunpack.c.h.b16 %v296
        %v473 = vunpack.c.l.b16 %v297
        %v474 = vunpack.c.h.b16 %v297
        %v475 = vunpack.c.l.b16 %v298
        %v476 = vunpack.c.h.b16 %v298
        %v477 = vunpack.c.l.b16 %v299
        %v478 = vunpack.c.h.b16 %v299
        %v479 = vunpack.c.l.b16 %v300
        %v480 = vunpack.c.h.b16 %v300
        %v481 = vunpack.c.l.b16 %v301
        %v482 = vunpack.c.h.b16 %v301
        %v483 = vunpack.c.l.b16 %v302
        %v484 = vunpack.c.h.b16 %v302
        %v485 = vunpack.c.l.b16 %v303
        %v486 = vunpack.c.h.b16 %v303
        %v487 = vunpack.c.l.b16 %v304
        %v488 = vunpack.c.h.b16 %v304
        %v489 = vunpack.c.l.b16 %v305
        %v490 = vunpack.c.h.b16 %v305
        %v491 = vunpack.c.l.b16 %v306
        %v492 = vunpack.c.h.b16 %v306
        %v493 = vunpack.c.l.b16 %v307
        %v494 = vunpack.c.h.b16 %v307
        %v495 = vunpack.c.l.b16 %v308
        %v496 = vunpack.c.h.b16 %v308
        %v497 = vunpack.c.l.b16 %v309
        %v498 = vunpack.c.h.b16 %v309
        %v499 = vunpack.c.l.b16 %v310
        %v500 = vunpack.c.h.b16 %v310
        %v501 = vunpack.c.l.b16 %v311
        %v502 = vunpack.c.h.b16 %v311
        %v503 = vunpack.c.l.b16 %v312
        %v504 = vunpack.c.h.b16 %v312
        %v505 = vunpack.c.l.b16 %v313
        %v506 = vunpack.c.h.b16 %v313
        %v507 = vunpack.c.l.b16 %v314
        %v508 = vunpack.c.h.b16 %v314
        %v509 = vunpack.c.l.b16 %v315
        %v510 = vunpack.c.h.b16 %v315
        %v511 = vunpack.c.l.b16 %v316
        %v512 = vunpack.c.h.b16 %v316
        %v513 = vunpack.c.l.b16 %v317
        %v514 = vunpack.c.h.b16 %v317
        %v515 = vunpack.c.l.b16 %v318
        %v516 = vunpack.c.h.b16 %v318
        %v517 = vunpack.c.l.b16 %v319
        %v518 = vunpack.c.h.b16 %v319
        %v519 = vunpack.c.l.b16 %v320
        %v520 = vunpack.c.h.b16 %v320
        %v521 = vunpack.c.l.b16 %v321
        %v522 = vunpack.c.h.b16 %v321
        %v523 = vunpack.c.l.b16 %v322
        %v524 = vunpack.c.h.b16 %v322
        %v525 = vunpack.c.l.b16 %v323
        %v526 = vunpack.c.h.b16 %v323
        %v527 = vunpack.c.l.b16 %v324
        %v528 = vunpack.c.h.b16 %v324
        %v529 = vunpack.c.l.b16 %v325
        %v530 = vunpack.c.h.b16 %v325
        %v531 = vunpack.c.l.b16 %v326
        %v532 = vunpack.c.h.b16 %v326
        %v533 = vunpack.c.l.b16 %v327
        %v534 = vunpack.c.h.b16 %v327
        %v535 = vunpack.c.l.b16 %v328
        %v536 = vunpack.c.h.b16 %v328
        %v537 = vunpack.c.l.b16 %v329
        %v538 = vunpack.c.h.b16 %v329
        %v539 = vunpack.c.l.b16 %v330
        %v540 = vunpack.c.h.b16 %v330
        %v541 = vunpack.c.l.b16 %v331
        %v542 = vunpack.c.h.b16 %v331
        %v543 = vunpack.c.l.b16 %v332
        %v544 = vunpack.c.h.b16 %v332
        %v545 = vunpack.c.l.b16 %v333
        %v546 = vunpack.c.h.b16 %v333
        %v547 = vunpack.c.l.b16 %v334
        %v548 = vunpack.c.h.b16 %v334
        %v549 = vunpack.c.l.b16 %v335
        %v550 = vunpack.c.h.b16 %v335
        %v551 = vunpack.c.l.b16 %v336
        %v552 = vunpack.c.h.b16 %v336
        %v553 = vunpack.c.l.b16 %v337
        %v554 = vunpack.c.h.b16 %v337
        %v555 = vunpack.c.l.b16 %v338
        %v556 = vunpack.c.h.b16 %v338
        %v557 = vunpack.c.l.b16 %v339
        %v558 = vunpack.c.h.b16 %v339
        %v559 = vunpack.c.l.b16 %v340
        %v560 = vunpack.c.h.b16 %v340
        %v561 = vunpack.c.l.b16 %v341
        %v562 = vunpack.c.h.b16 %v341
        %v563 = vunpack.c.l.b16 %v342
        %v564 = vunpack.c.h.b16 %v342
        %v565 = vunpack.c.l.b16 %v343
        %v566 = vunpack.c.h.b16 %v343
        %v567 = vunpack.c.l.b16 %v344
        %v568 = vunpack.c.h.b16 %v344
        %v569 = vunpack.c.l.b16 %v345
        %v570 = vunpack.c.h.b16 %v345
        %v571 = vunpack.c.l.b16 %v346
        %v572 = vunpack.c.h.b16 %v346
        %v573 = vunpack.c.l.b16 %v347
        %v574 = vunpack.c.h.b16 %v347
        %v575 = vunpack.c.l.b16 %v348
        %v576 = vunpack.c.h.b16 %v348
        %v577 = vunpack.c.l.b16 %v349
        %v578 = vunpack.c.h.b16 %v349
        %v579 = vunpack.c.l.b16 %v350
        %v580 = vunpack.c.h.b16 %v350
        %v581 = vunpack.c.l.b16 %v351
        %v582 = vunpack.c.h.b16 %v351
        %v583 = vunpack.c.l.b16 %v352
        %v584 = vunpack.c.h.b16 %v352
        %v585 = vunpack.c.l.b16 %v353
        %v586 = vunpack.c.h.b16 %v353
        %v587 = vunpack.c.l.b16 %v354
        %v588 = vunpack.c.h.b16 %v354
        %v589 = vunpack.c.l.b16 %v355
        %v590 = vunpack.c.h.b16 %v355
        %v591 = vunpack.c.l.b16 %v356
        %v592 = vunpack.c.h.b16 %v356
        %v593 = vunpack.c.l.b16 %v357
        %v594 = vunpack.c.h.b16 %v357
        %v595 = vunpack.c.l.b16 %v358
        %v596 = vunpack.c.h.b16 %v358
        %v597 = vunpack.c.l.b16 %v359
        %v598 = vunpack.c.h.b16 %v359
        %v599 = vunpack.c.l.b16 %v360
        %v600 = vunpack.c.h.b16 %v360
        %v601 = vunpack.c.l.b16 %v361
        %v602 = vunpack.c.h.b16 %v361
        %v603 = vunpack.c.l.b16 %v362
        %v604 = vunpack.c.h.b16 %v362
        %v605 = vunpack.c.l.b16 %v363
        %v606 = vunpack.c.h.b16 %v363
        %v607 = vunpack.c.l.b16 %v364
        %v608 = vunpack.c.h.b16 %v364
        %v609 = vunpack.c.l.b16 %v365
        %v610 = vunpack.c.h.b16 %v365
        %v611 = vunpack.c.l.b16 %v366
        %v612 = vunpack.c.h.b16 %v366
        %v613 = vunpack.c.l.b16 %v367
        %v614 = vunpack.c.h.b16 %v367
        %v615 = vunpack.c.l.b16 %v368
        %v616 = vunpack.c.h.b16 %v368
        %v617 = vunpack.c.l.b16 %v369
        %v618 = vunpack.c.h.b16 %v369
        %v619 = vunpack.c.l.b16 %v370
        %v620 = vunpack.c.h.b16 %v370
        %v621 = vunpack.c.l.b16 %v371
        %v622 = vunpack.c.h.b16 %v371
        %v623 = vunpack.c.l.b16 %v372
        %v624 = vunpack.c.h.b16 %v372
        %v625 = vunpack.c.l.b16 %v373
        %v626 = vunpack.c.h.b16 %v373
        %v627 = vunpack.c.l.b16 %v374
        %v628 = vunpack.c.h.b16 %v374
        %v629 = vunpack.c.l.b16 %v375
        %v630 = vunpack.c.h.b16 %v375
        %v631 = vpack.c.b16 %v463, %v461
        %v632 = vpack.c.b16 %v464, %v462
        %v633 = vpack.c.b16 %v467, %v465
        %v634 = vpack.c.b16 %v468, %v466
        %v635 = vpack.c.b16 %v471, %v469
        %v636 = vpack.c.b16 %v472, %v470
        %v637 = vpack.c.b16 %v475, %v473
        %v638 = vpack.c.b16 %v476, %v474
        %v639 = vpack.c.b16 %v479, %v477
        %v640 = vpack.c.b16 %v480, %v478
        %v641 = vpack.c.b16 %v483, %v481
        %v642 = vpack.c.b16 %v484, %v482
        %v643 = vpack.c.b16 %v487, %v485
        %v644 = vpack.c.b16 %v488, %v486
        %v645 = vpack.c.b16 %v491, %v489
        %v646 = vpack.c.b16 %v492, %v490
        %v647 = vpack.c.b16 %v495, %v493
        %v648 = vpack.c.b16 %v496, %v494
        %v649 = vpack.c.b16 %v499, %v497
        %v650 = vpack.c.b16 %v500, %v498
        %v651 = vpack.c.b16 %v503, %v501
        %v652 = vpack.c.b16 %v504, %v502
        %v653 = vpack.c.b16 %v507, %v505
        %v654 = vpack.c.b16 %v508, %v506
        %v655 = vpack.c.b16 %v511, %v509
        %v656 = vpack.c.b16 %v512, %v510
        %v657 = vpack.c.b16 %v515, %v513
        %v658 = vpack.c.b16 %v516, %v514
        %v659 = vpack.c.b16 %v519, %v517
        %v660 = vpack.c.b16 %v520, %v518
        %v661 = vpack.c.b16 %v523, %v521
        %v662 = vpack.c.b16 %v524, %v522
        %v663 = vpack.c.b16 %v527, %v525
        %v664 = vpack.c.b16 %v528, %v526
        %v665 = vpack.c.b16 %v531, %v529
        %v666 = vpack.c.b16 %v532, %v530
        %v667 = vpack.c.b16 %v535, %v533
        %v668 = vpack.c.b16 %v536, %v534
        %v669 = vpack.c.b16 %v539, %v537
        %v670 = vpack.c.b16 %v540, %v538
        %v671 = vpack.c.b16 %v543, %v541
        %v672 = vpack.c.b16 %v544, %v542
        %v673 = vpack.c.b16 %v547, %v545
        %v674 = vpack.c.b16 %v548, %v546
        %v675 = vpack.c.b16 %v551, %v549
        %v676 = vpack.c.b16 %v552, %v550
        %v677 = vpack.c.b16 %v555, %v553
        %v678 = vpack.c.b16 %v556, %v554
        %v679 = vpack.c.b16 %v559, %v557
        %v680 = vpack.c.b16 %v560, %v558
        %v681 = vpack.c.b16 %v563, %v561
        %v682 = vpack.c.b16 %v564, %v562
        %v683 = vpack.c.b16 %v567, %v565
        %v684 = vpack.c.b16 %v568, %v566
        %v685 = vpack.c.b16 %v571, %v569
        %v686 = vpack.c.b16 %v572, %v570
        %v687 = vpack.c.b16 %v575, %v573
        %v688 = vpack.c.b16 %v576, %v574
        %v689 = vpack.c.b16 %v579, %v577
        %v690 = vpack.c.b16 %v580, %v578
        %v691 = vpack.c.b16 %v583, %v581
        %v692 = vpack.c.b16 %v584, %v582
        %v693 = vpack.c.b16 %v587, %v585
        %v694 = vpack.c.b16 %v588, %v586
        %v695 = vpack.c.b16 %v591, %v589
        %v696 = vpack.c.b16 %v592, %v590
        %v697 = vpack.c.b16 %v595, %v593
        %v698 = vpack.c.b16 %v596, %v594
        %v699 = vpack.c.b16 %v599, %v597
        %v700 = vpack.c.b16 %v600, %v598
        %v701 = vpack.c.b16 %v603, %v601
        %v702 = vpack.c.b16 %v604, %v602
        %v703 = vpack.c.b16 %v607, %v605
        %v704 = vpack.c.b16 %v608, %v606
        %v705 = vpack.c.b16 %v611, %v609
        %v706 = vpack.c.b16 %v612, %v610
        %v707 = vpack.c.b16 %v615, %v613
        %v708 = vpack.c.b16 %v616, %v614
        %v709 = vpack.c.b16 %v619, %v617
        %v710 = vpack.c.b16 %v620, %v618
        %v711 = vpack.c.b16 %v623, %v621
        %v712 = vpack.c.b16 %v624, %v622
        %v713 = vpack.c.b16 %v627, %v625
        %v714 = vpack.c.b16 %v628, %v626
        %v715 = vpack.c.b16 %v629, %v629
        %v716 = vpack.c.b16 %v630, %v630
        %vm801 = vcmask 293888
        %v803 = vsel %vm801, %v290, 0
        %vm805 = vcmask 1041408
        %v807 = vsel %vm805, %v715, 0
        %v810 = vsel %vm805, %v716, 0
        %812 = vmatprep.subr.bf16.mxu0 %v632
        %813 = vmatpush1.bf16.msra.mxu0 %v631
        %814 = vmatprep.subr.bf16.mxu0 %v634
        %815 = vmatpush1.bf16.msra.mxu0 %v633
        %816 = vmatprep.subr.bf16.mxu0 %v636
        %817 = vmatpush1.bf16.msra.mxu0 %v635
        %818 = vmatprep.subr.bf16.mxu0 %v638
        %819 = vmatpush1.bf16.msra.mxu0 %v637
        %820 = vmatprep.subr.bf16.mxu0 %v640
        %821 = vmatpush1.bf16.msra.mxu0 %v639
        %822 = vmatprep.subr.bf16.mxu0 %v642
        %823 = vmatpush1.bf16.msra.mxu0 %v641
        %824 = vmatprep.subr.bf16.mxu0 %v644
        %825 = vmatpush1.bf16.msra.mxu0 %v643
        %826 = vmatprep.subr.bf16.mxu0 %v646
        %827 = vmatpush1.bf16.msra.mxu0 %v645
        %828 = vmatprep.subr.bf16.mxu0 %v648
        %829 = vmatpush1.bf16.msra.mxu0 %v647
        %830 = vmatprep.subr.bf16.mxu0 %v650
        %831 = vmatpush1.bf16.msra.mxu0 %v649
        %832 = vmatprep.subr.bf16.mxu0 %v652
        %833 = vmatpush1.bf16.msra.mxu0 %v651
        %834 = vmatprep.subr.bf16.mxu0 %v654
        %835 = vmatpush1.bf16.msra.mxu0 %v653
        %836 = vmatprep.subr.bf16.mxu0 %v656
        %837 = vmatpush1.bf16.msra.mxu0 %v655
        %838 = vmatprep.subr.bf16.mxu0 %v658
        %839 = vmatpush1.bf16.msra.mxu0 %v657
        %840 = vmatprep.subr.bf16.mxu0 %v660
        %841 = vmatpush1.bf16.msra.mxu0 %v659
        %842 = vmatprep.subr.bf16.mxu0 %v662
        %843 = vmatpush1.bf16.msra.mxu0 %v661
        %844 = vmatprep.mubr.bf16.mxu0 %v286
        %845 = vmatmul.mubr.bf16.gmra.mrb[0].mxu0 %v285
        %v846 = vpop.f32.mrb[0].mxu0
        %v847 = vadd.f32 0.0, %v846
        %v848 = vpop.f32.mrb[0].mxu0
        %v849 = vadd.f32 0.0, %v848
        %v850 = vpop.f32.mrb[0].mxu0
        %v851 = vpop.f32.mrb[0].mxu0
        %852 = vdwg.mxu0
        %853 = vmatprep.subr.bf16.mxu0 %v664
        %854 = vmatpush1.bf16.msra.mxu0 %v663
        %855 = vmatprep.subr.bf16.mxu0 %v666
        %856 = vmatpush1.bf16.msra.mxu0 %v665
        %857 = vmatprep.subr.bf16.mxu0 %v668
        %858 = vmatpush1.bf16.msra.mxu0 %v667
        %859 = vmatprep.subr.bf16.mxu0 %v670
        %860 = vmatpush1.bf16.msra.mxu0 %v669
        %861 = vmatprep.subr.bf16.mxu0 %v672
        %862 = vmatpush1.bf16.msra.mxu0 %v671
        %863 = vmatprep.subr.bf16.mxu0 %v674
        %864 = vmatpush1.bf16.msra.mxu0 %v673
        %865 = vmatprep.subr.bf16.mxu0 %v676
        %866 = vmatpush1.bf16.msra.mxu0 %v675
        %867 = vmatprep.subr.bf16.mxu0 %v678
        %868 = vmatpush1.bf16.msra.mxu0 %v677
        %869 = vmatprep.subr.bf16.mxu0 %v680
        %870 = vmatpush1.bf16.msra.mxu0 %v679
        %871 = vmatprep.subr.bf16.mxu0 %v682
        %872 = vmatpush1.bf16.msra.mxu0 %v681
        %873 = vmatprep.subr.bf16.mxu0 %v684
        %874 = vmatpush1.bf16.msra.mxu0 %v683
        %875 = vmatprep.subr.bf16.mxu0 %v686
        %876 = vmatpush1.bf16.msra.mxu0 %v685
        %877 = vmatprep.subr.bf16.mxu0 %v688
        %878 = vmatpush1.bf16.msra.mxu0 %v687
        %879 = vmatprep.subr.bf16.mxu0 %v690
        %880 = vmatpush1.bf16.msra.mxu0 %v689
        %881 = vmatprep.subr.bf16.mxu0 %v692
        %882 = vmatpush1.bf16.msra.mxu0 %v691
        %883 = vmatprep.subr.bf16.mxu0 %v694
        %884 = vmatpush1.bf16.msra.mxu0 %v693
        %885 = vmatprep.mubr.bf16.mxu0 %v288
        %886 = vmatmul.mubr.bf16.gmra.mrb[0].mxu0 %v287
        %v887 = vpop.f32.mrb[0].mxu0
        %v888 = vadd.f32 %v847, %v887
        %v889 = vpop.f32.mrb[0].mxu0
        %v890 = vadd.f32 %v849, %v889
        %v891 = vpop.f32.mrb[0].mxu0
        %v892 = vpop.f32.mrb[0].mxu0
        %893 = vdwg.mxu0
        %894 = vmatprep.subr.bf16.mxu0 %v696
        %895 = vmatpush1.bf16.msra.mxu0 %v695
        %896 = vmatprep.subr.bf16.mxu0 %v698
        %897 = vmatpush1.bf16.msra.mxu0 %v697
        %898 = vmatprep.subr.bf16.mxu0 %v700
        %899 = vmatpush1.bf16.msra.mxu0 %v699
        %900 = vmatprep.subr.bf16.mxu0 %v702
        %901 = vmatpush1.bf16.msra.mxu0 %v701
        %902 = vmatprep.subr.bf16.mxu0 %v704
        %903 = vmatpush1.bf16.msra.mxu0 %v703
        %904 = vmatprep.subr.bf16.mxu0 %v706
        %905 = vmatpush1.bf16.msra.mxu0 %v705
        %906 = vmatprep.subr.bf16.mxu0 %v708
        %907 = vmatpush1.bf16.msra.mxu0 %v707
        %908 = vmatprep.subr.bf16.mxu0 %v710
        %909 = vmatpush1.bf16.msra.mxu0 %v709
        %910 = vmatprep.subr.bf16.mxu0 %v712
        %911 = vmatpush1.bf16.msra.mxu0 %v711
        %912 = vmatprep.subr.bf16.mxu0 %v714
        %913 = vmatpush1.bf16.msra.mxu0 %v713
        %914 = vmatprep.subr.bf16.mxu0 %v810
        %915 = vmatpush1.bf16.msra.mxu0 %v807
        %916 = vmatprep.subr.bf16.mxu0 0
        %917 = vmatpush1.bf16.msra.mxu0 0
        %918 = vmatprep.subr.bf16.mxu0 0
        %919 = vmatpush1.bf16.msra.mxu0 0
        %920 = vmatprep.subr.bf16.mxu0 0
        %921 = vmatpush1.bf16.msra.mxu0 0
        %922 = vmatprep.subr.bf16.mxu0 0
        %923 = vmatpush1.bf16.msra.mxu0 0
        %924 = vmatprep.subr.bf16.mxu0 0
        %925 = vmatpush1.bf16.msra.mxu0 0
        %926 = vmatprep.mubr.bf16.mxu0 %v803
        %927 = vmatmul.mubr.bf16.gmra.mrb[0].mxu0 %v289
        %v928 = vpop.f32.mrb[0].mxu0
        %v929 = vadd.f32 %v888, %v928
        %v930 = vpop.f32.mrb[0].mxu0
        %v931 = vadd.f32 %v890, %v930
        %v932 = vpop.f32.mrb[0].mxu0
        %v933 = vpop.f32.mrb[0].mxu0
        %934 = vdwg.mxu0
        %v935 = vld [vmem:[#allocation2 + $0x8] sm:$0xff]
        %v936 = vld [vmem:[#allocation2 + $0x50] sm:$0xff]
        %v937 = vld [vmem:[#allocation2 + $0x98] sm:$0xff]
        %v938 = vld [vmem:[#allocation2 + $0xe0] sm:$0xff]
        %v939 = vld [vmem:[#allocation2 + $0x128] sm:$0xff]
        %v940 = vld [vmem:[#allocation2 + $0x170] sm:$0xff]
        %v941 = vld [vmem:[#allocation2 + $0x1b8] sm:$0xff]
        %v942 = vld [vmem:[#allocation2 + $0x200] sm:$0xff]
        %v943 = vld [vmem:[#allocation2 + $0x248] sm:$0xff]
        %v944 = vld [vmem:[#allocation2 + $0x290] sm:$0xff]
        %v945 = vld [vmem:[#allocation2 + $0x2d8] sm:$0xff]
        %v946 = vld [vmem:[#allocation2 + $0x320] sm:$0xff]
        %v947 = vld [vmem:[#allocation2 + $0x368] sm:$0xff]
        %v948 = vld [vmem:[#allocation2 + $0x3b0] sm:$0xff]
        %v949 = vld [vmem:[#allocation2 + $0x3f8] sm:$0xff]
        %v950 = vld [vmem:[#allocation2 + $0x440] sm:$0xff]
        %v951 = vld [vmem:[#allocation2 + $0x488] sm:$0xff]
        %v952 = vld [vmem:[#allocation2 + $0x4d0] sm:$0xff]
        %v953 = vld [vmem:[#allocation2 + $0x518] sm:$0xff]
        %v954 = vld [vmem:[#allocation2 + $0x560] sm:$0xff]
        %v955 = vld [vmem:[#allocation2 + $0x5a8] sm:$0xff]
        %v956 = vld [vmem:[#allocation2 + $0x5f0] sm:$0xff]
        %v957 = vld [vmem:[#allocation2 + $0x638] sm:$0xff]
        %v958 = vld [vmem:[#allocation2 + $0x680] sm:$0xff]
        %v959 = vld [vmem:[#allocation2 + $0x6c8] sm:$0xff]
        %v960 = vld [vmem:[#allocation2 + $0x710] sm:$0xff]
        %v961 = vld [vmem:[#allocation2 + $0x758] sm:$0xff]
        %v962 = vld [vmem:[#allocation2 + $0x7a0] sm:$0xff]
        %v963 = vld [vmem:[#allocation2 + $0x7e8] sm:$0xff]
        %v964 = vld [vmem:[#allocation2 + $0x830] sm:$0xff]
        %v965 = vld [vmem:[#allocation2 + $0x878] sm:$0xff]
        %v966 = vld [vmem:[#allocation2 + $0x8c0] sm:$0xff]
        %v967 = vld [vmem:[#allocation2 + $0x908] sm:$0xff]
        %v968 = vld [vmem:[#allocation2 + $0x950] sm:$0xff]
        %v969 = vld [vmem:[#allocation2 + $0x998] sm:$0xff]
        %v970 = vld [vmem:[#allocation2 + $0x9e0] sm:$0xff]
        %v971 = vld [vmem:[#allocation2 + $0xa28] sm:$0xff]
        %v972 = vld [vmem:[#allocation2 + $0xa70] sm:$0xff]
        %v973 = vld [vmem:[#allocation2 + $0xab8] sm:$0xff]
        %v974 = vld [vmem:[#allocation2 + $0xb00] sm:$0xff]
        %v975 = vld [vmem:[#allocation2 + $0xb48] sm:$0xff]
        %v976 = vld [vmem:[#allocation2 + $0xb90] sm:$0xff]
        %v977 = vld [vmem:[#allocation2 + $0xbd8] sm:$0xff]
        %v978 = vld [vmem:[#allocation2 + $0xc20] sm:$0xff]
        %v979 = vld [vmem:[#allocation2 + $0xc68] sm:$0xff]
        %v980 = vld [vmem:[#allocation2 + $0xcb0] sm:$0xff]
        %v981 = vld [vmem:[#allocation2 + $0xcf8] sm:$0xff]
        %v982 = vld [vmem:[#allocation2 + $0xd40] sm:$0xff]
        %v983 = vld [vmem:[#allocation2 + $0xd88] sm:$0xff]
        %v984 = vld [vmem:[#allocation2 + $0xdd0] sm:$0xff]
        %v985 = vld [vmem:[#allocation2 + $0xe18] sm:$0xff]
        %v986 = vld [vmem:[#allocation2 + $0xe60] sm:$0xff]
        %v987 = vld [vmem:[#allocation2 + $0xea8] sm:$0xff]
        %v988 = vld [vmem:[#allocation2 + $0xef0] sm:$0xff]
        %v989 = vld [vmem:[#allocation2 + $0xf38] sm:$0xff]
        %v990 = vld [vmem:[#allocation2 + $0xf80] sm:$0xff]
        %v991 = vld [vmem:[#allocation2 + $0xfc8] sm:$0xff]
        %v992 = vld [vmem:[#allocation2 + $0x1010] sm:$0xff]
        %v993 = vld [vmem:[#allocation2 + $0x1058] sm:$0xff]
        %v994 = vld [vmem:[#allocation2 + $0x10a0] sm:$0xff]
        %v995 = vld [vmem:[#allocation2 + $0x10e8] sm:$0xff]
        %v996 = vld [vmem:[#allocation2 + $0x1130] sm:$0xff]
        %v997 = vld [vmem:[#allocation2 + $0x1178] sm:$0xff]
        %v998 = vld [vmem:[#allocation2 + $0x11c0] sm:$0xff]
        %v999 = vld [vmem:[#allocation2 + $0x1208] sm:$0xff]
        %v1000 = vld [vmem:[#allocation2 + $0x1250] sm:$0xff]
        %v1001 = vld [vmem:[#allocation2 + $0x1298] sm:$0xff]
        %v1002 = vld [vmem:[#allocation2 + $0x12e0] sm:$0xff]
        %v1003 = vld [vmem:[#allocation2 + $0x1328] sm:$0xff]
        %v1004 = vld [vmem:[#allocation2 + $0x1370] sm:$0xff]
        %v1005 = vld [vmem:[#allocation2 + $0x13b8] sm:$0xff]
        %v1006 = vld [vmem:[#allocation2 + $0x1400] sm:$0xff]
        %v1007 = vld [vmem:[#allocation2 + $0x1448] sm:$0xff]
        %v1008 = vld [vmem:[#allocation2 + $0x1490] sm:$0xff]
        %v1009 = vld [vmem:[#allocation2 + $0x14d8] sm:$0xff]
        %v1010 = vld [vmem:[#allocation2 + $0x1520] sm:$0xff]
        %v1011 = vld [vmem:[#allocation2 + $0x1568] sm:$0xff]
        %v1012 = vld [vmem:[#allocation2 + $0x15b0] sm:$0xff]
        %v1013 = vld [vmem:[#allocation2 + $0x15f8] sm:$0xff]
        %v1014 = vld [vmem:[#allocation2 + $0x1640] sm:$0xff]
        %v1015 = vld [vmem:[#allocation2 + $0x1688] sm:$0xff]
        %v1016 = vld [vmem:[#allocation2 + $0x16d0] sm:$0xff]
        %v1017 = vld [vmem:[#allocation2 + $0x1718] sm:$0xff]
        %v1018 = vld [vmem:[#allocation2 + $0x1760] sm:$0xff]
        %v1019 = vld [vmem:[#allocation2 + $0x17a8] sm:$0x33]
        %v1105 = vunpack.c.l.b16 %v935
        %v1106 = vunpack.c.h.b16 %v935
        %v1107 = vunpack.c.l.b16 %v936
        %v1108 = vunpack.c.h.b16 %v936
        %v1109 = vunpack.c.l.b16 %v937
        %v1110 = vunpack.c.h.b16 %v937
        %v1111 = vunpack.c.l.b16 %v938
        %v1112 = vunpack.c.h.b16 %v938
        %v1113 = vunpack.c.l.b16 %v939
        %v1114 = vunpack.c.h.b16 %v939
        %v1115 = vunpack.c.l.b16 %v940
        %v1116 = vunpack.c.h.b16 %v940
        %v1117 = vunpack.c.l.b16 %v941
        %v1118 = vunpack.c.h.b16 %v941
        %v1119 = vunpack.c.l.b16 %v942
        %v1120 = vunpack.c.h.b16 %v942
        %v1121 = vunpack.c.l.b16 %v943
        %v1122 = vunpack.c.h.b16 %v943
        %v1123 = vunpack.c.l.b16 %v944
        %v1124 = vunpack.c.h.b16 %v944
        %v1125 = vunpack.c.l.b16 %v945
        %v1126 = vunpack.c.h.b16 %v945
        %v1127 = vunpack.c.l.b16 %v946
        %v1128 = vunpack.c.h.b16 %v946
        %v1129 = vunpack.c.l.b16 %v947
        %v1130 = vunpack.c.h.b16 %v947
        %v1131 = vunpack.c.l.b16 %v948
        %v1132 = vunpack.c.h.b16 %v948
        %v1133 = vunpack.c.l.b16 %v949
        %v1134 = vunpack.c.h.b16 %v949
        %v1135 = vunpack.c.l.b16 %v950
        %v1136 = vunpack.c.h.b16 %v950
        %v1137 = vunpack.c.l.b16 %v951
        %v1138 = vunpack.c.h.b16 %v951
        %v1139 = vunpack.c.l.b16 %v952
        %v1140 = vunpack.c.h.b16 %v952
        %v1141 = vunpack.c.l.b16 %v953
        %v1142 = vunpack.c.h.b16 %v953
        %v1143 = vunpack.c.l.b16 %v954
        %v1144 = vunpack.c.h.b16 %v954
        %v1145 = vunpack.c.l.b16 %v955
        %v1146 = vunpack.c.h.b16 %v955
        %v1147 = vunpack.c.l.b16 %v956
        %v1148 = vunpack.c.h.b16 %v956
        %v1149 = vunpack.c.l.b16 %v957
        %v1150 = vunpack.c.h.b16 %v957
        %v1151 = vunpack.c.l.b16 %v958
        %v1152 = vunpack.c.h.b16 %v958
        %v1153 = vunpack.c.l.b16 %v959
        %v1154 = vunpack.c.h.b16 %v959
        %v1155 = vunpack.c.l.b16 %v960
        %v1156 = vunpack.c.h.b16 %v960
        %v1157 = vunpack.c.l.b16 %v961
        %v1158 = vunpack.c.h.b16 %v961
        %v1159 = vunpack.c.l.b16 %v962
        %v1160 = vunpack.c.h.b16 %v962
        %v1161 = vunpack.c.l.b16 %v963
        %v1162 = vunpack.c.h.b16 %v963
        %v1163 = vunpack.c.l.b16 %v964
        %v1164 = vunpack.c.h.b16 %v964
        %v1165 = vunpack.c.l.b16 %v965
        %v1166 = vunpack.c.h.b16 %v965
        %v1167 = vunpack.c.l.b16 %v966
        %v1168 = vunpack.c.h.b16 %v966
        %v1169 = vunpack.c.l.b16 %v967
        %v1170 = vunpack.c.h.b16 %v967
        %v1171 = vunpack.c.l.b16 %v968
        %v1172 = vunpack.c.h.b16 %v968
        %v1173 = vunpack.c.l.b16 %v969
        %v1174 = vunpack.c.h.b16 %v969
        %v1175 = vunpack.c.l.b16 %v970
        %v1176 = vunpack.c.h.b16 %v970
        %v1177 = vunpack.c.l.b16 %v971
        %v1178 = vunpack.c.h.b16 %v971
        %v1179 = vunpack.c.l.b16 %v972
        %v1180 = vunpack.c.h.b16 %v972
        %v1181 = vunpack.c.l.b16 %v973
        %v1182 = vunpack.c.h.b16 %v973
        %v1183 = vunpack.c.l.b16 %v974
        %v1184 = vunpack.c.h.b16 %v974
        %v1185 = vunpack.c.l.b16 %v975
        %v1186 = vunpack.c.h.b16 %v975
        %v1187 = vunpack.c.l.b16 %v976
        %v1188 = vunpack.c.h.b16 %v976
        %v1189 = vunpack.c.l.b16 %v977
        %v1190 = vunpack.c.h.b16 %v977
        %v1191 = vunpack.c.l.b16 %v978
        %v1192 = vunpack.c.h.b16 %v978
        %v1193 = vunpack.c.l.b16 %v979
        %v1194 = vunpack.c.h.b16 %v979
        %v1195 = vunpack.c.l.b16 %v980
        %v1196 = vunpack.c.h.b16 %v980
        %v1197 = vunpack.c.l.b16 %v981
        %v1198 = vunpack.c.h.b16 %v981
        %v1199 = vunpack.c.l.b16 %v982
        %v1200 = vunpack.c.h.b16 %v982
        %v1201 = vunpack.c.l.b16 %v983
        %v1202 = vunpack.c.h.b16 %v983
        %v1203 = vunpack.c.l.b16 %v984
        %v1204 = vunpack.c.h.b16 %v984
        %v1205 = vunpack.c.l.b16 %v985
        %v1206 = vunpack.c.h.b16 %v985
        %v1207 = vunpack.c.l.b16 %v986
        %v1208 = vunpack.c.h.b16 %v986
        %v1209 = vunpack.c.l.b16 %v987
        %v1210 = vunpack.c.h.b16 %v987
        %v1211 = vunpack.c.l.b16 %v988
        %v1212 = vunpack.c.h.b16 %v988
        %v1213 = vunpack.c.l.b16 %v989
        %v1214 = vunpack.c.h.b16 %v989
        %v1215 = vunpack.c.l.b16 %v990
        %v1216 = vunpack.c.h.b16 %v990
        %v1217 = vunpack.c.l.b16 %v991
        %v1218 = vunpack.c.h.b16 %v991
        %v1219 = vunpack.c.l.b16 %v992
        %v1220 = vunpack.c.h.b16 %v992
        %v1221 = vunpack.c.l.b16 %v993
        %v1222 = vunpack.c.h.b16 %v993
        %v1223 = vunpack.c.l.b16 %v994
        %v1224 = vunpack.c.h.b16 %v994
        %v1225 = vunpack.c.l.b16 %v995
        %v1226 = vunpack.c.h.b16 %v995
        %v1227 = vunpack.c.l.b16 %v996
        %v1228 = vunpack.c.h.b16 %v996
        %v1229 = vunpack.c.l.b16 %v997
        %v1230 = vunpack.c.h.b16 %v997
        %v1231 = vunpack.c.l.b16 %v998
        %v1232 = vunpack.c.h.b16 %v998
        %v1233 = vunpack.c.l.b16 %v999
        %v1234 = vunpack.c.h.b16 %v999
        %v1235 = vunpack.c.l.b16 %v1000
        %v1236 = vunpack.c.h.b16 %v1000
        %v1237 = vunpack.c.l.b16 %v1001
        %v1238 = vunpack.c.h.b16 %v1001
        %v1239 = vunpack.c.l.b16 %v1002
        %v1240 = vunpack.c.h.b16 %v1002
        %v1241 = vunpack.c.l.b16 %v1003
        %v1242 = vunpack.c.h.b16 %v1003
        %v1243 = vunpack.c.l.b16 %v1004
        %v1244 = vunpack.c.h.b16 %v1004
        %v1245 = vunpack.c.l.b16 %v1005
        %v1246 = vunpack.c.h.b16 %v1005
        %v1247 = vunpack.c.l.b16 %v1006
        %v1248 = vunpack.c.h.b16 %v1006
        %v1249 = vunpack.c.l.b16 %v1007
        %v1250 = vunpack.c.h.b16 %v1007
        %v1251 = vunpack.c.l.b16 %v1008
        %v1252 = vunpack.c.h.b16 %v1008
        %v1253 = vunpack.c.l.b16 %v1009
        %v1254 = vunpack.c.h.b16 %v1009
        %v1255 = vunpack.c.l.b16 %v1010
        %v1256 = vunpack.c.h.b16 %v1010
        %v1257 = vunpack.c.l.b16 %v1011
        %v1258 = vunpack.c.h.b16 %v1011
        %v1259 = vunpack.c.l.b16 %v1012
        %v1260 = vunpack.c.h.b16 %v1012
        %v1261 = vunpack.c.l.b16 %v1013
        %v1262 = vunpack.c.h.b16 %v1013
        %v1263 = vunpack.c.l.b16 %v1014
        %v1264 = vunpack.c.h.b16 %v1014
        %v1265 = vunpack.c.l.b16 %v1015
        %v1266 = vunpack.c.h.b16 %v1015
        %v1267 = vunpack.c.l.b16 %v1016
        %v1268 = vunpack.c.h.b16 %v1016
        %v1269 = vunpack.c.l.b16 %v1017
        %v1270 = vunpack.c.h.b16 %v1017
        %v1271 = vunpack.c.l.b16 %v1018
        %v1272 = vunpack.c.h.b16 %v1018
        %v1273 = vunpack.c.l.b16 %v1019
        %v1274 = vunpack.c.h.b16 %v1019
        %v1275 = vpack.c.b16 %v1107, %v1105
        %v1276 = vpack.c.b16 %v1108, %v1106
        %v1277 = vpack.c.b16 %v1111, %v1109
        %v1278 = vpack.c.b16 %v1112, %v1110
        %v1279 = vpack.c.b16 %v1115, %v1113
        %v1280 = vpack.c.b16 %v1116, %v1114
        %v1281 = vpack.c.b16 %v1119, %v1117
        %v1282 = vpack.c.b16 %v1120, %v1118
        %v1283 = vpack.c.b16 %v1123, %v1121
        %v1284 = vpack.c.b16 %v1124, %v1122
        %v1285 = vpack.c.b16 %v1127, %v1125
        %v1286 = vpack.c.b16 %v1128, %v1126
        %v1287 = vpack.c.b16 %v1131, %v1129
        %v1288 = vpack.c.b16 %v1132, %v1130
        %v1289 = vpack.c.b16 %v1135, %v1133
        %v1290 = vpack.c.b16 %v1136, %v1134
        %v1291 = vpack.c.b16 %v1139, %v1137
        %v1292 = vpack.c.b16 %v1140, %v1138
        %v1293 = vpack.c.b16 %v1143, %v1141
        %v1294 = vpack.c.b16 %v1144, %v1142
        %v1295 = vpack.c.b16 %v1147, %v1145
        %v1296 = vpack.c.b16 %v1148, %v1146
        %v1297 = vpack.c.b16 %v1151, %v1149
        %v1298 = vpack.c.b16 %v1152, %v1150
        %v1299 = vpack.c.b16 %v1155, %v1153
        %v1300 = vpack.c.b16 %v1156, %v1154
        %v1301 = vpack.c.b16 %v1159, %v1157
        %v1302 = vpack.c.b16 %v1160, %v1158
        %v1303 = vpack.c.b16 %v1163, %v1161
        %v1304 = vpack.c.b16 %v1164, %v1162
        %v1305 = vpack.c.b16 %v1167, %v1165
        %v1306 = vpack.c.b16 %v1168, %v1166
        %v1307 = vpack.c.b16 %v1171, %v1169
        %v1308 = vpack.c.b16 %v1172, %v1170
        %v1309 = vpack.c.b16 %v1175, %v1173
        %v1310 = vpack.c.b16 %v1176, %v1174
        %v1311 = vpack.c.b16 %v1179, %v1177
        %v1312 = vpack.c.b16 %v1180, %v1178
        %v1313 = vpack.c.b16 %v1183, %v1181
        %v1314 = vpack.c.b16 %v1184, %v1182
        %v1315 = vpack.c.b16 %v1187, %v1185
        %v1316 = vpack.c.b16 %v1188, %v1186
        %v1317 = vpack.c.b16 %v1191, %v1189
        %v1318 = vpack.c.b16 %v1192, %v1190
        %v1319 = vpack.c.b16 %v1195, %v1193
        %v1320 = vpack.c.b16 %v1196, %v1194
        %v1321 = vpack.c.b16 %v1199, %v1197
        %v1322 = vpack.c.b16 %v1200, %v1198
        %v1323 = vpack.c.b16 %v1203, %v1201
        %v1324 = vpack.c.b16 %v1204, %v1202
        %v1325 = vpack.c.b16 %v1207, %v1205
        %v1326 = vpack.c.b16 %v1208, %v1206
        %v1327 = vpack.c.b16 %v1211, %v1209
        %v1328 = vpack.c.b16 %v1212, %v1210
        %v1329 = vpack.c.b16 %v1215, %v1213
        %v1330 = vpack.c.b16 %v1216, %v1214
        %v1331 = vpack.c.b16 %v1219, %v1217
        %v1332 = vpack.c.b16 %v1220, %v1218
        %v1333 = vpack.c.b16 %v1223, %v1221
        %v1334 = vpack.c.b16 %v1224, %v1222
        %v1335 = vpack.c.b16 %v1227, %v1225
        %v1336 = vpack.c.b16 %v1228, %v1226
        %v1337 = vpack.c.b16 %v1231, %v1229
        %v1338 = vpack.c.b16 %v1232, %v1230
        %v1339 = vpack.c.b16 %v1235, %v1233
        %v1340 = vpack.c.b16 %v1236, %v1234
        %v1341 = vpack.c.b16 %v1239, %v1237
        %v1342 = vpack.c.b16 %v1240, %v1238
        %v1343 = vpack.c.b16 %v1243, %v1241
        %v1344 = vpack.c.b16 %v1244, %v1242
        %v1345 = vpack.c.b16 %v1247, %v1245
        %v1346 = vpack.c.b16 %v1248, %v1246
        %v1347 = vpack.c.b16 %v1251, %v1249
        %v1348 = vpack.c.b16 %v1252, %v1250
        %v1349 = vpack.c.b16 %v1255, %v1253
        %v1350 = vpack.c.b16 %v1256, %v1254
        %v1351 = vpack.c.b16 %v1259, %v1257
        %v1352 = vpack.c.b16 %v1260, %v1258
        %v1353 = vpack.c.b16 %v1263, %v1261
        %v1354 = vpack.c.b16 %v1264, %v1262
        %v1355 = vpack.c.b16 %v1267, %v1265
        %v1356 = vpack.c.b16 %v1268, %v1266
        %v1357 = vpack.c.b16 %v1271, %v1269
        %v1358 = vpack.c.b16 %v1272, %v1270
        %v1359 = vpack.c.b16 %v1273, %v1273
        %v1360 = vpack.c.b16 %v1274, %v1274
        %v1446 = vsel %vm805, %v1359, 0
        %v1449 = vsel %vm805, %v1360, 0
        %1451 = vmatprep.subr.bf16.mxu0 %v1276
        %1452 = vmatpush1.bf16.msra.mxu0 %v1275
        %1453 = vmatprep.subr.bf16.mxu0 %v1278
        %1454 = vmatpush1.bf16.msra.mxu0 %v1277
        %1455 = vmatprep.subr.bf16.mxu0 %v1280
        %1456 = vmatpush1.bf16.msra.mxu0 %v1279
        %1457 = vmatprep.subr.bf16.mxu0 %v1282
        %1458 = vmatpush1.bf16.msra.mxu0 %v1281
        %1459 = vmatprep.subr.bf16.mxu0 %v1284
        %1460 = vmatpush1.bf16.msra.mxu0 %v1283
        %1461 = vmatprep.subr.bf16.mxu0 %v1286
        %1462 = vmatpush1.bf16.msra.mxu0 %v1285
        %1463 = vmatprep.subr.bf16.mxu0 %v1288
        %1464 = vmatpush1.bf16.msra.mxu0 %v1287
        %1465 = vmatprep.subr.bf16.mxu0 %v1290
        %1466 = vmatpush1.bf16.msra.mxu0 %v1289
        %1467 = vmatprep.subr.bf16.mxu0 %v1292
        %1468 = vmatpush1.bf16.msra.mxu0 %v1291
        %1469 = vmatprep.subr.bf16.mxu0 %v1294
        %1470 = vmatpush1.bf16.msra.mxu0 %v1293
        %1471 = vmatprep.subr.bf16.mxu0 %v1296
        %1472 = vmatpush1.bf16.msra.mxu0 %v1295
        %1473 = vmatprep.subr.bf16.mxu0 %v1298
        %1474 = vmatpush1.bf16.msra.mxu0 %v1297
        %1475 = vmatprep.subr.bf16.mxu0 %v1300
        %1476 = vmatpush1.bf16.msra.mxu0 %v1299
        %1477 = vmatprep.subr.bf16.mxu0 %v1302
        %1478 = vmatpush1.bf16.msra.mxu0 %v1301
        %1479 = vmatprep.subr.bf16.mxu0 %v1304
        %1480 = vmatpush1.bf16.msra.mxu0 %v1303
        %1481 = vmatprep.subr.bf16.mxu0 %v1306
        %1482 = vmatpush1.bf16.msra.mxu0 %v1305
        %1483 = vmatprep.mubr.bf16.mxu0 %v286
        %1484 = vmatmul.mubr.bf16.gmra.mrb[0].mxu0 %v285
        %v1485 = vpop.f32.mrb[0].mxu0
        %v1486 = vadd.f32 0.0, %v1485
        %v1487 = vpop.f32.mrb[0].mxu0
        %v1488 = vadd.f32 0.0, %v1487
        %v1489 = vpop.f32.mrb[0].mxu0
        %v1490 = vpop.f32.mrb[0].mxu0
        %1491 = vdwg.mxu0
        %1492 = vmatprep.subr.bf16.mxu0 %v1308
        %1493 = vmatpush1.bf16.msra.mxu0 %v1307
        %1494 = vmatprep.subr.bf16.mxu0 %v1310
        %1495 = vmatpush1.bf16.msra.mxu0 %v1309
        %1496 = vmatprep.subr.bf16.mxu0 %v1312
        %1497 = vmatpush1.bf16.msra.mxu0 %v1311
        %1498 = vmatprep.subr.bf16.mxu0 %v1314
        %1499 = vmatpush1.bf16.msra.mxu0 %v1313
        %1500 = vmatprep.subr.bf16.mxu0 %v1316
        %1501 = vmatpush1.bf16.msra.mxu0 %v1315
        %1502 = vmatprep.subr.bf16.mxu0 %v1318
        %1503 = vmatpush1.bf16.msra.mxu0 %v1317
        %1504 = vmatprep.subr.bf16.mxu0 %v1320
        %1505 = vmatpush1.bf16.msra.mxu0 %v1319
        %1506 = vmatprep.subr.bf16.mxu0 %v1322
        %1507 = vmatpush1.bf16.msra.mxu0 %v1321
        %1508 = vmatprep.subr.bf16.mxu0 %v1324
        %1509 = vmatpush1.bf16.msra.mxu0 %v1323
        %1510 = vmatprep.subr.bf16.mxu0 %v1326
        %1511 = vmatpush1.bf16.msra.mxu0 %v1325
        %1512 = vmatprep.subr.bf16.mxu0 %v1328
        %1513 = vmatpush1.bf16.msra.mxu0 %v1327
        %1514 = vmatprep.subr.bf16.mxu0 %v1330
        %1515 = vmatpush1.bf16.msra.mxu0 %v1329
        %1516 = vmatprep.subr.bf16.mxu0 %v1332
        %1517 = vmatpush1.bf16.msra.mxu0 %v1331
        %1518 = vmatprep.subr.bf16.mxu0 %v1334
        %1519 = vmatpush1.bf16.msra.mxu0 %v1333
        %1520 = vmatprep.subr.bf16.mxu0 %v1336
        %1521 = vmatpush1.bf16.msra.mxu0 %v1335
        %1522 = vmatprep.subr.bf16.mxu0 %v1338
        %1523 = vmatpush1.bf16.msra.mxu0 %v1337
        %1524 = vmatprep.mubr.bf16.mxu0 %v288
        %1525 = vmatmul.mubr.bf16.gmra.mrb[0].mxu0 %v287
        %v1526 = vpop.f32.mrb[0].mxu0
        %v1527 = vadd.f32 %v1486, %v1526
        %v1528 = vpop.f32.mrb[0].mxu0
        %v1529 = vadd.f32 %v1488, %v1528
        %v1530 = vpop.f32.mrb[0].mxu0
        %v1531 = vpop.f32.mrb[0].mxu0
        %1532 = vdwg.mxu0
        %1533 = vmatprep.subr.bf16.mxu0 %v1340
        %1534 = vmatpush1.bf16.msra.mxu0 %v1339
        %1535 = vmatprep.subr.bf16.mxu0 %v1342
        %1536 = vmatpush1.bf16.msra.mxu0 %v1341
        %1537 = vmatprep.subr.bf16.mxu0 %v1344
        %1538 = vmatpush1.bf16.msra.mxu0 %v1343
        %1539 = vmatprep.subr.bf16.mxu0 %v1346
        %1540 = vmatpush1.bf16.msra.mxu0 %v1345
        %1541 = vmatprep.subr.bf16.mxu0 %v1348
        %1542 = vmatpush1.bf16.msra.mxu0 %v1347
        %1543 = vmatprep.subr.bf16.mxu0 %v1350
        %1544 = vmatpush1.bf16.msra.mxu0 %v1349
        %1545 = vmatprep.subr.bf16.mxu0 %v1352
        %1546 = vmatpush1.bf16.msra.mxu0 %v1351
        %1547 = vmatprep.subr.bf16.mxu0 %v1354
        %1548 = vmatpush1.bf16.msra.mxu0 %v1353
        %1549 = vmatprep.subr.bf16.mxu0 %v1356
        %1550 = vmatpush1.bf16.msra.mxu0 %v1355
        %1551 = vmatprep.subr.bf16.mxu0 %v1358
        %1552 = vmatpush1.bf16.msra.mxu0 %v1357
        %1553 = vmatprep.subr.bf16.mxu0 %v1449
        %1554 = vmatpush1.bf16.msra.mxu0 %v1446
        %1555 = vmatprep.subr.bf16.mxu0 0
        %1556 = vmatpush1.bf16.msra.mxu0 0
        %1557 = vmatprep.subr.bf16.mxu0 0
        %1558 = vmatpush1.bf16.msra.mxu0 0
        %1559 = vmatprep.subr.bf16.mxu0 0
        %1560 = vmatpush1.bf16.msra.mxu0 0
        %1561 = vmatprep.subr.bf16.mxu0 0
        %1562 = vmatpush1.bf16.msra.mxu0 0
        %1563 = vmatprep.subr.bf16.mxu0 0
        %1564 = vmatpush1.bf16.msra.mxu0 0
        %1565 = vmatprep.mubr.bf16.mxu0 %v803
        %1566 = vmatmul.mubr.bf16.gmra.mrb[0].mxu0 %v289
        %v1567 = vpop.f32.mrb[0].mxu0
        %v1568 = vadd.f32 %v1527, %v1567
        %v1569 = vpop.f32.mrb[0].mxu0
        %v1570 = vadd.f32 %v1529, %v1569
        %v1571 = vpop.f32.mrb[0].mxu0
        %v1572 = vpop.f32.mrb[0].mxu0
        %1573 = vdwg.mxu0
        %v1574 = vmax.f32 %v929, %v1568
        %v1575 = vmax.f32 %v931, %v1570
        %v1576 = vld [vmem:[#allocation2 + $0x10] sm:$0xff]
        %v1577 = vld [vmem:[#allocation2 + $0x58] sm:$0xff]
        %v1578 = vld [vmem:[#allocation2 + $0xa0] sm:$0xff]
        %v1579 = vld [vmem:[#allocation2 + $0xe8] sm:$0xff]
        %v1580 = vld [vmem:[#allocation2 + $0x130] sm:$0xff]
        %v1581 = vld [vmem:[#allocation2 + $0x178] sm:$0xff]
        %v1582 = vld [vmem:[#allocation2 + $0x1c0] sm:$0xff]
        %v1583 = vld [vmem:[#allocation2 + $0x208] sm:$0xff]
        %v1584 = vld [vmem:[#allocation2 + $0x250] sm:$0xff]
        %v1585 = vld [vmem:[#allocation2 + $0x298] sm:$0xff]
        %v1586 = vld [vmem:[#allocation2 + $0x2e0] sm:$0xff]
        %v1587 = vld [vmem:[#allocation2 + $0x328] sm:$0xff]
        %v1588 = vld [vmem:[#allocation2 + $0x370] sm:$0xff]
        %v1589 = vld [vmem:[#allocation2 + $0x3b8] sm:$0xff]
        %v1590 = vld [vmem:[#allocation2 + $0x400] sm:$0xff]
        %v1591 = vld [vmem:[#allocation2 + $0x448] sm:$0xff]
        %v1592 = vld [vmem:[#allocation2 + $0x490] sm:$0xff]
        %v1593 = vld [vmem:[#allocation2 + $0x4d8] sm:$0xff]
        %v1594 = vld [vmem:[#allocation2 + $0x520] sm:$0xff]
        %v1595 = vld [vmem:[#allocation2 + $0x568] sm:$0xff]
        %v1596 = vld [vmem:[#allocation2 + $0x5b0] sm:$0xff]
        %v1597 = vld [vmem:[#allocation2 + $0x5f8] sm:$0xff]
        %v1598 = vld [vmem:[#allocation2 + $0x640] sm:$0xff]
        %v1599 = vld [vmem:[#allocation2 + $0x688] sm:$0xff]
        %v1600 = vld [vmem:[#allocation2 + $0x6d0] sm:$0xff]
        %v1601 = vld [vmem:[#allocation2 + $0x718] sm:$0xff]
        %v1602 = vld [vmem:[#allocation2 + $0x760] sm:$0xff]
        %v1603 = vld [vmem:[#allocation2 + $0x7a8] sm:$0xff]
        %v1604 = vld [vmem:[#allocation2 + $0x7f0] sm:$0xff]
        %v1605 = vld [vmem:[#allocation2 + $0x838] sm:$0xff]
        %v1606 = vld [vmem:[#allocation2 + $0x880] sm:$0xff]
        %v1607 = vld [vmem:[#allocation2 + $0x8c8] sm:$0xff]
        %v1608 = vld [vmem:[#allocation2 + $0x910] sm:$0xff]
        %v1609 = vld [vmem:[#allocation2 + $0x958] sm:$0xff]
        %v1610 = vld [vmem:[#allocation2 + $0x9a0] sm:$0xff]
        %v1611 = vld [vmem:[#allocation2 + $0x9e8] sm:$0xff]
        %v1612 = vld [vmem:[#allocation2 + $0xa30] sm:$0xff]
        %v1613 = vld [vmem:[#allocation2 + $0xa78] sm:$0xff]
        %v1614 = vld [vmem:[#allocation2 + $0xac0] sm:$0xff]
        %v1615 = vld [vmem:[#allocation2 + $0xb08] sm:$0xff]
        %v1616 = vld [vmem:[#allocation2 + $0xb50] sm:$0xff]
        %v1617 = vld [vmem:[#allocation2 + $0xb98] sm:$0xff]
        %v1618 = vld [vmem:[#allocation2 + $0xbe0] sm:$0xff]
        %v1619 = vld [vmem:[#allocation2 + $0xc28] sm:$0xff]
        %v1620 = vld [vmem:[#allocation2 + $0xc70] sm:$0xff]
        %v1621 = vld [vmem:[#allocation2 + $0xcb8] sm:$0xff]
        %v1622 = vld [vmem:[#allocation2 + $0xd00] sm:$0xff]
        %v1623 = vld [vmem:[#allocation2 + $0xd48] sm:$0xff]
        %v1624 = vld [vmem:[#allocation2 + $0xd90] sm:$0xff]
        %v1625 = vld [vmem:[#allocation2 + $0xdd8] sm:$0xff]
        %v1626 = vld [vmem:[#allocation2 + $0xe20] sm:$0xff]
        %v1627 = vld [vmem:[#allocation2 + $0xe68] sm:$0xff]
        %v1628 = vld [vmem:[#allocation2 + $0xeb0] sm:$0xff]
        %v1629 = vld [vmem:[#allocation2 + $0xef8] sm:$0xff]
        %v1630 = vld [vmem:[#allocation2 + $0xf40] sm:$0xff]
        %v1631 = vld [vmem:[#allocation2 + $0xf88] sm:$0xff]
        %v1632 = vld [vmem:[#allocation2 + $0xfd0] sm:$0xff]
        %v1633 = vld [vmem:[#allocation2 + $0x1018] sm:$0xff]
        %v1634 = vld [vmem:[#allocation2 + $0x1060] sm:$0xff]
        %v1635 = vld [vmem:[#allocation2 + $0x10a8] sm:$0xff]
        %v1636 = vld [vmem:[#allocation2 + $0x10f0] sm:$0xff]
        %v1637 = vld [vmem:[#allocation2 + $0x1138] sm:$0xff]
        %v1638 = vld [vmem:[#allocation2 + $0x1180] sm:$0xff]
        %v1639 = vld [vmem:[#allocation2 + $0x11c8] sm:$0xff]
        %v1640 = vld [vmem:[#allocation2 + $0x1210] sm:$0xff]
        %v1641 = vld [vmem:[#allocation2 + $0x1258] sm:$0xff]
        %v1642 = vld [vmem:[#allocation2 + $0x12a0] sm:$0xff]
        %v1643 = vld [vmem:[#allocation2 + $0x12e8] sm:$0xff]
        %v1644 = vld [vmem:[#allocation2 + $0x1330] sm:$0xff]
        %v1645 = vld [vmem:[#allocation2 + $0x1378] sm:$0xff]
        %v1646 = vld [vmem:[#allocation2 + $0x13c0] sm:$0xff]
        %v1647 = vld [vmem:[#allocation2 + $0x1408] sm:$0xff]
        %v1648 = vld [vmem:[#allocation2 + $0x1450] sm:$0xff]
        %v1649 = vld [vmem:[#allocation2 + $0x1498] sm:$0xff]
        %v1650 = vld [vmem:[#allocation2 + $0x14e0] sm:$0xff]
        %v1651 = vld [vmem:[#allocation2 + $0x1528] sm:$0xff]
        %v1652 = vld [vmem:[#allocation2 + $0x1570] sm:$0xff]
        %v1653 = vld [vmem:[#allocation2 + $0x15b8] sm:$0xff]
        %v1654 = vld [vmem:[#allocation2 + $0x1600] sm:$0xff]
        %v1655 = vld [vmem:[#allocation2 + $0x1648] sm:$0xff]
        %v1656 = vld [vmem:[#allocation2 + $0x1690] sm:$0xff]
        %v1657 = vld [vmem:[#allocation2 + $0x16d8] sm:$0xff]
        %v1658 = vld [vmem:[#allocation2 + $0x1720] sm:$0xff]
        %v1659 = vld [vmem:[#allocation2 + $0x1768] sm:$0xff]
        %v1660 = vld [vmem:[#allocation2 + $0x17b0] sm:$0x33]
        %v1746 = vunpack.c.l.b16 %v1576
        %v1747 = vunpack.c.h.b16 %v1576
        %v1748 = vunpack.c.l.b16 %v1577
        %v1749 = vunpack.c.h.b16 %v1577
        %v1750 = vunpack.c.l.b16 %v1578
        %v1751 = vunpack.c.h.b16 %v1578
        %v1752 = vunpack.c.l.b16 %v1579
        %v1753 = vunpack.c.h.b16 %v1579
        %v1754 = vunpack.c.l.b16 %v1580
        %v1755 = vunpack.c.h.b16 %v1580
        %v1756 = vunpack.c.l.b16 %v1581
        %v1757 = vunpack.c.h.b16 %v1581
        %v1758 = vunpack.c.l.b16 %v1582
        %v1759 = vunpack.c.h.b16 %v1582
        %v1760 = vunpack.c.l.b16 %v1583
        %v1761 = vunpack.c.h.b16 %v1583
        %v1762 = vunpack.c.l.b16 %v1584
        %v1763 = vunpack.c.h.b16 %v1584
        %v1764 = vunpack.c.l.b16 %v1585
        %v1765 = vunpack.c.h.b16 %v1585
        %v1766 = vunpack.c.l.b16 %v1586
        %v1767 = vunpack.c.h.b16 %v1586
        %v1768 = vunpack.c.l.b16 %v1587
        %v1769 = vunpack.c.h.b16 %v1587
        %v1770 = vunpack.c.l.b16 %v1588
        %v1771 = vunpack.c.h.b16 %v1588
        %v1772 = vunpack.c.l.b16 %v1589
        %v1773 = vunpack.c.h.b16 %v1589
        %v1774 = vunpack.c.l.b16 %v1590
        %v1775 = vunpack.c.h.b16 %v1590
        %v1776 = vunpack.c.l.b16 %v1591
        %v1777 = vunpack.c.h.b16 %v1591
        %v1778 = vunpack.c.l.b16 %v1592
        %v1779 = vunpack.c.h.b16 %v1592
        %v1780 = vunpack.c.l.b16 %v1593
        %v1781 = vunpack.c.h.b16 %v1593
        %v1782 = vunpack.c.l.b16 %v1594
        %v1783 = vunpack.c.h.b16 %v1594
        %v1784 = vunpack.c.l.b16 %v1595
        %v1785 = vunpack.c.h.b16 %v1595
        %v1786 = vunpack.c.l.b16 %v1596
        %v1787 = vunpack.c.h.b16 %v1596
        %v1788 = vunpack.c.l.b16 %v1597
        %v1789 = vunpack.c.h.b16 %v1597
        %v1790 = vunpack.c.l.b16 %v1598
        %v1791 = vunpack.c.h.b16 %v1598
        %v1792 = vunpack.c.l.b16 %v1599
        %v1793 = vunpack.c.h.b16 %v1599
        %v1794 = vunpack.c.l.b16 %v1600
        %v1795 = vunpack.c.h.b16 %v1600
        %v1796 = vunpack.c.l.b16 %v1601
        %v1797 = vunpack.c.h.b16 %v1601
        %v1798 = vunpack.c.l.b16 %v1602
        %v1799 = vunpack.c.h.b16 %v1602
        %v1800 = vunpack.c.l.b16 %v1603
        %v1801 = vunpack.c.h.b16 %v1603
        %v1802 = vunpack.c.l.b16 %v1604
        %v1803 = vunpack.c.h.b16 %v1604
        %v1804 = vunpack.c.l.b16 %v1605
        %v1805 = vunpack.c.h.b16 %v1605
        %v1806 = vunpack.c.l.b16 %v1606
        %v1807 = vunpack.c.h.b16 %v1606
        %v1808 = vunpack.c.l.b16 %v1607
        %v1809 = vunpack.c.h.b16 %v1607
        %v1810 = vunpack.c.l.b16 %v1608
        %v1811 = vunpack.c.h.b16 %v1608
        %v1812 = vunpack.c.l.b16 %v1609
        %v1813 = vunpack.c.h.b16 %v1609
        %v1814 = vunpack.c.l.b16 %v1610
        %v1815 = vunpack.c.h.b16 %v1610
        %v1816 = vunpack.c.l.b16 %v1611
        %v1817 = vunpack.c.h.b16 %v1611
        %v1818 = vunpack.c.l.b16 %v1612
        %v1819 = vunpack.c.h.b16 %v1612
        %v1820 = vunpack.c.l.b16 %v1613
        %v1821 = vunpack.c.h.b16 %v1613
        %v1822 = vunpack.c.l.b16 %v1614
        %v1823 = vunpack.c.h.b16 %v1614
        %v1824 = vunpack.c.l.b16 %v1615
        %v1825 = vunpack.c.h.b16 %v1615
        %v1826 = vunpack.c.l.b16 %v1616
        %v1827 = vunpack.c.h.b16 %v1616
        %v1828 = vunpack.c.l.b16 %v1617
        %v1829 = vunpack.c.h.b16 %v1617
        %v1830 = vunpack.c.l.b16 %v1618
        %v1831 = vunpack.c.h.b16 %v1618
        %v1832 = vunpack.c.l.b16 %v1619
        %v1833 = vunpack.c.h.b16 %v1619
        %v1834 = vunpack.c.l.b16 %v1620
        %v1835 = vunpack.c.h.b16 %v1620
        %v1836 = vunpack.c.l.b16 %v1621
        %v1837 = vunpack.c.h.b16 %v1621
        %v1838 = vunpack.c.l.b16 %v1622
        %v1839 = vunpack.c.h.b16 %v1622
        %v1840 = vunpack.c.l.b16 %v1623
        %v1841 = vunpack.c.h.b16 %v1623
        %v1842 = vunpack.c.l.b16 %v1624
        %v1843 = vunpack.c.h.b16 %v1624
        %v1844 = vunpack.c.l.b16 %v1625
        %v1845 = vunpack.c.h.b16 %v1625
        %v1846 = vunpack.c.l.b16 %v1626
        %v1847 = vunpack.c.h.b16 %v1626
        %v1848 = vunpack.c.l.b16 %v1627
        %v1849 = vunpack.c.h.b16 %v1627
        %v1850 = vunpack.c.l.b16 %v1628
        %v1851 = vunpack.c.h.b16 %v1628
        %v1852 = vunpack.c.l.b16 %v1629
        %v1853 = vunpack.c.h.b16 %v1629
        %v1854 = vunpack.c.l.b16 %v1630
        %v1855 = vunpack.c.h.b16 %v1630
        %v1856 = vunpack.c.l.b16 %v1631
        %v1857 = vunpack.c.h.b16 %v1631
        %v1858 = vunpack.c.l.b16 %v1632
        %v1859 = vunpack.c.h.b16 %v1632
        %v1860 = vunpack.c.l.b16 %v1633
        %v1861 = vunpack.c.h.b16 %v1633
        %v1862 = vunpack.c.l.b16 %v1634
        %v1863 = vunpack.c.h.b16 %v1634
        %v1864 = vunpack.c.l.b16 %v1635
        %v1865 = vunpack.c.h.b16 %v1635
        %v1866 = vunpack.c.l.b16 %v1636
        %v1867 = vunpack.c.h.b16 %v1636
        %v1868 = vunpack.c.l.b16 %v1637
        %v1869 = vunpack.c.h.b16 %v1637
        %v1870 = vunpack.c.l.b16 %v1638
        %v1871 = vunpack.c.h.b16 %v1638
        %v1872 = vunpack.c.l.b16 %v1639
        %v1873 = vunpack.c.h.b16 %v1639
        %v1874 = vunpack.c.l.b16 %v1640
        %v1875 = vunpack.c.h.b16 %v1640
        %v1876 = vunpack.c.l.b16 %v1641
        %v1877 = vunpack.c.h.b16 %v1641
        %v1878 = vunpack.c.l.b16 %v1642
        %v1879 = vunpack.c.h.b16 %v1642
        %v1880 = vunpack.c.l.b16 %v1643
        %v1881 = vunpack.c.h.b16 %v1643
        %v1882 = vunpack.c.l.b16 %v1644
        %v1883 = vunpack.c.h.b16 %v1644
        %v1884 = vunpack.c.l.b16 %v1645
        %v1885 = vunpack.c.h.b16 %v1645
        %v1886 = vunpack.c.l.b16 %v1646
        %v1887 = vunpack.c.h.b16 %v1646
        %v1888 = vunpack.c.l.b16 %v1647
        %v1889 = vunpack.c.h.b16 %v1647
        %v1890 = vunpack.c.l.b16 %v1648
        %v1891 = vunpack.c.h.b16 %v1648
        %v1892 = vunpack.c.l.b16 %v1649
        %v1893 = vunpack.c.h.b16 %v1649
        %v1894 = vunpack.c.l.b16 %v1650
        %v1895 = vunpack.c.h.b16 %v1650
        %v1896 = vunpack.c.l.b16 %v1651
        %v1897 = vunpack.c.h.b16 %v1651
        %v1898 = vunpack.c.l.b16 %v1652
        %v1899 = vunpack.c.h.b16 %v1652
        %v1900 = vunpack.c.l.b16 %v1653
        %v1901 = vunpack.c.h.b16 %v1653
        %v1902 = vunpack.c.l.b16 %v1654
        %v1903 = vunpack.c.h.b16 %v1654
        %v1904 = vunpack.c.l.b16 %v1655
        %v1905 = vunpack.c.h.b16 %v1655
        %v1906 = vunpack.c.l.b16 %v1656
        %v1907 = vunpack.c.h.b16 %v1656
        %v1908 = vunpack.c.l.b16 %v1657
        %v1909 = vunpack.c.h.b16 %v1657
        %v1910 = vunpack.c.l.b16 %v1658
        %v1911 = vunpack.c.h.b16 %v1658
        %v1912 = vunpack.c.l.b16 %v1659
        %v1913 = vunpack.c.h.b16 %v1659
        %v1914 = vunpack.c.l.b16 %v1660
        %v1915 = vunpack.c.h.b16 %v1660
        %v1916 = vpack.c.b16 %v1748, %v1746
        %v1917 = vpack.c.b16 %v1749, %v1747
        %v1918 = vpack.c.b16 %v1752, %v1750
        %v1919 = vpack.c.b16 %v1753, %v1751
        %v1920 = vpack.c.b16 %v1756, %v1754
        %v1921 = vpack.c.b16 %v1757, %v1755
        %v1922 = vpack.c.b16 %v1760, %v1758
        %v1923 = vpack.c.b16 %v1761, %v1759
        %v1924 = vpack.c.b16 %v1764, %v1762
        %v1925 = vpack.c.b16 %v1765, %v1763
        %v1926 = vpack.c.b16 %v1768, %v1766
        %v1927 = vpack.c.b16 %v1769, %v1767
        %v1928 = vpack.c.b16 %v1772, %v1770
        %v1929 = vpack.c.b16 %v1773, %v1771
        %v1930 = vpack.c.b16 %v1776, %v1774
        %v1931 = vpack.c.b16 %v1777, %v1775
        %v1932 = vpack.c.b16 %v1780, %v1778
        %v1933 = vpack.c.b16 %v1781, %v1779
        %v1934 = vpack.c.b16 %v1784, %v1782
        %v1935 = vpack.c.b16 %v1785, %v1783
        %v1936 = vpack.c.b16 %v1788, %v1786
        %v1937 = vpack.c.b16 %v1789, %v1787
        %v1938 = vpack.c.b16 %v1792, %v1790
        %v1939 = vpack.c.b16 %v1793, %v1791
        %v1940 = vpack.c.b16 %v1796, %v1794
        %v1941 = vpack.c.b16 %v1797, %v1795
        %v1942 = vpack.c.b16 %v1800, %v1798
        %v1943 = vpack.c.b16 %v1801, %v1799
        %v1944 = vpack.c.b16 %v1804, %v1802
        %v1945 = vpack.c.b16 %v1805, %v1803
        %v1946 = vpack.c.b16 %v1808, %v1806
        %v1947 = vpack.c.b16 %v1809, %v1807
        %v1948 = vpack.c.b16 %v1812, %v1810
        %v1949 = vpack.c.b16 %v1813, %v1811
        %v1950 = vpack.c.b16 %v1816, %v1814
        %v1951 = vpack.c.b16 %v1817, %v1815
        %v1952 = vpack.c.b16 %v1820, %v1818
        %v1953 = vpack.c.b16 %v1821, %v1819
        %v1954 = vpack.c.b16 %v1824, %v1822
        %v1955 = vpack.c.b16 %v1825, %v1823
        %v1956 = vpack.c.b16 %v1828, %v1826
        %v1957 = vpack.c.b16 %v1829, %v1827
        %v1958 = vpack.c.b16 %v1832, %v1830
        %v1959 = vpack.c.b16 %v1833, %v1831
        %v1960 = vpack.c.b16 %v1836, %v1834
        %v1961 = vpack.c.b16 %v1837, %v1835
        %v1962 = vpack.c.b16 %v1840, %v1838
        %v1963 = vpack.c.b16 %v1841, %v1839
        %v1964 = vpack.c.b16 %v1844, %v1842
        %v1965 = vpack.c.b16 %v1845, %v1843
        %v1966 = vpack.c.b16 %v1848, %v1846
        %v1967 = vpack.c.b16 %v1849, %v1847
        %v1968 = vpack.c.b16 %v1852, %v1850
        %v1969 = vpack.c.b16 %v1853, %v1851
        %v1970 = vpack.c.b16 %v1856, %v1854
        %v1971 = vpack.c.b16 %v1857, %v1855
        %v1972 = vpack.c.b16 %v1860, %v1858
        %v1973 = vpack.c.b16 %v1861, %v1859
        %v1974 = vpack.c.b16 %v1864, %v1862
        %v1975 = vpack.c.b16 %v1865, %v1863
        %v1976 = vpack.c.b16 %v1868, %v1866
        %v1977 = vpack.c.b16 %v1869, %v1867
        %v1978 = vpack.c.b16 %v1872, %v1870
        %v1979 = vpack.c.b16 %v1873, %v1871
        %v1980 = vpack.c.b16 %v1876, %v1874
        %v1981 = vpack.c.b16 %v1877, %v1875
        %v1982 = vpack.c.b16 %v1880, %v1878
        %v1983 = vpack.c.b16 %v1881, %v1879
        %v1984 = vpack.c.b16 %v1884, %v1882
        %v1985 = vpack.c.b16 %v1885, %v1883
        %v1986 = vpack.c.b16 %v1888, %v1886
        %v1987 = vpack.c.b16 %v1889, %v1887
        %v1988 = vpack.c.b16 %v1892, %v1890
        %v1989 = vpack.c.b16 %v1893, %v1891
        %v1990 = vpack.c.b16 %v1896, %v1894
        %v1991 = vpack.c.b16 %v1897, %v1895
        %v1992 = vpack.c.b16 %v1900, %v1898
        %v1993 = vpack.c.b16 %v1901, %v1899
        %v1994 = vpack.c.b16 %v1904, %v1902
        %v1995 = vpack.c.b16 %v1905, %v1903
        %v1996 = vpack.c.b16 %v1908, %v1906
        %v1997 = vpack.c.b16 %v1909, %v1907
        %v1998 = vpack.c.b16 %v1912, %v1910
        %v1999 = vpack.c.b16 %v1913, %v1911
        %v2000 = vpack.c.b16 %v1914, %v1914
        %v2001 = vpack.c.b16 %v1915, %v1915
        %v2087 = vsel %vm805, %v2000, 0
        %v2090 = vsel %vm805, %v2001, 0
        %2092 = vmatprep.subr.bf16.mxu0 %v1917
        %2093 = vmatpush1.bf16.msra.mxu0 %v1916
        %2094 = vmatprep.subr.bf16.mxu0 %v1919
        %2095 = vmatpush1.bf16.msra.mxu0 %v1918
        %2096 = vmatprep.subr.bf16.mxu0 %v1921
        %2097 = vmatpush1.bf16.msra.mxu0 %v1920
        %2098 = vmatprep.subr.bf16.mxu0 %v1923
        %2099 = vmatpush1.bf16.msra.mxu0 %v1922
        %2100 = vmatprep.subr.bf16.mxu0 %v1925
        %2101 = vmatpush1.bf16.msra.mxu0 %v1924
        %2102 = vmatprep.subr.bf16.mxu0 %v1927
        %2103 = vmatpush1.bf16.msra.mxu0 %v1926
        %2104 = vmatprep.subr.bf16.mxu0 %v1929
        %2105 = vmatpush1.bf16.msra.mxu0 %v1928
        %2106 = vmatprep.subr.bf16.mxu0 %v1931
        %2107 = vmatpush1.bf16.msra.mxu0 %v1930
        %2108 = vmatprep.subr.bf16.mxu0 %v1933
        %2109 = vmatpush1.bf16.msra.mxu0 %v1932
        %2110 = vmatprep.subr.bf16.mxu0 %v1935
        %2111 = vmatpush1.bf16.msra.mxu0 %v1934
        %2112 = vmatprep.subr.bf16.mxu0 %v1937
        %2113 = vmatpush1.bf16.msra.mxu0 %v1936
        %2114 = vmatprep.subr.bf16.mxu0 %v1939
        %2115 = vmatpush1.bf16.msra.mxu0 %v1938
        %2116 = vmatprep.subr.bf16.mxu0 %v1941
        %2117 = vmatpush1.bf16.msra.mxu0 %v1940
        %2118 = vmatprep.subr.bf16.mxu0 %v1943
        %2119 = vmatpush1.bf16.msra.mxu0 %v1942
        %2120 = vmatprep.subr.bf16.mxu0 %v1945
        %2121 = vmatpush1.bf16.msra.mxu0 %v1944
        %2122 = vmatprep.subr.bf16.mxu0 %v1947
        %2123 = vmatpush1.bf16.msra.mxu0 %v1946
        %2124 = vmatprep.mubr.bf16.mxu0 %v286
        %2125 = vmatmul.mubr.bf16.gmra.mrb[0].mxu0 %v285
        %v2126 = vpop.f32.mrb[0].mxu0
        %v2127 = vadd.f32 0.0, %v2126
        %v2128 = vpop.f32.mrb[0].mxu0
        %v2129 = vadd.f32 0.0, %v2128
        %v2130 = vpop.f32.mrb[0].mxu0
        %v2131 = vpop.f32.mrb[0].mxu0
        %2132 = vdwg.mxu0
        %2133 = vmatprep.subr.bf16.mxu0 %v1949
        %2134 = vmatpush1.bf16.msra.mxu0 %v1948
        %2135 = vmatprep.subr.bf16.mxu0 %v1951
        %2136 = vmatpush1.bf16.msra.mxu0 %v1950
        %2137 = vmatprep.subr.bf16.mxu0 %v1953
        %2138 = vmatpush1.bf16.msra.mxu0 %v1952
        %2139 = vmatprep.subr.bf16.mxu0 %v1955
        %2140 = vmatpush1.bf16.msra.mxu0 %v1954
        %2141 = vmatprep.subr.bf16.mxu0 %v1957
        %2142 = vmatpush1.bf16.msra.mxu0 %v1956
        %2143 = vmatprep.subr.bf16.mxu0 %v1959
        %2144 = vmatpush1.bf16.msra.mxu0 %v1958
        %2145 = vmatprep.subr.bf16.mxu0 %v1961
        %2146 = vmatpush1.bf16.msra.mxu0 %v1960
        %2147 = vmatprep.subr.bf16.mxu0 %v1963
        %2148 = vmatpush1.bf16.msra.mxu0 %v1962
        %2149 = vmatprep.subr.bf16.mxu0 %v1965
        %2150 = vmatpush1.bf16.msra.mxu0 %v1964
        %2151 = vmatprep.subr.bf16.mxu0 %v1967
        %2152 = vmatpush1.bf16.msra.mxu0 %v1966
        %2153 = vmatprep.subr.bf16.mxu0 %v1969
        %2154 = vmatpush1.bf16.msra.mxu0 %v1968
        %2155 = vmatprep.subr.bf16.mxu0 %v1971
        %2156 = vmatpush1.bf16.msra.mxu0 %v1970
        %2157 = vmatprep.subr.bf16.mxu0 %v1973
        %2158 = vmatpush1.bf16.msra.mxu0 %v1972
        %2159 = vmatprep.subr.bf16.mxu0 %v1975
        %2160 = vmatpush1.bf16.msra.mxu0 %v1974
        %2161 = vmatprep.subr.bf16.mxu0 %v1977
        %2162 = vmatpush1.bf16.msra.mxu0 %v1976
        %2163 = vmatprep.subr.bf16.mxu0 %v1979
        %2164 = vmatpush1.bf16.msra.mxu0 %v1978
        %2165 = vmatprep.mubr.bf16.mxu0 %v288
        %2166 = vmatmul.mubr.bf16.gmra.mrb[0].mxu0 %v287
        %v2167 = vpop.f32.mrb[0].mxu0
        %v2168 = vadd.f32 %v2127, %v2167
        %v2169 = vpop.f32.mrb[0].mxu0
        %v2170 = vadd.f32 %v2129, %v2169
        %v2171 = vpop.f32.mrb[0].mxu0
        %v2172 = vpop.f32.mrb[0].mxu0
        %2173 = vdwg.mxu0
        %2174 = vmatprep.subr.bf16.mxu0 %v1981
        %2175 = vmatpush1.bf16.msra.mxu0 %v1980
        %2176 = vmatprep.subr.bf16.mxu0 %v1983
        %2177 = vmatpush1.bf16.msra.mxu0 %v1982
        %2178 = vmatprep.subr.bf16.mxu0 %v1985
        %2179 = vmatpush1.bf16.msra.mxu0 %v1984
        %2180 = vmatprep.subr.bf16.mxu0 %v1987
        %2181 = vmatpush1.bf16.msra.mxu0 %v1986
        %2182 = vmatprep.subr.bf16.mxu0 %v1989
        %2183 = vmatpush1.bf16.msra.mxu0 %v1988
        %2184 = vmatprep.subr.bf16.mxu0 %v1991
        %2185 = vmatpush1.bf16.msra.mxu0 %v1990
        %2186 = vmatprep.subr.bf16.mxu0 %v1993
        %2187 = vmatpush1.bf16.msra.mxu0 %v1992
        %2188 = vmatprep.subr.bf16.mxu0 %v1995
        %2189 = vmatpush1.bf16.msra.mxu0 %v1994
        %2190 = vmatprep.subr.bf16.mxu0 %v1997
        %2191 = vmatpush1.bf16.msra.mxu0 %v1996
        %2192 = vmatprep.subr.bf16.mxu0 %v1999
        %2193 = vmatpush1.bf16.msra.mxu0 %v1998
        %2194 = vmatprep.subr.bf16.mxu0 %v2090
        %2195 = vmatpush1.bf16.msra.mxu0 %v2087
        %2196 = vmatprep.subr.bf16.mxu0 0
        %2197 = vmatpush1.bf16.msra.mxu0 0
        %2198 = vmatprep.subr.bf16.mxu0 0
        %2199 = vmatpush1.bf16.msra.mxu0 0
        %2200 = vmatprep.subr.bf16.mxu0 0
        %2201 = vmatpush1.bf16.msra.mxu0 0
        %2202 = vmatprep.subr.bf16.mxu0 0
        %2203 = vmatpush1.bf16.msra.mxu0 0
        %2204 = vmatprep.subr.bf16.mxu0 0
        %2205 = vmatpush1.bf16.msra.mxu0 0
        %2206 = vmatprep.mubr.bf16.mxu0 %v803
        %2207 = vmatmul.mubr.bf16.gmra.mrb[0].mxu0 %v289
        %v2208 = vpop.f32.mrb[0].mxu0
        %v2209 = vadd.f32 %v2168, %v2208
        %v2210 = vpop.f32.mrb[0].mxu0
        %v2211 = vadd.f32 %v2170, %v2210
        %v2212 = vpop.f32.mrb[0].mxu0
        %v2213 = vpop.f32.mrb[0].mxu0
        %2214 = vdwg.mxu0
        %v2215 = vmax.f32 %v1574, %v2209
        %v2216 = vmax.f32 %v1575, %v2211
        %v2217 = vld [vmem:[#allocation2 + $0x18] sm:$0xff]
        %v2218 = vld [vmem:[#allocation2 + $0x60] sm:$0xff]
        %v2219 = vld [vmem:[#allocation2 + $0xa8] sm:$0xff]
        %v2220 = vld [vmem:[#allocation2 + $0xf0] sm:$0xff]
        %v2221 = vld [vmem:[#allocation2 + $0x138] sm:$0xff]
        %v2222 = vld [vmem:[#allocation2 + $0x180] sm:$0xff]
        %v2223 = vld [vmem:[#allocation2 + $0x1c8] sm:$0xff]
        %v2224 = vld [vmem:[#allocation2 + $0x210] sm:$0xff]
        %v2225 = vld [vmem:[#allocation2 + $0x258] sm:$0xff]
        %v2226 = vld [vmem:[#allocation2 + $0x2a0] sm:$0xff]
        %v2227 = vld [vmem:[#allocation2 + $0x2e8] sm:$0xff]
        %v2228 = vld [vmem:[#allocation2 + $0x330] sm:$0xff]
        %v2229 = vld [vmem:[#allocation2 + $0x378] sm:$0xff]
        %v2230 = vld [vmem:[#allocation2 + $0x3c0] sm:$0xff]
        %v2231 = vld [vmem:[#allocation2 + $0x408] sm:$0xff]
        %v2232 = vld [vmem:[#allocation2 + $0x450] sm:$0xff]
        %v2233 = vld [vmem:[#allocation2 + $0x498] sm:$0xff]
        %v2234 = vld [vmem:[#allocation2 + $0x4e0] sm:$0xff]
        %v2235 = vld [vmem:[#allocation2 + $0x528] sm:$0xff]
        %v2236 = vld [vmem:[#allocation2 + $0x570] sm:$0xff]
        %v2237 = vld [vmem:[#allocation2 + $0x5b8] sm:$0xff]
        %v2238 = vld [vmem:[#allocation2 + $0x600] sm:$0xff]
        %v2239 = vld [vmem:[#allocation2 + $0x648] sm:$0xff]
        %v2240 = vld [vmem:[#allocation2 + $0x690] sm:$0xff]
        %v2241 = vld [vmem:[#allocation2 + $0x6d8] sm:$0xff]
        %v2242 = vld [vmem:[#allocation2 + $0x720] sm:$0xff]
        %v2243 = vld [vmem:[#allocation2 + $0x768] sm:$0xff]
        %v2244 = vld [vmem:[#allocation2 + $0x7b0] sm:$0xff]
        %v2245 = vld [vmem:[#allocation2 + $0x7f8] sm:$0xff]
        %v2246 = vld [vmem:[#allocation2 + $0x840] sm:$0xff]
        %v2247 = vld [vmem:[#allocation2 + $0x888] sm:$0xff]
        %v2248 = vld [vmem:[#allocation2 + $0x8d0] sm:$0xff]
        %v2249 = vld [vmem:[#allocation2 + $0x918] sm:$0xff]
        %v2250 = vld [vmem:[#allocation2 + $0x960] sm:$0xff]
        %v2251 = vld [vmem:[#allocation2 + $0x9a8] sm:$0xff]
        %v2252 = vld [vmem:[#allocation2 + $0x9f0] sm:$0xff]
        %v2253 = vld [vmem:[#allocation2 + $0xa38] sm:$0xff]
        %v2254 = vld [vmem:[#allocation2 + $0xa80] sm:$0xff]
        %v2255 = vld [vmem:[#allocation2 + $0xac8] sm:$0xff]
        %v2256 = vld [vmem:[#allocation2 + $0xb10] sm:$0xff]
        %v2257 = vld [vmem:[#allocation2 + $0xb58] sm:$0xff]
        %v2258 = vld [vmem:[#allocation2 + $0xba0] sm:$0xff]
        %v2259 = vld [vmem:[#allocation2 + $0xbe8] sm:$0xff]
        %v2260 = vld [vmem:[#allocation2 + $0xc30] sm:$0xff]
        %v2261 = vld [vmem:[#allocation2 + $0xc78] sm:$0xff]
        %v2262 = vld [vmem:[#allocation2 + $0xcc0] sm:$0xff]
        %v2263 = vld [vmem:[#allocation2 + $0xd08] sm:$0xff]
        %v2264 = vld [vmem:[#allocation2 + $0xd50] sm:$0xff]
        %v2265 = vld [vmem:[#allocation2 + $0xd98] sm:$0xff]
        %v2266 = vld [vmem:[#allocation2 + $0xde0] sm:$0xff]
        %v2267 = vld [vmem:[#allocation2 + $0xe28] sm:$0xff]
        %v2268 = vld [vmem:[#allocation2 + $0xe70] sm:$0xff]
        %v2269 = vld [vmem:[#allocation2 + $0xeb8] sm:$0xff]
        %v2270 = vld [vmem:[#allocation2 + $0xf00] sm:$0xff]
        %v2271 = vld [vmem:[#allocation2 + $0xf48] sm:$0xff]
        %v2272 = vld [vmem:[#allocation2 + $0xf90] sm:$0xff]
        %v2273 = vld [vmem:[#allocation2 + $0xfd8] sm:$0xff]
        %v2274 = vld [vmem:[#allocation2 + $0x1020] sm:$0xff]
        %v2275 = vld [vmem:[#allocation2 + $0x1068] sm:$0xff]
        %v2276 = vld [vmem:[#allocation2 + $0x10b0] sm:$0xff]
        %v2277 = vld [vmem:[#allocation2 + $0x10f8] sm:$0xff]
        %v2278 = vld [vmem:[#allocation2 + $0x1140] sm:$0xff]
        %v2279 = vld [vmem:[#allocation2 + $0x1188] sm:$0xff]
        %v2280 = vld [vmem:[#allocation2 + $0x11d0] sm:$0xff]
        %v2281 = vld [vmem:[#allocation2 + $0x1218] sm:$0xff]
        %v2282 = vld [vmem:[#allocation2 + $0x1260] sm:$0xff]
        %v2283 = vld [vmem:[#allocation2 + $0x12a8] sm:$0xff]
        %v2284 = vld [vmem:[#allocation2 + $0x12f0] sm:$0xff]
        %v2285 = vld [vmem:[#allocation2 + $0x1338] sm:$0xff]
        %v2286 = vld [vmem:[#allocation2 + $0x1380] sm:$0xff]
        %v2287 = vld [vmem:[#allocation2 + $0x13c8] sm:$0xff]
        %v2288 = vld [vmem:[#allocation2 + $0x1410] sm:$0xff]
        %v2289 = vld [vmem:[#allocation2 + $0x1458] sm:$0xff]
        %v2290 = vld [vmem:[#allocation2 + $0x14a0] sm:$0xff]
        %v2291 = vld [vmem:[#allocation2 + $0x14e8] sm:$0xff]
        %v2292 = vld [vmem:[#allocation2 + $0x1530] sm:$0xff]
        %v2293 = vld [vmem:[#allocation2 + $0x1578] sm:$0xff]
        %v2294 = vld [vmem:[#allocation2 + $0x15c0] sm:$0xff]
        %v2295 = vld [vmem:[#allocation2 + $0x1608] sm:$0xff]
        %v2296 = vld [vmem:[#allocation2 + $0x1650] sm:$0xff]
        %v2297 = vld [vmem:[#allocation2 + $0x1698] sm:$0xff]
        %v2298 = vld [vmem:[#allocation2 + $0x16e0] sm:$0xff]
        %v2299 = vld [vmem:[#allocation2 + $0x1728] sm:$0xff]
        %v2300 = vld [vmem:[#allocation2 + $0x1770] sm:$0xff]
        %v2301 = vld [vmem:[#allocation2 + $0x17b8] sm:$0x33]
        %v2387 = vunpack.c.l.b16 %v2217
        %v2388 = vunpack.c.h.b16 %v2217
        %v2389 = vunpack.c.l.b16 %v2218
        %v2390 = vunpack.c.h.b16 %v2218
        %v2391 = vunpack.c.l.b16 %v2219
        %v2392 = vunpack.c.h.b16 %v2219
        %v2393 = vunpack.c.l.b16 %v2220
        %v2394 = vunpack.c.h.b16 %v2220
        %v2395 = vunpack.c.l.b16 %v2221
        %v2396 = vunpack.c.h.b16 %v2221
        %v2397 = vunpack.c.l.b16 %v2222
        %v2398 = vunpack.c.h.b16 %v2222
        %v2399 = vunpack.c.l.b16 %v2223
        %v2400 = vunpack.c.h.b16 %v2223
        %v2401 = vunpack.c.l.b16 %v2224
        %v2402 = vunpack.c.h.b16 %v2224
        %v2403 = vunpack.c.l.b16 %v2225
        %v2404 = vunpack.c.h.b16 %v2225
        %v2405 = vunpack.c.l.b16 %v2226
        %v2406 = vunpack.c.h.b16 %v2226
        %v2407 = vunpack.c.l.b16 %v2227
        %v2408 = vunpack.c.h.b16 %v2227
        %v2409 = vunpack.c.l.b16 %v2228
        %v2410 = vunpack.c.h.b16 %v2228
        %v2411 = vunpack.c.l.b16 %v2229
        %v2412 = vunpack.c.h.b16 %v2229
        %v2413 = vunpack.c.l.b16 %v2230
        %v2414 = vunpack.c.h.b16 %v2230
        %v2415 = vunpack.c.l.b16 %v2231
        %v2416 = vunpack.c.h.b16 %v2231
        %v2417 = vunpack.c.l.b16 %v2232
        %v2418 = vunpack.c.h.b16 %v2232
        %v2419 = vunpack.c.l.b16 %v2233
        %v2420 = vunpack.c.h.b16 %v2233
        %v2421 = vunpack.c.l.b16 %v2234
        %v2422 = vunpack.c.h.b16 %v2234
        %v2423 = vunpack.c.l.b16 %v2235
        %v2424 = vunpack.c.h.b16 %v2235
        %v2425 = vunpack.c.l.b16 %v2236
        %v2426 = vunpack.c.h.b16 %v2236
        %v2427 = vunpack.c.l.b16 %v2237
        %v2428 = vunpack.c.h.b16 %v2237
        %v2429 = vunpack.c.l.b16 %v2238
        %v2430 = vunpack.c.h.b16 %v2238
        %v2431 = vunpack.c.l.b16 %v2239
        %v2432 = vunpack.c.h.b16 %v2239
        %v2433 = vunpack.c.l.b16 %v2240
        %v2434 = vunpack.c.h.b16 %v2240
        %v2435 = vunpack.c.l.b16 %v2241
        %v2436 = vunpack.c.h.b16 %v2241
        %v2437 = vunpack.c.l.b16 %v2242
        %v2438 = vunpack.c.h.b16 %v2242
        %v2439 = vunpack.c.l.b16 %v2243
        %v2440 = vunpack.c.h.b16 %v2243
        %v2441 = vunpack.c.l.b16 %v2244
        %v2442 = vunpack.c.h.b16 %v2244
        %v2443 = vunpack.c.l.b16 %v2245
        %v2444 = vunpack.c.h.b16 %v2245
        %v2445 = vunpack.c.l.b16 %v2246
        %v2446 = vunpack.c.h.b16 %v2246
        %v2447 = vunpack.c.l.b16 %v2247
        %v2448 = vunpack.c.h.b16 %v2247
        %v2449 = vunpack.c.l.b16 %v2248
        %v2450 = vunpack.c.h.b16 %v2248
        %v2451 = vunpack.c.l.b16 %v2249
        %v2452 = vunpack.c.h.b16 %v2249
        %v2453 = vunpack.c.l.b16 %v2250
        %v2454 = vunpack.c.h.b16 %v2250
        %v2455 = vunpack.c.l.b16 %v2251
        %v2456 = vunpack.c.h.b16 %v2251
        %v2457 = vunpack.c.l.b16 %v2252
        %v2458 = vunpack.c.h.b16 %v2252
        %v2459 = vunpack.c.l.b16 %v2253
        %v2460 = vunpack.c.h.b16 %v2253
        %v2461 = vunpack.c.l.b16 %v2254
        %v2462 = vunpack.c.h.b16 %v2254
        %v2463 = vunpack.c.l.b16 %v2255
        %v2464 = vunpack.c.h.b16 %v2255
        %v2465 = vunpack.c.l.b16 %v2256
        %v2466 = vunpack.c.h.b16 %v2256
        %v2467 = vunpack.c.l.b16 %v2257
        %v2468 = vunpack.c.h.b16 %v2257
        %v2469 = vunpack.c.l.b16 %v2258
        %v2470 = vunpack.c.h.b16 %v2258
        %v2471 = vunpack.c.l.b16 %v2259
        %v2472 = vunpack.c.h.b16 %v2259
        %v2473 = vunpack.c.l.b16 %v2260
        %v2474 = vunpack.c.h.b16 %v2260
        %v2475 = vunpack.c.l.b16 %v2261
        %v2476 = vunpack.c.h.b16 %v2261
        %v2477 = vunpack.c.l.b16 %v2262
        %v2478 = vunpack.c.h.b16 %v2262
        %v2479 = vunpack.c.l.b16 %v2263
        %v2480 = vunpack.c.h.b16 %v2263
        %v2481 = vunpack.c.l.b16 %v2264
        %v2482 = vunpack.c.h.b16 %v2264
        %v2483 = vunpack.c.l.b16 %v2265
        %v2484 = vunpack.c.h.b16 %v2265
        %v2485 = vunpack.c.l.b16 %v2266
        %v2486 = vunpack.c.h.b16 %v2266
        %v2487 = vunpack.c.l.b16 %v2267
        %v2488 = vunpack.c.h.b16 %v2267
        %v2489 = vunpack.c.l.b16 %v2268
        %v2490 = vunpack.c.h.b16 %v2268
        %v2491 = vunpack.c.l.b16 %v2269
        %v2492 = vunpack.c.h.b16 %v2269
        %v2493 = vunpack.c.l.b16 %v2270
        %v2494 = vunpack.c.h.b16 %v2270
        %v2495 = vunpack.c.l.b16 %v2271
        %v2496 = vunpack.c.h.b16 %v2271
        %v2497 = vunpack.c.l.b16 %v2272
        %v2498 = vunpack.c.h.b16 %v2272
        %v2499 = vunpack.c.l.b16 %v2273
        %v2500 = vunpack.c.h.b16 %v2273
        %v2501 = vunpack.c.l.b16 %v2274
        %v2502 = vunpack.c.h.b16 %v2274
        %v2503 = vunpack.c.l.b16 %v2275
        %v2504 = vunpack.c.h.b16 %v2275
        %v2505 = vunpack.c.l.b16 %v2276
        %v2506 = vunpack.c.h.b16 %v2276
        %v2507 = vunpack.c.l.b16 %v2277
        %v2508 = vunpack.c.h.b16 %v2277
        %v2509 = vunpack.c.l.b16 %v2278
        %v2510 = vunpack.c.h.b16 %v2278
        %v2511 = vunpack.c.l.b16 %v2279
        %v2512 = vunpack.c.h.b16 %v2279
        %v2513 = vunpack.c.l.b16 %v2280
        %v2514 = vunpack.c.h.b16 %v2280
        %v2515 = vunpack.c.l.b16 %v2281
        %v2516 = vunpack.c.h.b16 %v2281
        %v2517 = vunpack.c.l.b16 %v2282
        %v2518 = vunpack.c.h.b16 %v2282
        %v2519 = vunpack.c.l.b16 %v2283
        %v2520 = vunpack.c.h.b16 %v2283
        %v2521 = vunpack.c.l.b16 %v2284
        %v2522 = vunpack.c.h.b16 %v2284
        %v2523 = vunpack.c.l.b16 %v2285
        %v2524 = vunpack.c.h.b16 %v2285
        %v2525 = vunpack.c.l.b16 %v2286
        %v2526 = vunpack.c.h.b16 %v2286
        %v2527 = vunpack.c.l.b16 %v2287
        %v2528 = vunpack.c.h.b16 %v2287
        %v2529 = vunpack.c.l.b16 %v2288
        %v2530 = vunpack.c.h.b16 %v2288
        %v2531 = vunpack.c.l.b16 %v2289
        %v2532 = vunpack.c.h.b16 %v2289
        %v2533 = vunpack.c.l.b16 %v2290
        %v2534 = vunpack.c.h.b16 %v2290
        %v2535 = vunpack.c.l.b16 %v2291
        %v2536 = vunpack.c.h.b16 %v2291
        %v2537 = vunpack.c.l.b16 %v2292
        %v2538 = vunpack.c.h.b16 %v2292
        %v2539 = vunpack.c.l.b16 %v2293
        %v2540 = vunpack.c.h.b16 %v2293
        %v2541 = vunpack.c.l.b16 %v2294
        %v2542 = vunpack.c.h.b16 %v2294
        %v2543 = vunpack.c.l.b16 %v2295
        %v2544 = vunpack.c.h.b16 %v2295
        %v2545 = vunpack.c.l.b16 %v2296
        %v2546 = vunpack.c.h.b16 %v2296
        %v2547 = vunpack.c.l.b16 %v2297
        %v2548 = vunpack.c.h.b16 %v2297
        %v2549 = vunpack.c.l.b16 %v2298
        %v2550 = vunpack.c.h.b16 %v2298
        %v2551 = vunpack.c.l.b16 %v2299
        %v2552 = vunpack.c.h.b16 %v2299
        %v2553 = vunpack.c.l.b16 %v2300
        %v2554 = vunpack.c.h.b16 %v2300
        %v2555 = vunpack.c.l.b16 %v2301
        %v2556 = vunpack.c.h.b16 %v2301
        %v2557 = vpack.c.b16 %v2389, %v2387
        %v2558 = vpack.c.b16 %v2390, %v2388
        %v2559 = vpack.c.b16 %v2393, %v2391
        %v2560 = vpack.c.b16 %v2394, %v2392
        %v2561 = vpack.c.b16 %v2397, %v2395
        %v2562 = vpack.c.b16 %v2398, %v2396
        %v2563 = vpack.c.b16 %v2401, %v2399
        %v2564 = vpack.c.b16 %v2402, %v2400
        %v2565 = vpack.c.b16 %v2405, %v2403
        %v2566 = vpack.c.b16 %v2406, %v2404
        %v2567 = vpack.c.b16 %v2409, %v2407
        %v2568 = vpack.c.b16 %v2410, %v2408
        %v2569 = vpack.c.b16 %v2413, %v2411
        %v2570 = vpack.c.b16 %v2414, %v2412
        %v2571 = vpack.c.b16 %v2417, %v2415
        %v2572 = vpack.c.b16 %v2418, %v2416
        %v2573 = vpack.c.b16 %v2421, %v2419
        %v2574 = vpack.c.b16 %v2422, %v2420
        %v2575 = vpack.c.b16 %v2425, %v2423
        %v2576 = vpack.c.b16 %v2426, %v2424
        %v2577 = vpack.c.b16 %v2429, %v2427
        %v2578 = vpack.c.b16 %v2430, %v2428
        %v2579 = vpack.c.b16 %v2433, %v2431
        %v2580 = vpack.c.b16 %v2434, %v2432
        %v2581 = vpack.c.b16 %v2437, %v2435
        %v2582 = vpack.c.b16 %v2438, %v2436
        %v2583 = vpack.c.b16 %v2441, %v2439
        %v2584 = vpack.c.b16 %v2442, %v2440
        %v2585 = vpack.c.b16 %v2445, %v2443
        %v2586 = vpack.c.b16 %v2446, %v2444
        %v2587 = vpack.c.b16 %v2449, %v2447
        %v2588 = vpack.c.b16 %v2450, %v2448
        %v2589 = vpack.c.b16 %v2453, %v2451
        %v2590 = vpack.c.b16 %v2454, %v2452
        %v2591 = vpack.c.b16 %v2457, %v2455
        %v2592 = vpack.c.b16 %v2458, %v2456
        %v2593 = vpack.c.b16 %v2461, %v2459
        %v2594 = vpack.c.b16 %v2462, %v2460
        %v2595 = vpack.c.b16 %v2465, %v2463
        %v2596 = vpack.c.b16 %v2466, %v2464
        %v2597 = vpack.c.b16 %v2469, %v2467
        %v2598 = vpack.c.b16 %v2470, %v2468
        %v2599 = vpack.c.b16 %v2473, %v2471
        %v2600 = vpack.c.b16 %v2474, %v2472
        %v2601 = vpack.c.b16 %v2477, %v2475
        %v2602 = vpack.c.b16 %v2478, %v2476
        %v2603 = vpack.c.b16 %v2481, %v2479
        %v2604 = vpack.c.b16 %v2482, %v2480
        %v2605 = vpack.c.b16 %v2485, %v2483
        %v2606 = vpack.c.b16 %v2486, %v2484
        %v2607 = vpack.c.b16 %v2489, %v2487
        %v2608 = vpack.c.b16 %v2490, %v2488
        %v2609 = vpack.c.b16 %v2493, %v2491
        %v2610 = vpack.c.b16 %v2494, %v2492
        %v2611 = vpack.c.b16 %v2497, %v2495
        %v2612 = vpack.c.b16 %v2498, %v2496
        %v2613 = vpack.c.b16 %v2501, %v2499
        %v2614 = vpack.c.b16 %v2502, %v2500
        %v2615 = vpack.c.b16 %v2505, %v2503
        %v2616 = vpack.c.b16 %v2506, %v2504
        %v2617 = vpack.c.b16 %v2509, %v2507
        %v2618 = vpack.c.b16 %v2510, %v2508
        %v2619 = vpack.c.b16 %v2513, %v2511
        %v2620 = vpack.c.b16 %v2514, %v2512
        %v2621 = vpack.c.b16 %v2517, %v2515
        %v2622 = vpack.c.b16 %v2518, %v2516
        %v2623 = vpack.c.b16 %v2521, %v2519
        %v2624 = vpack.c.b16 %v2522, %v2520
        %v2625 = vpack.c.b16 %v2525, %v2523
        %v2626 = vpack.c.b16 %v2526, %v2524
        %v2627 = vpack.c.b16 %v2529, %v2527
        %v2628 = vpack.c.b16 %v2530, %v2528
        %v2629 = vpack.c.b16 %v2533, %v2531
        %v2630 = vpack.c.b16 %v2534, %v2532
        %v2631 = vpack.c.b16 %v2537, %v2535
        %v2632 = vpack.c.b16 %v2538, %v2536
        %v2633 = vpack.c.b16 %v2541, %v2539
        %v2634 = vpack.c.b16 %v2542, %v2540
        %v2635 = vpack.c.b16 %v2545, %v2543
        %v2636 = vpack.c.b16 %v2546, %v2544
        %v2637 = vpack.c.b16 %v2549, %v2547
        %v2638 = vpack.c.b16 %v2550, %v2548
        %v2639 = vpack.c.b16 %v2553, %v2551
        %v2640 = vpack.c.b16 %v2554, %v2552
        %v2641 = vpack.c.b16 %v2555, %v2555
        %v2642 = vpack.c.b16 %v2556, %v2556
        %v2728 = vsel %vm805, %v2641, 0
        %v2731 = vsel %vm805, %v2642, 0
        %2733 = vmatprep.subr.bf16.mxu0 %v2558
        %2734 = vmatpush1.bf16.msra.mxu0 %v2557
        %2735 = vmatprep.subr.bf16.mxu0 %v2560
        %2736 = vmatpush1.bf16.msra.mxu0 %v2559
        %2737 = vmatprep.subr.bf16.mxu0 %v2562
        %2738 = vmatpush1.bf16.msra.mxu0 %v2561
        %2739 = vmatprep.subr.bf16.mxu0 %v2564
        %2740 = vmatpush1.bf16.msra.mxu0 %v2563
        %2741 = vmatprep.subr.bf16.mxu0 %v2566
        %2742 = vmatpush1.bf16.msra.mxu0 %v2565
        %2743 = vmatprep.subr.bf16.mxu0 %v2568
        %2744 = vmatpush1.bf16.msra.mxu0 %v2567
        %2745 = vmatprep.subr.bf16.mxu0 %v2570
        %2746 = vmatpush1.bf16.msra.mxu0 %v2569
        %2747 = vmatprep.subr.bf16.mxu0 %v2572
        %2748 = vmatpush1.bf16.msra.mxu0 %v2571
        %2749 = vmatprep.subr.bf16.mxu0 %v2574
        %2750 = vmatpush1.bf16.msra.mxu0 %v2573
        %2751 = vmatprep.subr.bf16.mxu0 %v2576
        %2752 = vmatpush1.bf16.msra.mxu0 %v2575
        %2753 = vmatprep.subr.bf16.mxu0 %v2578
        %2754 = vmatpush1.bf16.msra.mxu0 %v2577
        %2755 = vmatprep.subr.bf16.mxu0 %v2580
        %2756 = vmatpush1.bf16.msra.mxu0 %v2579
        %2757 = vmatprep.subr.bf16.mxu0 %v2582
        %2758 = vmatpush1.bf16.msra.mxu0 %v2581
        %2759 = vmatprep.subr.bf16.mxu0 %v2584
        %2760 = vmatpush1.bf16.msra.mxu0 %v2583
        %2761 = vmatprep.subr.bf16.mxu0 %v2586
        %2762 = vmatpush1.bf16.msra.mxu0 %v2585
        %2763 = vmatprep.subr.bf16.mxu0 %v2588
        %2764 = vmatpush1.bf16.msra.mxu0 %v2587
        %2765 = vmatprep.mubr.bf16.mxu0 %v286
        %2766 = vmatmul.mubr.bf16.gmra.mrb[0].mxu0 %v285
        %v2767 = vpop.f32.mrb[0].mxu0
        %v2768 = vadd.f32 0.0, %v2767
        %v2769 = vpop.f32.mrb[0].mxu0
        %v2770 = vadd.f32 0.0, %v2769
        %v2771 = vpop.f32.mrb[0].mxu0
        %v2772 = vpop.f32.mrb[0].mxu0
        %2773 = vdwg.mxu0
        %2774 = vmatprep.subr.bf16.mxu0 %v2590
        %2775 = vmatpush1.bf16.msra.mxu0 %v2589
        %2776 = vmatprep.subr.bf16.mxu0 %v2592
        %2777 = vmatpush1.bf16.msra.mxu0 %v2591
        %2778 = vmatprep.subr.bf16.mxu0 %v2594
        %2779 = vmatpush1.bf16.msra.mxu0 %v2593
        %2780 = vmatprep.subr.bf16.mxu0 %v2596
        %2781 = vmatpush1.bf16.msra.mxu0 %v2595
        %2782 = vmatprep.subr.bf16.mxu0 %v2598
        %2783 = vmatpush1.bf16.msra.mxu0 %v2597
        %2784 = vmatprep.subr.bf16.mxu0 %v2600
        %2785 = vmatpush1.bf16.msra.mxu0 %v2599
        %2786 = vmatprep.subr.bf16.mxu0 %v2602
        %2787 = vmatpush1.bf16.msra.mxu0 %v2601
        %2788 = vmatprep.subr.bf16.mxu0 %v2604
        %2789 = vmatpush1.bf16.msra.mxu0 %v2603
        %2790 = vmatprep.subr.bf16.mxu0 %v2606
        %2791 = vmatpush1.bf16.msra.mxu0 %v2605
        %2792 = vmatprep.subr.bf16.mxu0 %v2608
        %2793 = vmatpush1.bf16.msra.mxu0 %v2607
        %2794 = vmatprep.subr.bf16.mxu0 %v2610
        %2795 = vmatpush1.bf16.msra.mxu0 %v2609
        %2796 = vmatprep.subr.bf16.mxu0 %v2612
        %2797 = vmatpush1.bf16.msra.mxu0 %v2611
        %2798 = vmatprep.subr.bf16.mxu0 %v2614
        %2799 = vmatpush1.bf16.msra.mxu0 %v2613
        %2800 = vmatprep.subr.bf16.mxu0 %v2616
        %2801 = vmatpush1.bf16.msra.mxu0 %v2615
        %2802 = vmatprep.subr.bf16.mxu0 %v2618
        %2803 = vmatpush1.bf16.msra.mxu0 %v2617
        %2804 = vmatprep.subr.bf16.mxu0 %v2620
        %2805 = vmatpush1.bf16.msra.mxu0 %v2619
        %2806 = vmatprep.mubr.bf16.mxu0 %v288
        %2807 = vmatmul.mubr.bf16.gmra.mrb[0].mxu0 %v287
        %v2808 = vpop.f32.mrb[0].mxu0
        %v2809 = vadd.f32 %v2768, %v2808
        %v2810 = vpop.f32.mrb[0].mxu0
        %v2811 = vadd.f32 %v2770, %v2810
        %v2812 = vpop.f32.mrb[0].mxu0
        %v2813 = vpop.f32.mrb[0].mxu0
        %2814 = vdwg.mxu0
        %2815 = vmatprep.subr.bf16.mxu0 %v2622
        %2816 = vmatpush1.bf16.msra.mxu0 %v2621
        %2817 = vmatprep.subr.bf16.mxu0 %v2624
        %2818 = vmatpush1.bf16.msra.mxu0 %v2623
        %2819 = vmatprep.subr.bf16.mxu0 %v2626
        %2820 = vmatpush1.bf16.msra.mxu0 %v2625
        %2821 = vmatprep.subr.bf16.mxu0 %v2628
        %2822 = vmatpush1.bf16.msra.mxu0 %v2627
        %2823 = vmatprep.subr.bf16.mxu0 %v2630
        %2824 = vmatpush1.bf16.msra.mxu0 %v2629
        %2825 = vmatprep.subr.bf16.mxu0 %v2632
        %2826 = vmatpush1.bf16.msra.mxu0 %v2631
        %2827 = vmatprep.subr.bf16.mxu0 %v2634
        %2828 = vmatpush1.bf16.msra.mxu0 %v2633
        %2829 = vmatprep.subr.bf16.mxu0 %v2636
        %2830 = vmatpush1.bf16.msra.mxu0 %v2635
        %2831 = vmatprep.subr.bf16.mxu0 %v2638
        %2832 = vmatpush1.bf16.msra.mxu0 %v2637
        %2833 = vmatprep.subr.bf16.mxu0 %v2640
        %2834 = vmatpush1.bf16.msra.mxu0 %v2639
        %2835 = vmatprep.subr.bf16.mxu0 %v2731
        %2836 = vmatpush1.bf16.msra.mxu0 %v2728
        %2837 = vmatprep.subr.bf16.mxu0 0
        %2838 = vmatpush1.bf16.msra.mxu0 0
        %2839 = vmatprep.subr.bf16.mxu0 0
        %2840 = vmatpush1.bf16.msra.mxu0 0
        %2841 = vmatprep.subr.bf16.mxu0 0
        %2842 = vmatpush1.bf16.msra.mxu0 0
        %2843 = vmatprep.subr.bf16.mxu0 0
        %2844 = vmatpush1.bf16.msra.mxu0 0
        %2845 = vmatprep.subr.bf16.mxu0 0
        %2846 = vmatpush1.bf16.msra.mxu0 0
        %2847 = vmatprep.mubr.bf16.mxu0 %v803
        %2848 = vmatmul.mubr.bf16.gmra.mrb[0].mxu0 %v289
        %v2849 = vpop.f32.mrb[0].mxu0
        %v2850 = vadd.f32 %v2809, %v2849
        %v2851 = vpop.f32.mrb[0].mxu0
        %v2852 = vadd.f32 %v2811, %v2851
        %v2853 = vpop.f32.mrb[0].mxu0
        %v2854 = vpop.f32.mrb[0].mxu0
        %2855 = vdwg.mxu0
        %v2856 = vmax.f32 %v2215, %v2850
        %v2857 = vmax.f32 %v2216, %v2852
        %v2858 = vld [vmem:[#allocation2 + $0x20] sm:$0xff]
        %v2859 = vld [vmem:[#allocation2 + $0x68] sm:$0xff]
        %v2860 = vld [vmem:[#allocation2 + $0xb0] sm:$0xff]
        %v2861 = vld [vmem:[#allocation2 + $0xf8] sm:$0xff]
        %v2862 = vld [vmem:[#allocation2 + $0x140] sm:$0xff]
        %v2863 = vld [vmem:[#allocation2 + $0x188] sm:$0xff]
        %v2864 = vld [vmem:[#allocation2 + $0x1d0] sm:$0xff]
        %v2865 = vld [vmem:[#allocation2 + $0x218] sm:$0xff]
        %v2866 = vld [vmem:[#allocation2 + $0x260] sm:$0xff]
        %v2867 = vld [vmem:[#allocation2 + $0x2a8] sm:$0xff]
        %v2868 = vld [vmem:[#allocation2 + $0x2f0] sm:$0xff]
        %v2869 = vld [vmem:[#allocation2 + $0x338] sm:$0xff]
        %v2870 = vld [vmem:[#allocation2 + $0x380] sm:$0xff]
        %v2871 = vld [vmem:[#allocation2 + $0x3c8] sm:$0xff]
        %v2872 = vld [vmem:[#allocation2 + $0x410] sm:$0xff]
        %v2873 = vld [vmem:[#allocation2 + $0x458] sm:$0xff]
        %v2874 = vld [vmem:[#allocation2 + $0x4a0] sm:$0xff]
        %v2875 = vld [vmem:[#allocation2 + $0x4e8] sm:$0xff]
        %v2876 = vld [vmem:[#allocation2 + $0x530] sm:$0xff]
        %v2877 = vld [vmem:[#allocation2 + $0x578] sm:$0xff]
        %v2878 = vld [vmem:[#allocation2 + $0x5c0] sm:$0xff]
        %v2879 = vld [vmem:[#allocation2 + $0x608] sm:$0xff]
        %v2880 = vld [vmem:[#allocation2 + $0x650] sm:$0xff]
        %v2881 = vld [vmem:[#allocation2 + $0x698] sm:$0xff]
        %v2882 = vld [vmem:[#allocation2 + $0x6e0] sm:$0xff]
        %v2883 = vld [vmem:[#allocation2 + $0x728] sm:$0xff]
        %v2884 = vld [vmem:[#allocation2 + $0x770] sm:$0xff]
        %v2885 = vld [vmem:[#allocation2 + $0x7b8] sm:$0xff]
        %v2886 = vld [vmem:[#allocation2 + $0x800] sm:$0xff]
        %v2887 = vld [vmem:[#allocation2 + $0x848] sm:$0xff]
        %v2888 = vld [vmem:[#allocation2 + $0x890] sm:$0xff]
        %v2889 = vld [vmem:[#allocation2 + $0x8d8] sm:$0xff]
        %v2890 = vld [vmem:[#allocation2 + $0x920] sm:$0xff]
        %v2891 = vld [vmem:[#allocation2 + $0x968] sm:$0xff]
        %v2892 = vld [vmem:[#allocation2 + $0x9b0] sm:$0xff]
        %v2893 = vld [vmem:[#allocation2 + $0x9f8] sm:$0xff]
        %v2894 = vld [vmem:[#allocation2 + $0xa40] sm:$0xff]
        %v2895 = vld [vmem:[#allocation2 + $0xa88] sm:$0xff]
        %v2896 = vld [vmem:[#allocation2 + $0xad0] sm:$0xff]
        %v2897 = vld [vmem:[#allocation2 + $0xb18] sm:$0xff]
        %v2898 = vld [vmem:[#allocation2 + $0xb60] sm:$0xff]
        %v2899 = vld [vmem:[#allocation2 + $0xba8] sm:$0xff]
        %v2900 = vld [vmem:[#allocation2 + $0xbf0] sm:$0xff]
        %v2901 = vld [vmem:[#allocation2 + $0xc38] sm:$0xff]
        %v2902 = vld [vmem:[#allocation2 + $0xc80] sm:$0xff]
        %v2903 = vld [vmem:[#allocation2 + $0xcc8] sm:$0xff]
        %v2904 = vld [vmem:[#allocation2 + $0xd10] sm:$0xff]
        %v2905 = vld [vmem:[#allocation2 + $0xd58] sm:$0xff]
        %v2906 = vld [vmem:[#allocation2 + $0xda0] sm:$0xff]
        %v2907 = vld [vmem:[#allocation2 + $0xde8] sm:$0xff]
        %v2908 = vld [vmem:[#allocation2 + $0xe30] sm:$0xff]
        %v2909 = vld [vmem:[#allocation2 + $0xe78] sm:$0xff]
        %v2910 = vld [vmem:[#allocation2 + $0xec0] sm:$0xff]
        %v2911 = vld [vmem:[#allocation2 + $0xf08] sm:$0xff]
        %v2912 = vld [vmem:[#allocation2 + $0xf50] sm:$0xff]
        %v2913 = vld [vmem:[#allocation2 + $0xf98] sm:$0xff]
        %v2914 = vld [vmem:[#allocation2 + $0xfe0] sm:$0xff]
        %v2915 = vld [vmem:[#allocation2 + $0x1028] sm:$0xff]
        %v2916 = vld [vmem:[#allocation2 + $0x1070] sm:$0xff]
        %v2917 = vld [vmem:[#allocation2 + $0x10b8] sm:$0xff]
        %v2918 = vld [vmem:[#allocation2 + $0x1100] sm:$0xff]
        %v2919 = vld [vmem:[#allocation2 + $0x1148] sm:$0xff]
        %v2920 = vld [vmem:[#allocation2 + $0x1190] sm:$0xff]
        %v2921 = vld [vmem:[#allocation2 + $0x11d8] sm:$0xff]
        %v2922 = vld [vmem:[#allocation2 + $0x1220] sm:$0xff]
        %v2923 = vld [vmem:[#allocation2 + $0x1268] sm:$0xff]
        %v2924 = vld [vmem:[#allocation2 + $0x12b0] sm:$0xff]
        %v2925 = vld [vmem:[#allocation2 + $0x12f8] sm:$0xff]
        %v2926 = vld [vmem:[#allocation2 + $0x1340] sm:$0xff]
        %v2927 = vld [vmem:[#allocation2 + $0x1388] sm:$0xff]
        %v2928 = vld [vmem:[#allocation2 + $0x13d0] sm:$0xff]
        %v2929 = vld [vmem:[#allocation2 + $0x1418] sm:$0xff]
        %v2930 = vld [vmem:[#allocation2 + $0x1460] sm:$0xff]
        %v2931 = vld [vmem:[#allocation2 + $0x14a8] sm:$0xff]
        %v2932 = vld [vmem:[#allocation2 + $0x14f0] sm:$0xff]
        %v2933 = vld [vmem:[#allocation2 + $0x1538] sm:$0xff]
        %v2934 = vld [vmem:[#allocation2 + $0x1580] sm:$0xff]
        %v2935 = vld [vmem:[#allocation2 + $0x15c8] sm:$0xff]
        %v2936 = vld [vmem:[#allocation2 + $0x1610] sm:$0xff]
        %v2937 = vld [vmem:[#allocation2 + $0x1658] sm:$0xff]
        %v2938 = vld [vmem:[#allocation2 + $0x16a0] sm:$0xff]
        %v2939 = vld [vmem:[#allocation2 + $0x16e8] sm:$0xff]
        %v2940 = vld [vmem:[#allocation2 + $0x1730] sm:$0xff]
        %v2941 = vld [vmem:[#allocation2 + $0x1778] sm:$0xff]
        %v2942 = vld [vmem:[#allocation2 + $0x17c0] sm:$0x33]
        %v3028 = vunpack.c.l.b16 %v2858
        %v3029 = vunpack.c.h.b16 %v2858
        %v3030 = vunpack.c.l.b16 %v2859
        %v3031 = vunpack.c.h.b16 %v2859
        %v3032 = vunpack.c.l.b16 %v2860
        %v3033 = vunpack.c.h.b16 %v2860
        %v3034 = vunpack.c.l.b16 %v2861
        %v3035 = vunpack.c.h.b16 %v2861
        %v3036 = vunpack.c.l.b16 %v2862
        %v3037 = vunpack.c.h.b16 %v2862
        %v3038 = vunpack.c.l.b16 %v2863
        %v3039 = vunpack.c.h.b16 %v2863
        %v3040 = vunpack.c.l.b16 %v2864
        %v3041 = vunpack.c.h.b16 %v2864
        %v3042 = vunpack.c.l.b16 %v2865
        %v3043 = vunpack.c.h.b16 %v2865
        %v3044 = vunpack.c.l.b16 %v2866
        %v3045 = vunpack.c.h.b16 %v2866
        %v3046 = vunpack.c.l.b16 %v2867
        %v3047 = vunpack.c.h.b16 %v2867
        %v3048 = vunpack.c.l.b16 %v2868
        %v3049 = vunpack.c.h.b16 %v2868
        %v3050 = vunpack.c.l.b16 %v2869
        %v3051 = vunpack.c.h.b16 %v2869
        %v3052 = vunpack.c.l.b16 %v2870
        %v3053 = vunpack.c.h.b16 %v2870
        %v3054 = vunpack.c.l.b16 %v2871
        %v3055 = vunpack.c.h.b16 %v2871
        %v3056 = vunpack.c.l.b16 %v2872
        %v3057 = vunpack.c.h.b16 %v2872
        %v3058 = vunpack.c.l.b16 %v2873
        %v3059 = vunpack.c.h.b16 %v2873
        %v3060 = vunpack.c.l.b16 %v2874
        %v3061 = vunpack.c.h.b16 %v2874
        %v3062 = vunpack.c.l.b16 %v2875
        %v3063 = vunpack.c.h.b16 %v2875
        %v3064 = vunpack.c.l.b16 %v2876
        %v3065 = vunpack.c.h.b16 %v2876
        %v3066 = vunpack.c.l.b16 %v2877
        %v3067 = vunpack.c.h.b16 %v2877
        %v3068 = vunpack.c.l.b16 %v2878
        %v3069 = vunpack.c.h.b16 %v2878
        %v3070 = vunpack.c.l.b16 %v2879
        %v3071 = vunpack.c.h.b16 %v2879
        %v3072 = vunpack.c.l.b16 %v2880
        %v3073 = vunpack.c.h.b16 %v2880
        %v3074 = vunpack.c.l.b16 %v2881
        %v3075 = vunpack.c.h.b16 %v2881
        %v3076 = vunpack.c.l.b16 %v2882
        %v3077 = vunpack.c.h.b16 %v2882
        %v3078 = vunpack.c.l.b16 %v2883
        %v3079 = vunpack.c.h.b16 %v2883
        %v3080 = vunpack.c.l.b16 %v2884
        %v3081 = vunpack.c.h.b16 %v2884
        %v3082 = vunpack.c.l.b16 %v2885
        %v3083 = vunpack.c.h.b16 %v2885
        %v3084 = vunpack.c.l.b16 %v2886
        %v3085 = vunpack.c.h.b16 %v2886
        %v3086 = vunpack.c.l.b16 %v2887
        %v3087 = vunpack.c.h.b16 %v2887
        %v3088 = vunpack.c.l.b16 %v2888
        %v3089 = vunpack.c.h.b16 %v2888
        %v3090 = vunpack.c.l.b16 %v2889
        %v3091 = vunpack.c.h.b16 %v2889
        %v3092 = vunpack.c.l.b16 %v2890
        %v3093 = vunpack.c.h.b16 %v2890
        %v3094 = vunpack.c.l.b16 %v2891
        %v3095 = vunpack.c.h.b16 %v2891
        %v3096 = vunpack.c.l.b16 %v2892
        %v3097 = vunpack.c.h.b16 %v2892
        %v3098 = vunpack.c.l.b16 %v2893
        %v3099 = vunpack.c.h.b16 %v2893
        %v3100 = vunpack.c.l.b16 %v2894
        %v3101 = vunpack.c.h.b16 %v2894
        %v3102 = vunpack.c.l.b16 %v2895
        %v3103 = vunpack.c.h.b16 %v2895
        %v3104 = vunpack.c.l.b16 %v2896
        %v3105 = vunpack.c.h.b16 %v2896
        %v3106 = vunpack.c.l.b16 %v2897
        %v3107 = vunpack.c.h.b16 %v2897
        %v3108 = vunpack.c.l.b16 %v2898
        %v3109 = vunpack.c.h.b16 %v2898
        %v3110 = vunpack.c.l.b16 %v2899
        %v3111 = vunpack.c.h.b16 %v2899
        %v3112 = vunpack.c.l.b16 %v2900
        %v3113 = vunpack.c.h.b16 %v2900
        %v3114 = vunpack.c.l.b16 %v2901
        %v3115 = vunpack.c.h.b16 %v2901
        %v3116 = vunpack.c.l.b16 %v2902
        %v3117 = vunpack.c.h.b16 %v2902
        %v3118 = vunpack.c.l.b16 %v2903
        %v3119 = vunpack.c.h.b16 %v2903
        %v3120 = vunpack.c.l.b16 %v2904
        %v3121 = vunpack.c.h.b16 %v2904
        %v3122 = vunpack.c.l.b16 %v2905
        %v3123 = vunpack.c.h.b16 %v2905
        %v3124 = vunpack.c.l.b16 %v2906
        %v3125 = vunpack.c.h.b16 %v2906
        %v3126 = vunpack.c.l.b16 %v2907
        %v3127 = vunpack.c.h.b16 %v2907
        %v3128 = vunpack.c.l.b16 %v2908
        %v3129 = vunpack.c.h.b16 %v2908
        %v3130 = vunpack.c.l.b16 %v2909
        %v3131 = vunpack.c.h.b16 %v2909
        %v3132 = vunpack.c.l.b16 %v2910
        %v3133 = vunpack.c.h.b16 %v2910
        %v3134 = vunpack.c.l.b16 %v2911
        %v3135 = vunpack.c.h.b16 %v2911
        %v3136 = vunpack.c.l.b16 %v2912
        %v3137 = vunpack.c.h.b16 %v2912
        %v3138 = vunpack.c.l.b16 %v2913
        %v3139 = vunpack.c.h.b16 %v2913
        %v3140 = vunpack.c.l.b16 %v2914
        %v3141 = vunpack.c.h.b16 %v2914
        %v3142 = vunpack.c.l.b16 %v2915
        %v3143 = vunpack.c.h.b16 %v2915
        %v3144 = vunpack.c.l.b16 %v2916
        %v3145 = vunpack.c.h.b16 %v2916
        %v3146 = vunpack.c.l.b16 %v2917
        %v3147 = vunpack.c.h.b16 %v2917
        %v3148 = vunpack.c.l.b16 %v2918
        %v3149 = vunpack.c.h.b16 %v2918
        %v3150 = vunpack.c.l.b16 %v2919
        %v3151 = vunpack.c.h.b16 %v2919
        %v3152 = vunpack.c.l.b16 %v2920
        %v3153 = vunpack.c.h.b16 %v2920
        %v3154 = vunpack.c.l.b16 %v2921
        %v3155 = vunpack.c.h.b16 %v2921
        %v3156 = vunpack.c.l.b16 %v2922
        %v3157 = vunpack.c.h.b16 %v2922
        %v3158 = vunpack.c.l.b16 %v2923
        %v3159 = vunpack.c.h.b16 %v2923
        %v3160 = vunpack.c.l.b16 %v2924
        %v3161 = vunpack.c.h.b16 %v2924
        %v3162 = vunpack.c.l.b16 %v2925
        %v3163 = vunpack.c.h.b16 %v2925
        %v3164 = vunpack.c.l.b16 %v2926
        %v3165 = vunpack.c.h.b16 %v2926
        %v3166 = vunpack.c.l.b16 %v2927
        %v3167 = vunpack.c.h.b16 %v2927
        %v3168 = vunpack.c.l.b16 %v2928
        %v3169 = vunpack.c.h.b16 %v2928
        %v3170 = vunpack.c.l.b16 %v2929
        %v3171 = vunpack.c.h.b16 %v2929
        %v3172 = vunpack.c.l.b16 %v2930
        %v3173 = vunpack.c.h.b16 %v2930
        %v3174 = vunpack.c.l.b16 %v2931
        %v3175 = vunpack.c.h.b16 %v2931
        %v3176 = vunpack.c.l.b16 %v2932
        %v3177 = vunpack.c.h.b16 %v2932
        %v3178 = vunpack.c.l.b16 %v2933
        %v3179 = vunpack.c.h.b16 %v2933
        %v3180 = vunpack.c.l.b16 %v2934
        %v3181 = vunpack.c.h.b16 %v2934
        %v3182 = vunpack.c.l.b16 %v2935
        %v3183 = vunpack.c.h.b16 %v2935
        %v3184 = vunpack.c.l.b16 %v2936
        %v3185 = vunpack.c.h.b16 %v2936
        %v3186 = vunpack.c.l.b16 %v2937
        %v3187 = vunpack.c.h.b16 %v2937
        %v3188 = vunpack.c.l.b16 %v2938
        %v3189 = vunpack.c.h.b16 %v2938
        %v3190 = vunpack.c.l.b16 %v2939
        %v3191 = vunpack.c.h.b16 %v2939
        %v3192 = vunpack.c.l.b16 %v2940
        %v3193 = vunpack.c.h.b16 %v2940
        %v3194 = vunpack.c.l.b16 %v2941
        %v3195 = vunpack.c.h.b16 %v2941
        %v3196 = vunpack.c.l.b16 %v2942
        %v3197 = vunpack.c.h.b16 %v2942
        %v3198 = vpack.c.b16 %v3030, %v3028
        %v3199 = vpack.c.b16 %v3031, %v3029
        %v3200 = vpack.c.b16 %v3034, %v3032
        %v3201 = vpack.c.b16 %v3035, %v3033
        %v3202 = vpack.c.b16 %v3038, %v3036
        %v3203 = vpack.c.b16 %v3039, %v3037
        %v3204 = vpack.c.b16 %v3042, %v3040
        %v3205 = vpack.c.b16 %v3043, %v3041
        %v3206 = vpack.c.b16 %v3046, %v3044
        %v3207 = vpack.c.b16 %v3047, %v3045
        %v3208 = vpack.c.b16 %v3050, %v3048
        %v3209 = vpack.c.b16 %v3051, %v3049
        %v3210 = vpack.c.b16 %v3054, %v3052
        %v3211 = vpack.c.b16 %v3055, %v3053
        %v3212 = vpack.c.b16 %v3058, %v3056
        %v3213 = vpack.c.b16 %v3059, %v3057
        %v3214 = vpack.c.b16 %v3062, %v3060
        %v3215 = vpack.c.b16 %v3063, %v3061
        %v3216 = vpack.c.b16 %v3066, %v3064
        %v3217 = vpack.c.b16 %v3067, %v3065
        %v3218 = vpack.c.b16 %v3070, %v3068
        %v3219 = vpack.c.b16 %v3071, %v3069
        %v3220 = vpack.c.b16 %v3074, %v3072
        %v3221 = vpack.c.b16 %v3075, %v3073
        %v3222 = vpack.c.b16 %v3078, %v3076
        %v3223 = vpack.c.b16 %v3079, %v3077
        %v3224 = vpack.c.b16 %v3082, %v3080
        %v3225 = vpack.c.b16 %v3083, %v3081
        %v3226 = vpack.c.b16 %v3086, %v3084
        %v3227 = vpack.c.b16 %v3087, %v3085
        %v3228 = vpack.c.b16 %v3090, %v3088
        %v3229 = vpack.c.b16 %v3091, %v3089
        %v3230 = vpack.c.b16 %v3094, %v3092
        %v3231 = vpack.c.b16 %v3095, %v3093
        %v3232 = vpack.c.b16 %v3098, %v3096
        %v3233 = vpack.c.b16 %v3099, %v3097
        %v3234 = vpack.c.b16 %v3102, %v3100
        %v3235 = vpack.c.b16 %v3103, %v3101
        %v3236 = vpack.c.b16 %v3106, %v3104
        %v3237 = vpack.c.b16 %v3107, %v3105
        %v3238 = vpack.c.b16 %v3110, %v3108
        %v3239 = vpack.c.b16 %v3111, %v3109
        %v3240 = vpack.c.b16 %v3114, %v3112
        %v3241 = vpack.c.b16 %v3115, %v3113
        %v3242 = vpack.c.b16 %v3118, %v3116
        %v3243 = vpack.c.b16 %v3119, %v3117
        %v3244 = vpack.c.b16 %v3122, %v3120
        %v3245 = vpack.c.b16 %v3123, %v3121
        %v3246 = vpack.c.b16 %v3126, %v3124
        %v3247 = vpack.c.b16 %v3127, %v3125
        %v3248 = vpack.c.b16 %v3130, %v3128
        %v3249 = vpack.c.b16 %v3131, %v3129
        %v3250 = vpack.c.b16 %v3134, %v3132
        %v3251 = vpack.c.b16 %v3135, %v3133
        %v3252 = vpack.c.b16 %v3138, %v3136
        %v3253 = vpack.c.b16 %v3139, %v3137
        %v3254 = vpack.c.b16 %v3142, %v3140
        %v3255 = vpack.c.b16 %v3143, %v3141
        %v3256 = vpack.c.b16 %v3146, %v3144
        %v3257 = vpack.c.b16 %v3147, %v3145
        %v3258 = vpack.c.b16 %v3150, %v3148
        %v3259 = vpack.c.b16 %v3151, %v3149
        %v3260 = vpack.c.b16 %v3154, %v3152
        %v3261 = vpack.c.b16 %v3155, %v3153
        %v3262 = vpack.c.b16 %v3158, %v3156
        %v3263 = vpack.c.b16 %v3159, %v3157
        %v3264 = vpack.c.b16 %v3162, %v3160
        %v3265 = vpack.c.b16 %v3163, %v3161
        %v3266 = vpack.c.b16 %v3166, %v3164
        %v3267 = vpack.c.b16 %v3167, %v3165
        %v3268 = vpack.c.b16 %v3170, %v3168
        %v3269 = vpack.c.b16 %v3171, %v3169
        %v3270 = vpack.c.b16 %v3174, %v3172
        %v3271 = vpack.c.b16 %v3175, %v3173
        %v3272 = vpack.c.b16 %v3178, %v3176
        %v3273 = vpack.c.b16 %v3179, %v3177
        %v3274 = vpack.c.b16 %v3182, %v3180
        %v3275 = vpack.c.b16 %v3183, %v3181
        %v3276 = vpack.c.b16 %v3186, %v3184
        %v3277 = vpack.c.b16 %v3187, %v3185
        %v3278 = vpack.c.b16 %v3190, %v3188
        %v3279 = vpack.c.b16 %v3191, %v3189
        %v3280 = vpack.c.b16 %v3194, %v3192
        %v3281 = vpack.c.b16 %v3195, %v3193
        %v3282 = vpack.c.b16 %v3196, %v3196
        %v3283 = vpack.c.b16 %v3197, %v3197
        %v3369 = vsel %vm805, %v3282, 0
        %v3372 = vsel %vm805, %v3283, 0
        %3374 = vmatprep.subr.bf16.mxu0 %v3199
        %3375 = vmatpush1.bf16.msra.mxu0 %v3198
        %3376 = vmatprep.subr.bf16.mxu0 %v3201
        %3377 = vmatpush1.bf16.msra.mxu0 %v3200
        %3378 = vmatprep.subr.bf16.mxu0 %v3203
        %3379 = vmatpush1.bf16.msra.mxu0 %v3202
        %3380 = vmatprep.subr.bf16.mxu0 %v3205
        %3381 = vmatpush1.bf16.msra.mxu0 %v3204
        %3382 = vmatprep.subr.bf16.mxu0 %v3207
        %3383 = vmatpush1.bf16.msra.mxu0 %v3206
        %3384 = vmatprep.subr.bf16.mxu0 %v3209
        %3385 = vmatpush1.bf16.msra.mxu0 %v3208
        %3386 = vmatprep.subr.bf16.mxu0 %v3211
        %3387 = vmatpush1.bf16.msra.mxu0 %v3210
        %3388 = vmatprep.subr.bf16.mxu0 %v3213
        %3389 = vmatpush1.bf16.msra.mxu0 %v3212
        %3390 = vmatprep.subr.bf16.mxu0 %v3215
        %3391 = vmatpush1.bf16.msra.mxu0 %v3214
        %3392 = vmatprep.subr.bf16.mxu0 %v3217
        %3393 = vmatpush1.bf16.msra.mxu0 %v3216
        %3394 = vmatprep.subr.bf16.mxu0 %v3219
        %3395 = vmatpush1.bf16.msra.mxu0 %v3218
        %3396 = vmatprep.subr.bf16.mxu0 %v3221
        %3397 = vmatpush1.bf16.msra.mxu0 %v3220
        %3398 = vmatprep.subr.bf16.mxu0 %v3223
        %3399 = vmatpush1.bf16.msra.mxu0 %v3222
        %3400 = vmatprep.subr.bf16.mxu0 %v3225
        %3401 = vmatpush1.bf16.msra.mxu0 %v3224
        %3402 = vmatprep.subr.bf16.mxu0 %v3227
        %3403 = vmatpush1.bf16.msra.mxu0 %v3226
        %3404 = vmatprep.subr.bf16.mxu0 %v3229
        %3405 = vmatpush1.bf16.msra.mxu0 %v3228
        %3406 = vmatprep.mubr.bf16.mxu0 %v286
        %3407 = vmatmul.mubr.bf16.gmra.mrb[0].mxu0 %v285
        %v3408 = vpop.f32.mrb[0].mxu0
        %v3409 = vadd.f32 0.0, %v3408
        %v3410 = vpop.f32.mrb[0].mxu0
        %v3411 = vadd.f32 0.0, %v3410
        %v3412 = vpop.f32.mrb[0].mxu0
        %v3413 = vpop.f32.mrb[0].mxu0
        %3414 = vdwg.mxu0
        %3415 = vmatprep.subr.bf16.mxu0 %v3231
        %3416 = vmatpush1.bf16.msra.mxu0 %v3230
        %3417 = vmatprep.subr.bf16.mxu0 %v3233
        %3418 = vmatpush1.bf16.msra.mxu0 %v3232
        %3419 = vmatprep.subr.bf16.mxu0 %v3235
        %3420 = vmatpush1.bf16.msra.mxu0 %v3234
        %3421 = vmatprep.subr.bf16.mxu0 %v3237
        %3422 = vmatpush1.bf16.msra.mxu0 %v3236
        %3423 = vmatprep.subr.bf16.mxu0 %v3239
        %3424 = vmatpush1.bf16.msra.mxu0 %v3238
        %3425 = vmatprep.subr.bf16.mxu0 %v3241
        %3426 = vmatpush1.bf16.msra.mxu0 %v3240
        %3427 = vmatprep.subr.bf16.mxu0 %v3243
        %3428 = vmatpush1.bf16.msra.mxu0 %v3242
        %3429 = vmatprep.subr.bf16.mxu0 %v3245
        %3430 = vmatpush1.bf16.msra.mxu0 %v3244
        %3431 = vmatprep.subr.bf16.mxu0 %v3247
        %3432 = vmatpush1.bf16.msra.mxu0 %v3246
        %3433 = vmatprep.subr.bf16.mxu0 %v3249
        %3434 = vmatpush1.bf16.msra.mxu0 %v3248
        %3435 = vmatprep.subr.bf16.mxu0 %v3251
        %3436 = vmatpush1.bf16.msra.mxu0 %v3250
        %3437 = vmatprep.subr.bf16.mxu0 %v3253
        %3438 = vmatpush1.bf16.msra.mxu0 %v3252
        %3439 = vmatprep.subr.bf16.mxu0 %v3255
        %3440 = vmatpush1.bf16.msra.mxu0 %v3254
        %3441 = vmatprep.subr.bf16.mxu0 %v3257
        %3442 = vmatpush1.bf16.msra.mxu0 %v3256
        %3443 = vmatprep.subr.bf16.mxu0 %v3259
        %3444 = vmatpush1.bf16.msra.mxu0 %v3258
        %3445 = vmatprep.subr.bf16.mxu0 %v3261
        %3446 = vmatpush1.bf16.msra.mxu0 %v3260
        %3447 = vmatprep.mubr.bf16.mxu0 %v288
        %3448 = vmatmul.mubr.bf16.gmra.mrb[0].mxu0 %v287
        %v3449 = vpop.f32.mrb[0].mxu0
        %v3450 = vadd.f32 %v3409, %v3449
        %v3451 = vpop.f32.mrb[0].mxu0
        %v3452 = vadd.f32 %v3411, %v3451
        %v3453 = vpop.f32.mrb[0].mxu0
        %v3454 = vpop.f32.mrb[0].mxu0
        %3455 = vdwg.mxu0
        %3456 = vmatprep.subr.bf16.mxu0 %v3263
        %3457 = vmatpush1.bf16.msra.mxu0 %v3262
        %3458 = vmatprep.subr.bf16.mxu0 %v3265
        %3459 = vmatpush1.bf16.msra.mxu0 %v3264
        %3460 = vmatprep.subr.bf16.mxu0 %v3267
        %3461 = vmatpush1.bf16.msra.mxu0 %v3266
        %3462 = vmatprep.subr.bf16.mxu0 %v3269
        %3463 = vmatpush1.bf16.msra.mxu0 %v3268
        %3464 = vmatprep.subr.bf16.mxu0 %v3271
        %3465 = vmatpush1.bf16.msra.mxu0 %v3270
        %3466 = vmatprep.subr.bf16.mxu0 %v3273
        %3467 = vmatpush1.bf16.msra.mxu0 %v3272
        %3468 = vmatprep.subr.bf16.mxu0 %v3275
        %3469 = vmatpush1.bf16.msra.mxu0 %v3274
        %3470 = vmatprep.subr.bf16.mxu0 %v3277
        %3471 = vmatpush1.bf16.msra.mxu0 %v3276
        %3472 = vmatprep.subr.bf16.mxu0 %v3279
        %3473 = vmatpush1.bf16.msra.mxu0 %v3278
        %3474 = vmatprep.subr.bf16.mxu0 %v3281
        %3475 = vmatpush1.bf16.msra.mxu0 %v3280
        %3476 = vmatprep.subr.bf16.mxu0 %v3372
        %3477 = vmatpush1.bf16.msra.mxu0 %v3369
        %3478 = vmatprep.subr.bf16.mxu0 0
        %3479 = vmatpush1.bf16.msra.mxu0 0
        %3480 = vmatprep.subr.bf16.mxu0 0
        %3481 = vmatpush1.bf16.msra.mxu0 0
        %3482 = vmatprep.subr.bf16.mxu0 0
        %3483 = vmatpush1.bf16.msra.mxu0 0
        %3484 = vmatprep.subr.bf16.mxu0 0
        %3485 = vmatpush1.bf16.msra.mxu0 0
        %3486 = vmatprep.subr.bf16.mxu0 0
        %3487 = vmatpush1.bf16.msra.mxu0 0
        %3488 = vmatprep.mubr.bf16.mxu0 %v803
        %3489 = vmatmul.mubr.bf16.gmra.mrb[0].mxu0 %v289
        %v3490 = vpop.f32.mrb[0].mxu0
        %v3491 = vadd.f32 %v3450, %v3490
        %v3492 = vpop.f32.mrb[0].mxu0
        %v3493 = vadd.f32 %v3452, %v3492
        %v3494 = vpop.f32.mrb[0].mxu0
        %v3495 = vpop.f32.mrb[0].mxu0
        %3496 = vdwg.mxu0
        %v3497 = vmax.f32 %v2856, %v3491
        %v3498 = vmax.f32 %v2857, %v3493
        %v3499 = vld [vmem:[#allocation2 + $0x28] sm:$0xff]
        %v3500 = vld [vmem:[#allocation2 + $0x70] sm:$0xff]
        %v3501 = vld [vmem:[#allocation2 + $0xb8] sm:$0xff]
        %v3502 = vld [vmem:[#allocation2 + $0x100] sm:$0xff]
        %v3503 = vld [vmem:[#allocation2 + $0x148] sm:$0xff]
        %v3504 = vld [vmem:[#allocation2 + $0x190] sm:$0xff]
        %v3505 = vld [vmem:[#allocation2 + $0x1d8] sm:$0xff]
        %v3506 = vld [vmem:[#allocation2 + $0x220] sm:$0xff]
        %v3507 = vld [vmem:[#allocation2 + $0x268] sm:$0xff]
        %v3508 = vld [vmem:[#allocation2 + $0x2b0] sm:$0xff]
        %v3509 = vld [vmem:[#allocation2 + $0x2f8] sm:$0xff]
        %v3510 = vld [vmem:[#allocation2 + $0x340] sm:$0xff]
        %v3511 = vld [vmem:[#allocation2 + $0x388] sm:$0xff]
        %v3512 = vld [vmem:[#allocation2 + $0x3d0] sm:$0xff]
        %v3513 = vld [vmem:[#allocation2 + $0x418] sm:$0xff]
        %v3514 = vld [vmem:[#allocation2 + $0x460] sm:$0xff]
        %v3515 = vld [vmem:[#allocation2 + $0x4a8] sm:$0xff]
        %v3516 = vld [vmem:[#allocation2 + $0x4f0] sm:$0xff]
        %v3517 = vld [vmem:[#allocation2 + $0x538] sm:$0xff]
        %v3518 = vld [vmem:[#allocation2 + $0x580] sm:$0xff]
        %v3519 = vld [vmem:[#allocation2 + $0x5c8] sm:$0xff]
        %v3520 = vld [vmem:[#allocation2 + $0x610] sm:$0xff]
        %v3521 = vld [vmem:[#allocation2 + $0x658] sm:$0xff]
        %v3522 = vld [vmem:[#allocation2 + $0x6a0] sm:$0xff]
        %v3523 = vld [vmem:[#allocation2 + $0x6e8] sm:$0xff]
        %v3524 = vld [vmem:[#allocation2 + $0x730] sm:$0xff]
        %v3525 = vld [vmem:[#allocation2 + $0x778] sm:$0xff]
        %v3526 = vld [vmem:[#allocation2 + $0x7c0] sm:$0xff]
        %v3527 = vld [vmem:[#allocation2 + $0x808] sm:$0xff]
        %v3528 = vld [vmem:[#allocation2 + $0x850] sm:$0xff]
        %v3529 = vld [vmem:[#allocation2 + $0x898] sm:$0xff]
        %v3530 = vld [vmem:[#allocation2 + $0x8e0] sm:$0xff]
        %v3531 = vld [vmem:[#allocation2 + $0x928] sm:$0xff]
        %v3532 = vld [vmem:[#allocation2 + $0x970] sm:$0xff]
        %v3533 = vld [vmem:[#allocation2 + $0x9b8] sm:$0xff]
        %v3534 = vld [vmem:[#allocation2 + $0xa00] sm:$0xff]
        %v3535 = vld [vmem:[#allocation2 + $0xa48] sm:$0xff]
        %v3536 = vld [vmem:[#allocation2 + $0xa90] sm:$0xff]
        %v3537 = vld [vmem:[#allocation2 + $0xad8] sm:$0xff]
        %v3538 = vld [vmem:[#allocation2 + $0xb20] sm:$0xff]
        %v3539 = vld [vmem:[#allocation2 + $0xb68] sm:$0xff]
        %v3540 = vld [vmem:[#allocation2 + $0xbb0] sm:$0xff]
        %v3541 = vld [vmem:[#allocation2 + $0xbf8] sm:$0xff]
        %v3542 = vld [vmem:[#allocation2 + $0xc40] sm:$0xff]
        %v3543 = vld [vmem:[#allocation2 + $0xc88] sm:$0xff]
        %v3544 = vld [vmem:[#allocation2 + $0xcd0] sm:$0xff]
        %v3545 = vld [vmem:[#allocation2 + $0xd18] sm:$0xff]
        %v3546 = vld [vmem:[#allocation2 + $0xd60] sm:$0xff]
        %v3547 = vld [vmem:[#allocation2 + $0xda8] sm:$0xff]
        %v3548 = vld [vmem:[#allocation2 + $0xdf0] sm:$0xff]
        %v3549 = vld [vmem:[#allocation2 + $0xe38] sm:$0xff]
        %v3550 = vld [vmem:[#allocation2 + $0xe80] sm:$0xff]
        %v3551 = vld [vmem:[#allocation2 + $0xec8] sm:$0xff]
        %v3552 = vld [vmem:[#allocation2 + $0xf10] sm:$0xff]
        %v3553 = vld [vmem:[#allocation2 + $0xf58] sm:$0xff]
        %v3554 = vld [vmem:[#allocation2 + $0xfa0] sm:$0xff]
        %v3555 = vld [vmem:[#allocation2 + $0xfe8] sm:$0xff]
        %v3556 = vld [vmem:[#allocation2 + $0x1030] sm:$0xff]
        %v3557 = vld [vmem:[#allocation2 + $0x1078] sm:$0xff]
        %v3558 = vld [vmem:[#allocation2 + $0x10c0] sm:$0xff]
        %v3559 = vld [vmem:[#allocation2 + $0x1108] sm:$0xff]
        %v3560 = vld [vmem:[#allocation2 + $0x1150] sm:$0xff]
        %v3561 = vld [vmem:[#allocation2 + $0x1198] sm:$0xff]
        %v3562 = vld [vmem:[#allocation2 + $0x11e0] sm:$0xff]
        %v3563 = vld [vmem:[#allocation2 + $0x1228] sm:$0xff]
        %v3564 = vld [vmem:[#allocation2 + $0x1270] sm:$0xff]
        %v3565 = vld [vmem:[#allocation2 + $0x12b8] sm:$0xff]
        %v3566 = vld [vmem:[#allocation2 + $0x1300] sm:$0xff]
        %v3567 = vld [vmem:[#allocation2 + $0x1348] sm:$0xff]
        %v3568 = vld [vmem:[#allocation2 + $0x1390] sm:$0xff]
        %v3569 = vld [vmem:[#allocation2 + $0x13d8] sm:$0xff]
        %v3570 = vld [vmem:[#allocation2 + $0x1420] sm:$0xff]
        %v3571 = vld [vmem:[#allocation2 + $0x1468] sm:$0xff]
        %v3572 = vld [vmem:[#allocation2 + $0x14b0] sm:$0xff]
        %v3573 = vld [vmem:[#allocation2 + $0x14f8] sm:$0xff]
        %v3574 = vld [vmem:[#allocation2 + $0x1540] sm:$0xff]
        %v3575 = vld [vmem:[#allocation2 + $0x1588] sm:$0xff]
        %v3576 = vld [vmem:[#allocation2 + $0x15d0] sm:$0xff]
        %v3577 = vld [vmem:[#allocation2 + $0x1618] sm:$0xff]
        %v3578 = vld [vmem:[#allocation2 + $0x1660] sm:$0xff]
        %v3579 = vld [vmem:[#allocation2 + $0x16a8] sm:$0xff]
        %v3580 = vld [vmem:[#allocation2 + $0x16f0] sm:$0xff]
        %v3581 = vld [vmem:[#allocation2 + $0x1738] sm:$0xff]
        %v3582 = vld [vmem:[#allocation2 + $0x1780] sm:$0xff]
        %v3583 = vld [vmem:[#allocation2 + $0x17c8] sm:$0x33]
        %v3669 = vunpack.c.l.b16 %v3499
        %v3670 = vunpack.c.h.b16 %v3499
        %v3671 = vunpack.c.l.b16 %v3500
        %v3672 = vunpack.c.h.b16 %v3500
        %v3673 = vunpack.c.l.b16 %v3501
        %v3674 = vunpack.c.h.b16 %v3501
        %v3675 = vunpack.c.l.b16 %v3502
        %v3676 = vunpack.c.h.b16 %v3502
        %v3677 = vunpack.c.l.b16 %v3503
        %v3678 = vunpack.c.h.b16 %v3503
        %v3679 = vunpack.c.l.b16 %v3504
        %v3680 = vunpack.c.h.b16 %v3504
        %v3681 = vunpack.c.l.b16 %v3505
        %v3682 = vunpack.c.h.b16 %v3505
        %v3683 = vunpack.c.l.b16 %v3506
        %v3684 = vunpack.c.h.b16 %v3506
        %v3685 = vunpack.c.l.b16 %v3507
        %v3686 = vunpack.c.h.b16 %v3507
        %v3687 = vunpack.c.l.b16 %v3508
        %v3688 = vunpack.c.h.b16 %v3508
        %v3689 = vunpack.c.l.b16 %v3509
        %v3690 = vunpack.c.h.b16 %v3509
        %v3691 = vunpack.c.l.b16 %v3510
        %v3692 = vunpack.c.h.b16 %v3510
        %v3693 = vunpack.c.l.b16 %v3511
        %v3694 = vunpack.c.h.b16 %v3511
        %v3695 = vunpack.c.l.b16 %v3512
        %v3696 = vunpack.c.h.b16 %v3512
        %v3697 = vunpack.c.l.b16 %v3513
        %v3698 = vunpack.c.h.b16 %v3513
        %v3699 = vunpack.c.l.b16 %v3514
        %v3700 = vunpack.c.h.b16 %v3514
        %v3701 = vunpack.c.l.b16 %v3515
        %v3702 = vunpack.c.h.b16 %v3515
        %v3703 = vunpack.c.l.b16 %v3516
        %v3704 = vunpack.c.h.b16 %v3516
        %v3705 = vunpack.c.l.b16 %v3517
        %v3706 = vunpack.c.h.b16 %v3517
        %v3707 = vunpack.c.l.b16 %v3518
        %v3708 = vunpack.c.h.b16 %v3518
        %v3709 = vunpack.c.l.b16 %v3519
        %v3710 = vunpack.c.h.b16 %v3519
        %v3711 = vunpack.c.l.b16 %v3520
        %v3712 = vunpack.c.h.b16 %v3520
        %v3713 = vunpack.c.l.b16 %v3521
        %v3714 = vunpack.c.h.b16 %v3521
        %v3715 = vunpack.c.l.b16 %v3522
        %v3716 = vunpack.c.h.b16 %v3522
        %v3717 = vunpack.c.l.b16 %v3523
        %v3718 = vunpack.c.h.b16 %v3523
        %v3719 = vunpack.c.l.b16 %v3524
        %v3720 = vunpack.c.h.b16 %v3524
        %v3721 = vunpack.c.l.b16 %v3525
        %v3722 = vunpack.c.h.b16 %v3525
        %v3723 = vunpack.c.l.b16 %v3526
        %v3724 = vunpack.c.h.b16 %v3526
        %v3725 = vunpack.c.l.b16 %v3527
        %v3726 = vunpack.c.h.b16 %v3527
        %v3727 = vunpack.c.l.b16 %v3528
        %v3728 = vunpack.c.h.b16 %v3528
        %v3729 = vunpack.c.l.b16 %v3529
        %v3730 = vunpack.c.h.b16 %v3529
        %v3731 = vunpack.c.l.b16 %v3530
        %v3732 = vunpack.c.h.b16 %v3530
        %v3733 = vunpack.c.l.b16 %v3531
        %v3734 = vunpack.c.h.b16 %v3531
        %v3735 = vunpack.c.l.b16 %v3532
        %v3736 = vunpack.c.h.b16 %v3532
        %v3737 = vunpack.c.l.b16 %v3533
        %v3738 = vunpack.c.h.b16 %v3533
        %v3739 = vunpack.c.l.b16 %v3534
        %v3740 = vunpack.c.h.b16 %v3534
        %v3741 = vunpack.c.l.b16 %v3535
        %v3742 = vunpack.c.h.b16 %v3535
        %v3743 = vunpack.c.l.b16 %v3536
        %v3744 = vunpack.c.h.b16 %v3536
        %v3745 = vunpack.c.l.b16 %v3537
        %v3746 = vunpack.c.h.b16 %v3537
        %v3747 = vunpack.c.l.b16 %v3538
        %v3748 = vunpack.c.h.b16 %v3538
        %v3749 = vunpack.c.l.b16 %v3539
        %v3750 = vunpack.c.h.b16 %v3539
        %v3751 = vunpack.c.l.b16 %v3540
        %v3752 = vunpack.c.h.b16 %v3540
        %v3753 = vunpack.c.l.b16 %v3541
        %v3754 = vunpack.c.h.b16 %v3541
        %v3755 = vunpack.c.l.b16 %v3542
        %v3756 = vunpack.c.h.b16 %v3542
        %v3757 = vunpack.c.l.b16 %v3543
        %v3758 = vunpack.c.h.b16 %v3543
        %v3759 = vunpack.c.l.b16 %v3544
        %v3760 = vunpack.c.h.b16 %v3544
        %v3761 = vunpack.c.l.b16 %v3545
        %v3762 = vunpack.c.h.b16 %v3545
        %v3763 = vunpack.c.l.b16 %v3546
        %v3764 = vunpack.c.h.b16 %v3546
        %v3765 = vunpack.c.l.b16 %v3547
        %v3766 = vunpack.c.h.b16 %v3547
        %v3767 = vunpack.c.l.b16 %v3548
        %v3768 = vunpack.c.h.b16 %v3548
        %v3769 = vunpack.c.l.b16 %v3549
        %v3770 = vunpack.c.h.b16 %v3549
        %v3771 = vunpack.c.l.b16 %v3550
        %v3772 = vunpack.c.h.b16 %v3550
        %v3773 = vunpack.c.l.b16 %v3551
        %v3774 = vunpack.c.h.b16 %v3551
        %v3775 = vunpack.c.l.b16 %v3552
        %v3776 = vunpack.c.h.b16 %v3552
        %v3777 = vunpack.c.l.b16 %v3553
        %v3778 = vunpack.c.h.b16 %v3553
        %v3779 = vunpack.c.l.b16 %v3554
        %v3780 = vunpack.c.h.b16 %v3554
        %v3781 = vunpack.c.l.b16 %v3555
        %v3782 = vunpack.c.h.b16 %v3555
        %v3783 = vunpack.c.l.b16 %v3556
        %v3784 = vunpack.c.h.b16 %v3556
        %v3785 = vunpack.c.l.b16 %v3557
        %v3786 = vunpack.c.h.b16 %v3557
        %v3787 = vunpack.c.l.b16 %v3558
        %v3788 = vunpack.c.h.b16 %v3558
        %v3789 = vunpack.c.l.b16 %v3559
        %v3790 = vunpack.c.h.b16 %v3559
        %v3791 = vunpack.c.l.b16 %v3560
        %v3792 = vunpack.c.h.b16 %v3560
        %v3793 = vunpack.c.l.b16 %v3561
        %v3794 = vunpack.c.h.b16 %v3561
        %v3795 = vunpack.c.l.b16 %v3562
        %v3796 = vunpack.c.h.b16 %v3562
        %v3797 = vunpack.c.l.b16 %v3563
        %v3798 = vunpack.c.h.b16 %v3563
        %v3799 = vunpack.c.l.b16 %v3564
        %v3800 = vunpack.c.h.b16 %v3564
        %v3801 = vunpack.c.l.b16 %v3565
        %v3802 = vunpack.c.h.b16 %v3565
        %v3803 = vunpack.c.l.b16 %v3566
        %v3804 = vunpack.c.h.b16 %v3566
        %v3805 = vunpack.c.l.b16 %v3567
        %v3806 = vunpack.c.h.b16 %v3567
        %v3807 = vunpack.c.l.b16 %v3568
        %v3808 = vunpack.c.h.b16 %v3568
        %v3809 = vunpack.c.l.b16 %v3569
        %v3810 = vunpack.c.h.b16 %v3569
        %v3811 = vunpack.c.l.b16 %v3570
        %v3812 = vunpack.c.h.b16 %v3570
        %v3813 = vunpack.c.l.b16 %v3571
        %v3814 = vunpack.c.h.b16 %v3571
        %v3815 = vunpack.c.l.b16 %v3572
        %v3816 = vunpack.c.h.b16 %v3572
        %v3817 = vunpack.c.l.b16 %v3573
        %v3818 = vunpack.c.h.b16 %v3573
        %v3819 = vunpack.c.l.b16 %v3574
        %v3820 = vunpack.c.h.b16 %v3574
        %v3821 = vunpack.c.l.b16 %v3575
        %v3822 = vunpack.c.h.b16 %v3575
        %v3823 = vunpack.c.l.b16 %v3576
        %v3824 = vunpack.c.h.b16 %v3576
        %v3825 = vunpack.c.l.b16 %v3577
        %v3826 = vunpack.c.h.b16 %v3577
        %v3827 = vunpack.c.l.b16 %v3578
        %v3828 = vunpack.c.h.b16 %v3578
        %v3829 = vunpack.c.l.b16 %v3579
        %v3830 = vunpack.c.h.b16 %v3579
        %v3831 = vunpack.c.l.b16 %v3580
        %v3832 = vunpack.c.h.b16 %v3580
        %v3833 = vunpack.c.l.b16 %v3581
        %v3834 = vunpack.c.h.b16 %v3581
        %v3835 = vunpack.c.l.b16 %v3582
        %v3836 = vunpack.c.h.b16 %v3582
        %v3837 = vunpack.c.l.b16 %v3583
        %v3838 = vunpack.c.h.b16 %v3583
        %v3839 = vpack.c.b16 %v3671, %v3669
        %v3840 = vpack.c.b16 %v3672, %v3670
        %v3841 = vpack.c.b16 %v3675, %v3673
        %v3842 = vpack.c.b16 %v3676, %v3674
        %v3843 = vpack.c.b16 %v3679, %v3677
        %v3844 = vpack.c.b16 %v3680, %v3678
        %v3845 = vpack.c.b16 %v3683, %v3681
        %v3846 = vpack.c.b16 %v3684, %v3682
        %v3847 = vpack.c.b16 %v3687, %v3685
        %v3848 = vpack.c.b16 %v3688, %v3686
        %v3849 = vpack.c.b16 %v3691, %v3689
        %v3850 = vpack.c.b16 %v3692, %v3690
        %v3851 = vpack.c.b16 %v3695, %v3693
        %v3852 = vpack.c.b16 %v3696, %v3694
        %v3853 = vpack.c.b16 %v3699, %v3697
        %v3854 = vpack.c.b16 %v3700, %v3698
        %v3855 = vpack.c.b16 %v3703, %v3701
        %v3856 = vpack.c.b16 %v3704, %v3702
        %v3857 = vpack.c.b16 %v3707, %v3705
        %v3858 = vpack.c.b16 %v3708, %v3706
        %v3859 = vpack.c.b16 %v3711, %v3709
        %v3860 = vpack.c.b16 %v3712, %v3710
        %v3861 = vpack.c.b16 %v3715, %v3713
        %v3862 = vpack.c.b16 %v3716, %v3714
        %v3863 = vpack.c.b16 %v3719, %v3717
        %v3864 = vpack.c.b16 %v3720, %v3718
        %v3865 = vpack.c.b16 %v3723, %v3721
        %v3866 = vpack.c.b16 %v3724, %v3722
        %v3867 = vpack.c.b16 %v3727, %v3725
        %v3868 = vpack.c.b16 %v3728, %v3726
        %v3869 = vpack.c.b16 %v3731, %v3729
        %v3870 = vpack.c.b16 %v3732, %v3730
        %v3871 = vpack.c.b16 %v3735, %v3733
        %v3872 = vpack.c.b16 %v3736, %v3734
        %v3873 = vpack.c.b16 %v3739, %v3737
        %v3874 = vpack.c.b16 %v3740, %v3738
        %v3875 = vpack.c.b16 %v3743, %v3741
        %v3876 = vpack.c.b16 %v3744, %v3742
        %v3877 = vpack.c.b16 %v3747, %v3745
        %v3878 = vpack.c.b16 %v3748, %v3746
        %v3879 = vpack.c.b16 %v3751, %v3749
        %v3880 = vpack.c.b16 %v3752, %v3750
        %v3881 = vpack.c.b16 %v3755, %v3753
        %v3882 = vpack.c.b16 %v3756, %v3754
        %v3883 = vpack.c.b16 %v3759, %v3757
        %v3884 = vpack.c.b16 %v3760, %v3758
        %v3885 = vpack.c.b16 %v3763, %v3761
        %v3886 = vpack.c.b16 %v3764, %v3762
        %v3887 = vpack.c.b16 %v3767, %v3765
        %v3888 = vpack.c.b16 %v3768, %v3766
        %v3889 = vpack.c.b16 %v3771, %v3769
        %v3890 = vpack.c.b16 %v3772, %v3770
        %v3891 = vpack.c.b16 %v3775, %v3773
        %v3892 = vpack.c.b16 %v3776, %v3774
        %v3893 = vpack.c.b16 %v3779, %v3777
        %v3894 = vpack.c.b16 %v3780, %v3778
        %v3895 = vpack.c.b16 %v3783, %v3781
        %v3896 = vpack.c.b16 %v3784, %v3782
        %v3897 = vpack.c.b16 %v3787, %v3785
        %v3898 = vpack.c.b16 %v3788, %v3786
        %v3899 = vpack.c.b16 %v3791, %v3789
        %v3900 = vpack.c.b16 %v3792, %v3790
        %v3901 = vpack.c.b16 %v3795, %v3793
        %v3902 = vpack.c.b16 %v3796, %v3794
        %v3903 = vpack.c.b16 %v3799, %v3797
        %v3904 = vpack.c.b16 %v3800, %v3798
        %v3905 = vpack.c.b16 %v3803, %v3801
        %v3906 = vpack.c.b16 %v3804, %v3802
        %v3907 = vpack.c.b16 %v3807, %v3805
        %v3908 = vpack.c.b16 %v3808, %v3806
        %v3909 = vpack.c.b16 %v3811, %v3809
        %v3910 = vpack.c.b16 %v3812, %v3810
        %v3911 = vpack.c.b16 %v3815, %v3813
        %v3912 = vpack.c.b16 %v3816, %v3814
        %v3913 = vpack.c.b16 %v3819, %v3817
        %v3914 = vpack.c.b16 %v3820, %v3818
        %v3915 = vpack.c.b16 %v3823, %v3821
        %v3916 = vpack.c.b16 %v3824, %v3822
        %v3917 = vpack.c.b16 %v3827, %v3825
        %v3918 = vpack.c.b16 %v3828, %v3826
        %v3919 = vpack.c.b16 %v3831, %v3829
        %v3920 = vpack.c.b16 %v3832, %v3830
        %v3921 = vpack.c.b16 %v3835, %v3833
        %v3922 = vpack.c.b16 %v3836, %v3834
        %v3923 = vpack.c.b16 %v3837, %v3837
        %v3924 = vpack.c.b16 %v3838, %v3838
        %v4010 = vsel %vm805, %v3923, 0
        %v4013 = vsel %vm805, %v3924, 0
        %4015 = vmatprep.subr.bf16.mxu0 %v3840
        %4016 = vmatpush1.bf16.msra.mxu0 %v3839
        %4017 = vmatprep.subr.bf16.mxu0 %v3842
        %4018 = vmatpush1.bf16.msra.mxu0 %v3841
        %4019 = vmatprep.subr.bf16.mxu0 %v3844
        %4020 = vmatpush1.bf16.msra.mxu0 %v3843
        %4021 = vmatprep.subr.bf16.mxu0 %v3846
        %4022 = vmatpush1.bf16.msra.mxu0 %v3845
        %4023 = vmatprep.subr.bf16.mxu0 %v3848
        %4024 = vmatpush1.bf16.msra.mxu0 %v3847
        %4025 = vmatprep.subr.bf16.mxu0 %v3850
        %4026 = vmatpush1.bf16.msra.mxu0 %v3849
        %4027 = vmatprep.subr.bf16.mxu0 %v3852
        %4028 = vmatpush1.bf16.msra.mxu0 %v3851
        %4029 = vmatprep.subr.bf16.mxu0 %v3854
        %4030 = vmatpush1.bf16.msra.mxu0 %v3853
        %4031 = vmatprep.subr.bf16.mxu0 %v3856
        %4032 = vmatpush1.bf16.msra.mxu0 %v3855
        %4033 = vmatprep.subr.bf16.mxu0 %v3858
        %4034 = vmatpush1.bf16.msra.mxu0 %v3857
        %4035 = vmatprep.subr.bf16.mxu0 %v3860
        %4036 = vmatpush1.bf16.msra.mxu0 %v3859
        %4037 = vmatprep.subr.bf16.mxu0 %v3862
        %4038 = vmatpush1.bf16.msra.mxu0 %v3861
        %4039 = vmatprep.subr.bf16.mxu0 %v3864
        %4040 = vmatpush1.bf16.msra.mxu0 %v3863
        %4041 = vmatprep.subr.bf16.mxu0 %v3866
        %4042 = vmatpush1.bf16.msra.mxu0 %v3865
        %4043 = vmatprep.subr.bf16.mxu0 %v3868
        %4044 = vmatpush1.bf16.msra.mxu0 %v3867
        %4045 = vmatprep.subr.bf16.mxu0 %v3870
        %4046 = vmatpush1.bf16.msra.mxu0 %v3869
        %4047 = vmatprep.mubr.bf16.mxu0 %v286
        %4048 = vmatmul.mubr.bf16.gmra.mrb[0].mxu0 %v285
        %v4049 = vpop.f32.mrb[0].mxu0
        %v4050 = vadd.f32 0.0, %v4049
        %v4051 = vpop.f32.mrb[0].mxu0
        %v4052 = vadd.f32 0.0, %v4051
        %v4053 = vpop.f32.mrb[0].mxu0
        %v4054 = vpop.f32.mrb[0].mxu0
        %4055 = vdwg.mxu0
        %4056 = vmatprep.subr.bf16.mxu0 %v3872
        %4057 = vmatpush1.bf16.msra.mxu0 %v3871
        %4058 = vmatprep.subr.bf16.mxu0 %v3874
        %4059 = vmatpush1.bf16.msra.mxu0 %v3873
        %4060 = vmatprep.subr.bf16.mxu0 %v3876
        %4061 = vmatpush1.bf16.msra.mxu0 %v3875
        %4062 = vmatprep.subr.bf16.mxu0 %v3878
        %4063 = vmatpush1.bf16.msra.mxu0 %v3877
        %4064 = vmatprep.subr.bf16.mxu0 %v3880
        %4065 = vmatpush1.bf16.msra.mxu0 %v3879
        %4066 = vmatprep.subr.bf16.mxu0 %v3882
        %4067 = vmatpush1.bf16.msra.mxu0 %v3881
        %4068 = vmatprep.subr.bf16.mxu0 %v3884
        %4069 = vmatpush1.bf16.msra.mxu0 %v3883
        %4070 = vmatprep.subr.bf16.mxu0 %v3886
        %4071 = vmatpush1.bf16.msra.mxu0 %v3885
        %4072 = vmatprep.subr.bf16.mxu0 %v3888
        %4073 = vmatpush1.bf16.msra.mxu0 %v3887
        %4074 = vmatprep.subr.bf16.mxu0 %v3890
        %4075 = vmatpush1.bf16.msra.mxu0 %v3889
        %4076 = vmatprep.subr.bf16.mxu0 %v3892
        %4077 = vmatpush1.bf16.msra.mxu0 %v3891
        %4078 = vmatprep.subr.bf16.mxu0 %v3894
        %4079 = vmatpush1.bf16.msra.mxu0 %v3893
        %4080 = vmatprep.subr.bf16.mxu0 %v3896
        %4081 = vmatpush1.bf16.msra.mxu0 %v3895
        %4082 = vmatprep.subr.bf16.mxu0 %v3898
        %4083 = vmatpush1.bf16.msra.mxu0 %v3897
        %4084 = vmatprep.subr.bf16.mxu0 %v3900
        %4085 = vmatpush1.bf16.msra.mxu0 %v3899
        %4086 = vmatprep.subr.bf16.mxu0 %v3902
        %4087 = vmatpush1.bf16.msra.mxu0 %v3901
        %4088 = vmatprep.mubr.bf16.mxu0 %v288
        %4089 = vmatmul.mubr.bf16.gmra.mrb[0].mxu0 %v287
        %v4090 = vpop.f32.mrb[0].mxu0
        %v4091 = vadd.f32 %v4050, %v4090
        %v4092 = vpop.f32.mrb[0].mxu0
        %v4093 = vadd.f32 %v4052, %v4092
        %v4094 = vpop.f32.mrb[0].mxu0
        %v4095 = vpop.f32.mrb[0].mxu0
        %4096 = vdwg.mxu0
        %4097 = vmatprep.subr.bf16.mxu0 %v3904
        %4098 = vmatpush1.bf16.msra.mxu0 %v3903
        %4099 = vmatprep.subr.bf16.mxu0 %v3906
        %4100 = vmatpush1.bf16.msra.mxu0 %v3905
        %4101 = vmatprep.subr.bf16.mxu0 %v3908
        %4102 = vmatpush1.bf16.msra.mxu0 %v3907
        %4103 = vmatprep.subr.bf16.mxu0 %v3910
        %4104 = vmatpush1.bf16.msra.mxu0 %v3909
        %4105 = vmatprep.subr.bf16.mxu0 %v3912
        %4106 = vmatpush1.bf16.msra.mxu0 %v3911
        %4107 = vmatprep.subr.bf16.mxu0 %v3914
        %4108 = vmatpush1.bf16.msra.mxu0 %v3913
        %4109 = vmatprep.subr.bf16.mxu0 %v3916
        %4110 = vmatpush1.bf16.msra.mxu0 %v3915
        %4111 = vmatprep.subr.bf16.mxu0 %v3918
        %4112 = vmatpush1.bf16.msra.mxu0 %v3917
        %4113 = vmatprep.subr.bf16.mxu0 %v3920
        %4114 = vmatpush1.bf16.msra.mxu0 %v3919
        %4115 = vmatprep.subr.bf16.mxu0 %v3922
        %4116 = vmatpush1.bf16.msra.mxu0 %v3921
        %4117 = vmatprep.subr.bf16.mxu0 %v4013
        %4118 = vmatpush1.bf16.msra.mxu0 %v4010
        %4119 = vmatprep.subr.bf16.mxu0 0
        %4120 = vmatpush1.bf16.msra.mxu0 0
        %4121 = vmatprep.subr.bf16.mxu0 0
        %4122 = vmatpush1.bf16.msra.mxu0 0
        %4123 = vmatprep.subr.bf16.mxu0 0
        %4124 = vmatpush1.bf16.msra.mxu0 0
        %4125 = vmatprep.subr.bf16.mxu0 0
        %4126 = vmatpush1.bf16.msra.mxu0 0
        %4127 = vmatprep.subr.bf16.mxu0 0
        %4128 = vmatpush1.bf16.msra.mxu0 0
        %4129 = vmatprep.mubr.bf16.mxu0 %v803
        %4130 = vmatmul.mubr.bf16.gmra.mrb[0].mxu0 %v289
        %v4131 = vpop.f32.mrb[0].mxu0
        %v4132 = vadd.f32 %v4091, %v4131
        %v4133 = vpop.f32.mrb[0].mxu0
        %v4134 = vadd.f32 %v4093, %v4133
        %v4135 = vpop.f32.mrb[0].mxu0
        %v4136 = vpop.f32.mrb[0].mxu0
        %4137 = vdwg.mxu0
        %v4138 = vmax.f32 %v3497, %v4132
        %v4139 = vmax.f32 %v3498, %v4134
        %v4140 = vld [vmem:[#allocation2 + $0x30] sm:$0xff]
        %v4141 = vld [vmem:[#allocation2 + $0x78] sm:$0xff]
        %v4142 = vld [vmem:[#allocation2 + $0xc0] sm:$0xff]
        %v4143 = vld [vmem:[#allocation2 + $0x108] sm:$0xff]
        %v4144 = vld [vmem:[#allocation2 + $0x150] sm:$0xff]
        %v4145 = vld [vmem:[#allocation2 + $0x198] sm:$0xff]
        %v4146 = vld [vmem:[#allocation2 + $0x1e0] sm:$0xff]
        %v4147 = vld [vmem:[#allocation2 + $0x228] sm:$0xff]
        %v4148 = vld [vmem:[#allocation2 + $0x270] sm:$0xff]
        %v4149 = vld [vmem:[#allocation2 + $0x2b8] sm:$0xff]
        %v4150 = vld [vmem:[#allocation2 + $0x300] sm:$0xff]
        %v4151 = vld [vmem:[#allocation2 + $0x348] sm:$0xff]
        %v4152 = vld [vmem:[#allocation2 + $0x390] sm:$0xff]
        %v4153 = vld [vmem:[#allocation2 + $0x3d8] sm:$0xff]
        %v4154 = vld [vmem:[#allocation2 + $0x420] sm:$0xff]
        %v4155 = vld [vmem:[#allocation2 + $0x468] sm:$0xff]
        %v4156 = vld [vmem:[#allocation2 + $0x4b0] sm:$0xff]
        %v4157 = vld [vmem:[#allocation2 + $0x4f8] sm:$0xff]
        %v4158 = vld [vmem:[#allocation2 + $0x540] sm:$0xff]
        %v4159 = vld [vmem:[#allocation2 + $0x588] sm:$0xff]
        %v4160 = vld [vmem:[#allocation2 + $0x5d0] sm:$0xff]
        %v4161 = vld [vmem:[#allocation2 + $0x618] sm:$0xff]
        %v4162 = vld [vmem:[#allocation2 + $0x660] sm:$0xff]
        %v4163 = vld [vmem:[#allocation2 + $0x6a8] sm:$0xff]
        %v4164 = vld [vmem:[#allocation2 + $0x6f0] sm:$0xff]
        %v4165 = vld [vmem:[#allocation2 + $0x738] sm:$0xff]
        %v4166 = vld [vmem:[#allocation2 + $0x780] sm:$0xff]
        %v4167 = vld [vmem:[#allocation2 + $0x7c8] sm:$0xff]
        %v4168 = vld [vmem:[#allocation2 + $0x810] sm:$0xff]
        %v4169 = vld [vmem:[#allocation2 + $0x858] sm:$0xff]
        %v4170 = vld [vmem:[#allocation2 + $0x8a0] sm:$0xff]
        %v4171 = vld [vmem:[#allocation2 + $0x8e8] sm:$0xff]
        %v4172 = vld [vmem:[#allocation2 + $0x930] sm:$0xff]
        %v4173 = vld [vmem:[#allocation2 + $0x978] sm:$0xff]
        %v4174 = vld [vmem:[#allocation2 + $0x9c0] sm:$0xff]
        %v4175 = vld [vmem:[#allocation2 + $0xa08] sm:$0xff]
        %v4176 = vld [vmem:[#allocation2 + $0xa50] sm:$0xff]
        %v4177 = vld [vmem:[#allocation2 + $0xa98] sm:$0xff]
        %v4178 = vld [vmem:[#allocation2 + $0xae0] sm:$0xff]
        %v4179 = vld [vmem:[#allocation2 + $0xb28] sm:$0xff]
        %v4180 = vld [vmem:[#allocation2 + $0xb70] sm:$0xff]
        %v4181 = vld [vmem:[#allocation2 + $0xbb8] sm:$0xff]
        %v4182 = vld [vmem:[#allocation2 + $0xc00] sm:$0xff]
        %v4183 = vld [vmem:[#allocation2 + $0xc48] sm:$0xff]
        %v4184 = vld [vmem:[#allocation2 + $0xc90] sm:$0xff]
        %v4185 = vld [vmem:[#allocation2 + $0xcd8] sm:$0xff]
        %v4186 = vld [vmem:[#allocation2 + $0xd20] sm:$0xff]
        %v4187 = vld [vmem:[#allocation2 + $0xd68] sm:$0xff]
        %v4188 = vld [vmem:[#allocation2 + $0xdb0] sm:$0xff]
        %v4189 = vld [vmem:[#allocation2 + $0xdf8] sm:$0xff]
        %v4190 = vld [vmem:[#allocation2 + $0xe40] sm:$0xff]
        %v4191 = vld [vmem:[#allocation2 + $0xe88] sm:$0xff]
        %v4192 = vld [vmem:[#allocation2 + $0xed0] sm:$0xff]
        %v4193 = vld [vmem:[#allocation2 + $0xf18] sm:$0xff]
        %v4194 = vld [vmem:[#allocation2 + $0xf60] sm:$0xff]
        %v4195 = vld [vmem:[#allocation2 + $0xfa8] sm:$0xff]
        %v4196 = vld [vmem:[#allocation2 + $0xff0] sm:$0xff]
        %v4197 = vld [vmem:[#allocation2 + $0x1038] sm:$0xff]
        %v4198 = vld [vmem:[#allocation2 + $0x1080] sm:$0xff]
        %v4199 = vld [vmem:[#allocation2 + $0x10c8] sm:$0xff]
        %v4200 = vld [vmem:[#allocation2 + $0x1110] sm:$0xff]
        %v4201 = vld [vmem:[#allocation2 + $0x1158] sm:$0xff]
        %v4202 = vld [vmem:[#allocation2 + $0x11a0] sm:$0xff]
        %v4203 = vld [vmem:[#allocation2 + $0x11e8] sm:$0xff]
        %v4204 = vld [vmem:[#allocation2 + $0x1230] sm:$0xff]
        %v4205 = vld [vmem:[#allocation2 + $0x1278] sm:$0xff]
        %v4206 = vld [vmem:[#allocation2 + $0x12c0] sm:$0xff]
        %v4207 = vld [vmem:[#allocation2 + $0x1308] sm:$0xff]
        %v4208 = vld [vmem:[#allocation2 + $0x1350] sm:$0xff]
        %v4209 = vld [vmem:[#allocation2 + $0x1398] sm:$0xff]
        %v4210 = vld [vmem:[#allocation2 + $0x13e0] sm:$0xff]
        %v4211 = vld [vmem:[#allocation2 + $0x1428] sm:$0xff]
        %v4212 = vld [vmem:[#allocation2 + $0x1470] sm:$0xff]
        %v4213 = vld [vmem:[#allocation2 + $0x14b8] sm:$0xff]
        %v4214 = vld [vmem:[#allocation2 + $0x1500] sm:$0xff]
        %v4215 = vld [vmem:[#allocation2 + $0x1548] sm:$0xff]
        %v4216 = vld [vmem:[#allocation2 + $0x1590] sm:$0xff]
        %v4217 = vld [vmem:[#allocation2 + $0x15d8] sm:$0xff]
        %v4218 = vld [vmem:[#allocation2 + $0x1620] sm:$0xff]
        %v4219 = vld [vmem:[#allocation2 + $0x1668] sm:$0xff]
        %v4220 = vld [vmem:[#allocation2 + $0x16b0] sm:$0xff]
        %v4221 = vld [vmem:[#allocation2 + $0x16f8] sm:$0xff]
        %v4222 = vld [vmem:[#allocation2 + $0x1740] sm:$0xff]
        %v4223 = vld [vmem:[#allocation2 + $0x1788] sm:$0xff]
        %v4224 = vld [vmem:[#allocation2 + $0x17d0] sm:$0x33]
        %v4310 = vunpack.c.l.b16 %v4140
        %v4311 = vunpack.c.h.b16 %v4140
        %v4312 = vunpack.c.l.b16 %v4141
        %v4313 = vunpack.c.h.b16 %v4141
        %v4314 = vunpack.c.l.b16 %v4142
        %v4315 = vunpack.c.h.b16 %v4142
        %v4316 = vunpack.c.l.b16 %v4143
        %v4317 = vunpack.c.h.b16 %v4143
        %v4318 = vunpack.c.l.b16 %v4144
        %v4319 = vunpack.c.h.b16 %v4144
        %v4320 = vunpack.c.l.b16 %v4145
        %v4321 = vunpack.c.h.b16 %v4145
        %v4322 = vunpack.c.l.b16 %v4146
        %v4323 = vunpack.c.h.b16 %v4146
        %v4324 = vunpack.c.l.b16 %v4147
        %v4325 = vunpack.c.h.b16 %v4147
        %v4326 = vunpack.c.l.b16 %v4148
        %v4327 = vunpack.c.h.b16 %v4148
        %v4328 = vunpack.c.l.b16 %v4149
        %v4329 = vunpack.c.h.b16 %v4149
        %v4330 = vunpack.c.l.b16 %v4150
        %v4331 = vunpack.c.h.b16 %v4150
        %v4332 = vunpack.c.l.b16 %v4151
        %v4333 = vunpack.c.h.b16 %v4151
        %v4334 = vunpack.c.l.b16 %v4152
        %v4335 = vunpack.c.h.b16 %v4152
        %v4336 = vunpack.c.l.b16 %v4153
        %v4337 = vunpack.c.h.b16 %v4153
        %v4338 = vunpack.c.l.b16 %v4154
        %v4339 = vunpack.c.h.b16 %v4154
        %v4340 = vunpack.c.l.b16 %v4155
        %v4341 = vunpack.c.h.b16 %v4155
        %v4342 = vunpack.c.l.b16 %v4156
        %v4343 = vunpack.c.h.b16 %v4156
        %v4344 = vunpack.c.l.b16 %v4157
        %v4345 = vunpack.c.h.b16 %v4157
        %v4346 = vunpack.c.l.b16 %v4158
        %v4347 = vunpack.c.h.b16 %v4158
        %v4348 = vunpack.c.l.b16 %v4159
        %v4349 = vunpack.c.h.b16 %v4159
        %v4350 = vunpack.c.l.b16 %v4160
        %v4351 = vunpack.c.h.b16 %v4160
        %v4352 = vunpack.c.l.b16 %v4161
        %v4353 = vunpack.c.h.b16 %v4161
        %v4354 = vunpack.c.l.b16 %v4162
        %v4355 = vunpack.c.h.b16 %v4162
        %v4356 = vunpack.c.l.b16 %v4163
        %v4357 = vunpack.c.h.b16 %v4163
        %v4358 = vunpack.c.l.b16 %v4164
        %v4359 = vunpack.c.h.b16 %v4164
        %v4360 = vunpack.c.l.b16 %v4165
        %v4361 = vunpack.c.h.b16 %v4165
        %v4362 = vunpack.c.l.b16 %v4166
        %v4363 = vunpack.c.h.b16 %v4166
        %v4364 = vunpack.c.l.b16 %v4167
        %v4365 = vunpack.c.h.b16 %v4167
        %v4366 = vunpack.c.l.b16 %v4168
        %v4367 = vunpack.c.h.b16 %v4168
        %v4368 = vunpack.c.l.b16 %v4169
        %v4369 = vunpack.c.h.b16 %v4169
        %v4370 = vunpack.c.l.b16 %v4170
        %v4371 = vunpack.c.h.b16 %v4170
        %v4372 = vunpack.c.l.b16 %v4171
        %v4373 = vunpack.c.h.b16 %v4171
        %v4374 = vunpack.c.l.b16 %v4172
        %v4375 = vunpack.c.h.b16 %v4172
        %v4376 = vunpack.c.l.b16 %v4173
        %v4377 = vunpack.c.h.b16 %v4173
        %v4378 = vunpack.c.l.b16 %v4174
        %v4379 = vunpack.c.h.b16 %v4174
        %v4380 = vunpack.c.l.b16 %v4175
        %v4381 = vunpack.c.h.b16 %v4175
        %v4382 = vunpack.c.l.b16 %v4176
        %v4383 = vunpack.c.h.b16 %v4176
        %v4384 = vunpack.c.l.b16 %v4177
        %v4385 = vunpack.c.h.b16 %v4177
        %v4386 = vunpack.c.l.b16 %v4178
        %v4387 = vunpack.c.h.b16 %v4178
        %v4388 = vunpack.c.l.b16 %v4179
        %v4389 = vunpack.c.h.b16 %v4179
        %v4390 = vunpack.c.l.b16 %v4180
        %v4391 = vunpack.c.h.b16 %v4180
        %v4392 = vunpack.c.l.b16 %v4181
        %v4393 = vunpack.c.h.b16 %v4181
        %v4394 = vunpack.c.l.b16 %v4182
        %v4395 = vunpack.c.h.b16 %v4182
        %v4396 = vunpack.c.l.b16 %v4183
        %v4397 = vunpack.c.h.b16 %v4183
        %v4398 = vunpack.c.l.b16 %v4184
        %v4399 = vunpack.c.h.b16 %v4184
        %v4400 = vunpack.c.l.b16 %v4185
        %v4401 = vunpack.c.h.b16 %v4185
        %v4402 = vunpack.c.l.b16 %v4186
        %v4403 = vunpack.c.h.b16 %v4186
        %v4404 = vunpack.c.l.b16 %v4187
        %v4405 = vunpack.c.h.b16 %v4187
        %v4406 = vunpack.c.l.b16 %v4188
        %v4407 = vunpack.c.h.b16 %v4188
        %v4408 = vunpack.c.l.b16 %v4189
        %v4409 = vunpack.c.h.b16 %v4189
        %v4410 = vunpack.c.l.b16 %v4190
        %v4411 = vunpack.c.h.b16 %v4190
        %v4412 = vunpack.c.l.b16 %v4191
        %v4413 = vunpack.c.h.b16 %v4191
        %v4414 = vunpack.c.l.b16 %v4192
        %v4415 = vunpack.c.h.b16 %v4192
        %v4416 = vunpack.c.l.b16 %v4193
        %v4417 = vunpack.c.h.b16 %v4193
        %v4418 = vunpack.c.l.b16 %v4194
        %v4419 = vunpack.c.h.b16 %v4194
        %v4420 = vunpack.c.l.b16 %v4195
        %v4421 = vunpack.c.h.b16 %v4195
        %v4422 = vunpack.c.l.b16 %v4196
        %v4423 = vunpack.c.h.b16 %v4196
        %v4424 = vunpack.c.l.b16 %v4197
        %v4425 = vunpack.c.h.b16 %v4197
        %v4426 = vunpack.c.l.b16 %v4198
        %v4427 = vunpack.c.h.b16 %v4198
        %v4428 = vunpack.c.l.b16 %v4199
        %v4429 = vunpack.c.h.b16 %v4199
        %v4430 = vunpack.c.l.b16 %v4200
        %v4431 = vunpack.c.h.b16 %v4200
        %v4432 = vunpack.c.l.b16 %v4201
        %v4433 = vunpack.c.h.b16 %v4201
        %v4434 = vunpack.c.l.b16 %v4202
        %v4435 = vunpack.c.h.b16 %v4202
        %v4436 = vunpack.c.l.b16 %v4203
        %v4437 = vunpack.c.h.b16 %v4203
        %v4438 = vunpack.c.l.b16 %v4204
        %v4439 = vunpack.c.h.b16 %v4204
        %v4440 = vunpack.c.l.b16 %v4205
        %v4441 = vunpack.c.h.b16 %v4205
        %v4442 = vunpack.c.l.b16 %v4206
        %v4443 = vunpack.c.h.b16 %v4206
        %v4444 = vunpack.c.l.b16 %v4207
        %v4445 = vunpack.c.h.b16 %v4207
        %v4446 = vunpack.c.l.b16 %v4208
        %v4447 = vunpack.c.h.b16 %v4208
        %v4448 = vunpack.c.l.b16 %v4209
        %v4449 = vunpack.c.h.b16 %v4209
        %v4450 = vunpack.c.l.b16 %v4210
        %v4451 = vunpack.c.h.b16 %v4210
        %v4452 = vunpack.c.l.b16 %v4211
        %v4453 = vunpack.c.h.b16 %v4211
        %v4454 = vunpack.c.l.b16 %v4212
        %v4455 = vunpack.c.h.b16 %v4212
        %v4456 = vunpack.c.l.b16 %v4213
        %v4457 = vunpack.c.h.b16 %v4213
        %v4458 = vunpack.c.l.b16 %v4214
        %v4459 = vunpack.c.h.b16 %v4214
        %v4460 = vunpack.c.l.b16 %v4215
        %v4461 = vunpack.c.h.b16 %v4215
        %v4462 = vunpack.c.l.b16 %v4216
        %v4463 = vunpack.c.h.b16 %v4216
        %v4464 = vunpack.c.l.b16 %v4217
        %v4465 = vunpack.c.h.b16 %v4217
        %v4466 = vunpack.c.l.b16 %v4218
        %v4467 = vunpack.c.h.b16 %v4218
        %v4468 = vunpack.c.l.b16 %v4219
        %v4469 = vunpack.c.h.b16 %v4219
        %v4470 = vunpack.c.l.b16 %v4220
        %v4471 = vunpack.c.h.b16 %v4220
        %v4472 = vunpack.c.l.b16 %v4221
        %v4473 = vunpack.c.h.b16 %v4221
        %v4474 = vunpack.c.l.b16 %v4222
        %v4475 = vunpack.c.h.b16 %v4222
        %v4476 = vunpack.c.l.b16 %v4223
        %v4477 = vunpack.c.h.b16 %v4223
        %v4478 = vunpack.c.l.b16 %v4224
        %v4479 = vunpack.c.h.b16 %v4224
        %v4480 = vpack.c.b16 %v4312, %v4310
        %v4481 = vpack.c.b16 %v4313, %v4311
        %v4482 = vpack.c.b16 %v4316, %v4314
        %v4483 = vpack.c.b16 %v4317, %v4315
        %v4484 = vpack.c.b16 %v4320, %v4318
        %v4485 = vpack.c.b16 %v4321, %v4319
        %v4486 = vpack.c.b16 %v4324, %v4322
        %v4487 = vpack.c.b16 %v4325, %v4323
        %v4488 = vpack.c.b16 %v4328, %v4326
        %v4489 = vpack.c.b16 %v4329, %v4327
        %v4490 = vpack.c.b16 %v4332, %v4330
        %v4491 = vpack.c.b16 %v4333, %v4331
        %v4492 = vpack.c.b16 %v4336, %v4334
        %v4493 = vpack.c.b16 %v4337, %v4335
        %v4494 = vpack.c.b16 %v4340, %v4338
        %v4495 = vpack.c.b16 %v4341, %v4339
        %v4496 = vpack.c.b16 %v4344, %v4342
        %v4497 = vpack.c.b16 %v4345, %v4343
        %v4498 = vpack.c.b16 %v4348, %v4346
        %v4499 = vpack.c.b16 %v4349, %v4347
        %v4500 = vpack.c.b16 %v4352, %v4350
        %v4501 = vpack.c.b16 %v4353, %v4351
        %v4502 = vpack.c.b16 %v4356, %v4354
        %v4503 = vpack.c.b16 %v4357, %v4355
        %v4504 = vpack.c.b16 %v4360, %v4358
        %v4505 = vpack.c.b16 %v4361, %v4359
        %v4506 = vpack.c.b16 %v4364, %v4362
        %v4507 = vpack.c.b16 %v4365, %v4363
        %v4508 = vpack.c.b16 %v4368, %v4366
        %v4509 = vpack.c.b16 %v4369, %v4367
        %v4510 = vpack.c.b16 %v4372, %v4370
        %v4511 = vpack.c.b16 %v4373, %v4371
        %v4512 = vpack.c.b16 %v4376, %v4374
        %v4513 = vpack.c.b16 %v4377, %v4375
        %v4514 = vpack.c.b16 %v4380, %v4378
        %v4515 = vpack.c.b16 %v4381, %v4379
        %v4516 = vpack.c.b16 %v4384, %v4382
        %v4517 = vpack.c.b16 %v4385, %v4383
        %v4518 = vpack.c.b16 %v4388, %v4386
        %v4519 = vpack.c.b16 %v4389, %v4387
        %v4520 = vpack.c.b16 %v4392, %v4390
        %v4521 = vpack.c.b16 %v4393, %v4391
        %v4522 = vpack.c.b16 %v4396, %v4394
        %v4523 = vpack.c.b16 %v4397, %v4395
        %v4524 = vpack.c.b16 %v4400, %v4398
        %v4525 = vpack.c.b16 %v4401, %v4399
        %v4526 = vpack.c.b16 %v4404, %v4402
        %v4527 = vpack.c.b16 %v4405, %v4403
        %v4528 = vpack.c.b16 %v4408, %v4406
        %v4529 = vpack.c.b16 %v4409, %v4407
        %v4530 = vpack.c.b16 %v4412, %v4410
        %v4531 = vpack.c.b16 %v4413, %v4411
        %v4532 = vpack.c.b16 %v4416, %v4414
        %v4533 = vpack.c.b16 %v4417, %v4415
        %v4534 = vpack.c.b16 %v4420, %v4418
        %v4535 = vpack.c.b16 %v4421, %v4419
        %v4536 = vpack.c.b16 %v4424, %v4422
        %v4537 = vpack.c.b16 %v4425, %v4423
        %v4538 = vpack.c.b16 %v4428, %v4426
        %v4539 = vpack.c.b16 %v4429, %v4427
        %v4540 = vpack.c.b16 %v4432, %v4430
        %v4541 = vpack.c.b16 %v4433, %v4431
        %v4542 = vpack.c.b16 %v4436, %v4434
        %v4543 = vpack.c.b16 %v4437, %v4435
        %v4544 = vpack.c.b16 %v4440, %v4438
        %v4545 = vpack.c.b16 %v4441, %v4439
        %v4546 = vpack.c.b16 %v4444, %v4442
        %v4547 = vpack.c.b16 %v4445, %v4443
        %v4548 = vpack.c.b16 %v4448, %v4446
        %v4549 = vpack.c.b16 %v4449, %v4447
        %v4550 = vpack.c.b16 %v4452, %v4450
        %v4551 = vpack.c.b16 %v4453, %v4451
        %v4552 = vpack.c.b16 %v4456, %v4454
        %v4553 = vpack.c.b16 %v4457, %v4455
        %v4554 = vpack.c.b16 %v4460, %v4458
        %v4555 = vpack.c.b16 %v4461, %v4459
        %v4556 = vpack.c.b16 %v4464, %v4462
        %v4557 = vpack.c.b16 %v4465, %v4463
        %v4558 = vpack.c.b16 %v4468, %v4466
        %v4559 = vpack.c.b16 %v4469, %v4467
        %v4560 = vpack.c.b16 %v4472, %v4470
        %v4561 = vpack.c.b16 %v4473, %v4471
        %v4562 = vpack.c.b16 %v4476, %v4474
        %v4563 = vpack.c.b16 %v4477, %v4475
        %v4564 = vpack.c.b16 %v4478, %v4478
        %v4565 = vpack.c.b16 %v4479, %v4479
        %v4651 = vsel %vm805, %v4564, 0
        %v4654 = vsel %vm805, %v4565, 0
        %4656 = vmatprep.subr.bf16.mxu0 %v4481
        %4657 = vmatpush1.bf16.msra.mxu0 %v4480
        %4658 = vmatprep.subr.bf16.mxu0 %v4483
        %4659 = vmatpush1.bf16.msra.mxu0 %v4482
        %4660 = vmatprep.subr.bf16.mxu0 %v4485
        %4661 = vmatpush1.bf16.msra.mxu0 %v4484
        %4662 = vmatprep.subr.bf16.mxu0 %v4487
        %4663 = vmatpush1.bf16.msra.mxu0 %v4486
        %4664 = vmatprep.subr.bf16.mxu0 %v4489
        %4665 = vmatpush1.bf16.msra.mxu0 %v4488
        %4666 = vmatprep.subr.bf16.mxu0 %v4491
        %4667 = vmatpush1.bf16.msra.mxu0 %v4490
        %4668 = vmatprep.subr.bf16.mxu0 %v4493
        %4669 = vmatpush1.bf16.msra.mxu0 %v4492
        %4670 = vmatprep.subr.bf16.mxu0 %v4495
        %4671 = vmatpush1.bf16.msra.mxu0 %v4494
        %4672 = vmatprep.subr.bf16.mxu0 %v4497
        %4673 = vmatpush1.bf16.msra.mxu0 %v4496
        %4674 = vmatprep.subr.bf16.mxu0 %v4499
        %4675 = vmatpush1.bf16.msra.mxu0 %v4498
        %4676 = vmatprep.subr.bf16.mxu0 %v4501
        %4677 = vmatpush1.bf16.msra.mxu0 %v4500
        %4678 = vmatprep.subr.bf16.mxu0 %v4503
        %4679 = vmatpush1.bf16.msra.mxu0 %v4502
        %4680 = vmatprep.subr.bf16.mxu0 %v4505
        %4681 = vmatpush1.bf16.msra.mxu0 %v4504
        %4682 = vmatprep.subr.bf16.mxu0 %v4507
        %4683 = vmatpush1.bf16.msra.mxu0 %v4506
        %4684 = vmatprep.subr.bf16.mxu0 %v4509
        %4685 = vmatpush1.bf16.msra.mxu0 %v4508
        %4686 = vmatprep.subr.bf16.mxu0 %v4511
        %4687 = vmatpush1.bf16.msra.mxu0 %v4510
        %4688 = vmatprep.mubr.bf16.mxu0 %v286
        %4689 = vmatmul.mubr.bf16.gmra.mrb[0].mxu0 %v285
        %v4690 = vpop.f32.mrb[0].mxu0
        %v4691 = vadd.f32 0.0, %v4690
        %v4692 = vpop.f32.mrb[0].mxu0
        %v4693 = vadd.f32 0.0, %v4692
        %v4694 = vpop.f32.mrb[0].mxu0
        %v4695 = vpop.f32.mrb[0].mxu0
        %4696 = vdwg.mxu0
        %4697 = vmatprep.subr.bf16.mxu0 %v4513
        %4698 = vmatpush1.bf16.msra.mxu0 %v4512
        %4699 = vmatprep.subr.bf16.mxu0 %v4515
        %4700 = vmatpush1.bf16.msra.mxu0 %v4514
        %4701 = vmatprep.subr.bf16.mxu0 %v4517
        %4702 = vmatpush1.bf16.msra.mxu0 %v4516
        %4703 = vmatprep.subr.bf16.mxu0 %v4519
        %4704 = vmatpush1.bf16.msra.mxu0 %v4518
        %4705 = vmatprep.subr.bf16.mxu0 %v4521
        %4706 = vmatpush1.bf16.msra.mxu0 %v4520
        %4707 = vmatprep.subr.bf16.mxu0 %v4523
        %4708 = vmatpush1.bf16.msra.mxu0 %v4522
        %4709 = vmatprep.subr.bf16.mxu0 %v4525
        %4710 = vmatpush1.bf16.msra.mxu0 %v4524
        %4711 = vmatprep.subr.bf16.mxu0 %v4527
        %4712 = vmatpush1.bf16.msra.mxu0 %v4526
        %4713 = vmatprep.subr.bf16.mxu0 %v4529
        %4714 = vmatpush1.bf16.msra.mxu0 %v4528
        %4715 = vmatprep.subr.bf16.mxu0 %v4531
        %4716 = vmatpush1.bf16.msra.mxu0 %v4530
        %4717 = vmatprep.subr.bf16.mxu0 %v4533
        %4718 = vmatpush1.bf16.msra.mxu0 %v4532
        %4719 = vmatprep.subr.bf16.mxu0 %v4535
        %4720 = vmatpush1.bf16.msra.mxu0 %v4534
        %4721 = vmatprep.subr.bf16.mxu0 %v4537
        %4722 = vmatpush1.bf16.msra.mxu0 %v4536
        %4723 = vmatprep.subr.bf16.mxu0 %v4539
        %4724 = vmatpush1.bf16.msra.mxu0 %v4538
        %4725 = vmatprep.subr.bf16.mxu0 %v4541
        %4726 = vmatpush1.bf16.msra.mxu0 %v4540
        %4727 = vmatprep.subr.bf16.mxu0 %v4543
        %4728 = vmatpush1.bf16.msra.mxu0 %v4542
        %4729 = vmatprep.mubr.bf16.mxu0 %v288
        %4730 = vmatmul.mubr.bf16.gmra.mrb[0].mxu0 %v287
        %v4731 = vpop.f32.mrb[0].mxu0
        %v4732 = vadd.f32 %v4691, %v4731
        %v4733 = vpop.f32.mrb[0].mxu0
        %v4734 = vadd.f32 %v4693, %v4733
        %v4735 = vpop.f32.mrb[0].mxu0
        %v4736 = vpop.f32.mrb[0].mxu0
        %4737 = vdwg.mxu0
        %4738 = vmatprep.subr.bf16.mxu0 %v4545
        %4739 = vmatpush1.bf16.msra.mxu0 %v4544
        %4740 = vmatprep.subr.bf16.mxu0 %v4547
        %4741 = vmatpush1.bf16.msra.mxu0 %v4546
        %4742 = vmatprep.subr.bf16.mxu0 %v4549
        %4743 = vmatpush1.bf16.msra.mxu0 %v4548
        %4744 = vmatprep.subr.bf16.mxu0 %v4551
        %4745 = vmatpush1.bf16.msra.mxu0 %v4550
        %4746 = vmatprep.subr.bf16.mxu0 %v4553
        %4747 = vmatpush1.bf16.msra.mxu0 %v4552
        %4748 = vmatprep.subr.bf16.mxu0 %v4555
        %4749 = vmatpush1.bf16.msra.mxu0 %v4554
        %4750 = vmatprep.subr.bf16.mxu0 %v4557
        %4751 = vmatpush1.bf16.msra.mxu0 %v4556
        %4752 = vmatprep.subr.bf16.mxu0 %v4559
        %4753 = vmatpush1.bf16.msra.mxu0 %v4558
        %4754 = vmatprep.subr.bf16.mxu0 %v4561
        %4755 = vmatpush1.bf16.msra.mxu0 %v4560
        %4756 = vmatprep.subr.bf16.mxu0 %v4563
        %4757 = vmatpush1.bf16.msra.mxu0 %v4562
        %4758 = vmatprep.subr.bf16.mxu0 %v4654
        %4759 = vmatpush1.bf16.msra.mxu0 %v4651
        %4760 = vmatprep.subr.bf16.mxu0 0
        %4761 = vmatpush1.bf16.msra.mxu0 0
        %4762 = vmatprep.subr.bf16.mxu0 0
        %4763 = vmatpush1.bf16.msra.mxu0 0
        %4764 = vmatprep.subr.bf16.mxu0 0
        %4765 = vmatpush1.bf16.msra.mxu0 0
        %4766 = vmatprep.subr.bf16.mxu0 0
        %4767 = vmatpush1.bf16.msra.mxu0 0
        %4768 = vmatprep.subr.bf16.mxu0 0
        %4769 = vmatpush1.bf16.msra.mxu0 0
        %4770 = vmatprep.mubr.bf16.mxu0 %v803
        %4771 = vmatmul.mubr.bf16.gmra.mrb[0].mxu0 %v289
        %v4772 = vpop.f32.mrb[0].mxu0
        %v4773 = vadd.f32 %v4732, %v4772
        %v4774 = vpop.f32.mrb[0].mxu0
        %v4775 = vadd.f32 %v4734, %v4774
        %v4776 = vpop.f32.mrb[0].mxu0
        %v4777 = vpop.f32.mrb[0].mxu0
        %4778 = vdwg.mxu0
        %v4779 = vmax.f32 %v4138, %v4773
        %v4780 = vmax.f32 %v4139, %v4775
        %v4781 = vld [vmem:[#allocation2 + $0x38] sm:$0xff]
        %v4782 = vld [vmem:[#allocation2 + $0x80] sm:$0xff]
        %v4783 = vld [vmem:[#allocation2 + $0xc8] sm:$0xff]
        %v4784 = vld [vmem:[#allocation2 + $0x110] sm:$0xff]
        %v4785 = vld [vmem:[#allocation2 + $0x158] sm:$0xff]
        %v4786 = vld [vmem:[#allocation2 + $0x1a0] sm:$0xff]
        %v4787 = vld [vmem:[#allocation2 + $0x1e8] sm:$0xff]
        %v4788 = vld [vmem:[#allocation2 + $0x230] sm:$0xff]
        %v4789 = vld [vmem:[#allocation2 + $0x278] sm:$0xff]
        %v4790 = vld [vmem:[#allocation2 + $0x2c0] sm:$0xff]
        %v4791 = vld [vmem:[#allocation2 + $0x308] sm:$0xff]
        %v4792 = vld [vmem:[#allocation2 + $0x350] sm:$0xff]
        %v4793 = vld [vmem:[#allocation2 + $0x398] sm:$0xff]
        %v4794 = vld [vmem:[#allocation2 + $0x3e0] sm:$0xff]
        %v4795 = vld [vmem:[#allocation2 + $0x428] sm:$0xff]
        %v4796 = vld [vmem:[#allocation2 + $0x470] sm:$0xff]
        %v4797 = vld [vmem:[#allocation2 + $0x4b8] sm:$0xff]
        %v4798 = vld [vmem:[#allocation2 + $0x500] sm:$0xff]
        %v4799 = vld [vmem:[#allocation2 + $0x548] sm:$0xff]
        %v4800 = vld [vmem:[#allocation2 + $0x590] sm:$0xff]
        %v4801 = vld [vmem:[#allocation2 + $0x5d8] sm:$0xff]
        %v4802 = vld [vmem:[#allocation2 + $0x620] sm:$0xff]
        %v4803 = vld [vmem:[#allocation2 + $0x668] sm:$0xff]
        %v4804 = vld [vmem:[#allocation2 + $0x6b0] sm:$0xff]
        %v4805 = vld [vmem:[#allocation2 + $0x6f8] sm:$0xff]
        %v4806 = vld [vmem:[#allocation2 + $0x740] sm:$0xff]
        %v4807 = vld [vmem:[#allocation2 + $0x788] sm:$0xff]
        %v4808 = vld [vmem:[#allocation2 + $0x7d0] sm:$0xff]
        %v4809 = vld [vmem:[#allocation2 + $0x818] sm:$0xff]
        %v4810 = vld [vmem:[#allocation2 + $0x860] sm:$0xff]
        %v4811 = vld [vmem:[#allocation2 + $0x8a8] sm:$0xff]
        %v4812 = vld [vmem:[#allocation2 + $0x8f0] sm:$0xff]
        %v4813 = vld [vmem:[#allocation2 + $0x938] sm:$0xff]
        %v4814 = vld [vmem:[#allocation2 + $0x980] sm:$0xff]
        %v4815 = vld [vmem:[#allocation2 + $0x9c8] sm:$0xff]
        %v4816 = vld [vmem:[#allocation2 + $0xa10] sm:$0xff]
        %v4817 = vld [vmem:[#allocation2 + $0xa58] sm:$0xff]
        %v4818 = vld [vmem:[#allocation2 + $0xaa0] sm:$0xff]
        %v4819 = vld [vmem:[#allocation2 + $0xae8] sm:$0xff]
        %v4820 = vld [vmem:[#allocation2 + $0xb30] sm:$0xff]
        %v4821 = vld [vmem:[#allocation2 + $0xb78] sm:$0xff]
        %v4822 = vld [vmem:[#allocation2 + $0xbc0] sm:$0xff]
        %v4823 = vld [vmem:[#allocation2 + $0xc08] sm:$0xff]
        %v4824 = vld [vmem:[#allocation2 + $0xc50] sm:$0xff]
        %v4825 = vld [vmem:[#allocation2 + $0xc98] sm:$0xff]
        %v4826 = vld [vmem:[#allocation2 + $0xce0] sm:$0xff]
        %v4827 = vld [vmem:[#allocation2 + $0xd28] sm:$0xff]
        %v4828 = vld [vmem:[#allocation2 + $0xd70] sm:$0xff]
        %v4829 = vld [vmem:[#allocation2 + $0xdb8] sm:$0xff]
        %v4830 = vld [vmem:[#allocation2 + $0xe00] sm:$0xff]
        %v4831 = vld [vmem:[#allocation2 + $0xe48] sm:$0xff]
        %v4832 = vld [vmem:[#allocation2 + $0xe90] sm:$0xff]
        %v4833 = vld [vmem:[#allocation2 + $0xed8] sm:$0xff]
        %v4834 = vld [vmem:[#allocation2 + $0xf20] sm:$0xff]
        %v4835 = vld [vmem:[#allocation2 + $0xf68] sm:$0xff]
        %v4836 = vld [vmem:[#allocation2 + $0xfb0] sm:$0xff]
        %v4837 = vld [vmem:[#allocation2 + $0xff8] sm:$0xff]
        %v4838 = vld [vmem:[#allocation2 + $0x1040] sm:$0xff]
        %v4839 = vld [vmem:[#allocation2 + $0x1088] sm:$0xff]
        %v4840 = vld [vmem:[#allocation2 + $0x10d0] sm:$0xff]
        %v4841 = vld [vmem:[#allocation2 + $0x1118] sm:$0xff]
        %v4842 = vld [vmem:[#allocation2 + $0x1160] sm:$0xff]
        %v4843 = vld [vmem:[#allocation2 + $0x11a8] sm:$0xff]
        %v4844 = vld [vmem:[#allocation2 + $0x11f0] sm:$0xff]
        %v4845 = vld [vmem:[#allocation2 + $0x1238] sm:$0xff]
        %v4846 = vld [vmem:[#allocation2 + $0x1280] sm:$0xff]
        %v4847 = vld [vmem:[#allocation2 + $0x12c8] sm:$0xff]
        %v4848 = vld [vmem:[#allocation2 + $0x1310] sm:$0xff]
        %v4849 = vld [vmem:[#allocation2 + $0x1358] sm:$0xff]
        %v4850 = vld [vmem:[#allocation2 + $0x13a0] sm:$0xff]
        %v4851 = vld [vmem:[#allocation2 + $0x13e8] sm:$0xff]
        %v4852 = vld [vmem:[#allocation2 + $0x1430] sm:$0xff]
        %v4853 = vld [vmem:[#allocation2 + $0x1478] sm:$0xff]
        %v4854 = vld [vmem:[#allocation2 + $0x14c0] sm:$0xff]
        %v4855 = vld [vmem:[#allocation2 + $0x1508] sm:$0xff]
        %v4856 = vld [vmem:[#allocation2 + $0x1550] sm:$0xff]
        %v4857 = vld [vmem:[#allocation2 + $0x1598] sm:$0xff]
        %v4858 = vld [vmem:[#allocation2 + $0x15e0] sm:$0xff]
        %v4859 = vld [vmem:[#allocation2 + $0x1628] sm:$0xff]
        %v4860 = vld [vmem:[#allocation2 + $0x1670] sm:$0xff]
        %v4861 = vld [vmem:[#allocation2 + $0x16b8] sm:$0xff]
        %v4862 = vld [vmem:[#allocation2 + $0x1700] sm:$0xff]
        %v4863 = vld [vmem:[#allocation2 + $0x1748] sm:$0xff]
        %v4864 = vld [vmem:[#allocation2 + $0x1790] sm:$0xff]
        %v4865 = vld [vmem:[#allocation2 + $0x17d8] sm:$0x33]
        %v4951 = vunpack.c.l.b16 %v4781
        %v4952 = vunpack.c.h.b16 %v4781
        %v4953 = vunpack.c.l.b16 %v4782
        %v4954 = vunpack.c.h.b16 %v4782
        %v4955 = vunpack.c.l.b16 %v4783
        %v4956 = vunpack.c.h.b16 %v4783
        %v4957 = vunpack.c.l.b16 %v4784
        %v4958 = vunpack.c.h.b16 %v4784
        %v4959 = vunpack.c.l.b16 %v4785
        %v4960 = vunpack.c.h.b16 %v4785
        %v4961 = vunpack.c.l.b16 %v4786
        %v4962 = vunpack.c.h.b16 %v4786
        %v4963 = vunpack.c.l.b16 %v4787
        %v4964 = vunpack.c.h.b16 %v4787
        %v4965 = vunpack.c.l.b16 %v4788
        %v4966 = vunpack.c.h.b16 %v4788
        %v4967 = vunpack.c.l.b16 %v4789
        %v4968 = vunpack.c.h.b16 %v4789
        %v4969 = vunpack.c.l.b16 %v4790
        %v4970 = vunpack.c.h.b16 %v4790
        %v4971 = vunpack.c.l.b16 %v4791
        %v4972 = vunpack.c.h.b16 %v4791
        %v4973 = vunpack.c.l.b16 %v4792
        %v4974 = vunpack.c.h.b16 %v4792
        %v4975 = vunpack.c.l.b16 %v4793
        %v4976 = vunpack.c.h.b16 %v4793
        %v4977 = vunpack.c.l.b16 %v4794
        %v4978 = vunpack.c.h.b16 %v4794
        %v4979 = vunpack.c.l.b16 %v4795
        %v4980 = vunpack.c.h.b16 %v4795
        %v4981 = vunpack.c.l.b16 %v4796
        %v4982 = vunpack.c.h.b16 %v4796
        %v4983 = vunpack.c.l.b16 %v4797
        %v4984 = vunpack.c.h.b16 %v4797
        %v4985 = vunpack.c.l.b16 %v4798
        %v4986 = vunpack.c.h.b16 %v4798
        %v4987 = vunpack.c.l.b16 %v4799
        %v4988 = vunpack.c.h.b16 %v4799
        %v4989 = vunpack.c.l.b16 %v4800
        %v4990 = vunpack.c.h.b16 %v4800
        %v4991 = vunpack.c.l.b16 %v4801
        %v4992 = vunpack.c.h.b16 %v4801
        %v4993 = vunpack.c.l.b16 %v4802
        %v4994 = vunpack.c.h.b16 %v4802
        %v4995 = vunpack.c.l.b16 %v4803
        %v4996 = vunpack.c.h.b16 %v4803
        %v4997 = vunpack.c.l.b16 %v4804
        %v4998 = vunpack.c.h.b16 %v4804
        %v4999 = vunpack.c.l.b16 %v4805
        %v5000 = vunpack.c.h.b16 %v4805
        %v5001 = vunpack.c.l.b16 %v4806
        %v5002 = vunpack.c.h.b16 %v4806
        %v5003 = vunpack.c.l.b16 %v4807
        %v5004 = vunpack.c.h.b16 %v4807
        %v5005 = vunpack.c.l.b16 %v4808
        %v5006 = vunpack.c.h.b16 %v4808
        %v5007 = vunpack.c.l.b16 %v4809
        %v5008 = vunpack.c.h.b16 %v4809
        %v5009 = vunpack.c.l.b16 %v4810
        %v5010 = vunpack.c.h.b16 %v4810
        %v5011 = vunpack.c.l.b16 %v4811
        %v5012 = vunpack.c.h.b16 %v4811
        %v5013 = vunpack.c.l.b16 %v4812
        %v5014 = vunpack.c.h.b16 %v4812
        %v5015 = vunpack.c.l.b16 %v4813
        %v5016 = vunpack.c.h.b16 %v4813
        %v5017 = vunpack.c.l.b16 %v4814
        %v5018 = vunpack.c.h.b16 %v4814
        %v5019 = vunpack.c.l.b16 %v4815
        %v5020 = vunpack.c.h.b16 %v4815
        %v5021 = vunpack.c.l.b16 %v4816
        %v5022 = vunpack.c.h.b16 %v4816
        %v5023 = vunpack.c.l.b16 %v4817
        %v5024 = vunpack.c.h.b16 %v4817
        %v5025 = vunpack.c.l.b16 %v4818
        %v5026 = vunpack.c.h.b16 %v4818
        %v5027 = vunpack.c.l.b16 %v4819
        %v5028 = vunpack.c.h.b16 %v4819
        %v5029 = vunpack.c.l.b16 %v4820
        %v5030 = vunpack.c.h.b16 %v4820
        %v5031 = vunpack.c.l.b16 %v4821
        %v5032 = vunpack.c.h.b16 %v4821
        %v5033 = vunpack.c.l.b16 %v4822
        %v5034 = vunpack.c.h.b16 %v4822
        %v5035 = vunpack.c.l.b16 %v4823
        %v5036 = vunpack.c.h.b16 %v4823
        %v5037 = vunpack.c.l.b16 %v4824
        %v5038 = vunpack.c.h.b16 %v4824
        %v5039 = vunpack.c.l.b16 %v4825
        %v5040 = vunpack.c.h.b16 %v4825
        %v5041 = vunpack.c.l.b16 %v4826
        %v5042 = vunpack.c.h.b16 %v4826
        %v5043 = vunpack.c.l.b16 %v4827
        %v5044 = vunpack.c.h.b16 %v4827
        %v5045 = vunpack.c.l.b16 %v4828
        %v5046 = vunpack.c.h.b16 %v4828
        %v5047 = vunpack.c.l.b16 %v4829
        %v5048 = vunpack.c.h.b16 %v4829
        %v5049 = vunpack.c.l.b16 %v4830
        %v5050 = vunpack.c.h.b16 %v4830
        %v5051 = vunpack.c.l.b16 %v4831
        %v5052 = vunpack.c.h.b16 %v4831
        %v5053 = vunpack.c.l.b16 %v4832
        %v5054 = vunpack.c.h.b16 %v4832
        %v5055 = vunpack.c.l.b16 %v4833
        %v5056 = vunpack.c.h.b16 %v4833
        %v5057 = vunpack.c.l.b16 %v4834
        %v5058 = vunpack.c.h.b16 %v4834
        %v5059 = vunpack.c.l.b16 %v4835
        %v5060 = vunpack.c.h.b16 %v4835
        %v5061 = vunpack.c.l.b16 %v4836
        %v5062 = vunpack.c.h.b16 %v4836
        %v5063 = vunpack.c.l.b16 %v4837
        %v5064 = vunpack.c.h.b16 %v4837
        %v5065 = vunpack.c.l.b16 %v4838
        %v5066 = vunpack.c.h.b16 %v4838
        %v5067 = vunpack.c.l.b16 %v4839
        %v5068 = vunpack.c.h.b16 %v4839
        %v5069 = vunpack.c.l.b16 %v4840
        %v5070 = vunpack.c.h.b16 %v4840
        %v5071 = vunpack.c.l.b16 %v4841
        %v5072 = vunpack.c.h.b16 %v4841
        %v5073 = vunpack.c.l.b16 %v4842
        %v5074 = vunpack.c.h.b16 %v4842
        %v5075 = vunpack.c.l.b16 %v4843
        %v5076 = vunpack.c.h.b16 %v4843
        %v5077 = vunpack.c.l.b16 %v4844
        %v5078 = vunpack.c.h.b16 %v4844
        %v5079 = vunpack.c.l.b16 %v4845
        %v5080 = vunpack.c.h.b16 %v4845
        %v5081 = vunpack.c.l.b16 %v4846
        %v5082 = vunpack.c.h.b16 %v4846
        %v5083 = vunpack.c.l.b16 %v4847
        %v5084 = vunpack.c.h.b16 %v4847
        %v5085 = vunpack.c.l.b16 %v4848
        %v5086 = vunpack.c.h.b16 %v4848
        %v5087 = vunpack.c.l.b16 %v4849
        %v5088 = vunpack.c.h.b16 %v4849
        %v5089 = vunpack.c.l.b16 %v4850
        %v5090 = vunpack.c.h.b16 %v4850
        %v5091 = vunpack.c.l.b16 %v4851
        %v5092 = vunpack.c.h.b16 %v4851
        %v5093 = vunpack.c.l.b16 %v4852
        %v5094 = vunpack.c.h.b16 %v4852
        %v5095 = vunpack.c.l.b16 %v4853
        %v5096 = vunpack.c.h.b16 %v4853
        %v5097 = vunpack.c.l.b16 %v4854
        %v5098 = vunpack.c.h.b16 %v4854
        %v5099 = vunpack.c.l.b16 %v4855
        %v5100 = vunpack.c.h.b16 %v4855
        %v5101 = vunpack.c.l.b16 %v4856
        %v5102 = vunpack.c.h.b16 %v4856
        %v5103 = vunpack.c.l.b16 %v4857
        %v5104 = vunpack.c.h.b16 %v4857
        %v5105 = vunpack.c.l.b16 %v4858
        %v5106 = vunpack.c.h.b16 %v4858
        %v5107 = vunpack.c.l.b16 %v4859
        %v5108 = vunpack.c.h.b16 %v4859
        %v5109 = vunpack.c.l.b16 %v4860
        %v5110 = vunpack.c.h.b16 %v4860
        %v5111 = vunpack.c.l.b16 %v4861
        %v5112 = vunpack.c.h.b16 %v4861
        %v5113 = vunpack.c.l.b16 %v4862
        %v5114 = vunpack.c.h.b16 %v4862
        %v5115 = vunpack.c.l.b16 %v4863
        %v5116 = vunpack.c.h.b16 %v4863
        %v5117 = vunpack.c.l.b16 %v4864
        %v5118 = vunpack.c.h.b16 %v4864
        %v5119 = vunpack.c.l.b16 %v4865
        %v5120 = vunpack.c.h.b16 %v4865
        %v5121 = vpack.c.b16 %v4953, %v4951
        %v5122 = vpack.c.b16 %v4954, %v4952
        %v5123 = vpack.c.b16 %v4957, %v4955
        %v5124 = vpack.c.b16 %v4958, %v4956
        %v5125 = vpack.c.b16 %v4961, %v4959
        %v5126 = vpack.c.b16 %v4962, %v4960
        %v5127 = vpack.c.b16 %v4965, %v4963
        %v5128 = vpack.c.b16 %v4966, %v4964
        %v5129 = vpack.c.b16 %v4969, %v4967
        %v5130 = vpack.c.b16 %v4970, %v4968
        %v5131 = vpack.c.b16 %v4973, %v4971
        %v5132 = vpack.c.b16 %v4974, %v4972
        %v5133 = vpack.c.b16 %v4977, %v4975
        %v5134 = vpack.c.b16 %v4978, %v4976
        %v5135 = vpack.c.b16 %v4981, %v4979
        %v5136 = vpack.c.b16 %v4982, %v4980
        %v5137 = vpack.c.b16 %v4985, %v4983
        %v5138 = vpack.c.b16 %v4986, %v4984
        %v5139 = vpack.c.b16 %v4989, %v4987
        %v5140 = vpack.c.b16 %v4990, %v4988
        %v5141 = vpack.c.b16 %v4993, %v4991
        %v5142 = vpack.c.b16 %v4994, %v4992
        %v5143 = vpack.c.b16 %v4997, %v4995
        %v5144 = vpack.c.b16 %v4998, %v4996
        %v5145 = vpack.c.b16 %v5001, %v4999
        %v5146 = vpack.c.b16 %v5002, %v5000
        %v5147 = vpack.c.b16 %v5005, %v5003
        %v5148 = vpack.c.b16 %v5006, %v5004
        %v5149 = vpack.c.b16 %v5009, %v5007
        %v5150 = vpack.c.b16 %v5010, %v5008
        %v5151 = vpack.c.b16 %v5013, %v5011
        %v5152 = vpack.c.b16 %v5014, %v5012
        %v5153 = vpack.c.b16 %v5017, %v5015
        %v5154 = vpack.c.b16 %v5018, %v5016
        %v5155 = vpack.c.b16 %v5021, %v5019
        %v5156 = vpack.c.b16 %v5022, %v5020
        %v5157 = vpack.c.b16 %v5025, %v5023
        %v5158 = vpack.c.b16 %v5026, %v5024
        %v5159 = vpack.c.b16 %v5029, %v5027
        %v5160 = vpack.c.b16 %v5030, %v5028
        %v5161 = vpack.c.b16 %v5033, %v5031
        %v5162 = vpack.c.b16 %v5034, %v5032
        %v5163 = vpack.c.b16 %v5037, %v5035
        %v5164 = vpack.c.b16 %v5038, %v5036
        %v5165 = vpack.c.b16 %v5041, %v5039
        %v5166 = vpack.c.b16 %v5042, %v5040
        %v5167 = vpack.c.b16 %v5045, %v5043
        %v5168 = vpack.c.b16 %v5046, %v5044
        %v5169 = vpack.c.b16 %v5049, %v5047
        %v5170 = vpack.c.b16 %v5050, %v5048
        %v5171 = vpack.c.b16 %v5053, %v5051
        %v5172 = vpack.c.b16 %v5054, %v5052
        %v5173 = vpack.c.b16 %v5057, %v5055
        %v5174 = vpack.c.b16 %v5058, %v5056
        %v5175 = vpack.c.b16 %v5061, %v5059
        %v5176 = vpack.c.b16 %v5062, %v5060
        %v5177 = vpack.c.b16 %v5065, %v5063
        %v5178 = vpack.c.b16 %v5066, %v5064
        %v5179 = vpack.c.b16 %v5069, %v5067
        %v5180 = vpack.c.b16 %v5070, %v5068
        %v5181 = vpack.c.b16 %v5073, %v5071
        %v5182 = vpack.c.b16 %v5074, %v5072
        %v5183 = vpack.c.b16 %v5077, %v5075
        %v5184 = vpack.c.b16 %v5078, %v5076
        %v5185 = vpack.c.b16 %v5081, %v5079
        %v5186 = vpack.c.b16 %v5082, %v5080
        %v5187 = vpack.c.b16 %v5085, %v5083
        %v5188 = vpack.c.b16 %v5086, %v5084
        %v5189 = vpack.c.b16 %v5089, %v5087
        %v5190 = vpack.c.b16 %v5090, %v5088
        %v5191 = vpack.c.b16 %v5093, %v5091
        %v5192 = vpack.c.b16 %v5094, %v5092
        %v5193 = vpack.c.b16 %v5097, %v5095
        %v5194 = vpack.c.b16 %v5098, %v5096
        %v5195 = vpack.c.b16 %v5101, %v5099
        %v5196 = vpack.c.b16 %v5102, %v5100
        %v5197 = vpack.c.b16 %v5105, %v5103
        %v5198 = vpack.c.b16 %v5106, %v5104
        %v5199 = vpack.c.b16 %v5109, %v5107
        %v5200 = vpack.c.b16 %v5110, %v5108
        %v5201 = vpack.c.b16 %v5113, %v5111
        %v5202 = vpack.c.b16 %v5114, %v5112
        %v5203 = vpack.c.b16 %v5117, %v5115
        %v5204 = vpack.c.b16 %v5118, %v5116
        %v5205 = vpack.c.b16 %v5119, %v5119
        %v5206 = vpack.c.b16 %v5120, %v5120
        %v5292 = vsel %vm805, %v5205, 0
        %v5295 = vsel %vm805, %v5206, 0
        %5297 = vmatprep.subr.bf16.mxu0 %v5122
        %5298 = vmatpush1.bf16.msra.mxu0 %v5121
        %5299 = vmatprep.subr.bf16.mxu0 %v5124
        %5300 = vmatpush1.bf16.msra.mxu0 %v5123
        %5301 = vmatprep.subr.bf16.mxu0 %v5126
        %5302 = vmatpush1.bf16.msra.mxu0 %v5125
        %5303 = vmatprep.subr.bf16.mxu0 %v5128
        %5304 = vmatpush1.bf16.msra.mxu0 %v5127
        %5305 = vmatprep.subr.bf16.mxu0 %v5130
        %5306 = vmatpush1.bf16.msra.mxu0 %v5129
        %5307 = vmatprep.subr.bf16.mxu0 %v5132
        %5308 = vmatpush1.bf16.msra.mxu0 %v5131
        %5309 = vmatprep.subr.bf16.mxu0 %v5134
        %5310 = vmatpush1.bf16.msra.mxu0 %v5133
        %5311 = vmatprep.subr.bf16.mxu0 %v5136
        %5312 = vmatpush1.bf16.msra.mxu0 %v5135
        %5313 = vmatprep.subr.bf16.mxu0 %v5138
        %5314 = vmatpush1.bf16.msra.mxu0 %v5137
        %5315 = vmatprep.subr.bf16.mxu0 %v5140
        %5316 = vmatpush1.bf16.msra.mxu0 %v5139
        %5317 = vmatprep.subr.bf16.mxu0 %v5142
        %5318 = vmatpush1.bf16.msra.mxu0 %v5141
        %5319 = vmatprep.subr.bf16.mxu0 %v5144
        %5320 = vmatpush1.bf16.msra.mxu0 %v5143
        %5321 = vmatprep.subr.bf16.mxu0 %v5146
        %5322 = vmatpush1.bf16.msra.mxu0 %v5145
        %5323 = vmatprep.subr.bf16.mxu0 %v5148
        %5324 = vmatpush1.bf16.msra.mxu0 %v5147
        %5325 = vmatprep.subr.bf16.mxu0 %v5150
        %5326 = vmatpush1.bf16.msra.mxu0 %v5149
        %5327 = vmatprep.subr.bf16.mxu0 %v5152
        %5328 = vmatpush1.bf16.msra.mxu0 %v5151
        %5329 = vmatprep.mubr.bf16.mxu0 %v286
        %5330 = vmatmul.mubr.bf16.gmra.mrb[0].mxu0 %v285
        %v5331 = vpop.f32.mrb[0].mxu0
        %v5332 = vadd.f32 0.0, %v5331
        %v5333 = vpop.f32.mrb[0].mxu0
        %v5334 = vadd.f32 0.0, %v5333
        %v5335 = vpop.f32.mrb[0].mxu0
        %v5336 = vpop.f32.mrb[0].mxu0
        %5337 = vdwg.mxu0
        %5338 = vmatprep.subr.bf16.mxu0 %v5154
        %5339 = vmatpush1.bf16.msra.mxu0 %v5153
        %5340 = vmatprep.subr.bf16.mxu0 %v5156
        %5341 = vmatpush1.bf16.msra.mxu0 %v5155
        %5342 = vmatprep.subr.bf16.mxu0 %v5158
        %5343 = vmatpush1.bf16.msra.mxu0 %v5157
        %5344 = vmatprep.subr.bf16.mxu0 %v5160
        %5345 = vmatpush1.bf16.msra.mxu0 %v5159
        %5346 = vmatprep.subr.bf16.mxu0 %v5162
        %5347 = vmatpush1.bf16.msra.mxu0 %v5161
        %5348 = vmatprep.subr.bf16.mxu0 %v5164
        %5349 = vmatpush1.bf16.msra.mxu0 %v5163
        %5350 = vmatprep.subr.bf16.mxu0 %v5166
        %5351 = vmatpush1.bf16.msra.mxu0 %v5165
        %5352 = vmatprep.subr.bf16.mxu0 %v5168
        %5353 = vmatpush1.bf16.msra.mxu0 %v5167
        %5354 = vmatprep.subr.bf16.mxu0 %v5170
        %5355 = vmatpush1.bf16.msra.mxu0 %v5169
        %5356 = vmatprep.subr.bf16.mxu0 %v5172
        %5357 = vmatpush1.bf16.msra.mxu0 %v5171
        %5358 = vmatprep.subr.bf16.mxu0 %v5174
        %5359 = vmatpush1.bf16.msra.mxu0 %v5173
        %5360 = vmatprep.subr.bf16.mxu0 %v5176
        %5361 = vmatpush1.bf16.msra.mxu0 %v5175
        %5362 = vmatprep.subr.bf16.mxu0 %v5178
        %5363 = vmatpush1.bf16.msra.mxu0 %v5177
        %5364 = vmatprep.subr.bf16.mxu0 %v5180
        %5365 = vmatpush1.bf16.msra.mxu0 %v5179
        %5366 = vmatprep.subr.bf16.mxu0 %v5182
        %5367 = vmatpush1.bf16.msra.mxu0 %v5181
        %5368 = vmatprep.subr.bf16.mxu0 %v5184
        %5369 = vmatpush1.bf16.msra.mxu0 %v5183
        %5370 = vmatprep.mubr.bf16.mxu0 %v288
        %5371 = vmatmul.mubr.bf16.gmra.mrb[0].mxu0 %v287
        %v5372 = vpop.f32.mrb[0].mxu0
        %v5373 = vadd.f32 %v5332, %v5372
        %v5374 = vpop.f32.mrb[0].mxu0
        %v5375 = vadd.f32 %v5334, %v5374
        %v5376 = vpop.f32.mrb[0].mxu0
        %v5377 = vpop.f32.mrb[0].mxu0
        %5378 = vdwg.mxu0
        %5379 = vmatprep.subr.bf16.mxu0 %v5186
        %5380 = vmatpush1.bf16.msra.mxu0 %v5185
        %5381 = vmatprep.subr.bf16.mxu0 %v5188
        %5382 = vmatpush1.bf16.msra.mxu0 %v5187
        %5383 = vmatprep.subr.bf16.mxu0 %v5190
        %5384 = vmatpush1.bf16.msra.mxu0 %v5189
        %5385 = vmatprep.subr.bf16.mxu0 %v5192
        %5386 = vmatpush1.bf16.msra.mxu0 %v5191
        %5387 = vmatprep.subr.bf16.mxu0 %v5194
        %5388 = vmatpush1.bf16.msra.mxu0 %v5193
        %5389 = vmatprep.subr.bf16.mxu0 %v5196
        %5390 = vmatpush1.bf16.msra.mxu0 %v5195
        %5391 = vmatprep.subr.bf16.mxu0 %v5198
        %5392 = vmatpush1.bf16.msra.mxu0 %v5197
        %5393 = vmatprep.subr.bf16.mxu0 %v5200
        %5394 = vmatpush1.bf16.msra.mxu0 %v5199
        %5395 = vmatprep.subr.bf16.mxu0 %v5202
        %5396 = vmatpush1.bf16.msra.mxu0 %v5201
        %5397 = vmatprep.subr.bf16.mxu0 %v5204
        %5398 = vmatpush1.bf16.msra.mxu0 %v5203
        %5399 = vmatprep.subr.bf16.mxu0 %v5295
        %5400 = vmatpush1.bf16.msra.mxu0 %v5292
        %5401 = vmatprep.subr.bf16.mxu0 0
        %5402 = vmatpush1.bf16.msra.mxu0 0
        %5403 = vmatprep.subr.bf16.mxu0 0
        %5404 = vmatpush1.bf16.msra.mxu0 0
        %5405 = vmatprep.subr.bf16.mxu0 0
        %5406 = vmatpush1.bf16.msra.mxu0 0
        %5407 = vmatprep.subr.bf16.mxu0 0
        %5408 = vmatpush1.bf16.msra.mxu0 0
        %5409 = vmatprep.subr.bf16.mxu0 0
        %5410 = vmatpush1.bf16.msra.mxu0 0
        %5411 = vmatprep.mubr.bf16.mxu0 %v803
        %5412 = vmatmul.mubr.bf16.gmra.mrb[0].mxu0 %v289
        %v5413 = vpop.f32.mrb[0].mxu0
        %v5414 = vadd.f32 %v5373, %v5413
        %v5415 = vpop.f32.mrb[0].mxu0
        %v5416 = vadd.f32 %v5375, %v5415
        %v5417 = vpop.f32.mrb[0].mxu0
        %v5418 = vpop.f32.mrb[0].mxu0
        %5419 = vdwg.mxu0
        %v5420 = vmax.f32 %v4779, %v5414
        %v5421 = vmax.f32 %v4780, %v5416
        %v5422 = vld [vmem:[#allocation2 + $0x40] sm:$0xff]
        %v5423 = vld [vmem:[#allocation2 + $0x88] sm:$0xff]
        %v5424 = vld [vmem:[#allocation2 + $0xd0] sm:$0xff]
        %v5425 = vld [vmem:[#allocation2 + $0x118] sm:$0xff]
        %v5426 = vld [vmem:[#allocation2 + $0x160] sm:$0xff]
        %v5427 = vld [vmem:[#allocation2 + $0x1a8] sm:$0xff]
        %v5428 = vld [vmem:[#allocation2 + $0x1f0] sm:$0xff]
        %v5429 = vld [vmem:[#allocation2 + $0x238] sm:$0xff]
        %v5430 = vld [vmem:[#allocation2 + $0x280] sm:$0xff]
        %v5431 = vld [vmem:[#allocation2 + $0x2c8] sm:$0xff]
        %v5432 = vld [vmem:[#allocation2 + $0x310] sm:$0xff]
        %v5433 = vld [vmem:[#allocation2 + $0x358] sm:$0xff]
        %v5434 = vld [vmem:[#allocation2 + $0x3a0] sm:$0xff]
        %v5435 = vld [vmem:[#allocation2 + $0x3e8] sm:$0xff]
        %v5436 = vld [vmem:[#allocation2 + $0x430] sm:$0xff]
        %v5437 = vld [vmem:[#allocation2 + $0x478] sm:$0xff]
        %v5438 = vld [vmem:[#allocation2 + $0x4c0] sm:$0xff]
        %v5439 = vld [vmem:[#allocation2 + $0x508] sm:$0xff]
        %v5440 = vld [vmem:[#allocation2 + $0x550] sm:$0xff]
        %v5441 = vld [vmem:[#allocation2 + $0x598] sm:$0xff]
        %v5442 = vld [vmem:[#allocation2 + $0x5e0] sm:$0xff]
        %v5443 = vld [vmem:[#allocation2 + $0x628] sm:$0xff]
        %v5444 = vld [vmem:[#allocation2 + $0x670] sm:$0xff]
        %v5445 = vld [vmem:[#allocation2 + $0x6b8] sm:$0xff]
        %v5446 = vld [vmem:[#allocation2 + $0x700] sm:$0xff]
        %v5447 = vld [vmem:[#allocation2 + $0x748] sm:$0xff]
        %v5448 = vld [vmem:[#allocation2 + $0x790] sm:$0xff]
        %v5449 = vld [vmem:[#allocation2 + $0x7d8] sm:$0xff]
        %v5450 = vld [vmem:[#allocation2 + $0x820] sm:$0xff]
        %v5451 = vld [vmem:[#allocation2 + $0x868] sm:$0xff]
        %v5452 = vld [vmem:[#allocation2 + $0x8b0] sm:$0xff]
        %v5453 = vld [vmem:[#allocation2 + $0x8f8] sm:$0xff]
        %v5454 = vld [vmem:[#allocation2 + $0x940] sm:$0xff]
        %v5455 = vld [vmem:[#allocation2 + $0x988] sm:$0xff]
        %v5456 = vld [vmem:[#allocation2 + $0x9d0] sm:$0xff]
        %v5457 = vld [vmem:[#allocation2 + $0xa18] sm:$0xff]
        %v5458 = vld [vmem:[#allocation2 + $0xa60] sm:$0xff]
        %v5459 = vld [vmem:[#allocation2 + $0xaa8] sm:$0xff]
        %v5460 = vld [vmem:[#allocation2 + $0xaf0] sm:$0xff]
        %v5461 = vld [vmem:[#allocation2 + $0xb38] sm:$0xff]
        %v5462 = vld [vmem:[#allocation2 + $0xb80] sm:$0xff]
        %v5463 = vld [vmem:[#allocation2 + $0xbc8] sm:$0xff]
        %v5464 = vld [vmem:[#allocation2 + $0xc10] sm:$0xff]
        %v5465 = vld [vmem:[#allocation2 + $0xc58] sm:$0xff]
        %v5466 = vld [vmem:[#allocation2 + $0xca0] sm:$0xff]
        %v5467 = vld [vmem:[#allocation2 + $0xce8] sm:$0xff]
        %v5468 = vld [vmem:[#allocation2 + $0xd30] sm:$0xff]
        %v5469 = vld [vmem:[#allocation2 + $0xd78] sm:$0xff]
        %v5470 = vld [vmem:[#allocation2 + $0xdc0] sm:$0xff]
        %v5471 = vld [vmem:[#allocation2 + $0xe08] sm:$0xff]
        %v5472 = vld [vmem:[#allocation2 + $0xe50] sm:$0xff]
        %v5473 = vld [vmem:[#allocation2 + $0xe98] sm:$0xff]
        %v5474 = vld [vmem:[#allocation2 + $0xee0] sm:$0xff]
        %v5475 = vld [vmem:[#allocation2 + $0xf28] sm:$0xff]
        %v5476 = vld [vmem:[#allocation2 + $0xf70] sm:$0xff]
        %v5477 = vld [vmem:[#allocation2 + $0xfb8] sm:$0xff]
        %v5478 = vld [vmem:[#allocation2 + $0x1000] sm:$0xff]
        %v5479 = vld [vmem:[#allocation2 + $0x1048] sm:$0xff]
        %v5480 = vld [vmem:[#allocation2 + $0x1090] sm:$0xff]
        %v5481 = vld [vmem:[#allocation2 + $0x10d8] sm:$0xff]
        %v5482 = vld [vmem:[#allocation2 + $0x1120] sm:$0xff]
        %v5483 = vld [vmem:[#allocation2 + $0x1168] sm:$0xff]
        %v5484 = vld [vmem:[#allocation2 + $0x11b0] sm:$0xff]
        %v5485 = vld [vmem:[#allocation2 + $0x11f8] sm:$0xff]
        %v5486 = vld [vmem:[#allocation2 + $0x1240] sm:$0xff]
        %v5487 = vld [vmem:[#allocation2 + $0x1288] sm:$0xff]
        %v5488 = vld [vmem:[#allocation2 + $0x12d0] sm:$0xff]
        %v5489 = vld [vmem:[#allocation2 + $0x1318] sm:$0xff]
        %v5490 = vld [vmem:[#allocation2 + $0x1360] sm:$0xff]
        %v5491 = vld [vmem:[#allocation2 + $0x13a8] sm:$0xff]
        %v5492 = vld [vmem:[#allocation2 + $0x13f0] sm:$0xff]
        %v5493 = vld [vmem:[#allocation2 + $0x1438] sm:$0xff]
        %v5494 = vld [vmem:[#allocation2 + $0x1480] sm:$0xff]
        %v5495 = vld [vmem:[#allocation2 + $0x14c8] sm:$0xff]
        %v5496 = vld [vmem:[#allocation2 + $0x1510] sm:$0xff]
        %v5497 = vld [vmem:[#allocation2 + $0x1558] sm:$0xff]
        %v5498 = vld [vmem:[#allocation2 + $0x15a0] sm:$0xff]
        %v5499 = vld [vmem:[#allocation2 + $0x15e8] sm:$0xff]
        %v5500 = vld [vmem:[#allocation2 + $0x1630] sm:$0xff]
        %v5501 = vld [vmem:[#allocation2 + $0x1678] sm:$0xff]
        %v5502 = vld [vmem:[#allocation2 + $0x16c0] sm:$0xff]
        %v5503 = vld [vmem:[#allocation2 + $0x1708] sm:$0xff]
        %v5504 = vld [vmem:[#allocation2 + $0x1750] sm:$0xff]
        %v5505 = vld [vmem:[#allocation2 + $0x1798] sm:$0xff]
        %v5506 = vld [vmem:[#allocation2 + $0x17e0] sm:$0x33]
        %v5592 = vunpack.c.l.b16 %v5422
        %v5593 = vunpack.c.h.b16 %v5422
        %v5594 = vunpack.c.l.b16 %v5423
        %v5595 = vunpack.c.h.b16 %v5423
        %v5596 = vunpack.c.l.b16 %v5424
        %v5597 = vunpack.c.h.b16 %v5424
        %v5598 = vunpack.c.l.b16 %v5425
        %v5599 = vunpack.c.h.b16 %v5425
        %v5600 = vunpack.c.l.b16 %v5426
        %v5601 = vunpack.c.h.b16 %v5426
        %v5602 = vunpack.c.l.b16 %v5427
        %v5603 = vunpack.c.h.b16 %v5427
        %v5604 = vunpack.c.l.b16 %v5428
        %v5605 = vunpack.c.h.b16 %v5428
        %v5606 = vunpack.c.l.b16 %v5429
        %v5607 = vunpack.c.h.b16 %v5429
        %v5608 = vunpack.c.l.b16 %v5430
        %v5609 = vunpack.c.h.b16 %v5430
        %v5610 = vunpack.c.l.b16 %v5431
        %v5611 = vunpack.c.h.b16 %v5431
        %v5612 = vunpack.c.l.b16 %v5432
        %v5613 = vunpack.c.h.b16 %v5432
        %v5614 = vunpack.c.l.b16 %v5433
        %v5615 = vunpack.c.h.b16 %v5433
        %v5616 = vunpack.c.l.b16 %v5434
        %v5617 = vunpack.c.h.b16 %v5434
        %v5618 = vunpack.c.l.b16 %v5435
        %v5619 = vunpack.c.h.b16 %v5435
        %v5620 = vunpack.c.l.b16 %v5436
        %v5621 = vunpack.c.h.b16 %v5436
        %v5622 = vunpack.c.l.b16 %v5437
        %v5623 = vunpack.c.h.b16 %v5437
        %v5624 = vunpack.c.l.b16 %v5438
        %v5625 = vunpack.c.h.b16 %v5438
        %v5626 = vunpack.c.l.b16 %v5439
        %v5627 = vunpack.c.h.b16 %v5439
        %v5628 = vunpack.c.l.b16 %v5440
        %v5629 = vunpack.c.h.b16 %v5440
        %v5630 = vunpack.c.l.b16 %v5441
        %v5631 = vunpack.c.h.b16 %v5441
        %v5632 = vunpack.c.l.b16 %v5442
        %v5633 = vunpack.c.h.b16 %v5442
        %v5634 = vunpack.c.l.b16 %v5443
        %v5635 = vunpack.c.h.b16 %v5443
        %v5636 = vunpack.c.l.b16 %v5444
        %v5637 = vunpack.c.h.b16 %v5444
        %v5638 = vunpack.c.l.b16 %v5445
        %v5639 = vunpack.c.h.b16 %v5445
        %v5640 = vunpack.c.l.b16 %v5446
        %v5641 = vunpack.c.h.b16 %v5446
        %v5642 = vunpack.c.l.b16 %v5447
        %v5643 = vunpack.c.h.b16 %v5447
        %v5644 = vunpack.c.l.b16 %v5448
        %v5645 = vunpack.c.h.b16 %v5448
        %v5646 = vunpack.c.l.b16 %v5449
        %v5647 = vunpack.c.h.b16 %v5449
        %v5648 = vunpack.c.l.b16 %v5450
        %v5649 = vunpack.c.h.b16 %v5450
        %v5650 = vunpack.c.l.b16 %v5451
        %v5651 = vunpack.c.h.b16 %v5451
        %v5652 = vunpack.c.l.b16 %v5452
        %v5653 = vunpack.c.h.b16 %v5452
        %v5654 = vunpack.c.l.b16 %v5453
        %v5655 = vunpack.c.h.b16 %v5453
        %v5656 = vunpack.c.l.b16 %v5454
        %v5657 = vunpack.c.h.b16 %v5454
        %v5658 = vunpack.c.l.b16 %v5455
        %v5659 = vunpack.c.h.b16 %v5455
        %v5660 = vunpack.c.l.b16 %v5456
        %v5661 = vunpack.c.h.b16 %v5456
        %v5662 = vunpack.c.l.b16 %v5457
        %v5663 = vunpack.c.h.b16 %v5457
        %v5664 = vunpack.c.l.b16 %v5458
        %v5665 = vunpack.c.h.b16 %v5458
        %v5666 = vunpack.c.l.b16 %v5459
        %v5667 = vunpack.c.h.b16 %v5459
        %v5668 = vunpack.c.l.b16 %v5460
        %v5669 = vunpack.c.h.b16 %v5460
        %v5670 = vunpack.c.l.b16 %v5461
        %v5671 = vunpack.c.h.b16 %v5461
        %v5672 = vunpack.c.l.b16 %v5462
        %v5673 = vunpack.c.h.b16 %v5462
        %v5674 = vunpack.c.l.b16 %v5463
        %v5675 = vunpack.c.h.b16 %v5463
        %v5676 = vunpack.c.l.b16 %v5464
        %v5677 = vunpack.c.h.b16 %v5464
        %v5678 = vunpack.c.l.b16 %v5465
        %v5679 = vunpack.c.h.b16 %v5465
        %v5680 = vunpack.c.l.b16 %v5466
        %v5681 = vunpack.c.h.b16 %v5466
        %v5682 = vunpack.c.l.b16 %v5467
        %v5683 = vunpack.c.h.b16 %v5467
        %v5684 = vunpack.c.l.b16 %v5468
        %v5685 = vunpack.c.h.b16 %v5468
        %v5686 = vunpack.c.l.b16 %v5469
        %v5687 = vunpack.c.h.b16 %v5469
        %v5688 = vunpack.c.l.b16 %v5470
        %v5689 = vunpack.c.h.b16 %v5470
        %v5690 = vunpack.c.l.b16 %v5471
        %v5691 = vunpack.c.h.b16 %v5471
        %v5692 = vunpack.c.l.b16 %v5472
        %v5693 = vunpack.c.h.b16 %v5472
        %v5694 = vunpack.c.l.b16 %v5473
        %v5695 = vunpack.c.h.b16 %v5473
        %v5696 = vunpack.c.l.b16 %v5474
        %v5697 = vunpack.c.h.b16 %v5474
        %v5698 = vunpack.c.l.b16 %v5475
        %v5699 = vunpack.c.h.b16 %v5475
        %v5700 = vunpack.c.l.b16 %v5476
        %v5701 = vunpack.c.h.b16 %v5476
        %v5702 = vunpack.c.l.b16 %v5477
        %v5703 = vunpack.c.h.b16 %v5477
        %v5704 = vunpack.c.l.b16 %v5478
        %v5705 = vunpack.c.h.b16 %v5478
        %v5706 = vunpack.c.l.b16 %v5479
        %v5707 = vunpack.c.h.b16 %v5479
        %v5708 = vunpack.c.l.b16 %v5480
        %v5709 = vunpack.c.h.b16 %v5480
        %v5710 = vunpack.c.l.b16 %v5481
        %v5711 = vunpack.c.h.b16 %v5481
        %v5712 = vunpack.c.l.b16 %v5482
        %v5713 = vunpack.c.h.b16 %v5482
        %v5714 = vunpack.c.l.b16 %v5483
        %v5715 = vunpack.c.h.b16 %v5483
        %v5716 = vunpack.c.l.b16 %v5484
        %v5717 = vunpack.c.h.b16 %v5484
        %v5718 = vunpack.c.l.b16 %v5485
        %v5719 = vunpack.c.h.b16 %v5485
        %v5720 = vunpack.c.l.b16 %v5486
        %v5721 = vunpack.c.h.b16 %v5486
        %v5722 = vunpack.c.l.b16 %v5487
        %v5723 = vunpack.c.h.b16 %v5487
        %v5724 = vunpack.c.l.b16 %v5488
        %v5725 = vunpack.c.h.b16 %v5488
        %v5726 = vunpack.c.l.b16 %v5489
        %v5727 = vunpack.c.h.b16 %v5489
        %v5728 = vunpack.c.l.b16 %v5490
        %v5729 = vunpack.c.h.b16 %v5490
        %v5730 = vunpack.c.l.b16 %v5491
        %v5731 = vunpack.c.h.b16 %v5491
        %v5732 = vunpack.c.l.b16 %v5492
        %v5733 = vunpack.c.h.b16 %v5492
        %v5734 = vunpack.c.l.b16 %v5493
        %v5735 = vunpack.c.h.b16 %v5493
        %v5736 = vunpack.c.l.b16 %v5494
        %v5737 = vunpack.c.h.b16 %v5494
        %v5738 = vunpack.c.l.b16 %v5495
        %v5739 = vunpack.c.h.b16 %v5495
        %v5740 = vunpack.c.l.b16 %v5496
        %v5741 = vunpack.c.h.b16 %v5496
        %v5742 = vunpack.c.l.b16 %v5497
        %v5743 = vunpack.c.h.b16 %v5497
        %v5744 = vunpack.c.l.b16 %v5498
        %v5745 = vunpack.c.h.b16 %v5498
        %v5746 = vunpack.c.l.b16 %v5499
        %v5747 = vunpack.c.h.b16 %v5499
        %v5748 = vunpack.c.l.b16 %v5500
        %v5749 = vunpack.c.h.b16 %v5500
        %v5750 = vunpack.c.l.b16 %v5501
        %v5751 = vunpack.c.h.b16 %v5501
        %v5752 = vunpack.c.l.b16 %v5502
        %v5753 = vunpack.c.h.b16 %v5502
        %v5754 = vunpack.c.l.b16 %v5503
        %v5755 = vunpack.c.h.b16 %v5503
        %v5756 = vunpack.c.l.b16 %v5504
        %v5757 = vunpack.c.h.b16 %v5504
        %v5758 = vunpack.c.l.b16 %v5505
        %v5759 = vunpack.c.h.b16 %v5505
        %v5760 = vunpack.c.l.b16 %v5506
        %v5761 = vunpack.c.h.b16 %v5506
        %v5762 = vpack.c.b16 %v5594, %v5592
        %v5763 = vpack.c.b16 %v5595, %v5593
        %v5764 = vpack.c.b16 %v5598, %v5596
        %v5765 = vpack.c.b16 %v5599, %v5597
        %v5766 = vpack.c.b16 %v5602, %v5600
        %v5767 = vpack.c.b16 %v5603, %v5601
        %v5768 = vpack.c.b16 %v5606, %v5604
        %v5769 = vpack.c.b16 %v5607, %v5605
        %v5770 = vpack.c.b16 %v5610, %v5608
        %v5771 = vpack.c.b16 %v5611, %v5609
        %v5772 = vpack.c.b16 %v5614, %v5612
        %v5773 = vpack.c.b16 %v5615, %v5613
        %v5774 = vpack.c.b16 %v5618, %v5616
        %v5775 = vpack.c.b16 %v5619, %v5617
        %v5776 = vpack.c.b16 %v5622, %v5620
        %v5777 = vpack.c.b16 %v5623, %v5621
        %v5778 = vpack.c.b16 %v5626, %v5624
        %v5779 = vpack.c.b16 %v5627, %v5625
        %v5780 = vpack.c.b16 %v5630, %v5628
        %v5781 = vpack.c.b16 %v5631, %v5629
        %v5782 = vpack.c.b16 %v5634, %v5632
        %v5783 = vpack.c.b16 %v5635, %v5633
        %v5784 = vpack.c.b16 %v5638, %v5636
        %v5785 = vpack.c.b16 %v5639, %v5637
        %v5786 = vpack.c.b16 %v5642, %v5640
        %v5787 = vpack.c.b16 %v5643, %v5641
        %v5788 = vpack.c.b16 %v5646, %v5644
        %v5789 = vpack.c.b16 %v5647, %v5645
        %v5790 = vpack.c.b16 %v5650, %v5648
        %v5791 = vpack.c.b16 %v5651, %v5649
        %v5792 = vpack.c.b16 %v5654, %v5652
        %v5793 = vpack.c.b16 %v5655, %v5653
        %v5794 = vpack.c.b16 %v5658, %v5656
        %v5795 = vpack.c.b16 %v5659, %v5657
        %v5796 = vpack.c.b16 %v5662, %v5660
        %v5797 = vpack.c.b16 %v5663, %v5661
        %v5798 = vpack.c.b16 %v5666, %v5664
        %v5799 = vpack.c.b16 %v5667, %v5665
        %v5800 = vpack.c.b16 %v5670, %v5668
        %v5801 = vpack.c.b16 %v5671, %v5669
        %v5802 = vpack.c.b16 %v5674, %v5672
        %v5803 = vpack.c.b16 %v5675, %v5673
        %v5804 = vpack.c.b16 %v5678, %v5676
        %v5805 = vpack.c.b16 %v5679, %v5677
        %v5806 = vpack.c.b16 %v5682, %v5680
        %v5807 = vpack.c.b16 %v5683, %v5681
        %v5808 = vpack.c.b16 %v5686, %v5684
        %v5809 = vpack.c.b16 %v5687, %v5685
        %v5810 = vpack.c.b16 %v5690, %v5688
        %v5811 = vpack.c.b16 %v5691, %v5689
        %v5812 = vpack.c.b16 %v5694, %v5692
        %v5813 = vpack.c.b16 %v5695, %v5693
        %v5814 = vpack.c.b16 %v5698, %v5696
        %v5815 = vpack.c.b16 %v5699, %v5697
        %v5816 = vpack.c.b16 %v5702, %v5700
        %v5817 = vpack.c.b16 %v5703, %v5701
        %v5818 = vpack.c.b16 %v5706, %v5704
        %v5819 = vpack.c.b16 %v5707, %v5705
        %v5820 = vpack.c.b16 %v5710, %v5708
        %v5821 = vpack.c.b16 %v5711, %v5709
        %v5822 = vpack.c.b16 %v5714, %v5712
        %v5823 = vpack.c.b16 %v5715, %v5713
        %v5824 = vpack.c.b16 %v5718, %v5716
        %v5825 = vpack.c.b16 %v5719, %v5717
        %v5826 = vpack.c.b16 %v5722, %v5720
        %v5827 = vpack.c.b16 %v5723, %v5721
        %v5828 = vpack.c.b16 %v5726, %v5724
        %v5829 = vpack.c.b16 %v5727, %v5725
        %v5830 = vpack.c.b16 %v5730, %v5728
        %v5831 = vpack.c.b16 %v5731, %v5729
        %v5832 = vpack.c.b16 %v5734, %v5732
        %v5833 = vpack.c.b16 %v5735, %v5733
        %v5834 = vpack.c.b16 %v5738, %v5736
        %v5835 = vpack.c.b16 %v5739, %v5737
        %v5836 = vpack.c.b16 %v5742, %v5740
        %v5837 = vpack.c.b16 %v5743, %v5741
        %v5838 = vpack.c.b16 %v5746, %v5744
        %v5839 = vpack.c.b16 %v5747, %v5745
        %v5840 = vpack.c.b16 %v5750, %v5748
        %v5841 = vpack.c.b16 %v5751, %v5749
        %v5842 = vpack.c.b16 %v5754, %v5752
        %v5843 = vpack.c.b16 %v5755, %v5753
        %v5844 = vpack.c.b16 %v5758, %v5756
        %v5845 = vpack.c.b16 %v5759, %v5757
        %v5846 = vpack.c.b16 %v5760, %v5760
        %v5847 = vpack.c.b16 %v5761, %v5761
        %v5933 = vsel %vm805, %v5846, 0
        %v5936 = vsel %vm805, %v5847, 0
        %5938 = vmatprep.subr.bf16.mxu0 %v5763
        %5939 = vmatpush1.bf16.msra.mxu0 %v5762
        %5940 = vmatprep.subr.bf16.mxu0 %v5765
        %5941 = vmatpush1.bf16.msra.mxu0 %v5764
        %5942 = vmatprep.subr.bf16.mxu0 %v5767
        %5943 = vmatpush1.bf16.msra.mxu0 %v5766
        %5944 = vmatprep.subr.bf16.mxu0 %v5769
        %5945 = vmatpush1.bf16.msra.mxu0 %v5768
        %5946 = vmatprep.subr.bf16.mxu0 %v5771
        %5947 = vmatpush1.bf16.msra.mxu0 %v5770
        %5948 = vmatprep.subr.bf16.mxu0 %v5773
        %5949 = vmatpush1.bf16.msra.mxu0 %v5772
        %5950 = vmatprep.subr.bf16.mxu0 %v5775
        %5951 = vmatpush1.bf16.msra.mxu0 %v5774
        %5952 = vmatprep.subr.bf16.mxu0 %v5777
        %5953 = vmatpush1.bf16.msra.mxu0 %v5776
        %5954 = vmatprep.subr.bf16.mxu0 %v5779
        %5955 = vmatpush1.bf16.msra.mxu0 %v5778
        %5956 = vmatprep.subr.bf16.mxu0 %v5781
        %5957 = vmatpush1.bf16.msra.mxu0 %v5780
        %5958 = vmatprep.subr.bf16.mxu0 %v5783
        %5959 = vmatpush1.bf16.msra.mxu0 %v5782
        %5960 = vmatprep.subr.bf16.mxu0 %v5785
        %5961 = vmatpush1.bf16.msra.mxu0 %v5784
        %5962 = vmatprep.subr.bf16.mxu0 %v5787
        %5963 = vmatpush1.bf16.msra.mxu0 %v5786
        %5964 = vmatprep.subr.bf16.mxu0 %v5789
        %5965 = vmatpush1.bf16.msra.mxu0 %v5788
        %5966 = vmatprep.subr.bf16.mxu0 %v5791
        %5967 = vmatpush1.bf16.msra.mxu0 %v5790
        %5968 = vmatprep.subr.bf16.mxu0 %v5793
        %5969 = vmatpush1.bf16.msra.mxu0 %v5792
        %5970 = vmatprep.mubr.bf16.mxu0 %v286
        %5971 = vmatmul.mubr.bf16.gmra.mrb[0].mxu0 %v285
        %v5972 = vpop.f32.mrb[0].mxu0
        %v5973 = vadd.f32 0.0, %v5972
        %v5974 = vpop.f32.mrb[0].mxu0
        %v5975 = vadd.f32 0.0, %v5974
        %v5976 = vpop.f32.mrb[0].mxu0
        %v5977 = vpop.f32.mrb[0].mxu0
        %5978 = vdwg.mxu0
        %5979 = vmatprep.subr.bf16.mxu0 %v5795
        %5980 = vmatpush1.bf16.msra.mxu0 %v5794
        %5981 = vmatprep.subr.bf16.mxu0 %v5797
        %5982 = vmatpush1.bf16.msra.mxu0 %v5796
        %5983 = vmatprep.subr.bf16.mxu0 %v5799
        %5984 = vmatpush1.bf16.msra.mxu0 %v5798
        %5985 = vmatprep.subr.bf16.mxu0 %v5801
        %5986 = vmatpush1.bf16.msra.mxu0 %v5800
        %5987 = vmatprep.subr.bf16.mxu0 %v5803
        %5988 = vmatpush1.bf16.msra.mxu0 %v5802
        %5989 = vmatprep.subr.bf16.mxu0 %v5805
        %5990 = vmatpush1.bf16.msra.mxu0 %v5804
        %5991 = vmatprep.subr.bf16.mxu0 %v5807
        %5992 = vmatpush1.bf16.msra.mxu0 %v5806
        %5993 = vmatprep.subr.bf16.mxu0 %v5809
        %5994 = vmatpush1.bf16.msra.mxu0 %v5808
        %5995 = vmatprep.subr.bf16.mxu0 %v5811
        %5996 = vmatpush1.bf16.msra.mxu0 %v5810
        %5997 = vmatprep.subr.bf16.mxu0 %v5813
        %5998 = vmatpush1.bf16.msra.mxu0 %v5812
        %5999 = vmatprep.subr.bf16.mxu0 %v5815
        %6000 = vmatpush1.bf16.msra.mxu0 %v5814
        %6001 = vmatprep.subr.bf16.mxu0 %v5817
        %6002 = vmatpush1.bf16.msra.mxu0 %v5816
        %6003 = vmatprep.subr.bf16.mxu0 %v5819
        %6004 = vmatpush1.bf16.msra.mxu0 %v5818
        %6005 = vmatprep.subr.bf16.mxu0 %v5821
        %6006 = vmatpush1.bf16.msra.mxu0 %v5820
        %6007 = vmatprep.subr.bf16.mxu0 %v5823
        %6008 = vmatpush1.bf16.msra.mxu0 %v5822
        %6009 = vmatprep.subr.bf16.mxu0 %v5825
        %6010 = vmatpush1.bf16.msra.mxu0 %v5824
        %6011 = vmatprep.mubr.bf16.mxu0 %v288
        %6012 = vmatmul.mubr.bf16.gmra.mrb[0].mxu0 %v287
        %v6013 = vpop.f32.mrb[0].mxu0
        %v6014 = vadd.f32 %v5973, %v6013
        %v6015 = vpop.f32.mrb[0].mxu0
        %v6016 = vadd.f32 %v5975, %v6015
        %v6017 = vpop.f32.mrb[0].mxu0
        %v6018 = vpop.f32.mrb[0].mxu0
        %6019 = vdwg.mxu0
        %6020 = vmatprep.subr.bf16.mxu0 %v5827
        %6021 = vmatpush1.bf16.msra.mxu0 %v5826
        %6022 = vmatprep.subr.bf16.mxu0 %v5829
        %6023 = vmatpush1.bf16.msra.mxu0 %v5828
        %6024 = vmatprep.subr.bf16.mxu0 %v5831
        %6025 = vmatpush1.bf16.msra.mxu0 %v5830
        %6026 = vmatprep.subr.bf16.mxu0 %v5833
        %6027 = vmatpush1.bf16.msra.mxu0 %v5832
        %6028 = vmatprep.subr.bf16.mxu0 %v5835
        %6029 = vmatpush1.bf16.msra.mxu0 %v5834
        %6030 = vmatprep.subr.bf16.mxu0 %v5837
        %6031 = vmatpush1.bf16.msra.mxu0 %v5836
        %6032 = vmatprep.subr.bf16.mxu0 %v5839
        %6033 = vmatpush1.bf16.msra.mxu0 %v5838
        %6034 = vmatprep.subr.bf16.mxu0 %v5841
        %6035 = vmatpush1.bf16.msra.mxu0 %v5840
        %6036 = vmatprep.subr.bf16.mxu0 %v5843
        %6037 = vmatpush1.bf16.msra.mxu0 %v5842
        %6038 = vmatprep.subr.bf16.mxu0 %v5845
        %6039 = vmatpush1.bf16.msra.mxu0 %v5844
        %6040 = vmatprep.subr.bf16.mxu0 %v5936
        %6041 = vmatpush1.bf16.msra.mxu0 %v5933
        %6042 = vmatprep.subr.bf16.mxu0 0
        %6043 = vmatpush1.bf16.msra.mxu0 0
        %6044 = vmatprep.subr.bf16.mxu0 0
        %6045 = vmatpush1.bf16.msra.mxu0 0
        %6046 = vmatprep.subr.bf16.mxu0 0
        %6047 = vmatpush1.bf16.msra.mxu0 0
        %6048 = vmatprep.subr.bf16.mxu0 0
        %6049 = vmatpush1.bf16.msra.mxu0 0
        %6050 = vmatprep.subr.bf16.mxu0 0
        %6051 = vmatpush1.bf16.msra.mxu0 0
        %6052 = vmatprep.mubr.bf16.mxu0 %v803
        %6053 = vmatmul.mubr.bf16.gmra.mrb[0].mxu0 %v289
        %v6054 = vpop.f32.mrb[0].mxu0
        %v6055 = vadd.f32 %v6014, %v6054
        %v6056 = vpop.f32.mrb[0].mxu0
        %v6057 = vadd.f32 %v6016, %v6056
        %v6058 = vpop.f32.mrb[0].mxu0
        %v6059 = vpop.f32.mrb[0].mxu0
        %6060 = vdwg.mxu0
        %v6061 = vmax.f32 %v5420, %v6055
        %v6062 = vmax.f32 %v5421, %v6057
        %v6063 = vld [vmem:[#allocation5] sm:$0x3]
        %v6065 = vlaneseq
        %v6066 = vshrl.u32 %v6065, 7
        %v6067 = vsub.s32 0, %v6066
        %v6068 = vrot.slane %v6063, %v6067
        %v6069 = vlaneseq
        %v6070 = vshrl.u32 %v6069, 7
        %v6071 = vsub.s32 1, %v6070
        %v6072 = vrot.slane %v6063, %v6071
        %v6075 = vadd.f32 %v6061, %v6068
        %v6076 = vadd.f32 %v6062, %v6072
        %v6077 = vmax.f32 %v6075, 0.0
        %v6078 = vmax.f32 %v6076, 0.0
        %v6079 = vpack.c.bf16 %v6077, %v6077
        %v6080 = vpack.c.bf16 %v6078, %v6078
        %v6081 = vld [vmem:[#allocation7] sm:$0xf]
        %v6082 = vld [vmem:[#allocation7 + $0x4] sm:$0xf]
        %v6083 = vld [vmem:[#allocation7 + $0x8] sm:$0xf]
        %v6084 = vld [vmem:[#allocation7 + $0xc] sm:$0xf]
        %v6085 = vld [vmem:[#allocation7 + $0x10] sm:$0xf]
        %v6086 = vld [vmem:[#allocation7 + $0x14] sm:$0xf]
        %v6087 = vld [vmem:[#allocation7 + $0x18] sm:$0xf]
        %v6088 = vld [vmem:[#allocation7 + $0x1c] sm:$0xf]
        %v6089 = vld [vmem:[#allocation7 + $0x20] sm:$0xf]
        %v6090 = vld [vmem:[#allocation7 + $0x24] sm:$0xf]
        %v6091 = vld [vmem:[#allocation7 + $0x28] sm:$0xf]
        %v6092 = vld [vmem:[#allocation7 + $0x2c] sm:$0xf]
        %v6093 = vld [vmem:[#allocation7 + $0x30] sm:$0xf]
        %v6094 = vld [vmem:[#allocation7 + $0x34] sm:$0xf]
        %v6095 = vld [vmem:[#allocation7 + $0x38] sm:$0xf]
        %v6096 = vld [vmem:[#allocation7 + $0x3c] sm:$0xf]
        %v6097 = vld [vmem:[#allocation7 + $0x40] sm:$0xf]
        %v6098 = vld [vmem:[#allocation7 + $0x44] sm:$0xf]
        %v6099 = vld [vmem:[#allocation7 + $0x48] sm:$0xf]
        %v6100 = vld [vmem:[#allocation7 + $0x4c] sm:$0xf]
        %v6101 = vld [vmem:[#allocation7 + $0x50] sm:$0xf]
        %v6102 = vld [vmem:[#allocation7 + $0x54] sm:$0xf]
        %v6103 = vld [vmem:[#allocation7 + $0x58] sm:$0xf]
        %v6104 = vld [vmem:[#allocation7 + $0x5c] sm:$0xf]
        %v6105 = vld [vmem:[#allocation7 + $0x60] sm:$0xf]
        %v6106 = vld [vmem:[#allocation7 + $0x64] sm:$0xf]
        %v6107 = vld [vmem:[#allocation7 + $0x68] sm:$0xf]
        %v6108 = vld [vmem:[#allocation7 + $0x6c] sm:$0xf]
        %v6109 = vld [vmem:[#allocation7 + $0x70] sm:$0xf]
        %v6110 = vld [vmem:[#allocation7 + $0x74] sm:$0xf]
        %v6111 = vld [vmem:[#allocation7 + $0x78] sm:$0xf]
        %v6112 = vld [vmem:[#allocation7 + $0x7c] sm:$0xf]
        %v6113 = vld [vmem:[#allocation8] sm:$0x1]
        %v6115 = vlaneseq
        %v6116 = vshrl.u32 %v6115, 7
        %v6117 = vsub.s32 0, %v6116
        %v6118 = vrot.slane %v6113, %v6117
        %v6152 = vunpack.c.l.b16 %v6081
        %v6153 = vunpack.c.l.b16 %v6082
        %v6154 = vunpack.c.l.b16 %v6083
        %v6155 = vunpack.c.l.b16 %v6084
        %v6156 = vunpack.c.l.b16 %v6085
        %v6157 = vunpack.c.l.b16 %v6086
        %v6158 = vunpack.c.l.b16 %v6087
        %v6159 = vunpack.c.l.b16 %v6088
        %v6160 = vunpack.c.l.b16 %v6089
        %v6161 = vunpack.c.l.b16 %v6090
        %v6162 = vunpack.c.l.b16 %v6091
        %v6163 = vunpack.c.l.b16 %v6092
        %v6164 = vunpack.c.l.b16 %v6093
        %v6165 = vunpack.c.l.b16 %v6094
        %v6166 = vunpack.c.l.b16 %v6095
        %v6167 = vunpack.c.l.b16 %v6096
        %v6168 = vunpack.c.l.b16 %v6097
        %v6169 = vunpack.c.l.b16 %v6098
        %v6170 = vunpack.c.l.b16 %v6099
        %v6171 = vunpack.c.l.b16 %v6100
        %v6172 = vunpack.c.l.b16 %v6101
        %v6173 = vunpack.c.l.b16 %v6102
        %v6174 = vunpack.c.l.b16 %v6103
        %v6175 = vunpack.c.l.b16 %v6104
        %v6176 = vunpack.c.l.b16 %v6105
        %v6177 = vunpack.c.l.b16 %v6106
        %v6178 = vunpack.c.l.b16 %v6107
        %v6179 = vunpack.c.l.b16 %v6108
        %v6180 = vunpack.c.l.b16 %v6109
        %v6181 = vunpack.c.l.b16 %v6110
        %v6182 = vunpack.c.l.b16 %v6111
        %v6183 = vunpack.c.l.b16 %v6112
        %v6184 = vpack.c.b16 %v6153, %v6152
        %v6185 = vpack.c.b16 %v6155, %v6154
        %v6186 = vpack.c.b16 %v6157, %v6156
        %v6187 = vpack.c.b16 %v6159, %v6158
        %v6188 = vpack.c.b16 %v6161, %v6160
        %v6189 = vpack.c.b16 %v6163, %v6162
        %v6190 = vpack.c.b16 %v6165, %v6164
        %v6191 = vpack.c.b16 %v6167, %v6166
        %v6192 = vpack.c.b16 %v6169, %v6168
        %v6193 = vpack.c.b16 %v6171, %v6170
        %v6194 = vpack.c.b16 %v6173, %v6172
        %v6195 = vpack.c.b16 %v6175, %v6174
        %v6196 = vpack.c.b16 %v6177, %v6176
        %v6197 = vpack.c.b16 %v6179, %v6178
        %v6198 = vpack.c.b16 %v6181, %v6180
        %v6199 = vpack.c.b16 %v6183, %v6182
        %6216 = vmatprep.subr.bf16.mxu0 0
        %6217 = vmatpush1.bf16.msra.mxu0 %v6184
        %6218 = vmatprep.subr.bf16.mxu0 0
        %6219 = vmatpush1.bf16.msra.mxu0 %v6185
        %6220 = vmatprep.subr.bf16.mxu0 0
        %6221 = vmatpush1.bf16.msra.mxu0 %v6186
        %6222 = vmatprep.subr.bf16.mxu0 0
        %6223 = vmatpush1.bf16.msra.mxu0 %v6187
        %6224 = vmatprep.subr.bf16.mxu0 0
        %6225 = vmatpush1.bf16.msra.mxu0 %v6188
        %6226 = vmatprep.subr.bf16.mxu0 0
        %6227 = vmatpush1.bf16.msra.mxu0 %v6189
        %6228 = vmatprep.subr.bf16.mxu0 0
        %6229 = vmatpush1.bf16.msra.mxu0 %v6190
        %6230 = vmatprep.subr.bf16.mxu0 0
        %6231 = vmatpush1.bf16.msra.mxu0 %v6191
        %6232 = vmatprep.subr.bf16.mxu0 0
        %6233 = vmatpush1.bf16.msra.mxu0 %v6192
        %6234 = vmatprep.subr.bf16.mxu0 0
        %6235 = vmatpush1.bf16.msra.mxu0 %v6193
        %6236 = vmatprep.subr.bf16.mxu0 0
        %6237 = vmatpush1.bf16.msra.mxu0 %v6194
        %6238 = vmatprep.subr.bf16.mxu0 0
        %6239 = vmatpush1.bf16.msra.mxu0 %v6195
        %6240 = vmatprep.subr.bf16.mxu0 0
        %6241 = vmatpush1.bf16.msra.mxu0 %v6196
        %6242 = vmatprep.subr.bf16.mxu0 0
        %6243 = vmatpush1.bf16.msra.mxu0 %v6197
        %6244 = vmatprep.subr.bf16.mxu0 0
        %6245 = vmatpush1.bf16.msra.mxu0 %v6198
        %6246 = vmatprep.subr.bf16.mxu0 0
        %6247 = vmatpush1.bf16.msra.mxu0 %v6199
        %6248 = vmatprep.mubr.bf16.mxu0 %v6080
        %6249 = vmatmul.mubr.bf16.gmra.mrb[0].mxu0 %v6079
        %v6250 = vpop.f32.mrb[0].mxu0
        %v6251 = vadd.f32 %v6118, %v6250
        %v6252 = vpop.f32.mrb[0].mxu0
        %v6253 = vpop.f32.mrb[0].mxu0
        %v6254 = vpop.f32.mrb[0].mxu0
        %6255 = vdwg.mxu0
        %6256 = vmax.xlane.f32.xlu0 %v6251
        %v6257 = vpop.xlane.xlu0 %6256
        %v6258 = vsub.f32 %v6251, %v6257
        %v6259 = vmul.f32 %v6258, 1.442695
        %v6260 = vpow.pop %v6259
        %6261 = vadd.xlane.f32.xlu0 %v6260
        %v6262 = vpop.xlane.xlu0 %6261
        %v6263 = vlog2.pop %v6262
        %v6264 = vmul.f32 %v6263, 0.6931472
        %v6265 = vsub.f32 %v6258, %v6264
        %6266 = vst [vmem:[%s272] sm:$0xff] %v6265
        %s6267 = sand.u32 %s140, 1
        %s6268 = scalar_lea.sflag [#allocation4], %s6267
        %s6269 = sand.u32 %s140, 1
        %s6270 = smul.addr %s6269, 8
        %s6271 = scalar_lea.vmem [#allocation10], %s6270
        // Predicated region
        $region57: #{convnet_forward.1} parent=39 // pred_check
          %p6272 = pneg %p150
        $region58: #{convnet_forward.1} parent=39 // pred_check_branch
          %6274 = sbr.rel (%p6272) target = $region60
        $region59: #{convnet_forward.1} parent=39 // pred_region
          %s6276 = ssub.s32 128, 128
          %6277 = vsyncadd %s6268, %s6276
          %s6278 = smul.addr %s22, 128
          %s6279 = scalar_lea.hbm %s5, %s6278
          %s6281 = sshll.u32 %s6271, 4
          %s6282 = int_to_ptr.vmem [resolvable:$true] %s6281
          %6284 = dma.vmem_to_hbm [thread:$0]  %s6282, 128, %s6279, %s6268
        $region60: #{convnet_forward.1} parent=39 // pred_fallthru
          _
      $region40: #{convnet_forward.1} parent=5 // pred_fallthru
        _
      %p6285 = scmp.le.s32.totalorder 2, %s17
      // Predicated region
      $region61: #{convnet_forward.1} parent=5 // pred_check
        %p6286 = pneg %p6285
      $region62: #{convnet_forward.1} parent=5 // pred_check_branch
        %6288 = sbr.rel (%p6286) target = $region64
      $region63: #{convnet_forward.1} parent=5 // pred_region
        %s6289 = ssub.s32 %s17, 2
        // Predicated region
        $region65: #{convnet_forward.1} parent=63 // pred_check
          %p6290 = pneg %p156
        $region66: #{convnet_forward.1} parent=63 // pred_check_branch
          %6292 = sbr.rel (%p6290) target = $region68
        $region67: #{convnet_forward.1} parent=63 // pred_region
          %s6293 = sand.u32 %s141, 1
          %s6294 = scalar_lea.sflag [#allocation4], %s6293
          %s6295 = sand.u32 %s141, 1
          %s6296 = smul.addr %s6295, 8
          %s6297 = scalar_lea.vmem [#allocation10], %s6296
          %6298 = dma.done %s6294, 128
        $region68: #{convnet_forward.1} parent=63 // pred_fallthru
          _
      $region64: #{convnet_forward.1} parent=5 // pred_fallthru
        _
    $region6: #{convnet_forward.1} parent=1 // loop_footer
      %s21 = sadd.s32 1, %s17
    $region7: #{convnet_forward.1} parent=1 // loop_footer_branch
      %16 = sbr.rel target = $region3
    $region8: #{convnet_forward.1} parent=1 // loop_exit
      _
    %6299 = vsyncpa [#allocation3], 1
    %s6300 = scalar_lea.sflag [#allocation3], 1
    %6301 = vsyncpa %s6300, 1
    %6302 = vsyncpa [#allocation6], 1
    %6303 = vsyncpa [#allocation9], 1
    %6304 = vsyncpa [#allocation4], 1
    %s6305 = scalar_lea.sflag [#allocation4], 1
    %6306 = vsyncpa %s6305, 1

</llo_original>
